<compile_context>
chip_gen: v6e
topology: v6e:2x2x1
jax: 0.10.0
libtpu: 0.0.40
codegen_flags: <defaults>
</compile_context>

<pallas_src>
import jax
import jax.numpy as jnp
from jax import lax
from jax.experimental import pallas as pl
from jax.experimental.pallas import tpu as pltpu


def _round_up(x, m):
    return (x + m - 1) // m * m


# ------------------------- Pallas kernel -------------------------

def _lstm_kernel(tok_ref,                         # (S*Bp, 1) int32 token ids (time-major, batch-padded)
                 w0p_ref,                         # (Ep, 4H)  = emb @ Wih0 (embedding folded in)
                 b0_ref,                          # (1, 4H)
                 whh0_ref,                        # (H, 4H)
                 b1_ref, b2_ref,                  # (1, 4H) each
                 bout_ref,                        # (1, Ep)
                 wih1_hbm, whh1_hbm,              # (H, 4H) each, HBM
                 wih2_hbm, whh2_hbm,              # (H, 4H) each, HBM
                 wout_hbm,                        # (H, Ep), HBM
                 out_ref,                         # (Bp, Ep)
                 seq_ref,                         # scratch (S*Bp, H)   per-layer output sequence
                 proj_ref,                        # scratch (S*Bp, 4H)  hoisted input projections
                 wih1_v, whh1_v,                  # scratch (H, 4H)
                 wih2_v, whh2_v,                  # scratch (H, 4H)
                 wout_v,                          # scratch (H, Ep)
                 dma_sems):                       # DMA semaphores (5,)
    Bp = out_ref.shape[0]
    H = whh0_ref.shape[0]
    Ep = w0p_ref.shape[0]
    SB = seq_ref.shape[0]
    S = SB // Bp

    # ---- start HBM->VMEM weight copies; they land while layer 0 computes ----
    copies = [
        pltpu.make_async_copy(wih1_hbm, wih1_v, dma_sems.at[0]),
        pltpu.make_async_copy(whh1_hbm, whh1_v, dma_sems.at[1]),
        pltpu.make_async_copy(wih2_hbm, wih2_v, dma_sems.at[2]),
        pltpu.make_async_copy(whh2_hbm, whh2_v, dma_sems.at[3]),
        pltpu.make_async_copy(wout_hbm, wout_v, dma_sems.at[4]),
    ]
    for cp in copies:
        cp.start()

    # ---- layer-0 input projection: exact one-hot gather fused with the input
    # matmul via the folded W0' (K=Ep, N=4H -> good MXU shape) ----
    tok = tok_ref[...]                                          # (SB, 1)
    iota = lax.broadcasted_iota(jnp.int32, (SB, Ep), 1)
    onehot = (iota == tok).astype(jnp.float32)                  # (SB, Ep)
    proj_ref[...] = (jnp.dot(onehot, w0p_ref[...],
                             preferred_element_type=jnp.float32)
                     + b0_ref[...])                             # (SB, 4H)

    def precompute_proj(wih_ref, b_ref):
        # One big matmul for the whole sequence, bias folded in; removes half
        # the matmuls from the serial chain.
        proj_ref[...] = (jnp.dot(seq_ref[...], wih_ref[...],
                                 preferred_element_type=jnp.float32)
                         + b_ref[...])

    def run_layer(whh_ref, store_seq):
        # h0 = c0 = 0 (PyTorch default); h/c live as loop-carried vregs.
        def step(t, carry):
            h, c = carry
            row = t * Bp
            gates = (proj_ref[pl.ds(row, Bp), :]
                     + jnp.dot(h, whh_ref[...],
                               preferred_element_type=jnp.float32))  # (Bp, 4H)
            # gate columns pre-permuted to (i, f, o, g): one sigmoid + one tanh
            sig = jax.nn.sigmoid(gates[:, : 3 * H])
            g = jnp.tanh(gates[:, 3 * H:])
            i_g = sig[:, 0 * H:1 * H]
            f_g = sig[:, 1 * H:2 * H]
            o_g = sig[:, 2 * H:3 * H]
            c_new = f_g * c + i_g * g
            h_new = o_g * jnp.tanh(c_new)
            if store_seq:  # final layer only needs h_last -> skip the stores
                seq_ref[pl.ds(row, Bp), :] = h_new
            return (h_new, c_new)

        z = jnp.zeros((Bp, H), jnp.float32)
        h_last, _ = lax.fori_loop(0, S, step, (z, z), unroll=True)
        return h_last

    # layer 0
    run_layer(whh0_ref, store_seq=True)

    # layer 1 (weights just DMA'd in)
    copies[0].wait()
    copies[1].wait()
    precompute_proj(wih1_v, b1_ref)
    run_layer(whh1_v, store_seq=True)

    # layer 2
    copies[2].wait()
    copies[3].wait()
    precompute_proj(wih2_v, b2_ref)
    h_top_last = run_layer(whh2_v, store_seq=False)

    # x = x[-1, :, :]; x = self.linear(x)
    copies[4].wait()
    out_ref[...] = (jnp.dot(h_top_last, wout_v[...],
                            preferred_element_type=jnp.float32)
                    + bout_ref[...])


# ------------------------- wrapper -------------------------

def predictive_lstm_forward(x_tokens, params):
    """x_tokens: (B, S) int32 token ids. Returns (B, E) float32 logits."""
    emb = params["embedding"]                      # (E, D)
    B, S = x_tokens.shape
    E, D = emb.shape
    H = params["whh0"].shape[0]

    Bp = _round_up(B, 8)       # sublane-tile batch
    Ep = _round_up(E, 128)     # lane-tile events (output N dim + table rows)

    # Gate-column permutation: PyTorch (i, f, g, o) -> (i, f, o, g) so the
    # three sigmoid gates form one contiguous 3H slab and g is the last H.
    perm = jnp.concatenate([jnp.arange(0, 2 * H),
                            jnp.arange(3 * H, 4 * H),
                            jnp.arange(2 * H, 3 * H)])

    def pw(w):
        return w[:, perm]

    def pb(b):
        return b[:, perm]

    # time-major tokens, batch padded with token 0 (valid index), flattened.
    tok = jnp.transpose(x_tokens, (1, 0)).astype(jnp.int32)        # (S, B)
    tok = jnp.pad(tok, ((0, 0), (0, Bp - B)))                      # (S, Bp)
    tok = tok.reshape(S * Bp, 1)                                   # (S*Bp, 1)

    # Fold the embedding table into the layer-0 input weights (exact: the
    # in-kernel one-hot selects rows of this product).
    emb_p = jnp.pad(emb, ((0, Ep - E), (0, 0)))                    # (Ep, D)
    w0p = jnp.dot(emb_p, pw(params["wih0"]),
                  precision=jax.lax.Precision.HIGHEST)             # (Ep, 4H)

    wout_p = jnp.pad(params["wout"], ((0, 0), (0, Ep - E)))        # (H, Ep)
    bout_p = jnp.pad(params["bout"], ((0, 0), (0, Ep - E)))        # (1, Ep)

    vmem = pl.BlockSpec(memory_space=pltpu.MemorySpace.VMEM)
    hbm = pl.BlockSpec(memory_space=pl.ANY)        # raw HBM ref, DMA'd in-kernel

    kernel_inputs = (
        tok, w0p, pb(params["b0"]), pw(params["whh0"]),
        pb(params["b1"]), pb(params["b2"]), bout_p,
        pw(params["wih1"]), pw(params["whh1"]),
        pw(params["wih2"]), pw(params["whh2"]), wout_p,
    )

    out = pl.pallas_call(
        _lstm_kernel,
        out_shape=jax.ShapeDtypeStruct((Bp, Ep), jnp.float32),
        in_specs=[vmem] * 7 + [hbm] * 5,
        out_specs=vmem,
        scratch_shapes=[
            pltpu.VMEM((S * Bp, H), jnp.float32),       # per-layer output sequence
            pltpu.VMEM((S * Bp, 4 * H), jnp.float32),   # hoisted input projections
            pltpu.VMEM((H, 4 * H), jnp.float32),        # wih1
            pltpu.VMEM((H, 4 * H), jnp.float32),        # whh1
            pltpu.VMEM((H, 4 * H), jnp.float32),        # wih2
            pltpu.VMEM((H, 4 * H), jnp.float32),        # whh2
            pltpu.VMEM((H, Ep), jnp.float32),           # wout
            pltpu.SemaphoreType.DMA((5,)),
        ],
    )(*kernel_inputs)
    return out[:B, :E]


# ------------------------- parameter setup -------------------------

def init_params(key, events_length, embed_dim, hidden_size):
    ks = jax.random.split(key, 16)
    s = 0.1

    def w(k, shape):
        return jax.random.normal(k, shape, dtype=jnp.float32) * s

    H = hidden_size
    params = {
        "embedding": w(ks[0], (events_length, embed_dim)),
        # layer 0: input_size = embed_dim (stored transposed for x @ W)
        "wih0": w(ks[1], (embed_dim, 4 * H)),
        "whh0": w(ks[2], (H, 4 * H)),
        "b0":   w(ks[3], (1, 4 * H)),   # = b_ih + b_hh combined
        # layer 1
        "wih1": w(ks[4], (H, 4 * H)),
        "whh1": w(ks[5], (H, 4 * H)),
        "b1":   w(ks[6], (1, 4 * H)),
        # layer 2
        "wih2": w(ks[7], (H, 4 * H)),
        "whh2": w(ks[8], (H, 4 * H)),
        "b2":   w(ks[9], (1, 4 * H)),
        # final linear: (H, E) transposed, bias (1, E)
        "wout": w(ks[10], (H, events_length)),
        "bout": w(ks[11], (1, events_length)),
    }
    return params


# ------------------------- pure-JAX reference -------------------------

def reference_forward(x_tokens, params):
    emb = params["embedding"]
    x = jnp.take(emb, x_tokens, axis=0)          # (B, S, D)
    x = jnp.transpose(x, (1, 0, 2))              # (S, B, D)
    H = params["whh0"].shape[0]
    B = x.shape[1]

    def run_layer(x_seq, wih, whh, b):
        def cell(carry, x_t):
            h, c = carry
            gates = x_t @ wih + h @ whh + b
            i = jax.nn.sigmoid(gates[:, 0 * H:1 * H])
            f = jax.nn.sigmoid(gates[:, 1 * H:2 * H])
            g = jnp.tanh(gates[:, 2 * H:3 * H])
            o = jax.nn.sigmoid(gates[:, 3 * H:4 * H])
            c = f * c + i * g
            h = o * jnp.tanh(c)
            return (h, c), h
        init = (jnp.zeros((B, H), jnp.float32), jnp.zeros((B, H), jnp.float32))
        _, ys = lax.scan(cell, init, x_seq)
        return ys

    x = run_layer(x, params["wih0"], params["whh0"], params["b0"])
    x = run_layer(x, params["wih1"], params["whh1"], params["b1"])
    x = run_layer(x, params["wih2"], params["whh2"], params["b2"])
    last = x[-1]                                  # (B, H)
    return last @ params["wout"] + params["bout"]


# ------------------------- main -------------------------

if __name__ == "__main__":
    # Small shapes consistent with the module's forward.
    EVENTS = 64      # events_length (vocab + output size)
    EMBED = 32       # embed_dim
    HIDDEN = 128     # hidden_size
    BATCH = 4
    SEQ = 8

    key = jax.random.PRNGKey(0)
    k_par, k_tok = jax.random.split(key)
    params = init_params(k_par, EVENTS, EMBED, HIDDEN)
    x_tokens = jax.random.randint(k_tok, (BATCH, SEQ), 0, EVENTS, dtype=jnp.int32)

    fwd = jax.jit(predictive_lstm_forward)
    out = jax.block_until_ready(fwd(x_tokens, params))

    ref = reference_forward(x_tokens, params)
    assert out.shape == (BATCH, EVENTS)
    assert jnp.allclose(out, ref, rtol=1e-4, atol=1e-4), "mismatch vs reference"

    print("KERNEL_OK")
</pallas_src>

<mosaic_0001>
module attributes {stable_mosaic.version = 11 : i64} {
  func.func @_lstm_kernel(%arg0: memref<64x1xi32, #tpu.memory_space<vmem>>, %arg1: memref<128x512xf32, #tpu.memory_space<vmem>>, %arg2: memref<1x512xf32, #tpu.memory_space<vmem>>, %arg3: memref<128x512xf32, #tpu.memory_space<vmem>>, %arg4: memref<1x512xf32, #tpu.memory_space<vmem>>, %arg5: memref<1x512xf32, #tpu.memory_space<vmem>>, %arg6: memref<1x128xf32, #tpu.memory_space<vmem>>, %arg7: memref<128x512xf32, #tpu.memory_space<any>>, %arg8: memref<128x512xf32, #tpu.memory_space<any>>, %arg9: memref<128x512xf32, #tpu.memory_space<any>>, %arg10: memref<128x512xf32, #tpu.memory_space<any>>, %arg11: memref<128x128xf32, #tpu.memory_space<any>>, %arg12: memref<8x128xf32, #tpu.memory_space<vmem>>, %arg13: memref<64x128xf32, #tpu.memory_space<vmem>>, %arg14: memref<64x512xf32, #tpu.memory_space<vmem>>, %arg15: memref<128x512xf32, #tpu.memory_space<vmem>>, %arg16: memref<128x512xf32, #tpu.memory_space<vmem>>, %arg17: memref<128x512xf32, #tpu.memory_space<vmem>>, %arg18: memref<128x512xf32, #tpu.memory_space<vmem>>, %arg19: memref<128x128xf32, #tpu.memory_space<vmem>>, %arg20: memref<5x!tpu.dma_semaphore, #tpu.memory_space<semaphore_mem>>) attributes {dimension_semantics = [], scalar_prefetch = 0 : i64, scratch_operands = 8 : i64, tpu.core_type = #tpu.core_type<tc>} {
    %c0_i32 = arith.constant 0 : i32
    %0 = tpu.memref_slice %arg20[%c0_i32] : memref<5x!tpu.dma_semaphore, #tpu.memory_space<semaphore_mem>> -> memref<1x!tpu.dma_semaphore, #tpu.memory_space<semaphore_mem>>
    %1 = tpu.memref_squeeze %0 : memref<1x!tpu.dma_semaphore, #tpu.memory_space<semaphore_mem>> -> memref<!tpu.dma_semaphore, #tpu.memory_space<semaphore_mem>>
    tpu.enqueue_dma source(%arg7 : memref<128x512xf32, #tpu.memory_space<any>>) target(%arg15 : memref<128x512xf32, #tpu.memory_space<vmem>>) target_semaphore(%1 : memref<!tpu.dma_semaphore, #tpu.memory_space<semaphore_mem>>)
    %c1_i32 = arith.constant 1 : i32
    %2 = tpu.memref_slice %arg20[%c1_i32] : memref<5x!tpu.dma_semaphore, #tpu.memory_space<semaphore_mem>> -> memref<1x!tpu.dma_semaphore, #tpu.memory_space<semaphore_mem>>
    %3 = tpu.memref_squeeze %2 : memref<1x!tpu.dma_semaphore, #tpu.memory_space<semaphore_mem>> -> memref<!tpu.dma_semaphore, #tpu.memory_space<semaphore_mem>>
    tpu.enqueue_dma source(%arg8 : memref<128x512xf32, #tpu.memory_space<any>>) target(%arg16 : memref<128x512xf32, #tpu.memory_space<vmem>>) target_semaphore(%3 : memref<!tpu.dma_semaphore, #tpu.memory_space<semaphore_mem>>)
    %c2_i32 = arith.constant 2 : i32
    %4 = tpu.memref_slice %arg20[%c2_i32] : memref<5x!tpu.dma_semaphore, #tpu.memory_space<semaphore_mem>> -> memref<1x!tpu.dma_semaphore, #tpu.memory_space<semaphore_mem>>
    %5 = tpu.memref_squeeze %4 : memref<1x!tpu.dma_semaphore, #tpu.memory_space<semaphore_mem>> -> memref<!tpu.dma_semaphore, #tpu.memory_space<semaphore_mem>>
    tpu.enqueue_dma source(%arg9 : memref<128x512xf32, #tpu.memory_space<any>>) target(%arg17 : memref<128x512xf32, #tpu.memory_space<vmem>>) target_semaphore(%5 : memref<!tpu.dma_semaphore, #tpu.memory_space<semaphore_mem>>)
    %c3_i32 = arith.constant 3 : i32
    %6 = tpu.memref_slice %arg20[%c3_i32] : memref<5x!tpu.dma_semaphore, #tpu.memory_space<semaphore_mem>> -> memref<1x!tpu.dma_semaphore, #tpu.memory_space<semaphore_mem>>
    %7 = tpu.memref_squeeze %6 : memref<1x!tpu.dma_semaphore, #tpu.memory_space<semaphore_mem>> -> memref<!tpu.dma_semaphore, #tpu.memory_space<semaphore_mem>>
    tpu.enqueue_dma source(%arg10 : memref<128x512xf32, #tpu.memory_space<any>>) target(%arg18 : memref<128x512xf32, #tpu.memory_space<vmem>>) target_semaphore(%7 : memref<!tpu.dma_semaphore, #tpu.memory_space<semaphore_mem>>)
    %c4_i32 = arith.constant 4 : i32
    %8 = tpu.memref_slice %arg20[%c4_i32] : memref<5x!tpu.dma_semaphore, #tpu.memory_space<semaphore_mem>> -> memref<1x!tpu.dma_semaphore, #tpu.memory_space<semaphore_mem>>
    %9 = tpu.memref_squeeze %8 : memref<1x!tpu.dma_semaphore, #tpu.memory_space<semaphore_mem>> -> memref<!tpu.dma_semaphore, #tpu.memory_space<semaphore_mem>>
    tpu.enqueue_dma source(%arg11 : memref<128x128xf32, #tpu.memory_space<any>>) target(%arg19 : memref<128x128xf32, #tpu.memory_space<vmem>>) target_semaphore(%9 : memref<!tpu.dma_semaphore, #tpu.memory_space<semaphore_mem>>)
    %c0 = arith.constant 0 : index
    %c0_0 = arith.constant 0 : index
    %10 = vector.load %arg0[%c0, %c0_0] : memref<64x1xi32, #tpu.memory_space<vmem>>, vector<64x1xi32>
    %11 = tpu.iota {dimensions = array<i32: 1>} : vector<64x128xi32>
    %12 = vector.broadcast %10 : vector<64x1xi32> to vector<64x128xi32>
    %13 = arith.cmpi eq, %11, %12 : vector<64x128xi32>
    %14 = arith.extui %13 : vector<64x128xi1> to vector<64x128xi32>
    %15 = arith.sitofp %14 : vector<64x128xi32> to vector<64x128xf32>
    %c0_1 = arith.constant 0 : index
    %c0_2 = arith.constant 0 : index
    %16 = vector.load %arg1[%c0_1, %c0_2] : memref<128x512xf32, #tpu.memory_space<vmem>>, vector<128x512xf32>
    %cst = arith.constant dense<0.000000e+00> : vector<64x512xf32>
    %17 = tpu.matmul %15, %16, %cst {dimension_numbers = #tpu.dot_dimension_numbers<[1], [0], [0], [1], [0, 0, 1, 1], [], []>} : vector<64x128xf32>, vector<128x512xf32>, vector<64x512xf32> -> vector<64x512xf32>
    %c0_3 = arith.constant 0 : index
    %c0_4 = arith.constant 0 : index
    %18 = vector.load %arg2[%c0_3, %c0_4] : memref<1x512xf32, #tpu.memory_space<vmem>>, vector<1x512xf32>
    %19 = vector.broadcast %18 : vector<1x512xf32> to vector<64x512xf32>
    %20 = arith.addf %17, %19 : vector<64x512xf32>
    %c0_5 = arith.constant 0 : index
    %c0_6 = arith.constant 0 : index
    %21 = vector.load %arg14[%c0_5, %c0_6] : memref<64x512xf32, #tpu.memory_space<vmem>>, vector<64x512xf32>
    tpu.vector_store %arg14[%c0_5, %c0_6], %20 {strides = array<i32>} : memref<64x512xf32, #tpu.memory_space<vmem>>, vector<64x512xf32>,
    %cst_7 = arith.constant 0.000000e+00 : f32
    %22 = vector.broadcast %cst_7 : f32 to vector<8x128xf32>
    %c0_i32_8 = arith.constant 0 : i32
    %c8_i32 = arith.constant 8 : i32
    %23 = arith.muli %c0_i32_8, %c8_i32 : i32
    %24 = arith.index_cast %23 : i32 to index
    %c0_9 = arith.constant 0 : index
    %25 = vector.load %arg14[%24, %c0_9] : memref<64x512xf32, #tpu.memory_space<vmem>>, vector<8x512xf32>
    %c0_10 = arith.constant 0 : index
    %c0_11 = arith.constant 0 : index
    %26 = vector.load %arg3[%c0_10, %c0_11] : memref<128x512xf32, #tpu.memory_space<vmem>>, vector<128x512xf32>
    %cst_12 = arith.constant dense<0.000000e+00> : vector<8x512xf32>
    %27 = tpu.matmul %22, %26, %cst_12 {dimension_numbers = #tpu.dot_dimension_numbers<[1], [0], [0], [1], [0, 0, 1, 1], [], []>} : vector<8x128xf32>, vector<128x512xf32>, vector<8x512xf32> -> vector<8x512xf32>
    %28 = arith.addf %25, %27 : vector<8x512xf32>
    %29 = vector.extract_strided_slice %28 {offsets = [0, 0], sizes = [8, 384], strides = [1, 1]} : vector<8x512xf32> to vector<8x384xf32>
    %30 = arith.negf %29 : vector<8x384xf32>
    %31 = math.exp %30 : vector<8x384xf32>
    %cst_13 = arith.constant 1.000000e+00 : f32
    %32 = vector.broadcast %cst_13 : f32 to vector<8x384xf32>
    %33 = arith.addf %32, %31 : vector<8x384xf32>
    %34 = arith.divf %32, %33 : vector<8x384xf32>
    %35 = vector.extract_strided_slice %28 {offsets = [0, 384], sizes = [8, 128], strides = [1, 1]} : vector<8x512xf32> to vector<8x128xf32>
    %36 = math.tanh %35 : vector<8x128xf32>
    %37 = vector.extract_strided_slice %34 {offsets = [0, 0], sizes = [8, 128], strides = [1, 1]} : vector<8x384xf32> to vector<8x128xf32>
    %38 = vector.extract_strided_slice %34 {offsets = [0, 128], sizes = [8, 128], strides = [1, 1]} : vector<8x384xf32> to vector<8x128xf32>
    %39 = vector.extract_strided_slice %34 {offsets = [0, 256], sizes = [8, 128], strides = [1, 1]} : vector<8x384xf32> to vector<8x128xf32>
    %40 = arith.mulf %38, %22 : vector<8x128xf32>
    %41 = arith.mulf %37, %36 : vector<8x128xf32>
    %42 = arith.addf %40, %41 : vector<8x128xf32>
    %43 = math.tanh %42 : vector<8x128xf32>
    %44 = arith.mulf %39, %43 : vector<8x128xf32>
    %45 = arith.index_cast %23 : i32 to index
    %c0_14 = arith.constant 0 : index
    %46 = vector.load %arg13[%45, %c0_14] : memref<64x128xf32, #tpu.memory_space<vmem>>, vector<8x128xf32>
    tpu.vector_store %arg13[%45, %c0_14], %44 {strides = array<i32>} : memref<64x128xf32, #tpu.memory_space<vmem>>, vector<8x128xf32>,
    %c1_i32_15 = arith.constant 1 : i32
    %c8_i32_16 = arith.constant 8 : i32
    %47 = arith.muli %c1_i32_15, %c8_i32_16 : i32
    %48 = arith.index_cast %47 : i32 to index
    %c0_17 = arith.constant 0 : index
    %49 = vector.load %arg14[%48, %c0_17] : memref<64x512xf32, #tpu.memory_space<vmem>>, vector<8x512xf32>
    %c0_18 = arith.constant 0 : index
    %c0_19 = arith.constant 0 : index
    %50 = vector.load %arg3[%c0_18, %c0_19] : memref<128x512xf32, #tpu.memory_space<vmem>>, vector<128x512xf32>
    %cst_20 = arith.constant dense<0.000000e+00> : vector<8x512xf32>
    %51 = tpu.matmul %44, %50, %cst_20 {dimension_numbers = #tpu.dot_dimension_numbers<[1], [0], [0], [1], [0, 0, 1, 1], [], []>} : vector<8x128xf32>, vector<128x512xf32>, vector<8x512xf32> -> vector<8x512xf32>
    %52 = arith.addf %49, %51 : vector<8x512xf32>
    %53 = vector.extract_strided_slice %52 {offsets = [0, 0], sizes = [8, 384], strides = [1, 1]} : vector<8x512xf32> to vector<8x384xf32>
    %54 = arith.negf %53 : vector<8x384xf32>
    %55 = math.exp %54 : vector<8x384xf32>
    %cst_21 = arith.constant 1.000000e+00 : f32
    %56 = vector.broadcast %cst_21 : f32 to vector<8x384xf32>
    %57 = arith.addf %56, %55 : vector<8x384xf32>
    %58 = arith.divf %56, %57 : vector<8x384xf32>
    %59 = vector.extract_strided_slice %52 {offsets = [0, 384], sizes = [8, 128], strides = [1, 1]} : vector<8x512xf32> to vector<8x128xf32>
    %60 = math.tanh %59 : vector<8x128xf32>
    %61 = vector.extract_strided_slice %58 {offsets = [0, 0], sizes = [8, 128], strides = [1, 1]} : vector<8x384xf32> to vector<8x128xf32>
    %62 = vector.extract_strided_slice %58 {offsets = [0, 128], sizes = [8, 128], strides = [1, 1]} : vector<8x384xf32> to vector<8x128xf32>
    %63 = vector.extract_strided_slice %58 {offsets = [0, 256], sizes = [8, 128], strides = [1, 1]} : vector<8x384xf32> to vector<8x128xf32>
    %64 = arith.mulf %62, %42 : vector<8x128xf32>
    %65 = arith.mulf %61, %60 : vector<8x128xf32>
    %66 = arith.addf %64, %65 : vector<8x128xf32>
    %67 = math.tanh %66 : vector<8x128xf32>
    %68 = arith.mulf %63, %67 : vector<8x128xf32>
    %69 = arith.index_cast %47 : i32 to index
    %c0_22 = arith.constant 0 : index
    %70 = vector.load %arg13[%69, %c0_22] : memref<64x128xf32, #tpu.memory_space<vmem>>, vector<8x128xf32>
    tpu.vector_store %arg13[%69, %c0_22], %68 {strides = array<i32>} : memref<64x128xf32, #tpu.memory_space<vmem>>, vector<8x128xf32>,
    %c2_i32_23 = arith.constant 2 : i32
    %c8_i32_24 = arith.constant 8 : i32
    %71 = arith.muli %c2_i32_23, %c8_i32_24 : i32
    %72 = arith.index_cast %71 : i32 to index
    %c0_25 = arith.constant 0 : index
    %73 = vector.load %arg14[%72, %c0_25] : memref<64x512xf32, #tpu.memory_space<vmem>>, vector<8x512xf32>
    %c0_26 = arith.constant 0 : index
    %c0_27 = arith.constant 0 : index
    %74 = vector.load %arg3[%c0_26, %c0_27] : memref<128x512xf32, #tpu.memory_space<vmem>>, vector<128x512xf32>
    %cst_28 = arith.constant dense<0.000000e+00> : vector<8x512xf32>
    %75 = tpu.matmul %68, %74, %cst_28 {dimension_numbers = #tpu.dot_dimension_numbers<[1], [0], [0], [1], [0, 0, 1, 1], [], []>} : vector<8x128xf32>, vector<128x512xf32>, vector<8x512xf32> -> vector<8x512xf32>
    %76 = arith.addf %73, %75 : vector<8x512xf32>
    %77 = vector.extract_strided_slice %76 {offsets = [0, 0], sizes = [8, 384], strides = [1, 1]} : vector<8x512xf32> to vector<8x384xf32>
    %78 = arith.negf %77 : vector<8x384xf32>
    %79 = math.exp %78 : vector<8x384xf32>
    %cst_29 = arith.constant 1.000000e+00 : f32
    %80 = vector.broadcast %cst_29 : f32 to vector<8x384xf32>
    %81 = arith.addf %80, %79 : vector<8x384xf32>
    %82 = arith.divf %80, %81 : vector<8x384xf32>
    %83 = vector.extract_strided_slice %76 {offsets = [0, 384], sizes = [8, 128], strides = [1, 1]} : vector<8x512xf32> to vector<8x128xf32>
    %84 = math.tanh %83 : vector<8x128xf32>
    %85 = vector.extract_strided_slice %82 {offsets = [0, 0], sizes = [8, 128], strides = [1, 1]} : vector<8x384xf32> to vector<8x128xf32>
    %86 = vector.extract_strided_slice %82 {offsets = [0, 128], sizes = [8, 128], strides = [1, 1]} : vector<8x384xf32> to vector<8x128xf32>
    %87 = vector.extract_strided_slice %82 {offsets = [0, 256], sizes = [8, 128], strides = [1, 1]} : vector<8x384xf32> to vector<8x128xf32>
    %88 = arith.mulf %86, %66 : vector<8x128xf32>
    %89 = arith.mulf %85, %84 : vector<8x128xf32>
    %90 = arith.addf %88, %89 : vector<8x128xf32>
    %91 = math.tanh %90 : vector<8x128xf32>
    %92 = arith.mulf %87, %91 : vector<8x128xf32>
    %93 = arith.index_cast %71 : i32 to index
    %c0_30 = arith.constant 0 : index
    %94 = vector.load %arg13[%93, %c0_30] : memref<64x128xf32, #tpu.memory_space<vmem>>, vector<8x128xf32>
    tpu.vector_store %arg13[%93, %c0_30], %92 {strides = array<i32>} : memref<64x128xf32, #tpu.memory_space<vmem>>, vector<8x128xf32>,
    %c3_i32_31 = arith.constant 3 : i32
    %c8_i32_32 = arith.constant 8 : i32
    %95 = arith.muli %c3_i32_31, %c8_i32_32 : i32
    %96 = arith.index_cast %95 : i32 to index
    %c0_33 = arith.constant 0 : index
    %97 = vector.load %arg14[%96, %c0_33] : memref<64x512xf32, #tpu.memory_space<vmem>>, vector<8x512xf32>
    %c0_34 = arith.constant 0 : index
    %c0_35 = arith.constant 0 : index
    %98 = vector.load %arg3[%c0_34, %c0_35] : memref<128x512xf32, #tpu.memory_space<vmem>>, vector<128x512xf32>
    %cst_36 = arith.constant dense<0.000000e+00> : vector<8x512xf32>
    %99 = tpu.matmul %92, %98, %cst_36 {dimension_numbers = #tpu.dot_dimension_numbers<[1], [0], [0], [1], [0, 0, 1, 1], [], []>} : vector<8x128xf32>, vector<128x512xf32>, vector<8x512xf32> -> vector<8x512xf32>
    %100 = arith.addf %97, %99 : vector<8x512xf32>
    %101 = vector.extract_strided_slice %100 {offsets = [0, 0], sizes = [8, 384], strides = [1, 1]} : vector<8x512xf32> to vector<8x384xf32>
    %102 = arith.negf %101 : vector<8x384xf32>
    %103 = math.exp %102 : vector<8x384xf32>
    %cst_37 = arith.constant 1.000000e+00 : f32
    %104 = vector.broadcast %cst_37 : f32 to vector<8x384xf32>
    %105 = arith.addf %104, %103 : vector<8x384xf32>
    %106 = arith.divf %104, %105 : vector<8x384xf32>
    %107 = vector.extract_strided_slice %100 {offsets = [0, 384], sizes = [8, 128], strides = [1, 1]} : vector<8x512xf32> to vector<8x128xf32>
    %108 = math.tanh %107 : vector<8x128xf32>
    %109 = vector.extract_strided_slice %106 {offsets = [0, 0], sizes = [8, 128], strides = [1, 1]} : vector<8x384xf32> to vector<8x128xf32>
    %110 = vector.extract_strided_slice %106 {offsets = [0, 128], sizes = [8, 128], strides = [1, 1]} : vector<8x384xf32> to vector<8x128xf32>
    %111 = vector.extract_strided_slice %106 {offsets = [0, 256], sizes = [8, 128], strides = [1, 1]} : vector<8x384xf32> to vector<8x128xf32>
    %112 = arith.mulf %110, %90 : vector<8x128xf32>
    %113 = arith.mulf %109, %108 : vector<8x128xf32>
    %114 = arith.addf %112, %113 : vector<8x128xf32>
    %115 = math.tanh %114 : vector<8x128xf32>
    %116 = arith.mulf %111, %115 : vector<8x128xf32>
    %117 = arith.index_cast %95 : i32 to index
    %c0_38 = arith.constant 0 : index
    %118 = vector.load %arg13[%117, %c0_38] : memref<64x128xf32, #tpu.memory_space<vmem>>, vector<8x128xf32>
    tpu.vector_store %arg13[%117, %c0_38], %116 {strides = array<i32>} : memref<64x128xf32, #tpu.memory_space<vmem>>, vector<8x128xf32>,
    %c4_i32_39 = arith.constant 4 : i32
    %c8_i32_40 = arith.constant 8 : i32
    %119 = arith.muli %c4_i32_39, %c8_i32_40 : i32
    %120 = arith.index_cast %119 : i32 to index
    %c0_41 = arith.constant 0 : index
    %121 = vector.load %arg14[%120, %c0_41] : memref<64x512xf32, #tpu.memory_space<vmem>>, vector<8x512xf32>
    %c0_42 = arith.constant 0 : index
    %c0_43 = arith.constant 0 : index
    %122 = vector.load %arg3[%c0_42, %c0_43] : memref<128x512xf32, #tpu.memory_space<vmem>>, vector<128x512xf32>
    %cst_44 = arith.constant dense<0.000000e+00> : vector<8x512xf32>
    %123 = tpu.matmul %116, %122, %cst_44 {dimension_numbers = #tpu.dot_dimension_numbers<[1], [0], [0], [1], [0, 0, 1, 1], [], []>} : vector<8x128xf32>, vector<128x512xf32>, vector<8x512xf32> -> vector<8x512xf32>
    %124 = arith.addf %121, %123 : vector<8x512xf32>
    %125 = vector.extract_strided_slice %124 {offsets = [0, 0], sizes = [8, 384], strides = [1, 1]} : vector<8x512xf32> to vector<8x384xf32>
    %126 = arith.negf %125 : vector<8x384xf32>
    %127 = math.exp %126 : vector<8x384xf32>
    %cst_45 = arith.constant 1.000000e+00 : f32
    %128 = vector.broadcast %cst_45 : f32 to vector<8x384xf32>
    %129 = arith.addf %128, %127 : vector<8x384xf32>
    %130 = arith.divf %128, %129 : vector<8x384xf32>
    %131 = vector.extract_strided_slice %124 {offsets = [0, 384], sizes = [8, 128], strides = [1, 1]} : vector<8x512xf32> to vector<8x128xf32>
    %132 = math.tanh %131 : vector<8x128xf32>
    %133 = vector.extract_strided_slice %130 {offsets = [0, 0], sizes = [8, 128], strides = [1, 1]} : vector<8x384xf32> to vector<8x128xf32>
    %134 = vector.extract_strided_slice %130 {offsets = [0, 128], sizes = [8, 128], strides = [1, 1]} : vector<8x384xf32> to vector<8x128xf32>
    %135 = vector.extract_strided_slice %130 {offsets = [0, 256], sizes = [8, 128], strides = [1, 1]} : vector<8x384xf32> to vector<8x128xf32>
    %136 = arith.mulf %134, %114 : vector<8x128xf32>
    %137 = arith.mulf %133, %132 : vector<8x128xf32>
    %138 = arith.addf %136, %137 : vector<8x128xf32>
    %139 = math.tanh %138 : vector<8x128xf32>
    %140 = arith.mulf %135, %139 : vector<8x128xf32>
    %141 = arith.index_cast %119 : i32 to index
    %c0_46 = arith.constant 0 : index
    %142 = vector.load %arg13[%141, %c0_46] : memref<64x128xf32, #tpu.memory_space<vmem>>, vector<8x128xf32>
    tpu.vector_store %arg13[%141, %c0_46], %140 {strides = array<i32>} : memref<64x128xf32, #tpu.memory_space<vmem>>, vector<8x128xf32>,
    %c5_i32 = arith.constant 5 : i32
    %c8_i32_47 = arith.constant 8 : i32
    %143 = arith.muli %c5_i32, %c8_i32_47 : i32
    %144 = arith.index_cast %143 : i32 to index
    %c0_48 = arith.constant 0 : index
    %145 = vector.load %arg14[%144, %c0_48] : memref<64x512xf32, #tpu.memory_space<vmem>>, vector<8x512xf32>
    %c0_49 = arith.constant 0 : index
    %c0_50 = arith.constant 0 : index
    %146 = vector.load %arg3[%c0_49, %c0_50] : memref<128x512xf32, #tpu.memory_space<vmem>>, vector<128x512xf32>
    %cst_51 = arith.constant dense<0.000000e+00> : vector<8x512xf32>
    %147 = tpu.matmul %140, %146, %cst_51 {dimension_numbers = #tpu.dot_dimension_numbers<[1], [0], [0], [1], [0, 0, 1, 1], [], []>} : vector<8x128xf32>, vector<128x512xf32>, vector<8x512xf32> -> vector<8x512xf32>
    %148 = arith.addf %145, %147 : vector<8x512xf32>
    %149 = vector.extract_strided_slice %148 {offsets = [0, 0], sizes = [8, 384], strides = [1, 1]} : vector<8x512xf32> to vector<8x384xf32>
    %150 = arith.negf %149 : vector<8x384xf32>
    %151 = math.exp %150 : vector<8x384xf32>
    %cst_52 = arith.constant 1.000000e+00 : f32
    %152 = vector.broadcast %cst_52 : f32 to vector<8x384xf32>
    %153 = arith.addf %152, %151 : vector<8x384xf32>
    %154 = arith.divf %152, %153 : vector<8x384xf32>
    %155 = vector.extract_strided_slice %148 {offsets = [0, 384], sizes = [8, 128], strides = [1, 1]} : vector<8x512xf32> to vector<8x128xf32>
    %156 = math.tanh %155 : vector<8x128xf32>
    %157 = vector.extract_strided_slice %154 {offsets = [0, 0], sizes = [8, 128], strides = [1, 1]} : vector<8x384xf32> to vector<8x128xf32>
    %158 = vector.extract_strided_slice %154 {offsets = [0, 128], sizes = [8, 128], strides = [1, 1]} : vector<8x384xf32> to vector<8x128xf32>
    %159 = vector.extract_strided_slice %154 {offsets = [0, 256], sizes = [8, 128], strides = [1, 1]} : vector<8x384xf32> to vector<8x128xf32>
    %160 = arith.mulf %158, %138 : vector<8x128xf32>
    %161 = arith.mulf %157, %156 : vector<8x128xf32>
    %162 = arith.addf %160, %161 : vector<8x128xf32>
    %163 = math.tanh %162 : vector<8x128xf32>
    %164 = arith.mulf %159, %163 : vector<8x128xf32>
    %165 = arith.index_cast %143 : i32 to index
    %c0_53 = arith.constant 0 : index
    %166 = vector.load %arg13[%165, %c0_53] : memref<64x128xf32, #tpu.memory_space<vmem>>, vector<8x128xf32>
    tpu.vector_store %arg13[%165, %c0_53], %164 {strides = array<i32>} : memref<64x128xf32, #tpu.memory_space<vmem>>, vector<8x128xf32>,
    %c6_i32 = arith.constant 6 : i32
    %c8_i32_54 = arith.constant 8 : i32
    %167 = arith.muli %c6_i32, %c8_i32_54 : i32
    %168 = arith.index_cast %167 : i32 to index
    %c0_55 = arith.constant 0 : index
    %169 = vector.load %arg14[%168, %c0_55] : memref<64x512xf32, #tpu.memory_space<vmem>>, vector<8x512xf32>
    %c0_56 = arith.constant 0 : index
    %c0_57 = arith.constant 0 : index
    %170 = vector.load %arg3[%c0_56, %c0_57] : memref<128x512xf32, #tpu.memory_space<vmem>>, vector<128x512xf32>
    %cst_58 = arith.constant dense<0.000000e+00> : vector<8x512xf32>
    %171 = tpu.matmul %164, %170, %cst_58 {dimension_numbers = #tpu.dot_dimension_numbers<[1], [0], [0], [1], [0, 0, 1, 1], [], []>} : vector<8x128xf32>, vector<128x512xf32>, vector<8x512xf32> -> vector<8x512xf32>
    %172 = arith.addf %169, %171 : vector<8x512xf32>
    %173 = vector.extract_strided_slice %172 {offsets = [0, 0], sizes = [8, 384], strides = [1, 1]} : vector<8x512xf32> to vector<8x384xf32>
    %174 = arith.negf %173 : vector<8x384xf32>
    %175 = math.exp %174 : vector<8x384xf32>
    %cst_59 = arith.constant 1.000000e+00 : f32
    %176 = vector.broadcast %cst_59 : f32 to vector<8x384xf32>
    %177 = arith.addf %176, %175 : vector<8x384xf32>
    %178 = arith.divf %176, %177 : vector<8x384xf32>
    %179 = vector.extract_strided_slice %172 {offsets = [0, 384], sizes = [8, 128], strides = [1, 1]} : vector<8x512xf32> to vector<8x128xf32>
    %180 = math.tanh %179 : vector<8x128xf32>
    %181 = vector.extract_strided_slice %178 {offsets = [0, 0], sizes = [8, 128], strides = [1, 1]} : vector<8x384xf32> to vector<8x128xf32>
    %182 = vector.extract_strided_slice %178 {offsets = [0, 128], sizes = [8, 128], strides = [1, 1]} : vector<8x384xf32> to vector<8x128xf32>
    %183 = vector.extract_strided_slice %178 {offsets = [0, 256], sizes = [8, 128], strides = [1, 1]} : vector<8x384xf32> to vector<8x128xf32>
    %184 = arith.mulf %182, %162 : vector<8x128xf32>
    %185 = arith.mulf %181, %180 : vector<8x128xf32>
    %186 = arith.addf %184, %185 : vector<8x128xf32>
    %187 = math.tanh %186 : vector<8x128xf32>
    %188 = arith.mulf %183, %187 : vector<8x128xf32>
    %189 = arith.index_cast %167 : i32 to index
    %c0_60 = arith.constant 0 : index
    %190 = vector.load %arg13[%189, %c0_60] : memref<64x128xf32, #tpu.memory_space<vmem>>, vector<8x128xf32>
    tpu.vector_store %arg13[%189, %c0_60], %188 {strides = array<i32>} : memref<64x128xf32, #tpu.memory_space<vmem>>, vector<8x128xf32>,
    %c7_i32 = arith.constant 7 : i32
    %c8_i32_61 = arith.constant 8 : i32
    %191 = arith.muli %c7_i32, %c8_i32_61 : i32
    %192 = arith.index_cast %191 : i32 to index
    %c0_62 = arith.constant 0 : index
    %193 = vector.load %arg14[%192, %c0_62] : memref<64x512xf32, #tpu.memory_space<vmem>>, vector<8x512xf32>
    %c0_63 = arith.constant 0 : index
    %c0_64 = arith.constant 0 : index
    %194 = vector.load %arg3[%c0_63, %c0_64] : memref<128x512xf32, #tpu.memory_space<vmem>>, vector<128x512xf32>
    %cst_65 = arith.constant dense<0.000000e+00> : vector<8x512xf32>
    %195 = tpu.matmul %188, %194, %cst_65 {dimension_numbers = #tpu.dot_dimension_numbers<[1], [0], [0], [1], [0, 0, 1, 1], [], []>} : vector<8x128xf32>, vector<128x512xf32>, vector<8x512xf32> -> vector<8x512xf32>
    %196 = arith.addf %193, %195 : vector<8x512xf32>
    %197 = vector.extract_strided_slice %196 {offsets = [0, 0], sizes = [8, 384], strides = [1, 1]} : vector<8x512xf32> to vector<8x384xf32>
    %198 = arith.negf %197 : vector<8x384xf32>
    %199 = math.exp %198 : vector<8x384xf32>
    %cst_66 = arith.constant 1.000000e+00 : f32
    %200 = vector.broadcast %cst_66 : f32 to vector<8x384xf32>
    %201 = arith.addf %200, %199 : vector<8x384xf32>
    %202 = arith.divf %200, %201 : vector<8x384xf32>
    %203 = vector.extract_strided_slice %196 {offsets = [0, 384], sizes = [8, 128], strides = [1, 1]} : vector<8x512xf32> to vector<8x128xf32>
    %204 = math.tanh %203 : vector<8x128xf32>
    %205 = vector.extract_strided_slice %202 {offsets = [0, 0], sizes = [8, 128], strides = [1, 1]} : vector<8x384xf32> to vector<8x128xf32>
    %206 = vector.extract_strided_slice %202 {offsets = [0, 128], sizes = [8, 128], strides = [1, 1]} : vector<8x384xf32> to vector<8x128xf32>
    %207 = vector.extract_strided_slice %202 {offsets = [0, 256], sizes = [8, 128], strides = [1, 1]} : vector<8x384xf32> to vector<8x128xf32>
    %208 = arith.mulf %206, %186 : vector<8x128xf32>
    %209 = arith.mulf %205, %204 : vector<8x128xf32>
    %210 = arith.addf %208, %209 : vector<8x128xf32>
    %211 = math.tanh %210 : vector<8x128xf32>
    %212 = arith.mulf %207, %211 : vector<8x128xf32>
    %213 = arith.index_cast %191 : i32 to index
    %c0_67 = arith.constant 0 : index
    %214 = vector.load %arg13[%213, %c0_67] : memref<64x128xf32, #tpu.memory_space<vmem>>, vector<8x128xf32>
    tpu.vector_store %arg13[%213, %c0_67], %212 {strides = array<i32>} : memref<64x128xf32, #tpu.memory_space<vmem>>, vector<8x128xf32>,
    %c8_i32_68 = arith.constant 8 : i32
    %c0_i32_69 = arith.constant 0 : i32
    %215 = tpu.memref_slice %arg20[%c0_i32_69] : memref<5x!tpu.dma_semaphore, #tpu.memory_space<semaphore_mem>> -> memref<1x!tpu.dma_semaphore, #tpu.memory_space<semaphore_mem>>
    %216 = tpu.memref_squeeze %215 : memref<1x!tpu.dma_semaphore, #tpu.memory_space<semaphore_mem>> -> memref<!tpu.dma_semaphore, #tpu.memory_space<semaphore_mem>>
    tpu.wait_dma2 semaphore(%216 : memref<!tpu.dma_semaphore, #tpu.memory_space<semaphore_mem>>) src(%arg7 : memref<128x512xf32, #tpu.memory_space<any>>) dst(%arg15 : memref<128x512xf32, #tpu.memory_space<vmem>>)
    %c1_i32_70 = arith.constant 1 : i32
    %217 = tpu.memref_slice %arg20[%c1_i32_70] : memref<5x!tpu.dma_semaphore, #tpu.memory_space<semaphore_mem>> -> memref<1x!tpu.dma_semaphore, #tpu.memory_space<semaphore_mem>>
    %218 = tpu.memref_squeeze %217 : memref<1x!tpu.dma_semaphore, #tpu.memory_space<semaphore_mem>> -> memref<!tpu.dma_semaphore, #tpu.memory_space<semaphore_mem>>
    tpu.wait_dma2 semaphore(%218 : memref<!tpu.dma_semaphore, #tpu.memory_space<semaphore_mem>>) src(%arg8 : memref<128x512xf32, #tpu.memory_space<any>>) dst(%arg16 : memref<128x512xf32, #tpu.memory_space<vmem>>)
    %c0_71 = arith.constant 0 : index
    %c0_72 = arith.constant 0 : index
    %219 = vector.load %arg13[%c0_71, %c0_72] : memref<64x128xf32, #tpu.memory_space<vmem>>, vector<64x128xf32>
    %c0_73 = arith.constant 0 : index
    %c0_74 = arith.constant 0 : index
    %220 = vector.load %arg15[%c0_73, %c0_74] : memref<128x512xf32, #tpu.memory_space<vmem>>, vector<128x512xf32>
    %cst_75 = arith.constant dense<0.000000e+00> : vector<64x512xf32>
    %221 = tpu.matmul %219, %220, %cst_75 {dimension_numbers = #tpu.dot_dimension_numbers<[1], [0], [0], [1], [0, 0, 1, 1], [], []>} : vector<64x128xf32>, vector<128x512xf32>, vector<64x512xf32> -> vector<64x512xf32>
    %c0_76 = arith.constant 0 : index
    %c0_77 = arith.constant 0 : index
    %222 = vector.load %arg4[%c0_76, %c0_77] : memref<1x512xf32, #tpu.memory_space<vmem>>, vector<1x512xf32>
    %223 = vector.broadcast %222 : vector<1x512xf32> to vector<64x512xf32>
    %224 = arith.addf %221, %223 : vector<64x512xf32>
    %c0_78 = arith.constant 0 : index
    %c0_79 = arith.constant 0 : index
    %225 = vector.load %arg14[%c0_78, %c0_79] : memref<64x512xf32, #tpu.memory_space<vmem>>, vector<64x512xf32>
    tpu.vector_store %arg14[%c0_78, %c0_79], %224 {strides = array<i32>} : memref<64x512xf32, #tpu.memory_space<vmem>>, vector<64x512xf32>,
    %cst_80 = arith.constant 0.000000e+00 : f32
    %226 = vector.broadcast %cst_80 : f32 to vector<8x128xf32>
    %c0_i32_81 = arith.constant 0 : i32
    %c8_i32_82 = arith.constant 8 : i32
    %227 = arith.muli %c0_i32_81, %c8_i32_82 : i32
    %228 = arith.index_cast %227 : i32 to index
    %c0_83 = arith.constant 0 : index
    %229 = vector.load %arg14[%228, %c0_83] : memref<64x512xf32, #tpu.memory_space<vmem>>, vector<8x512xf32>
    %c0_84 = arith.constant 0 : index
    %c0_85 = arith.constant 0 : index
    %230 = vector.load %arg16[%c0_84, %c0_85] : memref<128x512xf32, #tpu.memory_space<vmem>>, vector<128x512xf32>
    %cst_86 = arith.constant dense<0.000000e+00> : vector<8x512xf32>
    %231 = tpu.matmul %226, %230, %cst_86 {dimension_numbers = #tpu.dot_dimension_numbers<[1], [0], [0], [1], [0, 0, 1, 1], [], []>} : vector<8x128xf32>, vector<128x512xf32>, vector<8x512xf32> -> vector<8x512xf32>
    %232 = arith.addf %229, %231 : vector<8x512xf32>
    %233 = vector.extract_strided_slice %232 {offsets = [0, 0], sizes = [8, 384], strides = [1, 1]} : vector<8x512xf32> to vector<8x384xf32>
    %234 = arith.negf %233 : vector<8x384xf32>
    %235 = math.exp %234 : vector<8x384xf32>
    %cst_87 = arith.constant 1.000000e+00 : f32
    %236 = vector.broadcast %cst_87 : f32 to vector<8x384xf32>
    %237 = arith.addf %236, %235 : vector<8x384xf32>
    %238 = arith.divf %236, %237 : vector<8x384xf32>
    %239 = vector.extract_strided_slice %232 {offsets = [0, 384], sizes = [8, 128], strides = [1, 1]} : vector<8x512xf32> to vector<8x128xf32>
    %240 = math.tanh %239 : vector<8x128xf32>
    %241 = vector.extract_strided_slice %238 {offsets = [0, 0], sizes = [8, 128], strides = [1, 1]} : vector<8x384xf32> to vector<8x128xf32>
    %242 = vector.extract_strided_slice %238 {offsets = [0, 128], sizes = [8, 128], strides = [1, 1]} : vector<8x384xf32> to vector<8x128xf32>
    %243 = vector.extract_strided_slice %238 {offsets = [0, 256], sizes = [8, 128], strides = [1, 1]} : vector<8x384xf32> to vector<8x128xf32>
    %244 = arith.mulf %242, %226 : vector<8x128xf32>
    %245 = arith.mulf %241, %240 : vector<8x128xf32>
    %246 = arith.addf %244, %245 : vector<8x128xf32>
    %247 = math.tanh %246 : vector<8x128xf32>
    %248 = arith.mulf %243, %247 : vector<8x128xf32>
    %249 = arith.index_cast %227 : i32 to index
    %c0_88 = arith.constant 0 : index
    %250 = vector.load %arg13[%249, %c0_88] : memref<64x128xf32, #tpu.memory_space<vmem>>, vector<8x128xf32>
    tpu.vector_store %arg13[%249, %c0_88], %248 {strides = array<i32>} : memref<64x128xf32, #tpu.memory_space<vmem>>, vector<8x128xf32>,
    %c1_i32_89 = arith.constant 1 : i32
    %c8_i32_90 = arith.constant 8 : i32
    %251 = arith.muli %c1_i32_89, %c8_i32_90 : i32
    %252 = arith.index_cast %251 : i32 to index
    %c0_91 = arith.constant 0 : index
    %253 = vector.load %arg14[%252, %c0_91] : memref<64x512xf32, #tpu.memory_space<vmem>>, vector<8x512xf32>
    %c0_92 = arith.constant 0 : index
    %c0_93 = arith.constant 0 : index
    %254 = vector.load %arg16[%c0_92, %c0_93] : memref<128x512xf32, #tpu.memory_space<vmem>>, vector<128x512xf32>
    %cst_94 = arith.constant dense<0.000000e+00> : vector<8x512xf32>
    %255 = tpu.matmul %248, %254, %cst_94 {dimension_numbers = #tpu.dot_dimension_numbers<[1], [0], [0], [1], [0, 0, 1, 1], [], []>} : vector<8x128xf32>, vector<128x512xf32>, vector<8x512xf32> -> vector<8x512xf32>
    %256 = arith.addf %253, %255 : vector<8x512xf32>
    %257 = vector.extract_strided_slice %256 {offsets = [0, 0], sizes = [8, 384], strides = [1, 1]} : vector<8x512xf32> to vector<8x384xf32>
    %258 = arith.negf %257 : vector<8x384xf32>
    %259 = math.exp %258 : vector<8x384xf32>
    %cst_95 = arith.constant 1.000000e+00 : f32
    %260 = vector.broadcast %cst_95 : f32 to vector<8x384xf32>
    %261 = arith.addf %260, %259 : vector<8x384xf32>
    %262 = arith.divf %260, %261 : vector<8x384xf32>
    %263 = vector.extract_strided_slice %256 {offsets = [0, 384], sizes = [8, 128], strides = [1, 1]} : vector<8x512xf32> to vector<8x128xf32>
    %264 = math.tanh %263 : vector<8x128xf32>
    %265 = vector.extract_strided_slice %262 {offsets = [0, 0], sizes = [8, 128], strides = [1, 1]} : vector<8x384xf32> to vector<8x128xf32>
    %266 = vector.extract_strided_slice %262 {offsets = [0, 128], sizes = [8, 128], strides = [1, 1]} : vector<8x384xf32> to vector<8x128xf32>
    %267 = vector.extract_strided_slice %262 {offsets = [0, 256], sizes = [8, 128], strides = [1, 1]} : vector<8x384xf32> to vector<8x128xf32>
    %268 = arith.mulf %266, %246 : vector<8x128xf32>
    %269 = arith.mulf %265, %264 : vector<8x128xf32>
    %270 = arith.addf %268, %269 : vector<8x128xf32>
    %271 = math.tanh %270 : vector<8x128xf32>
    %272 = arith.mulf %267, %271 : vector<8x128xf32>
    %273 = arith.index_cast %251 : i32 to index
    %c0_96 = arith.constant 0 : index
    %274 = vector.load %arg13[%273, %c0_96] : memref<64x128xf32, #tpu.memory_space<vmem>>, vector<8x128xf32>
    tpu.vector_store %arg13[%273, %c0_96], %272 {strides = array<i32>} : memref<64x128xf32, #tpu.memory_space<vmem>>, vector<8x128xf32>,
    %c2_i32_97 = arith.constant 2 : i32
    %c8_i32_98 = arith.constant 8 : i32
    %275 = arith.muli %c2_i32_97, %c8_i32_98 : i32
    %276 = arith.index_cast %275 : i32 to index
    %c0_99 = arith.constant 0 : index
    %277 = vector.load %arg14[%276, %c0_99] : memref<64x512xf32, #tpu.memory_space<vmem>>, vector<8x512xf32>
    %c0_100 = arith.constant 0 : index
    %c0_101 = arith.constant 0 : index
    %278 = vector.load %arg16[%c0_100, %c0_101] : memref<128x512xf32, #tpu.memory_space<vmem>>, vector<128x512xf32>
    %cst_102 = arith.constant dense<0.000000e+00> : vector<8x512xf32>
    %279 = tpu.matmul %272, %278, %cst_102 {dimension_numbers = #tpu.dot_dimension_numbers<[1], [0], [0], [1], [0, 0, 1, 1], [], []>} : vector<8x128xf32>, vector<128x512xf32>, vector<8x512xf32> -> vector<8x512xf32>
    %280 = arith.addf %277, %279 : vector<8x512xf32>
    %281 = vector.extract_strided_slice %280 {offsets = [0, 0], sizes = [8, 384], strides = [1, 1]} : vector<8x512xf32> to vector<8x384xf32>
    %282 = arith.negf %281 : vector<8x384xf32>
    %283 = math.exp %282 : vector<8x384xf32>
    %cst_103 = arith.constant 1.000000e+00 : f32
    %284 = vector.broadcast %cst_103 : f32 to vector<8x384xf32>
    %285 = arith.addf %284, %283 : vector<8x384xf32>
    %286 = arith.divf %284, %285 : vector<8x384xf32>
    %287 = vector.extract_strided_slice %280 {offsets = [0, 384], sizes = [8, 128], strides = [1, 1]} : vector<8x512xf32> to vector<8x128xf32>
    %288 = math.tanh %287 : vector<8x128xf32>
    %289 = vector.extract_strided_slice %286 {offsets = [0, 0], sizes = [8, 128], strides = [1, 1]} : vector<8x384xf32> to vector<8x128xf32>
    %290 = vector.extract_strided_slice %286 {offsets = [0, 128], sizes = [8, 128], strides = [1, 1]} : vector<8x384xf32> to vector<8x128xf32>
    %291 = vector.extract_strided_slice %286 {offsets = [0, 256], sizes = [8, 128], strides = [1, 1]} : vector<8x384xf32> to vector<8x128xf32>
    %292 = arith.mulf %290, %270 : vector<8x128xf32>
    %293 = arith.mulf %289, %288 : vector<8x128xf32>
    %294 = arith.addf %292, %293 : vector<8x128xf32>
    %295 = math.tanh %294 : vector<8x128xf32>
    %296 = arith.mulf %291, %295 : vector<8x128xf32>
    %297 = arith.index_cast %275 : i32 to index
    %c0_104 = arith.constant 0 : index
    %298 = vector.load %arg13[%297, %c0_104] : memref<64x128xf32, #tpu.memory_space<vmem>>, vector<8x128xf32>
    tpu.vector_store %arg13[%297, %c0_104], %296 {strides = array<i32>} : memref<64x128xf32, #tpu.memory_space<vmem>>, vector<8x128xf32>,
    %c3_i32_105 = arith.constant 3 : i32
    %c8_i32_106 = arith.constant 8 : i32
    %299 = arith.muli %c3_i32_105, %c8_i32_106 : i32
    %300 = arith.index_cast %299 : i32 to index
    %c0_107 = arith.constant 0 : index
    %301 = vector.load %arg14[%300, %c0_107] : memref<64x512xf32, #tpu.memory_space<vmem>>, vector<8x512xf32>
    %c0_108 = arith.constant 0 : index
    %c0_109 = arith.constant 0 : index
    %302 = vector.load %arg16[%c0_108, %c0_109] : memref<128x512xf32, #tpu.memory_space<vmem>>, vector<128x512xf32>
    %cst_110 = arith.constant dense<0.000000e+00> : vector<8x512xf32>
    %303 = tpu.matmul %296, %302, %cst_110 {dimension_numbers = #tpu.dot_dimension_numbers<[1], [0], [0], [1], [0, 0, 1, 1], [], []>} : vector<8x128xf32>, vector<128x512xf32>, vector<8x512xf32> -> vector<8x512xf32>
    %304 = arith.addf %301, %303 : vector<8x512xf32>
    %305 = vector.extract_strided_slice %304 {offsets = [0, 0], sizes = [8, 384], strides = [1, 1]} : vector<8x512xf32> to vector<8x384xf32>
    %306 = arith.negf %305 : vector<8x384xf32>
    %307 = math.exp %306 : vector<8x384xf32>
    %cst_111 = arith.constant 1.000000e+00 : f32
    %308 = vector.broadcast %cst_111 : f32 to vector<8x384xf32>
    %309 = arith.addf %308, %307 : vector<8x384xf32>
    %310 = arith.divf %308, %309 : vector<8x384xf32>
    %311 = vector.extract_strided_slice %304 {offsets = [0, 384], sizes = [8, 128], strides = [1, 1]} : vector<8x512xf32> to vector<8x128xf32>
    %312 = math.tanh %311 : vector<8x128xf32>
    %313 = vector.extract_strided_slice %310 {offsets = [0, 0], sizes = [8, 128], strides = [1, 1]} : vector<8x384xf32> to vector<8x128xf32>
    %314 = vector.extract_strided_slice %310 {offsets = [0, 128], sizes = [8, 128], strides = [1, 1]} : vector<8x384xf32> to vector<8x128xf32>
    %315 = vector.extract_strided_slice %310 {offsets = [0, 256], sizes = [8, 128], strides = [1, 1]} : vector<8x384xf32> to vector<8x128xf32>
    %316 = arith.mulf %314, %294 : vector<8x128xf32>
    %317 = arith.mulf %313, %312 : vector<8x128xf32>
    %318 = arith.addf %316, %317 : vector<8x128xf32>
    %319 = math.tanh %318 : vector<8x128xf32>
    %320 = arith.mulf %315, %319 : vector<8x128xf32>
    %321 = arith.index_cast %299 : i32 to index
    %c0_112 = arith.constant 0 : index
    %322 = vector.load %arg13[%321, %c0_112] : memref<64x128xf32, #tpu.memory_space<vmem>>, vector<8x128xf32>
    tpu.vector_store %arg13[%321, %c0_112], %320 {strides = array<i32>} : memref<64x128xf32, #tpu.memory_space<vmem>>, vector<8x128xf32>,
    %c4_i32_113 = arith.constant 4 : i32
    %c8_i32_114 = arith.constant 8 : i32
    %323 = arith.muli %c4_i32_113, %c8_i32_114 : i32
    %324 = arith.index_cast %323 : i32 to index
    %c0_115 = arith.constant 0 : index
    %325 = vector.load %arg14[%324, %c0_115] : memref<64x512xf32, #tpu.memory_space<vmem>>, vector<8x512xf32>
    %c0_116 = arith.constant 0 : index
    %c0_117 = arith.constant 0 : index
    %326 = vector.load %arg16[%c0_116, %c0_117] : memref<128x512xf32, #tpu.memory_space<vmem>>, vector<128x512xf32>
    %cst_118 = arith.constant dense<0.000000e+00> : vector<8x512xf32>
    %327 = tpu.matmul %320, %326, %cst_118 {dimension_numbers = #tpu.dot_dimension_numbers<[1], [0], [0], [1], [0, 0, 1, 1], [], []>} : vector<8x128xf32>, vector<128x512xf32>, vector<8x512xf32> -> vector<8x512xf32>
    %328 = arith.addf %325, %327 : vector<8x512xf32>
    %329 = vector.extract_strided_slice %328 {offsets = [0, 0], sizes = [8, 384], strides = [1, 1]} : vector<8x512xf32> to vector<8x384xf32>
    %330 = arith.negf %329 : vector<8x384xf32>
    %331 = math.exp %330 : vector<8x384xf32>
    %cst_119 = arith.constant 1.000000e+00 : f32
    %332 = vector.broadcast %cst_119 : f32 to vector<8x384xf32>
    %333 = arith.addf %332, %331 : vector<8x384xf32>
    %334 = arith.divf %332, %333 : vector<8x384xf32>
    %335 = vector.extract_strided_slice %328 {offsets = [0, 384], sizes = [8, 128], strides = [1, 1]} : vector<8x512xf32> to vector<8x128xf32>
    %336 = math.tanh %335 : vector<8x128xf32>
    %337 = vector.extract_strided_slice %334 {offsets = [0, 0], sizes = [8, 128], strides = [1, 1]} : vector<8x384xf32> to vector<8x128xf32>
    %338 = vector.extract_strided_slice %334 {offsets = [0, 128], sizes = [8, 128], strides = [1, 1]} : vector<8x384xf32> to vector<8x128xf32>
    %339 = vector.extract_strided_slice %334 {offsets = [0, 256], sizes = [8, 128], strides = [1, 1]} : vector<8x384xf32> to vector<8x128xf32>
    %340 = arith.mulf %338, %318 : vector<8x128xf32>
    %341 = arith.mulf %337, %336 : vector<8x128xf32>
    %342 = arith.addf %340, %341 : vector<8x128xf32>
    %343 = math.tanh %342 : vector<8x128xf32>
    %344 = arith.mulf %339, %343 : vector<8x128xf32>
    %345 = arith.index_cast %323 : i32 to index
    %c0_120 = arith.constant 0 : index
    %346 = vector.load %arg13[%345, %c0_120] : memref<64x128xf32, #tpu.memory_space<vmem>>, vector<8x128xf32>
    tpu.vector_store %arg13[%345, %c0_120], %344 {strides = array<i32>} : memref<64x128xf32, #tpu.memory_space<vmem>>, vector<8x128xf32>,
    %c5_i32_121 = arith.constant 5 : i32
    %c8_i32_122 = arith.constant 8 : i32
    %347 = arith.muli %c5_i32_121, %c8_i32_122 : i32
    %348 = arith.index_cast %347 : i32 to index
    %c0_123 = arith.constant 0 : index
    %349 = vector.load %arg14[%348, %c0_123] : memref<64x512xf32, #tpu.memory_space<vmem>>, vector<8x512xf32>
    %c0_124 = arith.constant 0 : index
    %c0_125 = arith.constant 0 : index
    %350 = vector.load %arg16[%c0_124, %c0_125] : memref<128x512xf32, #tpu.memory_space<vmem>>, vector<128x512xf32>
    %cst_126 = arith.constant dense<0.000000e+00> : vector<8x512xf32>
    %351 = tpu.matmul %344, %350, %cst_126 {dimension_numbers = #tpu.dot_dimension_numbers<[1], [0], [0], [1], [0, 0, 1, 1], [], []>} : vector<8x128xf32>, vector<128x512xf32>, vector<8x512xf32> -> vector<8x512xf32>
    %352 = arith.addf %349, %351 : vector<8x512xf32>
    %353 = vector.extract_strided_slice %352 {offsets = [0, 0], sizes = [8, 384], strides = [1, 1]} : vector<8x512xf32> to vector<8x384xf32>
    %354 = arith.negf %353 : vector<8x384xf32>
    %355 = math.exp %354 : vector<8x384xf32>
    %cst_127 = arith.constant 1.000000e+00 : f32
    %356 = vector.broadcast %cst_127 : f32 to vector<8x384xf32>
    %357 = arith.addf %356, %355 : vector<8x384xf32>
    %358 = arith.divf %356, %357 : vector<8x384xf32>
    %359 = vector.extract_strided_slice %352 {offsets = [0, 384], sizes = [8, 128], strides = [1, 1]} : vector<8x512xf32> to vector<8x128xf32>
    %360 = math.tanh %359 : vector<8x128xf32>
    %361 = vector.extract_strided_slice %358 {offsets = [0, 0], sizes = [8, 128], strides = [1, 1]} : vector<8x384xf32> to vector<8x128xf32>
    %362 = vector.extract_strided_slice %358 {offsets = [0, 128], sizes = [8, 128], strides = [1, 1]} : vector<8x384xf32> to vector<8x128xf32>
    %363 = vector.extract_strided_slice %358 {offsets = [0, 256], sizes = [8, 128], strides = [1, 1]} : vector<8x384xf32> to vector<8x128xf32>
    %364 = arith.mulf %362, %342 : vector<8x128xf32>
    %365 = arith.mulf %361, %360 : vector<8x128xf32>
    %366 = arith.addf %364, %365 : vector<8x128xf32>
    %367 = math.tanh %366 : vector<8x128xf32>
    %368 = arith.mulf %363, %367 : vector<8x128xf32>
    %369 = arith.index_cast %347 : i32 to index
    %c0_128 = arith.constant 0 : index
    %370 = vector.load %arg13[%369, %c0_128] : memref<64x128xf32, #tpu.memory_space<vmem>>, vector<8x128xf32>
    tpu.vector_store %arg13[%369, %c0_128], %368 {strides = array<i32>} : memref<64x128xf32, #tpu.memory_space<vmem>>, vector<8x128xf32>,
    %c6_i32_129 = arith.constant 6 : i32
    %c8_i32_130 = arith.constant 8 : i32
    %371 = arith.muli %c6_i32_129, %c8_i32_130 : i32
    %372 = arith.index_cast %371 : i32 to index
    %c0_131 = arith.constant 0 : index
    %373 = vector.load %arg14[%372, %c0_131] : memref<64x512xf32, #tpu.memory_space<vmem>>, vector<8x512xf32>
    %c0_132 = arith.constant 0 : index
    %c0_133 = arith.constant 0 : index
    %374 = vector.load %arg16[%c0_132, %c0_133] : memref<128x512xf32, #tpu.memory_space<vmem>>, vector<128x512xf32>
    %cst_134 = arith.constant dense<0.000000e+00> : vector<8x512xf32>
    %375 = tpu.matmul %368, %374, %cst_134 {dimension_numbers = #tpu.dot_dimension_numbers<[1], [0], [0], [1], [0, 0, 1, 1], [], []>} : vector<8x128xf32>, vector<128x512xf32>, vector<8x512xf32> -> vector<8x512xf32>
    %376 = arith.addf %373, %375 : vector<8x512xf32>
    %377 = vector.extract_strided_slice %376 {offsets = [0, 0], sizes = [8, 384], strides = [1, 1]} : vector<8x512xf32> to vector<8x384xf32>
    %378 = arith.negf %377 : vector<8x384xf32>
    %379 = math.exp %378 : vector<8x384xf32>
    %cst_135 = arith.constant 1.000000e+00 : f32
    %380 = vector.broadcast %cst_135 : f32 to vector<8x384xf32>
    %381 = arith.addf %380, %379 : vector<8x384xf32>
    %382 = arith.divf %380, %381 : vector<8x384xf32>
    %383 = vector.extract_strided_slice %376 {offsets = [0, 384], sizes = [8, 128], strides = [1, 1]} : vector<8x512xf32> to vector<8x128xf32>
    %384 = math.tanh %383 : vector<8x128xf32>
    %385 = vector.extract_strided_slice %382 {offsets = [0, 0], sizes = [8, 128], strides = [1, 1]} : vector<8x384xf32> to vector<8x128xf32>
    %386 = vector.extract_strided_slice %382 {offsets = [0, 128], sizes = [8, 128], strides = [1, 1]} : vector<8x384xf32> to vector<8x128xf32>
    %387 = vector.extract_strided_slice %382 {offsets = [0, 256], sizes = [8, 128], strides = [1, 1]} : vector<8x384xf32> to vector<8x128xf32>
    %388 = arith.mulf %386, %366 : vector<8x128xf32>
    %389 = arith.mulf %385, %384 : vector<8x128xf32>
    %390 = arith.addf %388, %389 : vector<8x128xf32>
    %391 = math.tanh %390 : vector<8x128xf32>
    %392 = arith.mulf %387, %391 : vector<8x128xf32>
    %393 = arith.index_cast %371 : i32 to index
    %c0_136 = arith.constant 0 : index
    %394 = vector.load %arg13[%393, %c0_136] : memref<64x128xf32, #tpu.memory_space<vmem>>, vector<8x128xf32>
    tpu.vector_store %arg13[%393, %c0_136], %392 {strides = array<i32>} : memref<64x128xf32, #tpu.memory_space<vmem>>, vector<8x128xf32>,
    %c7_i32_137 = arith.constant 7 : i32
    %c8_i32_138 = arith.constant 8 : i32
    %395 = arith.muli %c7_i32_137, %c8_i32_138 : i32
    %396 = arith.index_cast %395 : i32 to index
    %c0_139 = arith.constant 0 : index
    %397 = vector.load %arg14[%396, %c0_139] : memref<64x512xf32, #tpu.memory_space<vmem>>, vector<8x512xf32>
    %c0_140 = arith.constant 0 : index
    %c0_141 = arith.constant 0 : index
    %398 = vector.load %arg16[%c0_140, %c0_141] : memref<128x512xf32, #tpu.memory_space<vmem>>, vector<128x512xf32>
    %cst_142 = arith.constant dense<0.000000e+00> : vector<8x512xf32>
    %399 = tpu.matmul %392, %398, %cst_142 {dimension_numbers = #tpu.dot_dimension_numbers<[1], [0], [0], [1], [0, 0, 1, 1], [], []>} : vector<8x128xf32>, vector<128x512xf32>, vector<8x512xf32> -> vector<8x512xf32>
    %400 = arith.addf %397, %399 : vector<8x512xf32>
    %401 = vector.extract_strided_slice %400 {offsets = [0, 0], sizes = [8, 384], strides = [1, 1]} : vector<8x512xf32> to vector<8x384xf32>
    %402 = arith.negf %401 : vector<8x384xf32>
    %403 = math.exp %402 : vector<8x384xf32>
    %cst_143 = arith.constant 1.000000e+00 : f32
    %404 = vector.broadcast %cst_143 : f32 to vector<8x384xf32>
    %405 = arith.addf %404, %403 : vector<8x384xf32>
    %406 = arith.divf %404, %405 : vector<8x384xf32>
    %407 = vector.extract_strided_slice %400 {offsets = [0, 384], sizes = [8, 128], strides = [1, 1]} : vector<8x512xf32> to vector<8x128xf32>
    %408 = math.tanh %407 : vector<8x128xf32>
    %409 = vector.extract_strided_slice %406 {offsets = [0, 0], sizes = [8, 128], strides = [1, 1]} : vector<8x384xf32> to vector<8x128xf32>
    %410 = vector.extract_strided_slice %406 {offsets = [0, 128], sizes = [8, 128], strides = [1, 1]} : vector<8x384xf32> to vector<8x128xf32>
    %411 = vector.extract_strided_slice %406 {offsets = [0, 256], sizes = [8, 128], strides = [1, 1]} : vector<8x384xf32> to vector<8x128xf32>
    %412 = arith.mulf %410, %390 : vector<8x128xf32>
    %413 = arith.mulf %409, %408 : vector<8x128xf32>
    %414 = arith.addf %412, %413 : vector<8x128xf32>
    %415 = math.tanh %414 : vector<8x128xf32>
    %416 = arith.mulf %411, %415 : vector<8x128xf32>
    %417 = arith.index_cast %395 : i32 to index
    %c0_144 = arith.constant 0 : index
    %418 = vector.load %arg13[%417, %c0_144] : memref<64x128xf32, #tpu.memory_space<vmem>>, vector<8x128xf32>
    tpu.vector_store %arg13[%417, %c0_144], %416 {strides = array<i32>} : memref<64x128xf32, #tpu.memory_space<vmem>>, vector<8x128xf32>,
    %c8_i32_145 = arith.constant 8 : i32
    %c2_i32_146 = arith.constant 2 : i32
    %419 = tpu.memref_slice %arg20[%c2_i32_146] : memref<5x!tpu.dma_semaphore, #tpu.memory_space<semaphore_mem>> -> memref<1x!tpu.dma_semaphore, #tpu.memory_space<semaphore_mem>>
    %420 = tpu.memref_squeeze %419 : memref<1x!tpu.dma_semaphore, #tpu.memory_space<semaphore_mem>> -> memref<!tpu.dma_semaphore, #tpu.memory_space<semaphore_mem>>
    tpu.wait_dma2 semaphore(%420 : memref<!tpu.dma_semaphore, #tpu.memory_space<semaphore_mem>>) src(%arg9 : memref<128x512xf32, #tpu.memory_space<any>>) dst(%arg17 : memref<128x512xf32, #tpu.memory_space<vmem>>)
    %c3_i32_147 = arith.constant 3 : i32
    %421 = tpu.memref_slice %arg20[%c3_i32_147] : memref<5x!tpu.dma_semaphore, #tpu.memory_space<semaphore_mem>> -> memref<1x!tpu.dma_semaphore, #tpu.memory_space<semaphore_mem>>
    %422 = tpu.memref_squeeze %421 : memref<1x!tpu.dma_semaphore, #tpu.memory_space<semaphore_mem>> -> memref<!tpu.dma_semaphore, #tpu.memory_space<semaphore_mem>>
    tpu.wait_dma2 semaphore(%422 : memref<!tpu.dma_semaphore, #tpu.memory_space<semaphore_mem>>) src(%arg10 : memref<128x512xf32, #tpu.memory_space<any>>) dst(%arg18 : memref<128x512xf32, #tpu.memory_space<vmem>>)
    %c0_148 = arith.constant 0 : index
    %c0_149 = arith.constant 0 : index
    %423 = vector.load %arg13[%c0_148, %c0_149] : memref<64x128xf32, #tpu.memory_space<vmem>>, vector<64x128xf32>
    %c0_150 = arith.constant 0 : index
    %c0_151 = arith.constant 0 : index
    %424 = vector.load %arg17[%c0_150, %c0_151] : memref<128x512xf32, #tpu.memory_space<vmem>>, vector<128x512xf32>
    %cst_152 = arith.constant dense<0.000000e+00> : vector<64x512xf32>
    %425 = tpu.matmul %423, %424, %cst_152 {dimension_numbers = #tpu.dot_dimension_numbers<[1], [0], [0], [1], [0, 0, 1, 1], [], []>} : vector<64x128xf32>, vector<128x512xf32>, vector<64x512xf32> -> vector<64x512xf32>
    %c0_153 = arith.constant 0 : index
    %c0_154 = arith.constant 0 : index
    %426 = vector.load %arg5[%c0_153, %c0_154] : memref<1x512xf32, #tpu.memory_space<vmem>>, vector<1x512xf32>
    %427 = vector.broadcast %426 : vector<1x512xf32> to vector<64x512xf32>
    %428 = arith.addf %425, %427 : vector<64x512xf32>
    %c0_155 = arith.constant 0 : index
    %c0_156 = arith.constant 0 : index
    %429 = vector.load %arg14[%c0_155, %c0_156] : memref<64x512xf32, #tpu.memory_space<vmem>>, vector<64x512xf32>
    tpu.vector_store %arg14[%c0_155, %c0_156], %428 {strides = array<i32>} : memref<64x512xf32, #tpu.memory_space<vmem>>, vector<64x512xf32>,
    %cst_157 = arith.constant 0.000000e+00 : f32
    %430 = vector.broadcast %cst_157 : f32 to vector<8x128xf32>
    %c0_i32_158 = arith.constant 0 : i32
    %c8_i32_159 = arith.constant 8 : i32
    %431 = arith.muli %c0_i32_158, %c8_i32_159 : i32
    %432 = arith.index_cast %431 : i32 to index
    %c0_160 = arith.constant 0 : index
    %433 = vector.load %arg14[%432, %c0_160] : memref<64x512xf32, #tpu.memory_space<vmem>>, vector<8x512xf32>
    %c0_161 = arith.constant 0 : index
    %c0_162 = arith.constant 0 : index
    %434 = vector.load %arg18[%c0_161, %c0_162] : memref<128x512xf32, #tpu.memory_space<vmem>>, vector<128x512xf32>
    %cst_163 = arith.constant dense<0.000000e+00> : vector<8x512xf32>
    %435 = tpu.matmul %430, %434, %cst_163 {dimension_numbers = #tpu.dot_dimension_numbers<[1], [0], [0], [1], [0, 0, 1, 1], [], []>} : vector<8x128xf32>, vector<128x512xf32>, vector<8x512xf32> -> vector<8x512xf32>
    %436 = arith.addf %433, %435 : vector<8x512xf32>
    %437 = vector.extract_strided_slice %436 {offsets = [0, 0], sizes = [8, 384], strides = [1, 1]} : vector<8x512xf32> to vector<8x384xf32>
    %438 = arith.negf %437 : vector<8x384xf32>
    %439 = math.exp %438 : vector<8x384xf32>
    %cst_164 = arith.constant 1.000000e+00 : f32
    %440 = vector.broadcast %cst_164 : f32 to vector<8x384xf32>
    %441 = arith.addf %440, %439 : vector<8x384xf32>
    %442 = arith.divf %440, %441 : vector<8x384xf32>
    %443 = vector.extract_strided_slice %436 {offsets = [0, 384], sizes = [8, 128], strides = [1, 1]} : vector<8x512xf32> to vector<8x128xf32>
    %444 = math.tanh %443 : vector<8x128xf32>
    %445 = vector.extract_strided_slice %442 {offsets = [0, 0], sizes = [8, 128], strides = [1, 1]} : vector<8x384xf32> to vector<8x128xf32>
    %446 = vector.extract_strided_slice %442 {offsets = [0, 128], sizes = [8, 128], strides = [1, 1]} : vector<8x384xf32> to vector<8x128xf32>
    %447 = vector.extract_strided_slice %442 {offsets = [0, 256], sizes = [8, 128], strides = [1, 1]} : vector<8x384xf32> to vector<8x128xf32>
    %448 = arith.mulf %446, %430 : vector<8x128xf32>
    %449 = arith.mulf %445, %444 : vector<8x128xf32>
    %450 = arith.addf %448, %449 : vector<8x128xf32>
    %451 = math.tanh %450 : vector<8x128xf32>
    %452 = arith.mulf %447, %451 : vector<8x128xf32>
    %c1_i32_165 = arith.constant 1 : i32
    %c8_i32_166 = arith.constant 8 : i32
    %453 = arith.muli %c1_i32_165, %c8_i32_166 : i32
    %454 = arith.index_cast %453 : i32 to index
    %c0_167 = arith.constant 0 : index
    %455 = vector.load %arg14[%454, %c0_167] : memref<64x512xf32, #tpu.memory_space<vmem>>, vector<8x512xf32>
    %c0_168 = arith.constant 0 : index
    %c0_169 = arith.constant 0 : index
    %456 = vector.load %arg18[%c0_168, %c0_169] : memref<128x512xf32, #tpu.memory_space<vmem>>, vector<128x512xf32>
    %cst_170 = arith.constant dense<0.000000e+00> : vector<8x512xf32>
    %457 = tpu.matmul %452, %456, %cst_170 {dimension_numbers = #tpu.dot_dimension_numbers<[1], [0], [0], [1], [0, 0, 1, 1], [], []>} : vector<8x128xf32>, vector<128x512xf32>, vector<8x512xf32> -> vector<8x512xf32>
    %458 = arith.addf %455, %457 : vector<8x512xf32>
    %459 = vector.extract_strided_slice %458 {offsets = [0, 0], sizes = [8, 384], strides = [1, 1]} : vector<8x512xf32> to vector<8x384xf32>
    %460 = arith.negf %459 : vector<8x384xf32>
    %461 = math.exp %460 : vector<8x384xf32>
    %cst_171 = arith.constant 1.000000e+00 : f32
    %462 = vector.broadcast %cst_171 : f32 to vector<8x384xf32>
    %463 = arith.addf %462, %461 : vector<8x384xf32>
    %464 = arith.divf %462, %463 : vector<8x384xf32>
    %465 = vector.extract_strided_slice %458 {offsets = [0, 384], sizes = [8, 128], strides = [1, 1]} : vector<8x512xf32> to vector<8x128xf32>
    %466 = math.tanh %465 : vector<8x128xf32>
    %467 = vector.extract_strided_slice %464 {offsets = [0, 0], sizes = [8, 128], strides = [1, 1]} : vector<8x384xf32> to vector<8x128xf32>
    %468 = vector.extract_strided_slice %464 {offsets = [0, 128], sizes = [8, 128], strides = [1, 1]} : vector<8x384xf32> to vector<8x128xf32>
    %469 = vector.extract_strided_slice %464 {offsets = [0, 256], sizes = [8, 128], strides = [1, 1]} : vector<8x384xf32> to vector<8x128xf32>
    %470 = arith.mulf %468, %450 : vector<8x128xf32>
    %471 = arith.mulf %467, %466 : vector<8x128xf32>
    %472 = arith.addf %470, %471 : vector<8x128xf32>
    %473 = math.tanh %472 : vector<8x128xf32>
    %474 = arith.mulf %469, %473 : vector<8x128xf32>
    %c2_i32_172 = arith.constant 2 : i32
    %c8_i32_173 = arith.constant 8 : i32
    %475 = arith.muli %c2_i32_172, %c8_i32_173 : i32
    %476 = arith.index_cast %475 : i32 to index
    %c0_174 = arith.constant 0 : index
    %477 = vector.load %arg14[%476, %c0_174] : memref<64x512xf32, #tpu.memory_space<vmem>>, vector<8x512xf32>
    %c0_175 = arith.constant 0 : index
    %c0_176 = arith.constant 0 : index
    %478 = vector.load %arg18[%c0_175, %c0_176] : memref<128x512xf32, #tpu.memory_space<vmem>>, vector<128x512xf32>
    %cst_177 = arith.constant dense<0.000000e+00> : vector<8x512xf32>
    %479 = tpu.matmul %474, %478, %cst_177 {dimension_numbers = #tpu.dot_dimension_numbers<[1], [0], [0], [1], [0, 0, 1, 1], [], []>} : vector<8x128xf32>, vector<128x512xf32>, vector<8x512xf32> -> vector<8x512xf32>
    %480 = arith.addf %477, %479 : vector<8x512xf32>
    %481 = vector.extract_strided_slice %480 {offsets = [0, 0], sizes = [8, 384], strides = [1, 1]} : vector<8x512xf32> to vector<8x384xf32>
    %482 = arith.negf %481 : vector<8x384xf32>
    %483 = math.exp %482 : vector<8x384xf32>
    %cst_178 = arith.constant 1.000000e+00 : f32
    %484 = vector.broadcast %cst_178 : f32 to vector<8x384xf32>
    %485 = arith.addf %484, %483 : vector<8x384xf32>
    %486 = arith.divf %484, %485 : vector<8x384xf32>
    %487 = vector.extract_strided_slice %480 {offsets = [0, 384], sizes = [8, 128], strides = [1, 1]} : vector<8x512xf32> to vector<8x128xf32>
    %488 = math.tanh %487 : vector<8x128xf32>
    %489 = vector.extract_strided_slice %486 {offsets = [0, 0], sizes = [8, 128], strides = [1, 1]} : vector<8x384xf32> to vector<8x128xf32>
    %490 = vector.extract_strided_slice %486 {offsets = [0, 128], sizes = [8, 128], strides = [1, 1]} : vector<8x384xf32> to vector<8x128xf32>
    %491 = vector.extract_strided_slice %486 {offsets = [0, 256], sizes = [8, 128], strides = [1, 1]} : vector<8x384xf32> to vector<8x128xf32>
    %492 = arith.mulf %490, %472 : vector<8x128xf32>
    %493 = arith.mulf %489, %488 : vector<8x128xf32>
    %494 = arith.addf %492, %493 : vector<8x128xf32>
    %495 = math.tanh %494 : vector<8x128xf32>
    %496 = arith.mulf %491, %495 : vector<8x128xf32>
    %c3_i32_179 = arith.constant 3 : i32
    %c8_i32_180 = arith.constant 8 : i32
    %497 = arith.muli %c3_i32_179, %c8_i32_180 : i32
    %498 = arith.index_cast %497 : i32 to index
    %c0_181 = arith.constant 0 : index
    %499 = vector.load %arg14[%498, %c0_181] : memref<64x512xf32, #tpu.memory_space<vmem>>, vector<8x512xf32>
    %c0_182 = arith.constant 0 : index
    %c0_183 = arith.constant 0 : index
    %500 = vector.load %arg18[%c0_182, %c0_183] : memref<128x512xf32, #tpu.memory_space<vmem>>, vector<128x512xf32>
    %cst_184 = arith.constant dense<0.000000e+00> : vector<8x512xf32>
    %501 = tpu.matmul %496, %500, %cst_184 {dimension_numbers = #tpu.dot_dimension_numbers<[1], [0], [0], [1], [0, 0, 1, 1], [], []>} : vector<8x128xf32>, vector<128x512xf32>, vector<8x512xf32> -> vector<8x512xf32>
    %502 = arith.addf %499, %501 : vector<8x512xf32>
    %503 = vector.extract_strided_slice %502 {offsets = [0, 0], sizes = [8, 384], strides = [1, 1]} : vector<8x512xf32> to vector<8x384xf32>
    %504 = arith.negf %503 : vector<8x384xf32>
    %505 = math.exp %504 : vector<8x384xf32>
    %cst_185 = arith.constant 1.000000e+00 : f32
    %506 = vector.broadcast %cst_185 : f32 to vector<8x384xf32>
    %507 = arith.addf %506, %505 : vector<8x384xf32>
    %508 = arith.divf %506, %507 : vector<8x384xf32>
    %509 = vector.extract_strided_slice %502 {offsets = [0, 384], sizes = [8, 128], strides = [1, 1]} : vector<8x512xf32> to vector<8x128xf32>
    %510 = math.tanh %509 : vector<8x128xf32>
    %511 = vector.extract_strided_slice %508 {offsets = [0, 0], sizes = [8, 128], strides = [1, 1]} : vector<8x384xf32> to vector<8x128xf32>
    %512 = vector.extract_strided_slice %508 {offsets = [0, 128], sizes = [8, 128], strides = [1, 1]} : vector<8x384xf32> to vector<8x128xf32>
    %513 = vector.extract_strided_slice %508 {offsets = [0, 256], sizes = [8, 128], strides = [1, 1]} : vector<8x384xf32> to vector<8x128xf32>
    %514 = arith.mulf %512, %494 : vector<8x128xf32>
    %515 = arith.mulf %511, %510 : vector<8x128xf32>
    %516 = arith.addf %514, %515 : vector<8x128xf32>
    %517 = math.tanh %516 : vector<8x128xf32>
    %518 = arith.mulf %513, %517 : vector<8x128xf32>
    %c4_i32_186 = arith.constant 4 : i32
    %c8_i32_187 = arith.constant 8 : i32
    %519 = arith.muli %c4_i32_186, %c8_i32_187 : i32
    %520 = arith.index_cast %519 : i32 to index
    %c0_188 = arith.constant 0 : index
    %521 = vector.load %arg14[%520, %c0_188] : memref<64x512xf32, #tpu.memory_space<vmem>>, vector<8x512xf32>
    %c0_189 = arith.constant 0 : index
    %c0_190 = arith.constant 0 : index
    %522 = vector.load %arg18[%c0_189, %c0_190] : memref<128x512xf32, #tpu.memory_space<vmem>>, vector<128x512xf32>
    %cst_191 = arith.constant dense<0.000000e+00> : vector<8x512xf32>
    %523 = tpu.matmul %518, %522, %cst_191 {dimension_numbers = #tpu.dot_dimension_numbers<[1], [0], [0], [1], [0, 0, 1, 1], [], []>} : vector<8x128xf32>, vector<128x512xf32>, vector<8x512xf32> -> vector<8x512xf32>
    %524 = arith.addf %521, %523 : vector<8x512xf32>
    %525 = vector.extract_strided_slice %524 {offsets = [0, 0], sizes = [8, 384], strides = [1, 1]} : vector<8x512xf32> to vector<8x384xf32>
    %526 = arith.negf %525 : vector<8x384xf32>
    %527 = math.exp %526 : vector<8x384xf32>
    %cst_192 = arith.constant 1.000000e+00 : f32
    %528 = vector.broadcast %cst_192 : f32 to vector<8x384xf32>
    %529 = arith.addf %528, %527 : vector<8x384xf32>
    %530 = arith.divf %528, %529 : vector<8x384xf32>
    %531 = vector.extract_strided_slice %524 {offsets = [0, 384], sizes = [8, 128], strides = [1, 1]} : vector<8x512xf32> to vector<8x128xf32>
    %532 = math.tanh %531 : vector<8x128xf32>
    %533 = vector.extract_strided_slice %530 {offsets = [0, 0], sizes = [8, 128], strides = [1, 1]} : vector<8x384xf32> to vector<8x128xf32>
    %534 = vector.extract_strided_slice %530 {offsets = [0, 128], sizes = [8, 128], strides = [1, 1]} : vector<8x384xf32> to vector<8x128xf32>
    %535 = vector.extract_strided_slice %530 {offsets = [0, 256], sizes = [8, 128], strides = [1, 1]} : vector<8x384xf32> to vector<8x128xf32>
    %536 = arith.mulf %534, %516 : vector<8x128xf32>
    %537 = arith.mulf %533, %532 : vector<8x128xf32>
    %538 = arith.addf %536, %537 : vector<8x128xf32>
    %539 = math.tanh %538 : vector<8x128xf32>
    %540 = arith.mulf %535, %539 : vector<8x128xf32>
    %c5_i32_193 = arith.constant 5 : i32
    %c8_i32_194 = arith.constant 8 : i32
    %541 = arith.muli %c5_i32_193, %c8_i32_194 : i32
    %542 = arith.index_cast %541 : i32 to index
    %c0_195 = arith.constant 0 : index
    %543 = vector.load %arg14[%542, %c0_195] : memref<64x512xf32, #tpu.memory_space<vmem>>, vector<8x512xf32>
    %c0_196 = arith.constant 0 : index
    %c0_197 = arith.constant 0 : index
    %544 = vector.load %arg18[%c0_196, %c0_197] : memref<128x512xf32, #tpu.memory_space<vmem>>, vector<128x512xf32>
    %cst_198 = arith.constant dense<0.000000e+00> : vector<8x512xf32>
    %545 = tpu.matmul %540, %544, %cst_198 {dimension_numbers = #tpu.dot_dimension_numbers<[1], [0], [0], [1], [0, 0, 1, 1], [], []>} : vector<8x128xf32>, vector<128x512xf32>, vector<8x512xf32> -> vector<8x512xf32>
    %546 = arith.addf %543, %545 : vector<8x512xf32>
    %547 = vector.extract_strided_slice %546 {offsets = [0, 0], sizes = [8, 384], strides = [1, 1]} : vector<8x512xf32> to vector<8x384xf32>
    %548 = arith.negf %547 : vector<8x384xf32>
    %549 = math.exp %548 : vector<8x384xf32>
    %cst_199 = arith.constant 1.000000e+00 : f32
    %550 = vector.broadcast %cst_199 : f32 to vector<8x384xf32>
    %551 = arith.addf %550, %549 : vector<8x384xf32>
    %552 = arith.divf %550, %551 : vector<8x384xf32>
    %553 = vector.extract_strided_slice %546 {offsets = [0, 384], sizes = [8, 128], strides = [1, 1]} : vector<8x512xf32> to vector<8x128xf32>
    %554 = math.tanh %553 : vector<8x128xf32>
    %555 = vector.extract_strided_slice %552 {offsets = [0, 0], sizes = [8, 128], strides = [1, 1]} : vector<8x384xf32> to vector<8x128xf32>
    %556 = vector.extract_strided_slice %552 {offsets = [0, 128], sizes = [8, 128], strides = [1, 1]} : vector<8x384xf32> to vector<8x128xf32>
    %557 = vector.extract_strided_slice %552 {offsets = [0, 256], sizes = [8, 128], strides = [1, 1]} : vector<8x384xf32> to vector<8x128xf32>
    %558 = arith.mulf %556, %538 : vector<8x128xf32>
    %559 = arith.mulf %555, %554 : vector<8x128xf32>
    %560 = arith.addf %558, %559 : vector<8x128xf32>
    %561 = math.tanh %560 : vector<8x128xf32>
    %562 = arith.mulf %557, %561 : vector<8x128xf32>
    %c6_i32_200 = arith.constant 6 : i32
    %c8_i32_201 = arith.constant 8 : i32
    %563 = arith.muli %c6_i32_200, %c8_i32_201 : i32
    %564 = arith.index_cast %563 : i32 to index
    %c0_202 = arith.constant 0 : index
    %565 = vector.load %arg14[%564, %c0_202] : memref<64x512xf32, #tpu.memory_space<vmem>>, vector<8x512xf32>
    %c0_203 = arith.constant 0 : index
    %c0_204 = arith.constant 0 : index
    %566 = vector.load %arg18[%c0_203, %c0_204] : memref<128x512xf32, #tpu.memory_space<vmem>>, vector<128x512xf32>
    %cst_205 = arith.constant dense<0.000000e+00> : vector<8x512xf32>
    %567 = tpu.matmul %562, %566, %cst_205 {dimension_numbers = #tpu.dot_dimension_numbers<[1], [0], [0], [1], [0, 0, 1, 1], [], []>} : vector<8x128xf32>, vector<128x512xf32>, vector<8x512xf32> -> vector<8x512xf32>
    %568 = arith.addf %565, %567 : vector<8x512xf32>
    %569 = vector.extract_strided_slice %568 {offsets = [0, 0], sizes = [8, 384], strides = [1, 1]} : vector<8x512xf32> to vector<8x384xf32>
    %570 = arith.negf %569 : vector<8x384xf32>
    %571 = math.exp %570 : vector<8x384xf32>
    %cst_206 = arith.constant 1.000000e+00 : f32
    %572 = vector.broadcast %cst_206 : f32 to vector<8x384xf32>
    %573 = arith.addf %572, %571 : vector<8x384xf32>
    %574 = arith.divf %572, %573 : vector<8x384xf32>
    %575 = vector.extract_strided_slice %568 {offsets = [0, 384], sizes = [8, 128], strides = [1, 1]} : vector<8x512xf32> to vector<8x128xf32>
    %576 = math.tanh %575 : vector<8x128xf32>
    %577 = vector.extract_strided_slice %574 {offsets = [0, 0], sizes = [8, 128], strides = [1, 1]} : vector<8x384xf32> to vector<8x128xf32>
    %578 = vector.extract_strided_slice %574 {offsets = [0, 128], sizes = [8, 128], strides = [1, 1]} : vector<8x384xf32> to vector<8x128xf32>
    %579 = vector.extract_strided_slice %574 {offsets = [0, 256], sizes = [8, 128], strides = [1, 1]} : vector<8x384xf32> to vector<8x128xf32>
    %580 = arith.mulf %578, %560 : vector<8x128xf32>
    %581 = arith.mulf %577, %576 : vector<8x128xf32>
    %582 = arith.addf %580, %581 : vector<8x128xf32>
    %583 = math.tanh %582 : vector<8x128xf32>
    %584 = arith.mulf %579, %583 : vector<8x128xf32>
    %c7_i32_207 = arith.constant 7 : i32
    %c8_i32_208 = arith.constant 8 : i32
    %585 = arith.muli %c7_i32_207, %c8_i32_208 : i32
    %586 = arith.index_cast %585 : i32 to index
    %c0_209 = arith.constant 0 : index
    %587 = vector.load %arg14[%586, %c0_209] : memref<64x512xf32, #tpu.memory_space<vmem>>, vector<8x512xf32>
    %c0_210 = arith.constant 0 : index
    %c0_211 = arith.constant 0 : index
    %588 = vector.load %arg18[%c0_210, %c0_211] : memref<128x512xf32, #tpu.memory_space<vmem>>, vector<128x512xf32>
    %cst_212 = arith.constant dense<0.000000e+00> : vector<8x512xf32>
    %589 = tpu.matmul %584, %588, %cst_212 {dimension_numbers = #tpu.dot_dimension_numbers<[1], [0], [0], [1], [0, 0, 1, 1], [], []>} : vector<8x128xf32>, vector<128x512xf32>, vector<8x512xf32> -> vector<8x512xf32>
    %590 = arith.addf %587, %589 : vector<8x512xf32>
    %591 = vector.extract_strided_slice %590 {offsets = [0, 0], sizes = [8, 384], strides = [1, 1]} : vector<8x512xf32> to vector<8x384xf32>
    %592 = arith.negf %591 : vector<8x384xf32>
    %593 = math.exp %592 : vector<8x384xf32>
    %cst_213 = arith.constant 1.000000e+00 : f32
    %594 = vector.broadcast %cst_213 : f32 to vector<8x384xf32>
    %595 = arith.addf %594, %593 : vector<8x384xf32>
    %596 = arith.divf %594, %595 : vector<8x384xf32>
    %597 = vector.extract_strided_slice %590 {offsets = [0, 384], sizes = [8, 128], strides = [1, 1]} : vector<8x512xf32> to vector<8x128xf32>
    %598 = math.tanh %597 : vector<8x128xf32>
    %599 = vector.extract_strided_slice %596 {offsets = [0, 0], sizes = [8, 128], strides = [1, 1]} : vector<8x384xf32> to vector<8x128xf32>
    %600 = vector.extract_strided_slice %596 {offsets = [0, 128], sizes = [8, 128], strides = [1, 1]} : vector<8x384xf32> to vector<8x128xf32>
    %601 = vector.extract_strided_slice %596 {offsets = [0, 256], sizes = [8, 128], strides = [1, 1]} : vector<8x384xf32> to vector<8x128xf32>
    %602 = arith.mulf %600, %582 : vector<8x128xf32>
    %603 = arith.mulf %599, %598 : vector<8x128xf32>
    %604 = arith.addf %602, %603 : vector<8x128xf32>
    %605 = math.tanh %604 : vector<8x128xf32>
    %606 = arith.mulf %601, %605 : vector<8x128xf32>
    %c8_i32_214 = arith.constant 8 : i32
    %c4_i32_215 = arith.constant 4 : i32
    %607 = tpu.memref_slice %arg20[%c4_i32_215] : memref<5x!tpu.dma_semaphore, #tpu.memory_space<semaphore_mem>> -> memref<1x!tpu.dma_semaphore, #tpu.memory_space<semaphore_mem>>
    %608 = tpu.memref_squeeze %607 : memref<1x!tpu.dma_semaphore, #tpu.memory_space<semaphore_mem>> -> memref<!tpu.dma_semaphore, #tpu.memory_space<semaphore_mem>>
    tpu.wait_dma2 semaphore(%608 : memref<!tpu.dma_semaphore, #tpu.memory_space<semaphore_mem>>) src(%arg11 : memref<128x128xf32, #tpu.memory_space<any>>) dst(%arg19 : memref<128x128xf32, #tpu.memory_space<vmem>>)
    %c0_216 = arith.constant 0 : index
    %c0_217 = arith.constant 0 : index
    %609 = vector.load %arg19[%c0_216, %c0_217] : memref<128x128xf32, #tpu.memory_space<vmem>>, vector<128x128xf32>
    %cst_218 = arith.constant dense<0.000000e+00> : vector<8x128xf32>
    %610 = tpu.matmul %606, %609, %cst_218 {dimension_numbers = #tpu.dot_dimension_numbers<[1], [0], [0], [1], [0, 0, 1, 1], [], []>} : vector<8x128xf32>, vector<128x128xf32>, vector<8x128xf32> -> vector<8x128xf32>
    %c0_219 = arith.constant 0 : index
    %c0_220 = arith.constant 0 : index
    %611 = vector.load %arg6[%c0_219, %c0_220] : memref<1x128xf32, #tpu.memory_space<vmem>>, vector<1x128xf32>
    %612 = vector.broadcast %611 : vector<1x128xf32> to vector<8x128xf32>
    %613 = arith.addf %610, %612 : vector<8x128xf32>
    %c0_221 = arith.constant 0 : index
    %c0_222 = arith.constant 0 : index
    %614 = vector.load %arg12[%c0_221, %c0_222] : memref<8x128xf32, #tpu.memory_space<vmem>>, vector<8x128xf32>
    tpu.vector_store %arg12[%c0_221, %c0_222], %613 {strides = array<i32>} : memref<8x128xf32, #tpu.memory_space<vmem>>, vector<8x128xf32>,
    return
  }
}

</mosaic_0001>

<llo_original>
// kernel: predictive_lstm_forward.1
$region0: #{predictive_lstm_forward.1}
  #allocation0 [shape = 'u32[]', space=smem, size = 0x4, offset = 0x4, fixed_abs, tag = 'smem constant byte address 0x4 - core index']
  #allocation1 [shape = 'u32[144,128]{1,0:T(1,128)}', space=vmem, size = 0x12000, scoped, tag = 'internal scratch']
  #allocation2 [shape = 'f32[64,128]{1,0:T(8,128)}', space=vmem, size = 0x8000, scoped, tag = 'scratch operand']
  #allocation3 [shape = 'f32[64,512]{1,0:T(8,128)}', space=vmem, size = 0x20000, scoped, tag = 'scratch operand']
  #allocation4 [shape = 'f32[128,512]{1,0:T(8,128)}', space=vmem, size = 0x40000, scoped, tag = 'scratch operand']
  #allocation5 [shape = 'f32[128,512]{1,0:T(8,128)}', space=vmem, size = 0x40000, scoped, tag = 'scratch operand']
  #allocation6 [shape = 'f32[128,512]{1,0:T(8,128)}', space=vmem, size = 0x40000, scoped, tag = 'scratch operand']
  #allocation7 [shape = 'f32[128,512]{1,0:T(8,128)}', space=vmem, size = 0x40000, scoped, tag = 'scratch operand']
  #allocation8 [shape = 'f32[128,128]{1,0:T(8,128)}', space=vmem, size = 0x10000, scoped, tag = 'scratch operand']
  #allocation9 [shape = 's32[5]{0}', space=sflag, size = 0x14, scoped, tag = 'scratch operand']
  #allocation10 [shape = 's32[]', space=sflag, size = 0x4, offset = 0, fixed_abs, tag = 'sflag constant byte address 0x0 - dummy sync flag']
  #allocation11 [shape = 's32[]', space=sflag, size = 0x4, offset = 0, fixed_abs, tag = 'sflag constant byte address 0x0 - dummy sync flag']
  #allocation12 [shape = 's32[]', space=sflag, size = 0x4, offset = 0, fixed_abs, tag = 'sflag constant byte address 0x0 - dummy sync flag']
  #allocation13 [shape = 's32[]', space=sflag, size = 0x4, offset = 0, fixed_abs, tag = 'sflag constant byte address 0x0 - dummy sync flag']
  #allocation14 [shape = 's32[]', space=sflag, size = 0x4, offset = 0, fixed_abs, tag = 'sflag constant byte address 0x0 - dummy sync flag']
  %s0 = inlined_call_operand.vmem [shape: s32[64,1], index: 0, kind: input, shape index: {}]
  %s1 = inlined_call_operand.vmem [shape: f32[128,512], index: 1, kind: input, shape index: {}]
  %s2 = inlined_call_operand.vmem [shape: f32[1,512], index: 2, kind: input, shape index: {}]
  %s3 = inlined_call_operand.vmem [shape: f32[128,512], index: 3, kind: input, shape index: {}]
  %s4 = inlined_call_operand.vmem [shape: f32[1,512], index: 4, kind: input, shape index: {}]
  %s5 = inlined_call_operand.vmem [shape: f32[1,512], index: 5, kind: input, shape index: {}]
  %s6 = inlined_call_operand.vmem [shape: f32[1,128], index: 6, kind: input, shape index: {}]
  %s7 = inlined_call_operand.vmem [shape: f32[128,512], index: 7, kind: input, shape index: {}]
  %s8 = inlined_call_operand.vmem [shape: f32[128,512], index: 8, kind: input, shape index: {}]
  %s9 = inlined_call_operand.vmem [shape: f32[128,512], index: 9, kind: input, shape index: {}]
  %s10 = inlined_call_operand.vmem [shape: f32[128,512], index: 10, kind: input, shape index: {}]
  %s11 = inlined_call_operand.vmem [shape: f32[128,128], index: 11, kind: input, shape index: {}]
  %s12 = inlined_call_operand.vmem [shape: f32[8,128], index: 12, kind: output, shape index: {}]
  %s13 = sld [smem:[#allocation0]]
  $region208: #{predictive_lstm_forward.1} parent=0
    _
  %s15 = ssub.s32 1, %s13
  %s16 = scalar_select 0, %s15, %s13
  // Predicated region
  $region2: #{predictive_lstm_forward.1} parent=0 // pred_check
    _
  $region3: #{predictive_lstm_forward.1} parent=0 // pred_check_branch
    %18 = sbr.rel (0) target = $region5
  $region4: #{predictive_lstm_forward.1} parent=0 // pred_region
    _
  $region5: #{predictive_lstm_forward.1} parent=0 // pred_fallthru
    _
  // Predicated region
  $region6: #{predictive_lstm_forward.1} parent=0 // pred_check
    _
  $region7: #{predictive_lstm_forward.1} parent=0 // pred_check_branch
    %20 = sbr.rel (0) target = $region9
  $region8: #{predictive_lstm_forward.1} parent=0 // pred_region
    _
  $region9: #{predictive_lstm_forward.1} parent=0 // pred_fallthru
    _
  // Predicated region
  $region10: #{predictive_lstm_forward.1} parent=0 // pred_check
    _
  $region11: #{predictive_lstm_forward.1} parent=0 // pred_check_branch
    %22 = sbr.rel (0) target = $region13
  $region12: #{predictive_lstm_forward.1} parent=0 // pred_region
    _
  $region13: #{predictive_lstm_forward.1} parent=0 // pred_fallthru
    _
  // Predicated region
  $region14: #{predictive_lstm_forward.1} parent=0 // pred_check
    _
  $region15: #{predictive_lstm_forward.1} parent=0 // pred_check_branch
    %24 = sbr.rel (0) target = $region17
  $region16: #{predictive_lstm_forward.1} parent=0 // pred_region
    _
  $region17: #{predictive_lstm_forward.1} parent=0 // pred_fallthru
    _
  // Predicated region
  $region18: #{predictive_lstm_forward.1} parent=0 // pred_check
    _
  $region19: #{predictive_lstm_forward.1} parent=0 // pred_check_branch
    %26 = sbr.rel (0) target = $region21
  $region20: #{predictive_lstm_forward.1} parent=0 // pred_region
    _
  $region21: #{predictive_lstm_forward.1} parent=0 // pred_fallthru
    _
  // Predicated region
  $region22: #{predictive_lstm_forward.1} parent=0 // pred_check
    _
  $region23: #{predictive_lstm_forward.1} parent=0 // pred_check_branch
    %28 = sbr.rel (0) target = $region25
  $region24: #{predictive_lstm_forward.1} parent=0 // pred_region
    _
  $region25: #{predictive_lstm_forward.1} parent=0 // pred_fallthru
    _
  // Predicated region
  $region26: #{predictive_lstm_forward.1} parent=0 // pred_check
    _
  $region27: #{predictive_lstm_forward.1} parent=0 // pred_check_branch
    %30 = sbr.rel (0) target = $region29
  $region28: #{predictive_lstm_forward.1} parent=0 // pred_region
    _
  $region29: #{predictive_lstm_forward.1} parent=0 // pred_fallthru
    _
  %p32 = scmp.lt.u32.totalorder 512, 8
  %p33 = pneg %p32
  // Predicated region
  $region30: #{predictive_lstm_forward.1} parent=0 // pred_check
    _
  $region31: #{predictive_lstm_forward.1} parent=0 // pred_check_branch
    %35 = sbr.rel (%p32) target = $region33
  $region32: #{predictive_lstm_forward.1} parent=0 // pred_region
    %s51 = sand.u32 512, 7
    %p52 = scmp.eq.s32.totalorder %s51, 0
    // Predicated region
    $region45: #{predictive_lstm_forward.1} parent=32 // pred_check
      %p53 = pneg %p52
    $region46: #{predictive_lstm_forward.1} parent=32 // pred_check_branch
      %55 = sbr.rel (%p53) target = $region48
    $region47: #{predictive_lstm_forward.1} parent=32 // pred_region
      loop: start=0, step=1, limit=1
      $region49: #{predictive_lstm_forward.1} parent=47 // loop_pre_header
        _
      $region50: #{predictive_lstm_forward.1} parent=47 // loop_header
        %s57 = sphi 0, %s61
        %p58 = scmp.ge.s32.totalorder %s57, 1
        %s62 = sphi %s7, %s7
        %s63 = sphi [#allocation4], [#allocation4]
      $region51: #{predictive_lstm_forward.1} parent=47 // loop_header_branch
        %60 = sbr.rel (%p58) target = $region55
      $region52: #{predictive_lstm_forward.1} parent=47 // loop_body
        %v64 = vld [vmem:[%s62] sm:$0xff]
        %65 = vst [vmem:[%s63] sm:$0xff] %v64
        %v66 = vld [vmem:[%s62 + $0x8] sm:$0xff]
        %67 = vst [vmem:[%s63 + $0x8] sm:$0xff] %v66
        %v68 = vld [vmem:[%s62 + $0x10] sm:$0xff]
        %69 = vst [vmem:[%s63 + $0x10] sm:$0xff] %v68
        %v70 = vld [vmem:[%s62 + $0x18] sm:$0xff]
        %71 = vst [vmem:[%s63 + $0x18] sm:$0xff] %v70
        %v72 = vld [vmem:[%s62 + $0x20] sm:$0xff]
        %73 = vst [vmem:[%s63 + $0x20] sm:$0xff] %v72
        %v74 = vld [vmem:[%s62 + $0x28] sm:$0xff]
        %75 = vst [vmem:[%s63 + $0x28] sm:$0xff] %v74
        %v76 = vld [vmem:[%s62 + $0x30] sm:$0xff]
        %77 = vst [vmem:[%s63 + $0x30] sm:$0xff] %v76
        %v78 = vld [vmem:[%s62 + $0x38] sm:$0xff]
        %79 = vst [vmem:[%s63 + $0x38] sm:$0xff] %v78
        %v80 = vld [vmem:[%s62 + $0x40] sm:$0xff]
        %81 = vst [vmem:[%s63 + $0x40] sm:$0xff] %v80
        %v82 = vld [vmem:[%s62 + $0x48] sm:$0xff]
        %83 = vst [vmem:[%s63 + $0x48] sm:$0xff] %v82
        %v84 = vld [vmem:[%s62 + $0x50] sm:$0xff]
        %85 = vst [vmem:[%s63 + $0x50] sm:$0xff] %v84
        %v86 = vld [vmem:[%s62 + $0x58] sm:$0xff]
        %87 = vst [vmem:[%s63 + $0x58] sm:$0xff] %v86
        %v88 = vld [vmem:[%s62 + $0x60] sm:$0xff]
        %89 = vst [vmem:[%s63 + $0x60] sm:$0xff] %v88
        %v90 = vld [vmem:[%s62 + $0x68] sm:$0xff]
        %91 = vst [vmem:[%s63 + $0x68] sm:$0xff] %v90
        %v92 = vld [vmem:[%s62 + $0x70] sm:$0xff]
        %93 = vst [vmem:[%s63 + $0x70] sm:$0xff] %v92
        %v94 = vld [vmem:[%s62 + $0x78] sm:$0xff]
        %95 = vst [vmem:[%s63 + $0x78] sm:$0xff] %v94
        %v96 = vld [vmem:[%s62 + $0x80] sm:$0xff]
        %97 = vst [vmem:[%s63 + $0x80] sm:$0xff] %v96
        %v98 = vld [vmem:[%s62 + $0x88] sm:$0xff]
        %99 = vst [vmem:[%s63 + $0x88] sm:$0xff] %v98
        %v100 = vld [vmem:[%s62 + $0x90] sm:$0xff]
        %101 = vst [vmem:[%s63 + $0x90] sm:$0xff] %v100
        %v102 = vld [vmem:[%s62 + $0x98] sm:$0xff]
        %103 = vst [vmem:[%s63 + $0x98] sm:$0xff] %v102
        %v104 = vld [vmem:[%s62 + $0xa0] sm:$0xff]
        %105 = vst [vmem:[%s63 + $0xa0] sm:$0xff] %v104
        %v106 = vld [vmem:[%s62 + $0xa8] sm:$0xff]
        %107 = vst [vmem:[%s63 + $0xa8] sm:$0xff] %v106
        %v108 = vld [vmem:[%s62 + $0xb0] sm:$0xff]
        %109 = vst [vmem:[%s63 + $0xb0] sm:$0xff] %v108
        %v110 = vld [vmem:[%s62 + $0xb8] sm:$0xff]
        %111 = vst [vmem:[%s63 + $0xb8] sm:$0xff] %v110
        %v112 = vld [vmem:[%s62 + $0xc0] sm:$0xff]
        %113 = vst [vmem:[%s63 + $0xc0] sm:$0xff] %v112
        %v114 = vld [vmem:[%s62 + $0xc8] sm:$0xff]
        %115 = vst [vmem:[%s63 + $0xc8] sm:$0xff] %v114
        %v116 = vld [vmem:[%s62 + $0xd0] sm:$0xff]
        %117 = vst [vmem:[%s63 + $0xd0] sm:$0xff] %v116
        %v118 = vld [vmem:[%s62 + $0xd8] sm:$0xff]
        %119 = vst [vmem:[%s63 + $0xd8] sm:$0xff] %v118
        %v120 = vld [vmem:[%s62 + $0xe0] sm:$0xff]
        %121 = vst [vmem:[%s63 + $0xe0] sm:$0xff] %v120
        %v122 = vld [vmem:[%s62 + $0xe8] sm:$0xff]
        %123 = vst [vmem:[%s63 + $0xe8] sm:$0xff] %v122
        %v124 = vld [vmem:[%s62 + $0xf0] sm:$0xff]
        %125 = vst [vmem:[%s63 + $0xf0] sm:$0xff] %v124
        %v126 = vld [vmem:[%s62 + $0xf8] sm:$0xff]
        %127 = vst [vmem:[%s63 + $0xf8] sm:$0xff] %v126
        %v128 = vld [vmem:[%s62 + $0x100] sm:$0xff]
        %129 = vst [vmem:[%s63 + $0x100] sm:$0xff] %v128
        %v130 = vld [vmem:[%s62 + $0x108] sm:$0xff]
        %131 = vst [vmem:[%s63 + $0x108] sm:$0xff] %v130
        %v132 = vld [vmem:[%s62 + $0x110] sm:$0xff]
        %133 = vst [vmem:[%s63 + $0x110] sm:$0xff] %v132
        %v134 = vld [vmem:[%s62 + $0x118] sm:$0xff]
        %135 = vst [vmem:[%s63 + $0x118] sm:$0xff] %v134
        %v136 = vld [vmem:[%s62 + $0x120] sm:$0xff]
        %137 = vst [vmem:[%s63 + $0x120] sm:$0xff] %v136
        %v138 = vld [vmem:[%s62 + $0x128] sm:$0xff]
        %139 = vst [vmem:[%s63 + $0x128] sm:$0xff] %v138
        %v140 = vld [vmem:[%s62 + $0x130] sm:$0xff]
        %141 = vst [vmem:[%s63 + $0x130] sm:$0xff] %v140
        %v142 = vld [vmem:[%s62 + $0x138] sm:$0xff]
        %143 = vst [vmem:[%s63 + $0x138] sm:$0xff] %v142
        %v144 = vld [vmem:[%s62 + $0x140] sm:$0xff]
        %145 = vst [vmem:[%s63 + $0x140] sm:$0xff] %v144
        %v146 = vld [vmem:[%s62 + $0x148] sm:$0xff]
        %147 = vst [vmem:[%s63 + $0x148] sm:$0xff] %v146
        %v148 = vld [vmem:[%s62 + $0x150] sm:$0xff]
        %149 = vst [vmem:[%s63 + $0x150] sm:$0xff] %v148
        %v150 = vld [vmem:[%s62 + $0x158] sm:$0xff]
        %151 = vst [vmem:[%s63 + $0x158] sm:$0xff] %v150
        %v152 = vld [vmem:[%s62 + $0x160] sm:$0xff]
        %153 = vst [vmem:[%s63 + $0x160] sm:$0xff] %v152
        %v154 = vld [vmem:[%s62 + $0x168] sm:$0xff]
        %155 = vst [vmem:[%s63 + $0x168] sm:$0xff] %v154
        %v156 = vld [vmem:[%s62 + $0x170] sm:$0xff]
        %157 = vst [vmem:[%s63 + $0x170] sm:$0xff] %v156
        %v158 = vld [vmem:[%s62 + $0x178] sm:$0xff]
        %159 = vst [vmem:[%s63 + $0x178] sm:$0xff] %v158
        %v160 = vld [vmem:[%s62 + $0x180] sm:$0xff]
        %161 = vst [vmem:[%s63 + $0x180] sm:$0xff] %v160
        %v162 = vld [vmem:[%s62 + $0x188] sm:$0xff]
        %163 = vst [vmem:[%s63 + $0x188] sm:$0xff] %v162
        %v164 = vld [vmem:[%s62 + $0x190] sm:$0xff]
        %165 = vst [vmem:[%s63 + $0x190] sm:$0xff] %v164
        %v166 = vld [vmem:[%s62 + $0x198] sm:$0xff]
        %167 = vst [vmem:[%s63 + $0x198] sm:$0xff] %v166
        %v168 = vld [vmem:[%s62 + $0x1a0] sm:$0xff]
        %169 = vst [vmem:[%s63 + $0x1a0] sm:$0xff] %v168
        %v170 = vld [vmem:[%s62 + $0x1a8] sm:$0xff]
        %171 = vst [vmem:[%s63 + $0x1a8] sm:$0xff] %v170
        %v172 = vld [vmem:[%s62 + $0x1b0] sm:$0xff]
        %173 = vst [vmem:[%s63 + $0x1b0] sm:$0xff] %v172
        %v174 = vld [vmem:[%s62 + $0x1b8] sm:$0xff]
        %175 = vst [vmem:[%s63 + $0x1b8] sm:$0xff] %v174
        %v176 = vld [vmem:[%s62 + $0x1c0] sm:$0xff]
        %177 = vst [vmem:[%s63 + $0x1c0] sm:$0xff] %v176
        %v178 = vld [vmem:[%s62 + $0x1c8] sm:$0xff]
        %179 = vst [vmem:[%s63 + $0x1c8] sm:$0xff] %v178
        %v180 = vld [vmem:[%s62 + $0x1d0] sm:$0xff]
        %181 = vst [vmem:[%s63 + $0x1d0] sm:$0xff] %v180
        %v182 = vld [vmem:[%s62 + $0x1d8] sm:$0xff]
        %183 = vst [vmem:[%s63 + $0x1d8] sm:$0xff] %v182
        %v184 = vld [vmem:[%s62 + $0x1e0] sm:$0xff]
        %185 = vst [vmem:[%s63 + $0x1e0] sm:$0xff] %v184
        %v186 = vld [vmem:[%s62 + $0x1e8] sm:$0xff]
        %187 = vst [vmem:[%s63 + $0x1e8] sm:$0xff] %v186
        %v188 = vld [vmem:[%s62 + $0x1f0] sm:$0xff]
        %189 = vst [vmem:[%s63 + $0x1f0] sm:$0xff] %v188
        %v190 = vld [vmem:[%s62 + $0x1f8] sm:$0xff]
        %191 = vst [vmem:[%s63 + $0x1f8] sm:$0xff] %v190
      $region53: #{predictive_lstm_forward.1} parent=47 // loop_footer
        %s61 = sadd.s32 1, %s57
      $region54: #{predictive_lstm_forward.1} parent=47 // loop_footer_branch
        %56 = sbr.rel target = $region50
      $region55: #{predictive_lstm_forward.1} parent=47 // loop_exit
        _
    $region48: #{predictive_lstm_forward.1} parent=32 // pred_fallthru
      _
    %p192 = pneg %p52
    // Predicated region
    $region56: #{predictive_lstm_forward.1} parent=32 // pred_check
      _
    $region57: #{predictive_lstm_forward.1} parent=32 // pred_check_branch
      %194 = sbr.rel (%p52) target = $region59
    $region58: #{predictive_lstm_forward.1} parent=32 // pred_region
      %s195 = sand.u32 512, 7
    $region59: #{predictive_lstm_forward.1} parent=32 // pred_fallthru
      _
  $region33: #{predictive_lstm_forward.1} parent=0 // pred_fallthru
    _
  // Predicated region
  $region34: #{predictive_lstm_forward.1} parent=0 // pred_check
    %p36 = pneg %p32
  $region35: #{predictive_lstm_forward.1} parent=0 // pred_check_branch
    %38 = sbr.rel (%p36) target = $region37
  $region36: #{predictive_lstm_forward.1} parent=0 // pred_region
    %s39 = sshll.u32 1, 512
    %s40 = ssub.s32 %s39, 1
    loop: start=0, step=1, limit=1
    $region38: #{predictive_lstm_forward.1} parent=36 // loop_pre_header
      _
    $region39: #{predictive_lstm_forward.1} parent=36 // loop_header
      %s42 = sphi 0, %s46
      %p43 = scmp.ge.s32.totalorder %s42, 1
      %s47 = sphi %s7, %s7
      %s48 = sphi [#allocation4], [#allocation4]
    $region40: #{predictive_lstm_forward.1} parent=36 // loop_header_branch
      %45 = sbr.rel (%p43) target = $region44
    $region41: #{predictive_lstm_forward.1} parent=36 // loop_body
      %v49 = vld [vmem:[%s47] sm:%s40]
      %50 = vst [vmem:[%s48] sm:%s40] %v49
    $region42: #{predictive_lstm_forward.1} parent=36 // loop_footer
      %s46 = sadd.s32 1, %s42
    $region43: #{predictive_lstm_forward.1} parent=36 // loop_footer_branch
      %41 = sbr.rel target = $region39
    $region44: #{predictive_lstm_forward.1} parent=36 // loop_exit
      _
  $region37: #{predictive_lstm_forward.1} parent=0 // pred_fallthru
    _
  // Predicated region
  $region60: #{predictive_lstm_forward.1} parent=0 // pred_check
    _
  $region61: #{predictive_lstm_forward.1} parent=0 // pred_check_branch
    %198 = sbr.rel (0) target = $region63
  $region62: #{predictive_lstm_forward.1} parent=0 // pred_region
    %199 = vsyncadd [#allocation9], 8192
  $region63: #{predictive_lstm_forward.1} parent=0 // pred_fallthru
    _
  %s200 = scalar_lea.sflag [#allocation9], 1
  %p202 = scmp.lt.u32.totalorder 512, 8
  %p203 = pneg %p202
  // Predicated region
  $region64: #{predictive_lstm_forward.1} parent=0 // pred_check
    _
  $region65: #{predictive_lstm_forward.1} parent=0 // pred_check_branch
    %205 = sbr.rel (%p202) target = $region67
  $region66: #{predictive_lstm_forward.1} parent=0 // pred_region
    %s221 = sand.u32 512, 7
    %p222 = scmp.eq.s32.totalorder %s221, 0
    // Predicated region
    $region79: #{predictive_lstm_forward.1} parent=66 // pred_check
      %p223 = pneg %p222
    $region80: #{predictive_lstm_forward.1} parent=66 // pred_check_branch
      %225 = sbr.rel (%p223) target = $region82
    $region81: #{predictive_lstm_forward.1} parent=66 // pred_region
      loop: start=0, step=1, limit=1
      $region83: #{predictive_lstm_forward.1} parent=81 // loop_pre_header
        _
      $region84: #{predictive_lstm_forward.1} parent=81 // loop_header
        %s227 = sphi 0, %s231
        %p228 = scmp.ge.s32.totalorder %s227, 1
        %s232 = sphi %s8, %s8
        %s233 = sphi [#allocation5], [#allocation5]
      $region85: #{predictive_lstm_forward.1} parent=81 // loop_header_branch
        %230 = sbr.rel (%p228) target = $region89
      $region86: #{predictive_lstm_forward.1} parent=81 // loop_body
        %v234 = vld [vmem:[%s232] sm:$0xff]
        %235 = vst [vmem:[%s233] sm:$0xff] %v234
        %v236 = vld [vmem:[%s232 + $0x8] sm:$0xff]
        %237 = vst [vmem:[%s233 + $0x8] sm:$0xff] %v236
        %v238 = vld [vmem:[%s232 + $0x10] sm:$0xff]
        %239 = vst [vmem:[%s233 + $0x10] sm:$0xff] %v238
        %v240 = vld [vmem:[%s232 + $0x18] sm:$0xff]
        %241 = vst [vmem:[%s233 + $0x18] sm:$0xff] %v240
        %v242 = vld [vmem:[%s232 + $0x20] sm:$0xff]
        %243 = vst [vmem:[%s233 + $0x20] sm:$0xff] %v242
        %v244 = vld [vmem:[%s232 + $0x28] sm:$0xff]
        %245 = vst [vmem:[%s233 + $0x28] sm:$0xff] %v244
        %v246 = vld [vmem:[%s232 + $0x30] sm:$0xff]
        %247 = vst [vmem:[%s233 + $0x30] sm:$0xff] %v246
        %v248 = vld [vmem:[%s232 + $0x38] sm:$0xff]
        %249 = vst [vmem:[%s233 + $0x38] sm:$0xff] %v248
        %v250 = vld [vmem:[%s232 + $0x40] sm:$0xff]
        %251 = vst [vmem:[%s233 + $0x40] sm:$0xff] %v250
        %v252 = vld [vmem:[%s232 + $0x48] sm:$0xff]
        %253 = vst [vmem:[%s233 + $0x48] sm:$0xff] %v252
        %v254 = vld [vmem:[%s232 + $0x50] sm:$0xff]
        %255 = vst [vmem:[%s233 + $0x50] sm:$0xff] %v254
        %v256 = vld [vmem:[%s232 + $0x58] sm:$0xff]
        %257 = vst [vmem:[%s233 + $0x58] sm:$0xff] %v256
        %v258 = vld [vmem:[%s232 + $0x60] sm:$0xff]
        %259 = vst [vmem:[%s233 + $0x60] sm:$0xff] %v258
        %v260 = vld [vmem:[%s232 + $0x68] sm:$0xff]
        %261 = vst [vmem:[%s233 + $0x68] sm:$0xff] %v260
        %v262 = vld [vmem:[%s232 + $0x70] sm:$0xff]
        %263 = vst [vmem:[%s233 + $0x70] sm:$0xff] %v262
        %v264 = vld [vmem:[%s232 + $0x78] sm:$0xff]
        %265 = vst [vmem:[%s233 + $0x78] sm:$0xff] %v264
        %v266 = vld [vmem:[%s232 + $0x80] sm:$0xff]
        %267 = vst [vmem:[%s233 + $0x80] sm:$0xff] %v266
        %v268 = vld [vmem:[%s232 + $0x88] sm:$0xff]
        %269 = vst [vmem:[%s233 + $0x88] sm:$0xff] %v268
        %v270 = vld [vmem:[%s232 + $0x90] sm:$0xff]
        %271 = vst [vmem:[%s233 + $0x90] sm:$0xff] %v270
        %v272 = vld [vmem:[%s232 + $0x98] sm:$0xff]
        %273 = vst [vmem:[%s233 + $0x98] sm:$0xff] %v272
        %v274 = vld [vmem:[%s232 + $0xa0] sm:$0xff]
        %275 = vst [vmem:[%s233 + $0xa0] sm:$0xff] %v274
        %v276 = vld [vmem:[%s232 + $0xa8] sm:$0xff]
        %277 = vst [vmem:[%s233 + $0xa8] sm:$0xff] %v276
        %v278 = vld [vmem:[%s232 + $0xb0] sm:$0xff]
        %279 = vst [vmem:[%s233 + $0xb0] sm:$0xff] %v278
        %v280 = vld [vmem:[%s232 + $0xb8] sm:$0xff]
        %281 = vst [vmem:[%s233 + $0xb8] sm:$0xff] %v280
        %v282 = vld [vmem:[%s232 + $0xc0] sm:$0xff]
        %283 = vst [vmem:[%s233 + $0xc0] sm:$0xff] %v282
        %v284 = vld [vmem:[%s232 + $0xc8] sm:$0xff]
        %285 = vst [vmem:[%s233 + $0xc8] sm:$0xff] %v284
        %v286 = vld [vmem:[%s232 + $0xd0] sm:$0xff]
        %287 = vst [vmem:[%s233 + $0xd0] sm:$0xff] %v286
        %v288 = vld [vmem:[%s232 + $0xd8] sm:$0xff]
        %289 = vst [vmem:[%s233 + $0xd8] sm:$0xff] %v288
        %v290 = vld [vmem:[%s232 + $0xe0] sm:$0xff]
        %291 = vst [vmem:[%s233 + $0xe0] sm:$0xff] %v290
        %v292 = vld [vmem:[%s232 + $0xe8] sm:$0xff]
        %293 = vst [vmem:[%s233 + $0xe8] sm:$0xff] %v292
        %v294 = vld [vmem:[%s232 + $0xf0] sm:$0xff]
        %295 = vst [vmem:[%s233 + $0xf0] sm:$0xff] %v294
        %v296 = vld [vmem:[%s232 + $0xf8] sm:$0xff]
        %297 = vst [vmem:[%s233 + $0xf8] sm:$0xff] %v296
        %v298 = vld [vmem:[%s232 + $0x100] sm:$0xff]
        %299 = vst [vmem:[%s233 + $0x100] sm:$0xff] %v298
        %v300 = vld [vmem:[%s232 + $0x108] sm:$0xff]
        %301 = vst [vmem:[%s233 + $0x108] sm:$0xff] %v300
        %v302 = vld [vmem:[%s232 + $0x110] sm:$0xff]
        %303 = vst [vmem:[%s233 + $0x110] sm:$0xff] %v302
        %v304 = vld [vmem:[%s232 + $0x118] sm:$0xff]
        %305 = vst [vmem:[%s233 + $0x118] sm:$0xff] %v304
        %v306 = vld [vmem:[%s232 + $0x120] sm:$0xff]
        %307 = vst [vmem:[%s233 + $0x120] sm:$0xff] %v306
        %v308 = vld [vmem:[%s232 + $0x128] sm:$0xff]
        %309 = vst [vmem:[%s233 + $0x128] sm:$0xff] %v308
        %v310 = vld [vmem:[%s232 + $0x130] sm:$0xff]
        %311 = vst [vmem:[%s233 + $0x130] sm:$0xff] %v310
        %v312 = vld [vmem:[%s232 + $0x138] sm:$0xff]
        %313 = vst [vmem:[%s233 + $0x138] sm:$0xff] %v312
        %v314 = vld [vmem:[%s232 + $0x140] sm:$0xff]
        %315 = vst [vmem:[%s233 + $0x140] sm:$0xff] %v314
        %v316 = vld [vmem:[%s232 + $0x148] sm:$0xff]
        %317 = vst [vmem:[%s233 + $0x148] sm:$0xff] %v316
        %v318 = vld [vmem:[%s232 + $0x150] sm:$0xff]
        %319 = vst [vmem:[%s233 + $0x150] sm:$0xff] %v318
        %v320 = vld [vmem:[%s232 + $0x158] sm:$0xff]
        %321 = vst [vmem:[%s233 + $0x158] sm:$0xff] %v320
        %v322 = vld [vmem:[%s232 + $0x160] sm:$0xff]
        %323 = vst [vmem:[%s233 + $0x160] sm:$0xff] %v322
        %v324 = vld [vmem:[%s232 + $0x168] sm:$0xff]
        %325 = vst [vmem:[%s233 + $0x168] sm:$0xff] %v324
        %v326 = vld [vmem:[%s232 + $0x170] sm:$0xff]
        %327 = vst [vmem:[%s233 + $0x170] sm:$0xff] %v326
        %v328 = vld [vmem:[%s232 + $0x178] sm:$0xff]
        %329 = vst [vmem:[%s233 + $0x178] sm:$0xff] %v328
        %v330 = vld [vmem:[%s232 + $0x180] sm:$0xff]
        %331 = vst [vmem:[%s233 + $0x180] sm:$0xff] %v330
        %v332 = vld [vmem:[%s232 + $0x188] sm:$0xff]
        %333 = vst [vmem:[%s233 + $0x188] sm:$0xff] %v332
        %v334 = vld [vmem:[%s232 + $0x190] sm:$0xff]
        %335 = vst [vmem:[%s233 + $0x190] sm:$0xff] %v334
        %v336 = vld [vmem:[%s232 + $0x198] sm:$0xff]
        %337 = vst [vmem:[%s233 + $0x198] sm:$0xff] %v336
        %v338 = vld [vmem:[%s232 + $0x1a0] sm:$0xff]
        %339 = vst [vmem:[%s233 + $0x1a0] sm:$0xff] %v338
        %v340 = vld [vmem:[%s232 + $0x1a8] sm:$0xff]
        %341 = vst [vmem:[%s233 + $0x1a8] sm:$0xff] %v340
        %v342 = vld [vmem:[%s232 + $0x1b0] sm:$0xff]
        %343 = vst [vmem:[%s233 + $0x1b0] sm:$0xff] %v342
        %v344 = vld [vmem:[%s232 + $0x1b8] sm:$0xff]
        %345 = vst [vmem:[%s233 + $0x1b8] sm:$0xff] %v344
        %v346 = vld [vmem:[%s232 + $0x1c0] sm:$0xff]
        %347 = vst [vmem:[%s233 + $0x1c0] sm:$0xff] %v346
        %v348 = vld [vmem:[%s232 + $0x1c8] sm:$0xff]
        %349 = vst [vmem:[%s233 + $0x1c8] sm:$0xff] %v348
        %v350 = vld [vmem:[%s232 + $0x1d0] sm:$0xff]
        %351 = vst [vmem:[%s233 + $0x1d0] sm:$0xff] %v350
        %v352 = vld [vmem:[%s232 + $0x1d8] sm:$0xff]
        %353 = vst [vmem:[%s233 + $0x1d8] sm:$0xff] %v352
        %v354 = vld [vmem:[%s232 + $0x1e0] sm:$0xff]
        %355 = vst [vmem:[%s233 + $0x1e0] sm:$0xff] %v354
        %v356 = vld [vmem:[%s232 + $0x1e8] sm:$0xff]
        %357 = vst [vmem:[%s233 + $0x1e8] sm:$0xff] %v356
        %v358 = vld [vmem:[%s232 + $0x1f0] sm:$0xff]
        %359 = vst [vmem:[%s233 + $0x1f0] sm:$0xff] %v358
        %v360 = vld [vmem:[%s232 + $0x1f8] sm:$0xff]
        %361 = vst [vmem:[%s233 + $0x1f8] sm:$0xff] %v360
      $region87: #{predictive_lstm_forward.1} parent=81 // loop_footer
        %s231 = sadd.s32 1, %s227
      $region88: #{predictive_lstm_forward.1} parent=81 // loop_footer_branch
        %226 = sbr.rel target = $region84
      $region89: #{predictive_lstm_forward.1} parent=81 // loop_exit
        _
    $region82: #{predictive_lstm_forward.1} parent=66 // pred_fallthru
      _
    %p362 = pneg %p222
    // Predicated region
    $region90: #{predictive_lstm_forward.1} parent=66 // pred_check
      _
    $region91: #{predictive_lstm_forward.1} parent=66 // pred_check_branch
      %364 = sbr.rel (%p222) target = $region93
    $region92: #{predictive_lstm_forward.1} parent=66 // pred_region
      %s365 = sand.u32 512, 7
    $region93: #{predictive_lstm_forward.1} parent=66 // pred_fallthru
      _
  $region67: #{predictive_lstm_forward.1} parent=0 // pred_fallthru
    _
  // Predicated region
  $region68: #{predictive_lstm_forward.1} parent=0 // pred_check
    %p206 = pneg %p202
  $region69: #{predictive_lstm_forward.1} parent=0 // pred_check_branch
    %208 = sbr.rel (%p206) target = $region71
  $region70: #{predictive_lstm_forward.1} parent=0 // pred_region
    %s209 = sshll.u32 1, 512
    %s210 = ssub.s32 %s209, 1
    loop: start=0, step=1, limit=1
    $region72: #{predictive_lstm_forward.1} parent=70 // loop_pre_header
      _
    $region73: #{predictive_lstm_forward.1} parent=70 // loop_header
      %s212 = sphi 0, %s216
      %p213 = scmp.ge.s32.totalorder %s212, 1
      %s217 = sphi %s8, %s8
      %s218 = sphi [#allocation5], [#allocation5]
    $region74: #{predictive_lstm_forward.1} parent=70 // loop_header_branch
      %215 = sbr.rel (%p213) target = $region78
    $region75: #{predictive_lstm_forward.1} parent=70 // loop_body
      %v219 = vld [vmem:[%s217] sm:%s210]
      %220 = vst [vmem:[%s218] sm:%s210] %v219
    $region76: #{predictive_lstm_forward.1} parent=70 // loop_footer
      %s216 = sadd.s32 1, %s212
    $region77: #{predictive_lstm_forward.1} parent=70 // loop_footer_branch
      %211 = sbr.rel target = $region73
    $region78: #{predictive_lstm_forward.1} parent=70 // loop_exit
      _
  $region71: #{predictive_lstm_forward.1} parent=0 // pred_fallthru
    _
  // Predicated region
  $region94: #{predictive_lstm_forward.1} parent=0 // pred_check
    _
  $region95: #{predictive_lstm_forward.1} parent=0 // pred_check_branch
    %368 = sbr.rel (0) target = $region97
  $region96: #{predictive_lstm_forward.1} parent=0 // pred_region
    %369 = vsyncadd %s200, 8192
  $region97: #{predictive_lstm_forward.1} parent=0 // pred_fallthru
    _
  %s370 = scalar_lea.sflag [#allocation9], 2
  %p372 = scmp.lt.u32.totalorder 512, 8
  %p373 = pneg %p372
  // Predicated region
  $region98: #{predictive_lstm_forward.1} parent=0 // pred_check
    _
  $region99: #{predictive_lstm_forward.1} parent=0 // pred_check_branch
    %375 = sbr.rel (%p372) target = $region101
  $region100: #{predictive_lstm_forward.1} parent=0 // pred_region
    %s391 = sand.u32 512, 7
    %p392 = scmp.eq.s32.totalorder %s391, 0
    // Predicated region
    $region113: #{predictive_lstm_forward.1} parent=100 // pred_check
      %p393 = pneg %p392
    $region114: #{predictive_lstm_forward.1} parent=100 // pred_check_branch
      %395 = sbr.rel (%p393) target = $region116
    $region115: #{predictive_lstm_forward.1} parent=100 // pred_region
      loop: start=0, step=1, limit=1
      $region117: #{predictive_lstm_forward.1} parent=115 // loop_pre_header
        _
      $region118: #{predictive_lstm_forward.1} parent=115 // loop_header
        %s397 = sphi 0, %s401
        %p398 = scmp.ge.s32.totalorder %s397, 1
        %s402 = sphi %s9, %s9
        %s403 = sphi [#allocation6], [#allocation6]
      $region119: #{predictive_lstm_forward.1} parent=115 // loop_header_branch
        %400 = sbr.rel (%p398) target = $region123
      $region120: #{predictive_lstm_forward.1} parent=115 // loop_body
        %v404 = vld [vmem:[%s402] sm:$0xff]
        %405 = vst [vmem:[%s403] sm:$0xff] %v404
        %v406 = vld [vmem:[%s402 + $0x8] sm:$0xff]
        %407 = vst [vmem:[%s403 + $0x8] sm:$0xff] %v406
        %v408 = vld [vmem:[%s402 + $0x10] sm:$0xff]
        %409 = vst [vmem:[%s403 + $0x10] sm:$0xff] %v408
        %v410 = vld [vmem:[%s402 + $0x18] sm:$0xff]
        %411 = vst [vmem:[%s403 + $0x18] sm:$0xff] %v410
        %v412 = vld [vmem:[%s402 + $0x20] sm:$0xff]
        %413 = vst [vmem:[%s403 + $0x20] sm:$0xff] %v412
        %v414 = vld [vmem:[%s402 + $0x28] sm:$0xff]
        %415 = vst [vmem:[%s403 + $0x28] sm:$0xff] %v414
        %v416 = vld [vmem:[%s402 + $0x30] sm:$0xff]
        %417 = vst [vmem:[%s403 + $0x30] sm:$0xff] %v416
        %v418 = vld [vmem:[%s402 + $0x38] sm:$0xff]
        %419 = vst [vmem:[%s403 + $0x38] sm:$0xff] %v418
        %v420 = vld [vmem:[%s402 + $0x40] sm:$0xff]
        %421 = vst [vmem:[%s403 + $0x40] sm:$0xff] %v420
        %v422 = vld [vmem:[%s402 + $0x48] sm:$0xff]
        %423 = vst [vmem:[%s403 + $0x48] sm:$0xff] %v422
        %v424 = vld [vmem:[%s402 + $0x50] sm:$0xff]
        %425 = vst [vmem:[%s403 + $0x50] sm:$0xff] %v424
        %v426 = vld [vmem:[%s402 + $0x58] sm:$0xff]
        %427 = vst [vmem:[%s403 + $0x58] sm:$0xff] %v426
        %v428 = vld [vmem:[%s402 + $0x60] sm:$0xff]
        %429 = vst [vmem:[%s403 + $0x60] sm:$0xff] %v428
        %v430 = vld [vmem:[%s402 + $0x68] sm:$0xff]
        %431 = vst [vmem:[%s403 + $0x68] sm:$0xff] %v430
        %v432 = vld [vmem:[%s402 + $0x70] sm:$0xff]
        %433 = vst [vmem:[%s403 + $0x70] sm:$0xff] %v432
        %v434 = vld [vmem:[%s402 + $0x78] sm:$0xff]
        %435 = vst [vmem:[%s403 + $0x78] sm:$0xff] %v434
        %v436 = vld [vmem:[%s402 + $0x80] sm:$0xff]
        %437 = vst [vmem:[%s403 + $0x80] sm:$0xff] %v436
        %v438 = vld [vmem:[%s402 + $0x88] sm:$0xff]
        %439 = vst [vmem:[%s403 + $0x88] sm:$0xff] %v438
        %v440 = vld [vmem:[%s402 + $0x90] sm:$0xff]
        %441 = vst [vmem:[%s403 + $0x90] sm:$0xff] %v440
        %v442 = vld [vmem:[%s402 + $0x98] sm:$0xff]
        %443 = vst [vmem:[%s403 + $0x98] sm:$0xff] %v442
        %v444 = vld [vmem:[%s402 + $0xa0] sm:$0xff]
        %445 = vst [vmem:[%s403 + $0xa0] sm:$0xff] %v444
        %v446 = vld [vmem:[%s402 + $0xa8] sm:$0xff]
        %447 = vst [vmem:[%s403 + $0xa8] sm:$0xff] %v446
        %v448 = vld [vmem:[%s402 + $0xb0] sm:$0xff]
        %449 = vst [vmem:[%s403 + $0xb0] sm:$0xff] %v448
        %v450 = vld [vmem:[%s402 + $0xb8] sm:$0xff]
        %451 = vst [vmem:[%s403 + $0xb8] sm:$0xff] %v450
        %v452 = vld [vmem:[%s402 + $0xc0] sm:$0xff]
        %453 = vst [vmem:[%s403 + $0xc0] sm:$0xff] %v452
        %v454 = vld [vmem:[%s402 + $0xc8] sm:$0xff]
        %455 = vst [vmem:[%s403 + $0xc8] sm:$0xff] %v454
        %v456 = vld [vmem:[%s402 + $0xd0] sm:$0xff]
        %457 = vst [vmem:[%s403 + $0xd0] sm:$0xff] %v456
        %v458 = vld [vmem:[%s402 + $0xd8] sm:$0xff]
        %459 = vst [vmem:[%s403 + $0xd8] sm:$0xff] %v458
        %v460 = vld [vmem:[%s402 + $0xe0] sm:$0xff]
        %461 = vst [vmem:[%s403 + $0xe0] sm:$0xff] %v460
        %v462 = vld [vmem:[%s402 + $0xe8] sm:$0xff]
        %463 = vst [vmem:[%s403 + $0xe8] sm:$0xff] %v462
        %v464 = vld [vmem:[%s402 + $0xf0] sm:$0xff]
        %465 = vst [vmem:[%s403 + $0xf0] sm:$0xff] %v464
        %v466 = vld [vmem:[%s402 + $0xf8] sm:$0xff]
        %467 = vst [vmem:[%s403 + $0xf8] sm:$0xff] %v466
        %v468 = vld [vmem:[%s402 + $0x100] sm:$0xff]
        %469 = vst [vmem:[%s403 + $0x100] sm:$0xff] %v468
        %v470 = vld [vmem:[%s402 + $0x108] sm:$0xff]
        %471 = vst [vmem:[%s403 + $0x108] sm:$0xff] %v470
        %v472 = vld [vmem:[%s402 + $0x110] sm:$0xff]
        %473 = vst [vmem:[%s403 + $0x110] sm:$0xff] %v472
        %v474 = vld [vmem:[%s402 + $0x118] sm:$0xff]
        %475 = vst [vmem:[%s403 + $0x118] sm:$0xff] %v474
        %v476 = vld [vmem:[%s402 + $0x120] sm:$0xff]
        %477 = vst [vmem:[%s403 + $0x120] sm:$0xff] %v476
        %v478 = vld [vmem:[%s402 + $0x128] sm:$0xff]
        %479 = vst [vmem:[%s403 + $0x128] sm:$0xff] %v478
        %v480 = vld [vmem:[%s402 + $0x130] sm:$0xff]
        %481 = vst [vmem:[%s403 + $0x130] sm:$0xff] %v480
        %v482 = vld [vmem:[%s402 + $0x138] sm:$0xff]
        %483 = vst [vmem:[%s403 + $0x138] sm:$0xff] %v482
        %v484 = vld [vmem:[%s402 + $0x140] sm:$0xff]
        %485 = vst [vmem:[%s403 + $0x140] sm:$0xff] %v484
        %v486 = vld [vmem:[%s402 + $0x148] sm:$0xff]
        %487 = vst [vmem:[%s403 + $0x148] sm:$0xff] %v486
        %v488 = vld [vmem:[%s402 + $0x150] sm:$0xff]
        %489 = vst [vmem:[%s403 + $0x150] sm:$0xff] %v488
        %v490 = vld [vmem:[%s402 + $0x158] sm:$0xff]
        %491 = vst [vmem:[%s403 + $0x158] sm:$0xff] %v490
        %v492 = vld [vmem:[%s402 + $0x160] sm:$0xff]
        %493 = vst [vmem:[%s403 + $0x160] sm:$0xff] %v492
        %v494 = vld [vmem:[%s402 + $0x168] sm:$0xff]
        %495 = vst [vmem:[%s403 + $0x168] sm:$0xff] %v494
        %v496 = vld [vmem:[%s402 + $0x170] sm:$0xff]
        %497 = vst [vmem:[%s403 + $0x170] sm:$0xff] %v496
        %v498 = vld [vmem:[%s402 + $0x178] sm:$0xff]
        %499 = vst [vmem:[%s403 + $0x178] sm:$0xff] %v498
        %v500 = vld [vmem:[%s402 + $0x180] sm:$0xff]
        %501 = vst [vmem:[%s403 + $0x180] sm:$0xff] %v500
        %v502 = vld [vmem:[%s402 + $0x188] sm:$0xff]
        %503 = vst [vmem:[%s403 + $0x188] sm:$0xff] %v502
        %v504 = vld [vmem:[%s402 + $0x190] sm:$0xff]
        %505 = vst [vmem:[%s403 + $0x190] sm:$0xff] %v504
        %v506 = vld [vmem:[%s402 + $0x198] sm:$0xff]
        %507 = vst [vmem:[%s403 + $0x198] sm:$0xff] %v506
        %v508 = vld [vmem:[%s402 + $0x1a0] sm:$0xff]
        %509 = vst [vmem:[%s403 + $0x1a0] sm:$0xff] %v508
        %v510 = vld [vmem:[%s402 + $0x1a8] sm:$0xff]
        %511 = vst [vmem:[%s403 + $0x1a8] sm:$0xff] %v510
        %v512 = vld [vmem:[%s402 + $0x1b0] sm:$0xff]
        %513 = vst [vmem:[%s403 + $0x1b0] sm:$0xff] %v512
        %v514 = vld [vmem:[%s402 + $0x1b8] sm:$0xff]
        %515 = vst [vmem:[%s403 + $0x1b8] sm:$0xff] %v514
        %v516 = vld [vmem:[%s402 + $0x1c0] sm:$0xff]
        %517 = vst [vmem:[%s403 + $0x1c0] sm:$0xff] %v516
        %v518 = vld [vmem:[%s402 + $0x1c8] sm:$0xff]
        %519 = vst [vmem:[%s403 + $0x1c8] sm:$0xff] %v518
        %v520 = vld [vmem:[%s402 + $0x1d0] sm:$0xff]
        %521 = vst [vmem:[%s403 + $0x1d0] sm:$0xff] %v520
        %v522 = vld [vmem:[%s402 + $0x1d8] sm:$0xff]
        %523 = vst [vmem:[%s403 + $0x1d8] sm:$0xff] %v522
        %v524 = vld [vmem:[%s402 + $0x1e0] sm:$0xff]
        %525 = vst [vmem:[%s403 + $0x1e0] sm:$0xff] %v524
        %v526 = vld [vmem:[%s402 + $0x1e8] sm:$0xff]
        %527 = vst [vmem:[%s403 + $0x1e8] sm:$0xff] %v526
        %v528 = vld [vmem:[%s402 + $0x1f0] sm:$0xff]
        %529 = vst [vmem:[%s403 + $0x1f0] sm:$0xff] %v528
        %v530 = vld [vmem:[%s402 + $0x1f8] sm:$0xff]
        %531 = vst [vmem:[%s403 + $0x1f8] sm:$0xff] %v530
      $region121: #{predictive_lstm_forward.1} parent=115 // loop_footer
        %s401 = sadd.s32 1, %s397
      $region122: #{predictive_lstm_forward.1} parent=115 // loop_footer_branch
        %396 = sbr.rel target = $region118
      $region123: #{predictive_lstm_forward.1} parent=115 // loop_exit
        _
    $region116: #{predictive_lstm_forward.1} parent=100 // pred_fallthru
      _
    %p532 = pneg %p392
    // Predicated region
    $region124: #{predictive_lstm_forward.1} parent=100 // pred_check
      _
    $region125: #{predictive_lstm_forward.1} parent=100 // pred_check_branch
      %534 = sbr.rel (%p392) target = $region127
    $region126: #{predictive_lstm_forward.1} parent=100 // pred_region
      %s535 = sand.u32 512, 7
    $region127: #{predictive_lstm_forward.1} parent=100 // pred_fallthru
      _
  $region101: #{predictive_lstm_forward.1} parent=0 // pred_fallthru
    _
  // Predicated region
  $region102: #{predictive_lstm_forward.1} parent=0 // pred_check
    %p376 = pneg %p372
  $region103: #{predictive_lstm_forward.1} parent=0 // pred_check_branch
    %378 = sbr.rel (%p376) target = $region105
  $region104: #{predictive_lstm_forward.1} parent=0 // pred_region
    %s379 = sshll.u32 1, 512
    %s380 = ssub.s32 %s379, 1
    loop: start=0, step=1, limit=1
    $region106: #{predictive_lstm_forward.1} parent=104 // loop_pre_header
      _
    $region107: #{predictive_lstm_forward.1} parent=104 // loop_header
      %s382 = sphi 0, %s386
      %p383 = scmp.ge.s32.totalorder %s382, 1
      %s387 = sphi %s9, %s9
      %s388 = sphi [#allocation6], [#allocation6]
    $region108: #{predictive_lstm_forward.1} parent=104 // loop_header_branch
      %385 = sbr.rel (%p383) target = $region112
    $region109: #{predictive_lstm_forward.1} parent=104 // loop_body
      %v389 = vld [vmem:[%s387] sm:%s380]
      %390 = vst [vmem:[%s388] sm:%s380] %v389
    $region110: #{predictive_lstm_forward.1} parent=104 // loop_footer
      %s386 = sadd.s32 1, %s382
    $region111: #{predictive_lstm_forward.1} parent=104 // loop_footer_branch
      %381 = sbr.rel target = $region107
    $region112: #{predictive_lstm_forward.1} parent=104 // loop_exit
      _
  $region105: #{predictive_lstm_forward.1} parent=0 // pred_fallthru
    _
  // Predicated region
  $region128: #{predictive_lstm_forward.1} parent=0 // pred_check
    _
  $region129: #{predictive_lstm_forward.1} parent=0 // pred_check_branch
    %538 = sbr.rel (0) target = $region131
  $region130: #{predictive_lstm_forward.1} parent=0 // pred_region
    %539 = vsyncadd %s370, 8192
  $region131: #{predictive_lstm_forward.1} parent=0 // pred_fallthru
    _
  %s540 = scalar_lea.sflag [#allocation9], 3
  %p542 = scmp.lt.u32.totalorder 512, 8
  %p543 = pneg %p542
  // Predicated region
  $region132: #{predictive_lstm_forward.1} parent=0 // pred_check
    _
  $region133: #{predictive_lstm_forward.1} parent=0 // pred_check_branch
    %545 = sbr.rel (%p542) target = $region135
  $region134: #{predictive_lstm_forward.1} parent=0 // pred_region
    %s561 = sand.u32 512, 7
    %p562 = scmp.eq.s32.totalorder %s561, 0
    // Predicated region
    $region147: #{predictive_lstm_forward.1} parent=134 // pred_check
      %p563 = pneg %p562
    $region148: #{predictive_lstm_forward.1} parent=134 // pred_check_branch
      %565 = sbr.rel (%p563) target = $region150
    $region149: #{predictive_lstm_forward.1} parent=134 // pred_region
      loop: start=0, step=1, limit=1
      $region151: #{predictive_lstm_forward.1} parent=149 // loop_pre_header
        _
      $region152: #{predictive_lstm_forward.1} parent=149 // loop_header
        %s567 = sphi 0, %s571
        %p568 = scmp.ge.s32.totalorder %s567, 1
        %s572 = sphi %s10, %s10
        %s573 = sphi [#allocation7], [#allocation7]
      $region153: #{predictive_lstm_forward.1} parent=149 // loop_header_branch
        %570 = sbr.rel (%p568) target = $region157
      $region154: #{predictive_lstm_forward.1} parent=149 // loop_body
        %v574 = vld [vmem:[%s572] sm:$0xff]
        %575 = vst [vmem:[%s573] sm:$0xff] %v574
        %v576 = vld [vmem:[%s572 + $0x8] sm:$0xff]
        %577 = vst [vmem:[%s573 + $0x8] sm:$0xff] %v576
        %v578 = vld [vmem:[%s572 + $0x10] sm:$0xff]
        %579 = vst [vmem:[%s573 + $0x10] sm:$0xff] %v578
        %v580 = vld [vmem:[%s572 + $0x18] sm:$0xff]
        %581 = vst [vmem:[%s573 + $0x18] sm:$0xff] %v580
        %v582 = vld [vmem:[%s572 + $0x20] sm:$0xff]
        %583 = vst [vmem:[%s573 + $0x20] sm:$0xff] %v582
        %v584 = vld [vmem:[%s572 + $0x28] sm:$0xff]
        %585 = vst [vmem:[%s573 + $0x28] sm:$0xff] %v584
        %v586 = vld [vmem:[%s572 + $0x30] sm:$0xff]
        %587 = vst [vmem:[%s573 + $0x30] sm:$0xff] %v586
        %v588 = vld [vmem:[%s572 + $0x38] sm:$0xff]
        %589 = vst [vmem:[%s573 + $0x38] sm:$0xff] %v588
        %v590 = vld [vmem:[%s572 + $0x40] sm:$0xff]
        %591 = vst [vmem:[%s573 + $0x40] sm:$0xff] %v590
        %v592 = vld [vmem:[%s572 + $0x48] sm:$0xff]
        %593 = vst [vmem:[%s573 + $0x48] sm:$0xff] %v592
        %v594 = vld [vmem:[%s572 + $0x50] sm:$0xff]
        %595 = vst [vmem:[%s573 + $0x50] sm:$0xff] %v594
        %v596 = vld [vmem:[%s572 + $0x58] sm:$0xff]
        %597 = vst [vmem:[%s573 + $0x58] sm:$0xff] %v596
        %v598 = vld [vmem:[%s572 + $0x60] sm:$0xff]
        %599 = vst [vmem:[%s573 + $0x60] sm:$0xff] %v598
        %v600 = vld [vmem:[%s572 + $0x68] sm:$0xff]
        %601 = vst [vmem:[%s573 + $0x68] sm:$0xff] %v600
        %v602 = vld [vmem:[%s572 + $0x70] sm:$0xff]
        %603 = vst [vmem:[%s573 + $0x70] sm:$0xff] %v602
        %v604 = vld [vmem:[%s572 + $0x78] sm:$0xff]
        %605 = vst [vmem:[%s573 + $0x78] sm:$0xff] %v604
        %v606 = vld [vmem:[%s572 + $0x80] sm:$0xff]
        %607 = vst [vmem:[%s573 + $0x80] sm:$0xff] %v606
        %v608 = vld [vmem:[%s572 + $0x88] sm:$0xff]
        %609 = vst [vmem:[%s573 + $0x88] sm:$0xff] %v608
        %v610 = vld [vmem:[%s572 + $0x90] sm:$0xff]
        %611 = vst [vmem:[%s573 + $0x90] sm:$0xff] %v610
        %v612 = vld [vmem:[%s572 + $0x98] sm:$0xff]
        %613 = vst [vmem:[%s573 + $0x98] sm:$0xff] %v612
        %v614 = vld [vmem:[%s572 + $0xa0] sm:$0xff]
        %615 = vst [vmem:[%s573 + $0xa0] sm:$0xff] %v614
        %v616 = vld [vmem:[%s572 + $0xa8] sm:$0xff]
        %617 = vst [vmem:[%s573 + $0xa8] sm:$0xff] %v616
        %v618 = vld [vmem:[%s572 + $0xb0] sm:$0xff]
        %619 = vst [vmem:[%s573 + $0xb0] sm:$0xff] %v618
        %v620 = vld [vmem:[%s572 + $0xb8] sm:$0xff]
        %621 = vst [vmem:[%s573 + $0xb8] sm:$0xff] %v620
        %v622 = vld [vmem:[%s572 + $0xc0] sm:$0xff]
        %623 = vst [vmem:[%s573 + $0xc0] sm:$0xff] %v622
        %v624 = vld [vmem:[%s572 + $0xc8] sm:$0xff]
        %625 = vst [vmem:[%s573 + $0xc8] sm:$0xff] %v624
        %v626 = vld [vmem:[%s572 + $0xd0] sm:$0xff]
        %627 = vst [vmem:[%s573 + $0xd0] sm:$0xff] %v626
        %v628 = vld [vmem:[%s572 + $0xd8] sm:$0xff]
        %629 = vst [vmem:[%s573 + $0xd8] sm:$0xff] %v628
        %v630 = vld [vmem:[%s572 + $0xe0] sm:$0xff]
        %631 = vst [vmem:[%s573 + $0xe0] sm:$0xff] %v630
        %v632 = vld [vmem:[%s572 + $0xe8] sm:$0xff]
        %633 = vst [vmem:[%s573 + $0xe8] sm:$0xff] %v632
        %v634 = vld [vmem:[%s572 + $0xf0] sm:$0xff]
        %635 = vst [vmem:[%s573 + $0xf0] sm:$0xff] %v634
        %v636 = vld [vmem:[%s572 + $0xf8] sm:$0xff]
        %637 = vst [vmem:[%s573 + $0xf8] sm:$0xff] %v636
        %v638 = vld [vmem:[%s572 + $0x100] sm:$0xff]
        %639 = vst [vmem:[%s573 + $0x100] sm:$0xff] %v638
        %v640 = vld [vmem:[%s572 + $0x108] sm:$0xff]
        %641 = vst [vmem:[%s573 + $0x108] sm:$0xff] %v640
        %v642 = vld [vmem:[%s572 + $0x110] sm:$0xff]
        %643 = vst [vmem:[%s573 + $0x110] sm:$0xff] %v642
        %v644 = vld [vmem:[%s572 + $0x118] sm:$0xff]
        %645 = vst [vmem:[%s573 + $0x118] sm:$0xff] %v644
        %v646 = vld [vmem:[%s572 + $0x120] sm:$0xff]
        %647 = vst [vmem:[%s573 + $0x120] sm:$0xff] %v646
        %v648 = vld [vmem:[%s572 + $0x128] sm:$0xff]
        %649 = vst [vmem:[%s573 + $0x128] sm:$0xff] %v648
        %v650 = vld [vmem:[%s572 + $0x130] sm:$0xff]
        %651 = vst [vmem:[%s573 + $0x130] sm:$0xff] %v650
        %v652 = vld [vmem:[%s572 + $0x138] sm:$0xff]
        %653 = vst [vmem:[%s573 + $0x138] sm:$0xff] %v652
        %v654 = vld [vmem:[%s572 + $0x140] sm:$0xff]
        %655 = vst [vmem:[%s573 + $0x140] sm:$0xff] %v654
        %v656 = vld [vmem:[%s572 + $0x148] sm:$0xff]
        %657 = vst [vmem:[%s573 + $0x148] sm:$0xff] %v656
        %v658 = vld [vmem:[%s572 + $0x150] sm:$0xff]
        %659 = vst [vmem:[%s573 + $0x150] sm:$0xff] %v658
        %v660 = vld [vmem:[%s572 + $0x158] sm:$0xff]
        %661 = vst [vmem:[%s573 + $0x158] sm:$0xff] %v660
        %v662 = vld [vmem:[%s572 + $0x160] sm:$0xff]
        %663 = vst [vmem:[%s573 + $0x160] sm:$0xff] %v662
        %v664 = vld [vmem:[%s572 + $0x168] sm:$0xff]
        %665 = vst [vmem:[%s573 + $0x168] sm:$0xff] %v664
        %v666 = vld [vmem:[%s572 + $0x170] sm:$0xff]
        %667 = vst [vmem:[%s573 + $0x170] sm:$0xff] %v666
        %v668 = vld [vmem:[%s572 + $0x178] sm:$0xff]
        %669 = vst [vmem:[%s573 + $0x178] sm:$0xff] %v668
        %v670 = vld [vmem:[%s572 + $0x180] sm:$0xff]
        %671 = vst [vmem:[%s573 + $0x180] sm:$0xff] %v670
        %v672 = vld [vmem:[%s572 + $0x188] sm:$0xff]
        %673 = vst [vmem:[%s573 + $0x188] sm:$0xff] %v672
        %v674 = vld [vmem:[%s572 + $0x190] sm:$0xff]
        %675 = vst [vmem:[%s573 + $0x190] sm:$0xff] %v674
        %v676 = vld [vmem:[%s572 + $0x198] sm:$0xff]
        %677 = vst [vmem:[%s573 + $0x198] sm:$0xff] %v676
        %v678 = vld [vmem:[%s572 + $0x1a0] sm:$0xff]
        %679 = vst [vmem:[%s573 + $0x1a0] sm:$0xff] %v678
        %v680 = vld [vmem:[%s572 + $0x1a8] sm:$0xff]
        %681 = vst [vmem:[%s573 + $0x1a8] sm:$0xff] %v680
        %v682 = vld [vmem:[%s572 + $0x1b0] sm:$0xff]
        %683 = vst [vmem:[%s573 + $0x1b0] sm:$0xff] %v682
        %v684 = vld [vmem:[%s572 + $0x1b8] sm:$0xff]
        %685 = vst [vmem:[%s573 + $0x1b8] sm:$0xff] %v684
        %v686 = vld [vmem:[%s572 + $0x1c0] sm:$0xff]
        %687 = vst [vmem:[%s573 + $0x1c0] sm:$0xff] %v686
        %v688 = vld [vmem:[%s572 + $0x1c8] sm:$0xff]
        %689 = vst [vmem:[%s573 + $0x1c8] sm:$0xff] %v688
        %v690 = vld [vmem:[%s572 + $0x1d0] sm:$0xff]
        %691 = vst [vmem:[%s573 + $0x1d0] sm:$0xff] %v690
        %v692 = vld [vmem:[%s572 + $0x1d8] sm:$0xff]
        %693 = vst [vmem:[%s573 + $0x1d8] sm:$0xff] %v692
        %v694 = vld [vmem:[%s572 + $0x1e0] sm:$0xff]
        %695 = vst [vmem:[%s573 + $0x1e0] sm:$0xff] %v694
        %v696 = vld [vmem:[%s572 + $0x1e8] sm:$0xff]
        %697 = vst [vmem:[%s573 + $0x1e8] sm:$0xff] %v696
        %v698 = vld [vmem:[%s572 + $0x1f0] sm:$0xff]
        %699 = vst [vmem:[%s573 + $0x1f0] sm:$0xff] %v698
        %v700 = vld [vmem:[%s572 + $0x1f8] sm:$0xff]
        %701 = vst [vmem:[%s573 + $0x1f8] sm:$0xff] %v700
      $region155: #{predictive_lstm_forward.1} parent=149 // loop_footer
        %s571 = sadd.s32 1, %s567
      $region156: #{predictive_lstm_forward.1} parent=149 // loop_footer_branch
        %566 = sbr.rel target = $region152
      $region157: #{predictive_lstm_forward.1} parent=149 // loop_exit
        _
    $region150: #{predictive_lstm_forward.1} parent=134 // pred_fallthru
      _
    %p702 = pneg %p562
    // Predicated region
    $region158: #{predictive_lstm_forward.1} parent=134 // pred_check
      _
    $region159: #{predictive_lstm_forward.1} parent=134 // pred_check_branch
      %704 = sbr.rel (%p562) target = $region161
    $region160: #{predictive_lstm_forward.1} parent=134 // pred_region
      %s705 = sand.u32 512, 7
    $region161: #{predictive_lstm_forward.1} parent=134 // pred_fallthru
      _
  $region135: #{predictive_lstm_forward.1} parent=0 // pred_fallthru
    _
  // Predicated region
  $region136: #{predictive_lstm_forward.1} parent=0 // pred_check
    %p546 = pneg %p542
  $region137: #{predictive_lstm_forward.1} parent=0 // pred_check_branch
    %548 = sbr.rel (%p546) target = $region139
  $region138: #{predictive_lstm_forward.1} parent=0 // pred_region
    %s549 = sshll.u32 1, 512
    %s550 = ssub.s32 %s549, 1
    loop: start=0, step=1, limit=1
    $region140: #{predictive_lstm_forward.1} parent=138 // loop_pre_header
      _
    $region141: #{predictive_lstm_forward.1} parent=138 // loop_header
      %s552 = sphi 0, %s556
      %p553 = scmp.ge.s32.totalorder %s552, 1
      %s557 = sphi %s10, %s10
      %s558 = sphi [#allocation7], [#allocation7]
    $region142: #{predictive_lstm_forward.1} parent=138 // loop_header_branch
      %555 = sbr.rel (%p553) target = $region146
    $region143: #{predictive_lstm_forward.1} parent=138 // loop_body
      %v559 = vld [vmem:[%s557] sm:%s550]
      %560 = vst [vmem:[%s558] sm:%s550] %v559
    $region144: #{predictive_lstm_forward.1} parent=138 // loop_footer
      %s556 = sadd.s32 1, %s552
    $region145: #{predictive_lstm_forward.1} parent=138 // loop_footer_branch
      %551 = sbr.rel target = $region141
    $region146: #{predictive_lstm_forward.1} parent=138 // loop_exit
      _
  $region139: #{predictive_lstm_forward.1} parent=0 // pred_fallthru
    _
  // Predicated region
  $region162: #{predictive_lstm_forward.1} parent=0 // pred_check
    _
  $region163: #{predictive_lstm_forward.1} parent=0 // pred_check_branch
    %708 = sbr.rel (0) target = $region165
  $region164: #{predictive_lstm_forward.1} parent=0 // pred_region
    %709 = vsyncadd %s540, 8192
  $region165: #{predictive_lstm_forward.1} parent=0 // pred_fallthru
    _
  %s710 = scalar_lea.sflag [#allocation9], 4
  %p712 = scmp.lt.u32.totalorder 128, 8
  %p713 = pneg %p712
  // Predicated region
  $region166: #{predictive_lstm_forward.1} parent=0 // pred_check
    _
  $region167: #{predictive_lstm_forward.1} parent=0 // pred_check_branch
    %715 = sbr.rel (%p712) target = $region169
  $region168: #{predictive_lstm_forward.1} parent=0 // pred_region
    %s731 = sand.u32 128, 7
    %p732 = scmp.eq.s32.totalorder %s731, 0
    // Predicated region
    $region181: #{predictive_lstm_forward.1} parent=168 // pred_check
      %p733 = pneg %p732
    $region182: #{predictive_lstm_forward.1} parent=168 // pred_check_branch
      %735 = sbr.rel (%p733) target = $region184
    $region183: #{predictive_lstm_forward.1} parent=168 // pred_region
      loop: start=0, step=1, limit=1
      $region185: #{predictive_lstm_forward.1} parent=183 // loop_pre_header
        _
      $region186: #{predictive_lstm_forward.1} parent=183 // loop_header
        %s737 = sphi 0, %s741
        %p738 = scmp.ge.s32.totalorder %s737, 1
        %s742 = sphi %s11, %s11
        %s743 = sphi [#allocation8], [#allocation8]
      $region187: #{predictive_lstm_forward.1} parent=183 // loop_header_branch
        %740 = sbr.rel (%p738) target = $region191
      $region188: #{predictive_lstm_forward.1} parent=183 // loop_body
        %v744 = vld [vmem:[%s742] sm:$0xff]
        %745 = vst [vmem:[%s743] sm:$0xff] %v744
        %v746 = vld [vmem:[%s742 + $0x8] sm:$0xff]
        %747 = vst [vmem:[%s743 + $0x8] sm:$0xff] %v746
        %v748 = vld [vmem:[%s742 + $0x10] sm:$0xff]
        %749 = vst [vmem:[%s743 + $0x10] sm:$0xff] %v748
        %v750 = vld [vmem:[%s742 + $0x18] sm:$0xff]
        %751 = vst [vmem:[%s743 + $0x18] sm:$0xff] %v750
        %v752 = vld [vmem:[%s742 + $0x20] sm:$0xff]
        %753 = vst [vmem:[%s743 + $0x20] sm:$0xff] %v752
        %v754 = vld [vmem:[%s742 + $0x28] sm:$0xff]
        %755 = vst [vmem:[%s743 + $0x28] sm:$0xff] %v754
        %v756 = vld [vmem:[%s742 + $0x30] sm:$0xff]
        %757 = vst [vmem:[%s743 + $0x30] sm:$0xff] %v756
        %v758 = vld [vmem:[%s742 + $0x38] sm:$0xff]
        %759 = vst [vmem:[%s743 + $0x38] sm:$0xff] %v758
        %v760 = vld [vmem:[%s742 + $0x40] sm:$0xff]
        %761 = vst [vmem:[%s743 + $0x40] sm:$0xff] %v760
        %v762 = vld [vmem:[%s742 + $0x48] sm:$0xff]
        %763 = vst [vmem:[%s743 + $0x48] sm:$0xff] %v762
        %v764 = vld [vmem:[%s742 + $0x50] sm:$0xff]
        %765 = vst [vmem:[%s743 + $0x50] sm:$0xff] %v764
        %v766 = vld [vmem:[%s742 + $0x58] sm:$0xff]
        %767 = vst [vmem:[%s743 + $0x58] sm:$0xff] %v766
        %v768 = vld [vmem:[%s742 + $0x60] sm:$0xff]
        %769 = vst [vmem:[%s743 + $0x60] sm:$0xff] %v768
        %v770 = vld [vmem:[%s742 + $0x68] sm:$0xff]
        %771 = vst [vmem:[%s743 + $0x68] sm:$0xff] %v770
        %v772 = vld [vmem:[%s742 + $0x70] sm:$0xff]
        %773 = vst [vmem:[%s743 + $0x70] sm:$0xff] %v772
        %v774 = vld [vmem:[%s742 + $0x78] sm:$0xff]
        %775 = vst [vmem:[%s743 + $0x78] sm:$0xff] %v774
      $region189: #{predictive_lstm_forward.1} parent=183 // loop_footer
        %s741 = sadd.s32 1, %s737
      $region190: #{predictive_lstm_forward.1} parent=183 // loop_footer_branch
        %736 = sbr.rel target = $region186
      $region191: #{predictive_lstm_forward.1} parent=183 // loop_exit
        _
    $region184: #{predictive_lstm_forward.1} parent=168 // pred_fallthru
      _
    %p776 = pneg %p732
    // Predicated region
    $region192: #{predictive_lstm_forward.1} parent=168 // pred_check
      _
    $region193: #{predictive_lstm_forward.1} parent=168 // pred_check_branch
      %778 = sbr.rel (%p732) target = $region195
    $region194: #{predictive_lstm_forward.1} parent=168 // pred_region
      %s779 = sand.u32 128, 7
    $region195: #{predictive_lstm_forward.1} parent=168 // pred_fallthru
      _
  $region169: #{predictive_lstm_forward.1} parent=0 // pred_fallthru
    _
  // Predicated region
  $region170: #{predictive_lstm_forward.1} parent=0 // pred_check
    %p716 = pneg %p712
  $region171: #{predictive_lstm_forward.1} parent=0 // pred_check_branch
    %718 = sbr.rel (%p716) target = $region173
  $region172: #{predictive_lstm_forward.1} parent=0 // pred_region
    %s719 = sshll.u32 1, 128
    %s720 = ssub.s32 %s719, 1
    loop: start=0, step=1, limit=1
    $region174: #{predictive_lstm_forward.1} parent=172 // loop_pre_header
      _
    $region175: #{predictive_lstm_forward.1} parent=172 // loop_header
      %s722 = sphi 0, %s726
      %p723 = scmp.ge.s32.totalorder %s722, 1
      %s727 = sphi %s11, %s11
      %s728 = sphi [#allocation8], [#allocation8]
    $region176: #{predictive_lstm_forward.1} parent=172 // loop_header_branch
      %725 = sbr.rel (%p723) target = $region180
    $region177: #{predictive_lstm_forward.1} parent=172 // loop_body
      %v729 = vld [vmem:[%s727] sm:%s720]
      %730 = vst [vmem:[%s728] sm:%s720] %v729
    $region178: #{predictive_lstm_forward.1} parent=172 // loop_footer
      %s726 = sadd.s32 1, %s722
    $region179: #{predictive_lstm_forward.1} parent=172 // loop_footer_branch
      %721 = sbr.rel target = $region175
    $region180: #{predictive_lstm_forward.1} parent=172 // loop_exit
      _
  $region173: #{predictive_lstm_forward.1} parent=0 // pred_fallthru
    _
  // Predicated region
  $region196: #{predictive_lstm_forward.1} parent=0 // pred_check
    _
  $region197: #{predictive_lstm_forward.1} parent=0 // pred_check_branch
    %782 = sbr.rel (0) target = $region199
  $region198: #{predictive_lstm_forward.1} parent=0 // pred_region
    %783 = vsyncadd %s710, 2048
  $region199: #{predictive_lstm_forward.1} parent=0 // pred_fallthru
    _
  %v784 = vld [vmem:[%s0] sm:$0xff]
  %v785 = vld [vmem:[%s0 + $0x8] sm:$0xff]
  %v786 = vld [vmem:[%s0 + $0x10] sm:$0xff]
  %v787 = vld [vmem:[%s0 + $0x18] sm:$0xff]
  %v788 = vld [vmem:[%s0 + $0x20] sm:$0xff]
  %v789 = vld [vmem:[%s0 + $0x28] sm:$0xff]
  %v790 = vld [vmem:[%s0 + $0x30] sm:$0xff]
  %v791 = vld [vmem:[%s0 + $0x38] sm:$0xff]
  %v792 = vlaneseq
  %v793 = vand.u32 %v792, 127
  %794 = vset.pattern.permute.xlu0 0
  %795 = vperm.xlu0 %794, %v784
  %v796 = vpop.permute.xlu0 %795
  %797 = vset.pattern.permute.xlu0 0
  %798 = vperm.xlu0 %797, %v785
  %v799 = vpop.permute.xlu0 %798
  %800 = vset.pattern.permute.xlu0 0
  %801 = vperm.xlu0 %800, %v786
  %v802 = vpop.permute.xlu0 %801
  %803 = vset.pattern.permute.xlu0 0
  %804 = vperm.xlu0 %803, %v787
  %v805 = vpop.permute.xlu0 %804
  %806 = vset.pattern.permute.xlu0 0
  %807 = vperm.xlu0 %806, %v788
  %v808 = vpop.permute.xlu0 %807
  %809 = vset.pattern.permute.xlu0 0
  %810 = vperm.xlu0 %809, %v789
  %v811 = vpop.permute.xlu0 %810
  %812 = vset.pattern.permute.xlu0 0
  %813 = vperm.xlu0 %812, %v790
  %v814 = vpop.permute.xlu0 %813
  %815 = vset.pattern.permute.xlu0 0
  %816 = vperm.xlu0 %815, %v791
  %v817 = vpop.permute.xlu0 %816
  %vm818 = vcmp.eq.s32.totalorder %v793, %v796
  %vm819 = vcmp.eq.s32.totalorder %v793, %v799
  %vm820 = vcmp.eq.s32.totalorder %v793, %v802
  %vm821 = vcmp.eq.s32.totalorder %v793, %v805
  %vm822 = vcmp.eq.s32.totalorder %v793, %v808
  %vm823 = vcmp.eq.s32.totalorder %v793, %v811
  %vm824 = vcmp.eq.s32.totalorder %v793, %v814
  %vm825 = vcmp.eq.s32.totalorder %v793, %v817
  %v826 = vsel %vm818, 1, 0
  %v827 = vsel %vm819, 1, 0
  %v828 = vsel %vm820, 1, 0
  %v829 = vsel %vm821, 1, 0
  %v830 = vsel %vm822, 1, 0
  %v831 = vsel %vm823, 1, 0
  %v832 = vsel %vm824, 1, 0
  %v833 = vsel %vm825, 1, 0
  %v834 = vcvt.s32.f32 %v826
  %v835 = vcvt.s32.f32 %v827
  %v836 = vcvt.s32.f32 %v828
  %v837 = vcvt.s32.f32 %v829
  %v838 = vcvt.s32.f32 %v830
  %v839 = vcvt.s32.f32 %v831
  %v840 = vcvt.s32.f32 %v832
  %v841 = vcvt.s32.f32 %v833
  %v842 = vld [vmem:[%s1] sm:$0xff]
  %v843 = vld [vmem:[%s1 + $0x8] sm:$0xff]
  %v844 = vld [vmem:[%s1 + $0x10] sm:$0xff]
  %v845 = vld [vmem:[%s1 + $0x18] sm:$0xff]
  %v846 = vld [vmem:[%s1 + $0x20] sm:$0xff]
  %v847 = vld [vmem:[%s1 + $0x28] sm:$0xff]
  %v848 = vld [vmem:[%s1 + $0x30] sm:$0xff]
  %v849 = vld [vmem:[%s1 + $0x38] sm:$0xff]
  %v850 = vld [vmem:[%s1 + $0x40] sm:$0xff]
  %v851 = vld [vmem:[%s1 + $0x48] sm:$0xff]
  %v852 = vld [vmem:[%s1 + $0x50] sm:$0xff]
  %v853 = vld [vmem:[%s1 + $0x58] sm:$0xff]
  %v854 = vld [vmem:[%s1 + $0x60] sm:$0xff]
  %v855 = vld [vmem:[%s1 + $0x68] sm:$0xff]
  %v856 = vld [vmem:[%s1 + $0x70] sm:$0xff]
  %v857 = vld [vmem:[%s1 + $0x78] sm:$0xff]
  %v858 = vld [vmem:[%s1 + $0x80] sm:$0xff]
  %v859 = vld [vmem:[%s1 + $0x88] sm:$0xff]
  %v860 = vld [vmem:[%s1 + $0x90] sm:$0xff]
  %v861 = vld [vmem:[%s1 + $0x98] sm:$0xff]
  %v862 = vld [vmem:[%s1 + $0xa0] sm:$0xff]
  %v863 = vld [vmem:[%s1 + $0xa8] sm:$0xff]
  %v864 = vld [vmem:[%s1 + $0xb0] sm:$0xff]
  %v865 = vld [vmem:[%s1 + $0xb8] sm:$0xff]
  %v866 = vld [vmem:[%s1 + $0xc0] sm:$0xff]
  %v867 = vld [vmem:[%s1 + $0xc8] sm:$0xff]
  %v868 = vld [vmem:[%s1 + $0xd0] sm:$0xff]
  %v869 = vld [vmem:[%s1 + $0xd8] sm:$0xff]
  %v870 = vld [vmem:[%s1 + $0xe0] sm:$0xff]
  %v871 = vld [vmem:[%s1 + $0xe8] sm:$0xff]
  %v872 = vld [vmem:[%s1 + $0xf0] sm:$0xff]
  %v873 = vld [vmem:[%s1 + $0xf8] sm:$0xff]
  %v874 = vld [vmem:[%s1 + $0x100] sm:$0xff]
  %v875 = vld [vmem:[%s1 + $0x108] sm:$0xff]
  %v876 = vld [vmem:[%s1 + $0x110] sm:$0xff]
  %v877 = vld [vmem:[%s1 + $0x118] sm:$0xff]
  %v878 = vld [vmem:[%s1 + $0x120] sm:$0xff]
  %v879 = vld [vmem:[%s1 + $0x128] sm:$0xff]
  %v880 = vld [vmem:[%s1 + $0x130] sm:$0xff]
  %v881 = vld [vmem:[%s1 + $0x138] sm:$0xff]
  %v882 = vld [vmem:[%s1 + $0x140] sm:$0xff]
  %v883 = vld [vmem:[%s1 + $0x148] sm:$0xff]
  %v884 = vld [vmem:[%s1 + $0x150] sm:$0xff]
  %v885 = vld [vmem:[%s1 + $0x158] sm:$0xff]
  %v886 = vld [vmem:[%s1 + $0x160] sm:$0xff]
  %v887 = vld [vmem:[%s1 + $0x168] sm:$0xff]
  %v888 = vld [vmem:[%s1 + $0x170] sm:$0xff]
  %v889 = vld [vmem:[%s1 + $0x178] sm:$0xff]
  %v890 = vld [vmem:[%s1 + $0x180] sm:$0xff]
  %v891 = vld [vmem:[%s1 + $0x188] sm:$0xff]
  %v892 = vld [vmem:[%s1 + $0x190] sm:$0xff]
  %v893 = vld [vmem:[%s1 + $0x198] sm:$0xff]
  %v894 = vld [vmem:[%s1 + $0x1a0] sm:$0xff]
  %v895 = vld [vmem:[%s1 + $0x1a8] sm:$0xff]
  %v896 = vld [vmem:[%s1 + $0x1b0] sm:$0xff]
  %v897 = vld [vmem:[%s1 + $0x1b8] sm:$0xff]
  %v898 = vld [vmem:[%s1 + $0x1c0] sm:$0xff]
  %v899 = vld [vmem:[%s1 + $0x1c8] sm:$0xff]
  %v900 = vld [vmem:[%s1 + $0x1d0] sm:$0xff]
  %v901 = vld [vmem:[%s1 + $0x1d8] sm:$0xff]
  %v902 = vld [vmem:[%s1 + $0x1e0] sm:$0xff]
  %v903 = vld [vmem:[%s1 + $0x1e8] sm:$0xff]
  %v904 = vld [vmem:[%s1 + $0x1f0] sm:$0xff]
  %v905 = vld [vmem:[%s1 + $0x1f8] sm:$0xff]
  %v906 = vld [vmem:[%s2] sm:$0xf]
  %v908 = vlaneseq
  %v909 = vshrl.u32 %v908, 7
  %v910 = vsub.s32 0, %v909
  %v911 = vrot.slane %v906, %v910
  %v912 = vlaneseq
  %v913 = vshrl.u32 %v912, 7
  %v914 = vsub.s32 1, %v913
  %v915 = vrot.slane %v906, %v914
  %v916 = vlaneseq
  %v917 = vshrl.u32 %v916, 7
  %v918 = vsub.s32 2, %v917
  %v919 = vrot.slane %v906, %v918
  %v920 = vlaneseq
  %v921 = vshrl.u32 %v920, 7
  %v922 = vsub.s32 3, %v921
  %v923 = vrot.slane %v906, %v922
  %928 = vmatprep.subr.mxu0 %v903
  %929 = vmatpush1.msra.mxu0 %v902
  %930 = vmatprep.subr.mxu0 %v899
  %931 = vmatpush1.msra.mxu0 %v898
  %932 = vmatprep.subr.mxu0 %v895
  %933 = vmatpush1.msra.mxu0 %v894
  %934 = vmatprep.subr.mxu0 %v891
  %935 = vmatpush1.msra.mxu0 %v890
  %936 = vmatprep.subr.mxu0 %v887
  %937 = vmatpush1.msra.mxu0 %v886
  %938 = vmatprep.subr.mxu0 %v883
  %939 = vmatpush1.msra.mxu0 %v882
  %940 = vmatprep.subr.mxu0 %v879
  %941 = vmatpush1.msra.mxu0 %v878
  %942 = vmatprep.subr.mxu0 %v875
  %943 = vmatpush1.msra.mxu0 %v874
  %944 = vmatprep.subr.mxu0 %v871
  %945 = vmatpush1.msra.mxu0 %v870
  %946 = vmatprep.subr.mxu0 %v867
  %947 = vmatpush1.msra.mxu0 %v866
  %948 = vmatprep.subr.mxu0 %v863
  %949 = vmatpush1.msra.mxu0 %v862
  %950 = vmatprep.subr.mxu0 %v859
  %951 = vmatpush1.msra.mxu0 %v858
  %952 = vmatprep.subr.mxu0 %v855
  %953 = vmatpush1.msra.mxu0 %v854
  %954 = vmatprep.subr.mxu0 %v851
  %955 = vmatpush1.msra.mxu0 %v850
  %956 = vmatprep.subr.mxu0 %v847
  %957 = vmatpush1.msra.mxu0 %v846
  %958 = vmatprep.subr.mxu0 %v843
  %959 = vmatpush1.msra.mxu0 %v842
  %960 = vmatprep.subr.mxu0 0.0
  %961 = vmatpush2.msra.mxu0 0.0
  %962 = vmatprep.subr.mxu0 0.0
  %963 = vmatpush2.msra.mxu0 0.0
  %964 = vmatprep.subr.mxu0 0.0
  %965 = vmatpush2.msra.mxu0 0.0
  %966 = vmatprep.subr.mxu0 0.0
  %967 = vmatpush2.msra.mxu0 0.0
  %968 = vmatprep.subr.mxu0 0.0
  %969 = vmatpush2.msra.mxu0 0.0
  %970 = vmatprep.subr.mxu0 0.0
  %971 = vmatpush2.msra.mxu0 0.0
  %972 = vmatprep.subr.mxu0 0.0
  %973 = vmatpush2.msra.mxu0 0.0
  %974 = vmatprep.subr.mxu0 0.0
  %975 = vmatpush2.msra.mxu0 0.0
  %976 = vmatprep.subr.mxu0 0.0
  %977 = vmatpush2.msra.mxu0 0.0
  %978 = vmatprep.subr.mxu0 0.0
  %979 = vmatpush2.msra.mxu0 0.0
  %980 = vmatprep.subr.mxu0 0.0
  %981 = vmatpush2.msra.mxu0 0.0
  %982 = vmatprep.subr.mxu0 0.0
  %983 = vmatpush2.msra.mxu0 0.0
  %984 = vmatprep.subr.mxu0 0.0
  %985 = vmatpush2.msra.mxu0 0.0
  %986 = vmatprep.subr.mxu0 0.0
  %987 = vmatpush2.msra.mxu0 0.0
  %988 = vmatprep.subr.mxu0 0.0
  %989 = vmatpush2.msra.mxu0 0.0
  %990 = vmatprep.subr.mxu0 0.0
  %991 = vmatpush2.msra.mxu0 0.0
  %992 = vmatprep.mubr.f32.mxu0 0.0
  %993 = vmatmul.mubr.f32.gmra.mxu0 %v834
  %v994 = vpop.f32.mrf.mxu0
  %v995 = vadd.f32 %v911, %v994
  %v996 = vpop.f32.mrf.mxu0
  %v997 = vadd.f32 %v915, %v996
  %998 = vmatprep.mubr.f32.mxu0 0.0
  %999 = vmatmul.mubr.f32.gmra.mxu0 %v835
  %v1000 = vpop.f32.mrf.mxu0
  %v1001 = vadd.f32 %v911, %v1000
  %v1002 = vpop.f32.mrf.mxu0
  %v1003 = vadd.f32 %v915, %v1002
  %1004 = vmatprep.mubr.f32.mxu0 0.0
  %1005 = vmatmul.mubr.f32.gmra.mxu0 %v836
  %v1006 = vpop.f32.mrf.mxu0
  %v1007 = vadd.f32 %v911, %v1006
  %v1008 = vpop.f32.mrf.mxu0
  %v1009 = vadd.f32 %v915, %v1008
  %1010 = vmatprep.mubr.f32.mxu0 0.0
  %1011 = vmatmul.mubr.f32.gmra.mxu0 %v837
  %v1012 = vpop.f32.mrf.mxu0
  %v1013 = vadd.f32 %v911, %v1012
  %v1014 = vpop.f32.mrf.mxu0
  %v1015 = vadd.f32 %v915, %v1014
  %1016 = vmatprep.mubr.f32.mxu0 0.0
  %1017 = vmatmul.mubr.f32.gmra.mxu0 %v838
  %v1018 = vpop.f32.mrf.mxu0
  %v1019 = vadd.f32 %v911, %v1018
  %v1020 = vpop.f32.mrf.mxu0
  %v1021 = vadd.f32 %v915, %v1020
  %1022 = vmatprep.mubr.f32.mxu0 0.0
  %1023 = vmatmul.mubr.f32.gmra.mxu0 %v839
  %v1024 = vpop.f32.mrf.mxu0
  %v1025 = vadd.f32 %v911, %v1024
  %v1026 = vpop.f32.mrf.mxu0
  %v1027 = vadd.f32 %v915, %v1026
  %1028 = vmatprep.mubr.f32.mxu0 0.0
  %1029 = vmatmul.mubr.f32.gmra.mxu0 %v840
  %v1030 = vpop.f32.mrf.mxu0
  %v1031 = vadd.f32 %v911, %v1030
  %v1032 = vpop.f32.mrf.mxu0
  %v1033 = vadd.f32 %v915, %v1032
  %1034 = vmatprep.mubr.f32.mxu0 0.0
  %1035 = vmatmul.mubr.f32.gmra.mxu0 %v841
  %v1036 = vpop.f32.mrf.mxu0
  %v1037 = vadd.f32 %v911, %v1036
  %v1038 = vpop.f32.mrf.mxu0
  %v1039 = vadd.f32 %v915, %v1038
  %1040 = vdwg.mxu0
  %1041 = vmatprep.subr.mxu0 %v905
  %1042 = vmatpush1.msra.mxu0 %v904
  %1043 = vmatprep.subr.mxu0 %v901
  %1044 = vmatpush1.msra.mxu0 %v900
  %1045 = vmatprep.subr.mxu0 %v897
  %1046 = vmatpush1.msra.mxu0 %v896
  %1047 = vmatprep.subr.mxu0 %v893
  %1048 = vmatpush1.msra.mxu0 %v892
  %1049 = vmatprep.subr.mxu0 %v889
  %1050 = vmatpush1.msra.mxu0 %v888
  %1051 = vmatprep.subr.mxu0 %v885
  %1052 = vmatpush1.msra.mxu0 %v884
  %1053 = vmatprep.subr.mxu0 %v881
  %1054 = vmatpush1.msra.mxu0 %v880
  %1055 = vmatprep.subr.mxu0 %v877
  %1056 = vmatpush1.msra.mxu0 %v876
  %1057 = vmatprep.subr.mxu0 %v873
  %1058 = vmatpush1.msra.mxu0 %v872
  %1059 = vmatprep.subr.mxu0 %v869
  %1060 = vmatpush1.msra.mxu0 %v868
  %1061 = vmatprep.subr.mxu0 %v865
  %1062 = vmatpush1.msra.mxu0 %v864
  %1063 = vmatprep.subr.mxu0 %v861
  %1064 = vmatpush1.msra.mxu0 %v860
  %1065 = vmatprep.subr.mxu0 %v857
  %1066 = vmatpush1.msra.mxu0 %v856
  %1067 = vmatprep.subr.mxu0 %v853
  %1068 = vmatpush1.msra.mxu0 %v852
  %1069 = vmatprep.subr.mxu0 %v849
  %1070 = vmatpush1.msra.mxu0 %v848
  %1071 = vmatprep.subr.mxu0 %v845
  %1072 = vmatpush1.msra.mxu0 %v844
  %1073 = vmatprep.subr.mxu0 0.0
  %1074 = vmatpush2.msra.mxu0 0.0
  %1075 = vmatprep.subr.mxu0 0.0
  %1076 = vmatpush2.msra.mxu0 0.0
  %1077 = vmatprep.subr.mxu0 0.0
  %1078 = vmatpush2.msra.mxu0 0.0
  %1079 = vmatprep.subr.mxu0 0.0
  %1080 = vmatpush2.msra.mxu0 0.0
  %1081 = vmatprep.subr.mxu0 0.0
  %1082 = vmatpush2.msra.mxu0 0.0
  %1083 = vmatprep.subr.mxu0 0.0
  %1084 = vmatpush2.msra.mxu0 0.0
  %1085 = vmatprep.subr.mxu0 0.0
  %1086 = vmatpush2.msra.mxu0 0.0
  %1087 = vmatprep.subr.mxu0 0.0
  %1088 = vmatpush2.msra.mxu0 0.0
  %1089 = vmatprep.subr.mxu0 0.0
  %1090 = vmatpush2.msra.mxu0 0.0
  %1091 = vmatprep.subr.mxu0 0.0
  %1092 = vmatpush2.msra.mxu0 0.0
  %1093 = vmatprep.subr.mxu0 0.0
  %1094 = vmatpush2.msra.mxu0 0.0
  %1095 = vmatprep.subr.mxu0 0.0
  %1096 = vmatpush2.msra.mxu0 0.0
  %1097 = vmatprep.subr.mxu0 0.0
  %1098 = vmatpush2.msra.mxu0 0.0
  %1099 = vmatprep.subr.mxu0 0.0
  %1100 = vmatpush2.msra.mxu0 0.0
  %1101 = vmatprep.subr.mxu0 0.0
  %1102 = vmatpush2.msra.mxu0 0.0
  %1103 = vmatprep.subr.mxu0 0.0
  %1104 = vmatpush2.msra.mxu0 0.0
  %1105 = vmatprep.mubr.f32.mxu0 0.0
  %1106 = vmatmul.mubr.f32.gmra.mxu0 %v834
  %v1107 = vpop.f32.mrf.mxu0
  %v1108 = vadd.f32 %v919, %v1107
  %v1109 = vpop.f32.mrf.mxu0
  %v1110 = vadd.f32 %v923, %v1109
  %1111 = vmatprep.mubr.f32.mxu0 0.0
  %1112 = vmatmul.mubr.f32.gmra.mxu0 %v835
  %v1113 = vpop.f32.mrf.mxu0
  %v1114 = vadd.f32 %v919, %v1113
  %v1115 = vpop.f32.mrf.mxu0
  %v1116 = vadd.f32 %v923, %v1115
  %1117 = vmatprep.mubr.f32.mxu0 0.0
  %1118 = vmatmul.mubr.f32.gmra.mxu0 %v836
  %v1119 = vpop.f32.mrf.mxu0
  %v1120 = vadd.f32 %v919, %v1119
  %v1121 = vpop.f32.mrf.mxu0
  %v1122 = vadd.f32 %v923, %v1121
  %1123 = vmatprep.mubr.f32.mxu0 0.0
  %1124 = vmatmul.mubr.f32.gmra.mxu0 %v837
  %v1125 = vpop.f32.mrf.mxu0
  %v1126 = vadd.f32 %v919, %v1125
  %v1127 = vpop.f32.mrf.mxu0
  %v1128 = vadd.f32 %v923, %v1127
  %1129 = vmatprep.mubr.f32.mxu0 0.0
  %1130 = vmatmul.mubr.f32.gmra.mxu0 %v838
  %v1131 = vpop.f32.mrf.mxu0
  %v1132 = vadd.f32 %v919, %v1131
  %v1133 = vpop.f32.mrf.mxu0
  %v1134 = vadd.f32 %v923, %v1133
  %1135 = vmatprep.mubr.f32.mxu0 0.0
  %1136 = vmatmul.mubr.f32.gmra.mxu0 %v839
  %v1137 = vpop.f32.mrf.mxu0
  %v1138 = vadd.f32 %v919, %v1137
  %v1139 = vpop.f32.mrf.mxu0
  %v1140 = vadd.f32 %v923, %v1139
  %1141 = vmatprep.mubr.f32.mxu0 0.0
  %1142 = vmatmul.mubr.f32.gmra.mxu0 %v840
  %v1143 = vpop.f32.mrf.mxu0
  %v1144 = vadd.f32 %v919, %v1143
  %v1145 = vpop.f32.mrf.mxu0
  %v1146 = vadd.f32 %v923, %v1145
  %1147 = vmatprep.mubr.f32.mxu0 0.0
  %1148 = vmatmul.mubr.f32.gmra.mxu0 %v841
  %v1149 = vpop.f32.mrf.mxu0
  %v1150 = vadd.f32 %v919, %v1149
  %v1151 = vpop.f32.mrf.mxu0
  %v1152 = vadd.f32 %v923, %v1151
  %1153 = vdwg.mxu0
  %1154 = vst [vmem:[#allocation3] sm:$0xff] %v995
  %1155 = vst [vmem:[#allocation3 + $0x8] sm:$0xff] %v997
  %1156 = vst [vmem:[#allocation3 + $0x10] sm:$0xff] %v1108
  %1157 = vst [vmem:[#allocation3 + $0x18] sm:$0xff] %v1110
  %1158 = vst [vmem:[#allocation3 + $0x20] sm:$0xff] %v1001
  %1159 = vst [vmem:[#allocation3 + $0x28] sm:$0xff] %v1003
  %1160 = vst [vmem:[#allocation3 + $0x30] sm:$0xff] %v1114
  %1161 = vst [vmem:[#allocation3 + $0x38] sm:$0xff] %v1116
  %1162 = vst [vmem:[#allocation3 + $0x40] sm:$0xff] %v1007
  %1163 = vst [vmem:[#allocation3 + $0x48] sm:$0xff] %v1009
  %1164 = vst [vmem:[#allocation3 + $0x50] sm:$0xff] %v1120
  %1165 = vst [vmem:[#allocation3 + $0x58] sm:$0xff] %v1122
  %1166 = vst [vmem:[#allocation3 + $0x60] sm:$0xff] %v1013
  %1167 = vst [vmem:[#allocation3 + $0x68] sm:$0xff] %v1015
  %1168 = vst [vmem:[#allocation3 + $0x70] sm:$0xff] %v1126
  %1169 = vst [vmem:[#allocation3 + $0x78] sm:$0xff] %v1128
  %1170 = vst [vmem:[#allocation3 + $0x80] sm:$0xff] %v1019
  %1171 = vst [vmem:[#allocation3 + $0x88] sm:$0xff] %v1021
  %1172 = vst [vmem:[#allocation3 + $0x90] sm:$0xff] %v1132
  %1173 = vst [vmem:[#allocation3 + $0x98] sm:$0xff] %v1134
  %1174 = vst [vmem:[#allocation3 + $0xa0] sm:$0xff] %v1025
  %1175 = vst [vmem:[#allocation3 + $0xa8] sm:$0xff] %v1027
  %1176 = vst [vmem:[#allocation3 + $0xb0] sm:$0xff] %v1138
  %1177 = vst [vmem:[#allocation3 + $0xb8] sm:$0xff] %v1140
  %1178 = vst [vmem:[#allocation3 + $0xc0] sm:$0xff] %v1031
  %1179 = vst [vmem:[#allocation3 + $0xc8] sm:$0xff] %v1033
  %1180 = vst [vmem:[#allocation3 + $0xd0] sm:$0xff] %v1144
  %1181 = vst [vmem:[#allocation3 + $0xd8] sm:$0xff] %v1146
  %1182 = vst [vmem:[#allocation3 + $0xe0] sm:$0xff] %v1037
  %1183 = vst [vmem:[#allocation3 + $0xe8] sm:$0xff] %v1039
  %1184 = vst [vmem:[#allocation3 + $0xf0] sm:$0xff] %v1150
  %1185 = vst [vmem:[#allocation3 + $0xf8] sm:$0xff] %v1152
  %v1186 = vld [vmem:[#allocation3] sm:$0xff]
  %v1187 = vld [vmem:[#allocation3 + $0x8] sm:$0xff]
  %v1188 = vld [vmem:[#allocation3 + $0x10] sm:$0xff]
  %v1189 = vld [vmem:[#allocation3 + $0x18] sm:$0xff]
  %v1190 = vld [vmem:[%s3] sm:$0xff]
  %v1191 = vld [vmem:[%s3 + $0x8] sm:$0xff]
  %v1192 = vld [vmem:[%s3 + $0x10] sm:$0xff]
  %v1193 = vld [vmem:[%s3 + $0x18] sm:$0xff]
  %v1194 = vld [vmem:[%s3 + $0x20] sm:$0xff]
  %v1195 = vld [vmem:[%s3 + $0x28] sm:$0xff]
  %v1196 = vld [vmem:[%s3 + $0x30] sm:$0xff]
  %v1197 = vld [vmem:[%s3 + $0x38] sm:$0xff]
  %v1198 = vld [vmem:[%s3 + $0x40] sm:$0xff]
  %v1199 = vld [vmem:[%s3 + $0x48] sm:$0xff]
  %v1200 = vld [vmem:[%s3 + $0x50] sm:$0xff]
  %v1201 = vld [vmem:[%s3 + $0x58] sm:$0xff]
  %v1202 = vld [vmem:[%s3 + $0x60] sm:$0xff]
  %v1203 = vld [vmem:[%s3 + $0x68] sm:$0xff]
  %v1204 = vld [vmem:[%s3 + $0x70] sm:$0xff]
  %v1205 = vld [vmem:[%s3 + $0x78] sm:$0xff]
  %v1206 = vld [vmem:[%s3 + $0x80] sm:$0xff]
  %v1207 = vld [vmem:[%s3 + $0x88] sm:$0xff]
  %v1208 = vld [vmem:[%s3 + $0x90] sm:$0xff]
  %v1209 = vld [vmem:[%s3 + $0x98] sm:$0xff]
  %v1210 = vld [vmem:[%s3 + $0xa0] sm:$0xff]
  %v1211 = vld [vmem:[%s3 + $0xa8] sm:$0xff]
  %v1212 = vld [vmem:[%s3 + $0xb0] sm:$0xff]
  %v1213 = vld [vmem:[%s3 + $0xb8] sm:$0xff]
  %v1214 = vld [vmem:[%s3 + $0xc0] sm:$0xff]
  %v1215 = vld [vmem:[%s3 + $0xc8] sm:$0xff]
  %v1216 = vld [vmem:[%s3 + $0xd0] sm:$0xff]
  %v1217 = vld [vmem:[%s3 + $0xd8] sm:$0xff]
  %v1218 = vld [vmem:[%s3 + $0xe0] sm:$0xff]
  %v1219 = vld [vmem:[%s3 + $0xe8] sm:$0xff]
  %v1220 = vld [vmem:[%s3 + $0xf0] sm:$0xff]
  %v1221 = vld [vmem:[%s3 + $0xf8] sm:$0xff]
  %v1222 = vld [vmem:[%s3 + $0x100] sm:$0xff]
  %v1223 = vld [vmem:[%s3 + $0x108] sm:$0xff]
  %v1224 = vld [vmem:[%s3 + $0x110] sm:$0xff]
  %v1225 = vld [vmem:[%s3 + $0x118] sm:$0xff]
  %v1226 = vld [vmem:[%s3 + $0x120] sm:$0xff]
  %v1227 = vld [vmem:[%s3 + $0x128] sm:$0xff]
  %v1228 = vld [vmem:[%s3 + $0x130] sm:$0xff]
  %v1229 = vld [vmem:[%s3 + $0x138] sm:$0xff]
  %v1230 = vld [vmem:[%s3 + $0x140] sm:$0xff]
  %v1231 = vld [vmem:[%s3 + $0x148] sm:$0xff]
  %v1232 = vld [vmem:[%s3 + $0x150] sm:$0xff]
  %v1233 = vld [vmem:[%s3 + $0x158] sm:$0xff]
  %v1234 = vld [vmem:[%s3 + $0x160] sm:$0xff]
  %v1235 = vld [vmem:[%s3 + $0x168] sm:$0xff]
  %v1236 = vld [vmem:[%s3 + $0x170] sm:$0xff]
  %v1237 = vld [vmem:[%s3 + $0x178] sm:$0xff]
  %v1238 = vld [vmem:[%s3 + $0x180] sm:$0xff]
  %v1239 = vld [vmem:[%s3 + $0x188] sm:$0xff]
  %v1240 = vld [vmem:[%s3 + $0x190] sm:$0xff]
  %v1241 = vld [vmem:[%s3 + $0x198] sm:$0xff]
  %v1242 = vld [vmem:[%s3 + $0x1a0] sm:$0xff]
  %v1243 = vld [vmem:[%s3 + $0x1a8] sm:$0xff]
  %v1244 = vld [vmem:[%s3 + $0x1b0] sm:$0xff]
  %v1245 = vld [vmem:[%s3 + $0x1b8] sm:$0xff]
  %v1246 = vld [vmem:[%s3 + $0x1c0] sm:$0xff]
  %v1247 = vld [vmem:[%s3 + $0x1c8] sm:$0xff]
  %v1248 = vld [vmem:[%s3 + $0x1d0] sm:$0xff]
  %v1249 = vld [vmem:[%s3 + $0x1d8] sm:$0xff]
  %v1250 = vld [vmem:[%s3 + $0x1e0] sm:$0xff]
  %v1251 = vld [vmem:[%s3 + $0x1e8] sm:$0xff]
  %v1252 = vld [vmem:[%s3 + $0x1f0] sm:$0xff]
  %v1253 = vld [vmem:[%s3 + $0x1f8] sm:$0xff]
  %1254 = vmatprep.subr.mxu0 %v1251
  %1255 = vmatpush1.msra.mxu0 %v1250
  %1256 = vmatprep.subr.mxu0 %v1247
  %1257 = vmatpush1.msra.mxu0 %v1246
  %1258 = vmatprep.subr.mxu0 %v1243
  %1259 = vmatpush1.msra.mxu0 %v1242
  %1260 = vmatprep.subr.mxu0 %v1239
  %1261 = vmatpush1.msra.mxu0 %v1238
  %1262 = vmatprep.subr.mxu0 %v1235
  %1263 = vmatpush1.msra.mxu0 %v1234
  %1264 = vmatprep.subr.mxu0 %v1231
  %1265 = vmatpush1.msra.mxu0 %v1230
  %1266 = vmatprep.subr.mxu0 %v1227
  %1267 = vmatpush1.msra.mxu0 %v1226
  %1268 = vmatprep.subr.mxu0 %v1223
  %1269 = vmatpush1.msra.mxu0 %v1222
  %1270 = vmatprep.subr.mxu0 %v1219
  %1271 = vmatpush1.msra.mxu0 %v1218
  %1272 = vmatprep.subr.mxu0 %v1215
  %1273 = vmatpush1.msra.mxu0 %v1214
  %1274 = vmatprep.subr.mxu0 %v1211
  %1275 = vmatpush1.msra.mxu0 %v1210
  %1276 = vmatprep.subr.mxu0 %v1207
  %1277 = vmatpush1.msra.mxu0 %v1206
  %1278 = vmatprep.subr.mxu0 %v1203
  %1279 = vmatpush1.msra.mxu0 %v1202
  %1280 = vmatprep.subr.mxu0 %v1199
  %1281 = vmatpush1.msra.mxu0 %v1198
  %1282 = vmatprep.subr.mxu0 %v1195
  %1283 = vmatpush1.msra.mxu0 %v1194
  %1284 = vmatprep.subr.mxu0 %v1191
  %1285 = vmatpush1.msra.mxu0 %v1190
  %1286 = vmatprep.subr.mxu0 0.0
  %1287 = vmatpush2.msra.mxu0 0.0
  %1288 = vmatprep.subr.mxu0 0.0
  %1289 = vmatpush2.msra.mxu0 0.0
  %1290 = vmatprep.subr.mxu0 0.0
  %1291 = vmatpush2.msra.mxu0 0.0
  %1292 = vmatprep.subr.mxu0 0.0
  %1293 = vmatpush2.msra.mxu0 0.0
  %1294 = vmatprep.subr.mxu0 0.0
  %1295 = vmatpush2.msra.mxu0 0.0
  %1296 = vmatprep.subr.mxu0 0.0
  %1297 = vmatpush2.msra.mxu0 0.0
  %1298 = vmatprep.subr.mxu0 0.0
  %1299 = vmatpush2.msra.mxu0 0.0
  %1300 = vmatprep.subr.mxu0 0.0
  %1301 = vmatpush2.msra.mxu0 0.0
  %1302 = vmatprep.subr.mxu0 0.0
  %1303 = vmatpush2.msra.mxu0 0.0
  %1304 = vmatprep.subr.mxu0 0.0
  %1305 = vmatpush2.msra.mxu0 0.0
  %1306 = vmatprep.subr.mxu0 0.0
  %1307 = vmatpush2.msra.mxu0 0.0
  %1308 = vmatprep.subr.mxu0 0.0
  %1309 = vmatpush2.msra.mxu0 0.0
  %1310 = vmatprep.subr.mxu0 0.0
  %1311 = vmatpush2.msra.mxu0 0.0
  %1312 = vmatprep.subr.mxu0 0.0
  %1313 = vmatpush2.msra.mxu0 0.0
  %1314 = vmatprep.subr.mxu0 0.0
  %1315 = vmatpush2.msra.mxu0 0.0
  %1316 = vmatprep.subr.mxu0 0.0
  %1317 = vmatpush2.msra.mxu0 0.0
  %1318 = vmatprep.mubr.f32.mxu0 0.0
  %1319 = vmatmul.mubr.f32.gmra.mxu0 0.0
  %v1320 = vpop.f32.mrf.mxu0
  %v1321 = vadd.f32 0.0, %v1320
  %v1322 = vpop.f32.mrf.mxu0
  %v1323 = vadd.f32 0.0, %v1322
  %1324 = vdwg.mxu0
  %1325 = vmatprep.subr.mxu0 %v1253
  %1326 = vmatpush1.msra.mxu0 %v1252
  %1327 = vmatprep.subr.mxu0 %v1249
  %1328 = vmatpush1.msra.mxu0 %v1248
  %1329 = vmatprep.subr.mxu0 %v1245
  %1330 = vmatpush1.msra.mxu0 %v1244
  %1331 = vmatprep.subr.mxu0 %v1241
  %1332 = vmatpush1.msra.mxu0 %v1240
  %1333 = vmatprep.subr.mxu0 %v1237
  %1334 = vmatpush1.msra.mxu0 %v1236
  %1335 = vmatprep.subr.mxu0 %v1233
  %1336 = vmatpush1.msra.mxu0 %v1232
  %1337 = vmatprep.subr.mxu0 %v1229
  %1338 = vmatpush1.msra.mxu0 %v1228
  %1339 = vmatprep.subr.mxu0 %v1225
  %1340 = vmatpush1.msra.mxu0 %v1224
  %1341 = vmatprep.subr.mxu0 %v1221
  %1342 = vmatpush1.msra.mxu0 %v1220
  %1343 = vmatprep.subr.mxu0 %v1217
  %1344 = vmatpush1.msra.mxu0 %v1216
  %1345 = vmatprep.subr.mxu0 %v1213
  %1346 = vmatpush1.msra.mxu0 %v1212
  %1347 = vmatprep.subr.mxu0 %v1209
  %1348 = vmatpush1.msra.mxu0 %v1208
  %1349 = vmatprep.subr.mxu0 %v1205
  %1350 = vmatpush1.msra.mxu0 %v1204
  %1351 = vmatprep.subr.mxu0 %v1201
  %1352 = vmatpush1.msra.mxu0 %v1200
  %1353 = vmatprep.subr.mxu0 %v1197
  %1354 = vmatpush1.msra.mxu0 %v1196
  %1355 = vmatprep.subr.mxu0 %v1193
  %1356 = vmatpush1.msra.mxu0 %v1192
  %1357 = vmatprep.subr.mxu0 0.0
  %1358 = vmatpush2.msra.mxu0 0.0
  %1359 = vmatprep.subr.mxu0 0.0
  %1360 = vmatpush2.msra.mxu0 0.0
  %1361 = vmatprep.subr.mxu0 0.0
  %1362 = vmatpush2.msra.mxu0 0.0
  %1363 = vmatprep.subr.mxu0 0.0
  %1364 = vmatpush2.msra.mxu0 0.0
  %1365 = vmatprep.subr.mxu0 0.0
  %1366 = vmatpush2.msra.mxu0 0.0
  %1367 = vmatprep.subr.mxu0 0.0
  %1368 = vmatpush2.msra.mxu0 0.0
  %1369 = vmatprep.subr.mxu0 0.0
  %1370 = vmatpush2.msra.mxu0 0.0
  %1371 = vmatprep.subr.mxu0 0.0
  %1372 = vmatpush2.msra.mxu0 0.0
  %1373 = vmatprep.subr.mxu0 0.0
  %1374 = vmatpush2.msra.mxu0 0.0
  %1375 = vmatprep.subr.mxu0 0.0
  %1376 = vmatpush2.msra.mxu0 0.0
  %1377 = vmatprep.subr.mxu0 0.0
  %1378 = vmatpush2.msra.mxu0 0.0
  %1379 = vmatprep.subr.mxu0 0.0
  %1380 = vmatpush2.msra.mxu0 0.0
  %1381 = vmatprep.subr.mxu0 0.0
  %1382 = vmatpush2.msra.mxu0 0.0
  %1383 = vmatprep.subr.mxu0 0.0
  %1384 = vmatpush2.msra.mxu0 0.0
  %1385 = vmatprep.subr.mxu0 0.0
  %1386 = vmatpush2.msra.mxu0 0.0
  %1387 = vmatprep.subr.mxu0 0.0
  %1388 = vmatpush2.msra.mxu0 0.0
  %1389 = vmatprep.mubr.f32.mxu0 0.0
  %1390 = vmatmul.mubr.f32.gmra.mxu0 0.0
  %v1391 = vpop.f32.mrf.mxu0
  %v1392 = vadd.f32 0.0, %v1391
  %v1393 = vpop.f32.mrf.mxu0
  %v1394 = vadd.f32 0.0, %v1393
  %1395 = vdwg.mxu0
  %v1396 = vadd.f32 %v1186, %v1321
  %v1397 = vadd.f32 %v1187, %v1323
  %v1398 = vadd.f32 %v1188, %v1392
  %v1399 = vadd.f32 %v1189, %v1394
  %v1400 = vxor.u32 %v1396, 2147483648
  %v1401 = vxor.u32 %v1397, 2147483648
  %v1402 = vxor.u32 %v1398, 2147483648
  %v1403 = vmul.f32 %v1400, 1.442695
  %v1404 = vpow.pop %v1403
  %v1405 = vmul.f32 %v1401, 1.442695
  %v1406 = vpow.pop %v1405
  %v1407 = vmul.f32 %v1402, 1.442695
  %v1408 = vpow.pop %v1407
  %v1409 = vadd.f32 %v1404, 1.0
  %v1410 = vadd.f32 %v1406, 1.0
  %v1411 = vadd.f32 %v1408, 1.0
  %v1412 = vrcp.pop %v1409
  %v1413 = vmul.f32 1.0, %v1412
  %v1414 = vrcp.pop %v1410
  %v1415 = vmul.f32 1.0, %v1414
  %v1416 = vrcp.pop %v1411
  %v1417 = vmul.f32 1.0, %v1416
  %v1418 = vtanh.pop %v1399
  %v1419 = vmul.f32 %v1415, 0.0
  %v1420 = vmul.f32 %v1413, %v1418
  %v1421 = vadd.f32 %v1419, %v1420
  %v1422 = vtanh.pop %v1421
  %v1423 = vmul.f32 %v1417, %v1422
  %1424 = vst [vmem:[#allocation2] sm:$0xff] %v1423
  %v1425 = vld [vmem:[#allocation3 + $0x20] sm:$0xff]
  %v1426 = vld [vmem:[#allocation3 + $0x28] sm:$0xff]
  %v1427 = vld [vmem:[#allocation3 + $0x30] sm:$0xff]
  %v1428 = vld [vmem:[#allocation3 + $0x38] sm:$0xff]
  %v1429 = vld [vmem:[%s3] sm:$0xff]
  %v1430 = vld [vmem:[%s3 + $0x8] sm:$0xff]
  %v1431 = vld [vmem:[%s3 + $0x10] sm:$0xff]
  %v1432 = vld [vmem:[%s3 + $0x18] sm:$0xff]
  %v1433 = vld [vmem:[%s3 + $0x20] sm:$0xff]
  %v1434 = vld [vmem:[%s3 + $0x28] sm:$0xff]
  %v1435 = vld [vmem:[%s3 + $0x30] sm:$0xff]
  %v1436 = vld [vmem:[%s3 + $0x38] sm:$0xff]
  %v1437 = vld [vmem:[%s3 + $0x40] sm:$0xff]
  %v1438 = vld [vmem:[%s3 + $0x48] sm:$0xff]
  %v1439 = vld [vmem:[%s3 + $0x50] sm:$0xff]
  %v1440 = vld [vmem:[%s3 + $0x58] sm:$0xff]
  %v1441 = vld [vmem:[%s3 + $0x60] sm:$0xff]
  %v1442 = vld [vmem:[%s3 + $0x68] sm:$0xff]
  %v1443 = vld [vmem:[%s3 + $0x70] sm:$0xff]
  %v1444 = vld [vmem:[%s3 + $0x78] sm:$0xff]
  %v1445 = vld [vmem:[%s3 + $0x80] sm:$0xff]
  %v1446 = vld [vmem:[%s3 + $0x88] sm:$0xff]
  %v1447 = vld [vmem:[%s3 + $0x90] sm:$0xff]
  %v1448 = vld [vmem:[%s3 + $0x98] sm:$0xff]
  %v1449 = vld [vmem:[%s3 + $0xa0] sm:$0xff]
  %v1450 = vld [vmem:[%s3 + $0xa8] sm:$0xff]
  %v1451 = vld [vmem:[%s3 + $0xb0] sm:$0xff]
  %v1452 = vld [vmem:[%s3 + $0xb8] sm:$0xff]
  %v1453 = vld [vmem:[%s3 + $0xc0] sm:$0xff]
  %v1454 = vld [vmem:[%s3 + $0xc8] sm:$0xff]
  %v1455 = vld [vmem:[%s3 + $0xd0] sm:$0xff]
  %v1456 = vld [vmem:[%s3 + $0xd8] sm:$0xff]
  %v1457 = vld [vmem:[%s3 + $0xe0] sm:$0xff]
  %v1458 = vld [vmem:[%s3 + $0xe8] sm:$0xff]
  %v1459 = vld [vmem:[%s3 + $0xf0] sm:$0xff]
  %v1460 = vld [vmem:[%s3 + $0xf8] sm:$0xff]
  %v1461 = vld [vmem:[%s3 + $0x100] sm:$0xff]
  %v1462 = vld [vmem:[%s3 + $0x108] sm:$0xff]
  %v1463 = vld [vmem:[%s3 + $0x110] sm:$0xff]
  %v1464 = vld [vmem:[%s3 + $0x118] sm:$0xff]
  %v1465 = vld [vmem:[%s3 + $0x120] sm:$0xff]
  %v1466 = vld [vmem:[%s3 + $0x128] sm:$0xff]
  %v1467 = vld [vmem:[%s3 + $0x130] sm:$0xff]
  %v1468 = vld [vmem:[%s3 + $0x138] sm:$0xff]
  %v1469 = vld [vmem:[%s3 + $0x140] sm:$0xff]
  %v1470 = vld [vmem:[%s3 + $0x148] sm:$0xff]
  %v1471 = vld [vmem:[%s3 + $0x150] sm:$0xff]
  %v1472 = vld [vmem:[%s3 + $0x158] sm:$0xff]
  %v1473 = vld [vmem:[%s3 + $0x160] sm:$0xff]
  %v1474 = vld [vmem:[%s3 + $0x168] sm:$0xff]
  %v1475 = vld [vmem:[%s3 + $0x170] sm:$0xff]
  %v1476 = vld [vmem:[%s3 + $0x178] sm:$0xff]
  %v1477 = vld [vmem:[%s3 + $0x180] sm:$0xff]
  %v1478 = vld [vmem:[%s3 + $0x188] sm:$0xff]
  %v1479 = vld [vmem:[%s3 + $0x190] sm:$0xff]
  %v1480 = vld [vmem:[%s3 + $0x198] sm:$0xff]
  %v1481 = vld [vmem:[%s3 + $0x1a0] sm:$0xff]
  %v1482 = vld [vmem:[%s3 + $0x1a8] sm:$0xff]
  %v1483 = vld [vmem:[%s3 + $0x1b0] sm:$0xff]
  %v1484 = vld [vmem:[%s3 + $0x1b8] sm:$0xff]
  %v1485 = vld [vmem:[%s3 + $0x1c0] sm:$0xff]
  %v1486 = vld [vmem:[%s3 + $0x1c8] sm:$0xff]
  %v1487 = vld [vmem:[%s3 + $0x1d0] sm:$0xff]
  %v1488 = vld [vmem:[%s3 + $0x1d8] sm:$0xff]
  %v1489 = vld [vmem:[%s3 + $0x1e0] sm:$0xff]
  %v1490 = vld [vmem:[%s3 + $0x1e8] sm:$0xff]
  %v1491 = vld [vmem:[%s3 + $0x1f0] sm:$0xff]
  %v1492 = vld [vmem:[%s3 + $0x1f8] sm:$0xff]
  %1493 = vmatprep.subr.mxu0 %v1490
  %1494 = vmatpush1.msra.mxu0 %v1489
  %1495 = vmatprep.subr.mxu0 %v1486
  %1496 = vmatpush1.msra.mxu0 %v1485
  %1497 = vmatprep.subr.mxu0 %v1482
  %1498 = vmatpush1.msra.mxu0 %v1481
  %1499 = vmatprep.subr.mxu0 %v1478
  %1500 = vmatpush1.msra.mxu0 %v1477
  %1501 = vmatprep.subr.mxu0 %v1474
  %1502 = vmatpush1.msra.mxu0 %v1473
  %1503 = vmatprep.subr.mxu0 %v1470
  %1504 = vmatpush1.msra.mxu0 %v1469
  %1505 = vmatprep.subr.mxu0 %v1466
  %1506 = vmatpush1.msra.mxu0 %v1465
  %1507 = vmatprep.subr.mxu0 %v1462
  %1508 = vmatpush1.msra.mxu0 %v1461
  %1509 = vmatprep.subr.mxu0 %v1458
  %1510 = vmatpush1.msra.mxu0 %v1457
  %1511 = vmatprep.subr.mxu0 %v1454
  %1512 = vmatpush1.msra.mxu0 %v1453
  %1513 = vmatprep.subr.mxu0 %v1450
  %1514 = vmatpush1.msra.mxu0 %v1449
  %1515 = vmatprep.subr.mxu0 %v1446
  %1516 = vmatpush1.msra.mxu0 %v1445
  %1517 = vmatprep.subr.mxu0 %v1442
  %1518 = vmatpush1.msra.mxu0 %v1441
  %1519 = vmatprep.subr.mxu0 %v1438
  %1520 = vmatpush1.msra.mxu0 %v1437
  %1521 = vmatprep.subr.mxu0 %v1434
  %1522 = vmatpush1.msra.mxu0 %v1433
  %1523 = vmatprep.subr.mxu0 %v1430
  %1524 = vmatpush1.msra.mxu0 %v1429
  %1525 = vmatprep.subr.mxu0 0.0
  %1526 = vmatpush2.msra.mxu0 0.0
  %1527 = vmatprep.subr.mxu0 0.0
  %1528 = vmatpush2.msra.mxu0 0.0
  %1529 = vmatprep.subr.mxu0 0.0
  %1530 = vmatpush2.msra.mxu0 0.0
  %1531 = vmatprep.subr.mxu0 0.0
  %1532 = vmatpush2.msra.mxu0 0.0
  %1533 = vmatprep.subr.mxu0 0.0
  %1534 = vmatpush2.msra.mxu0 0.0
  %1535 = vmatprep.subr.mxu0 0.0
  %1536 = vmatpush2.msra.mxu0 0.0
  %1537 = vmatprep.subr.mxu0 0.0
  %1538 = vmatpush2.msra.mxu0 0.0
  %1539 = vmatprep.subr.mxu0 0.0
  %1540 = vmatpush2.msra.mxu0 0.0
  %1541 = vmatprep.subr.mxu0 0.0
  %1542 = vmatpush2.msra.mxu0 0.0
  %1543 = vmatprep.subr.mxu0 0.0
  %1544 = vmatpush2.msra.mxu0 0.0
  %1545 = vmatprep.subr.mxu0 0.0
  %1546 = vmatpush2.msra.mxu0 0.0
  %1547 = vmatprep.subr.mxu0 0.0
  %1548 = vmatpush2.msra.mxu0 0.0
  %1549 = vmatprep.subr.mxu0 0.0
  %1550 = vmatpush2.msra.mxu0 0.0
  %1551 = vmatprep.subr.mxu0 0.0
  %1552 = vmatpush2.msra.mxu0 0.0
  %1553 = vmatprep.subr.mxu0 0.0
  %1554 = vmatpush2.msra.mxu0 0.0
  %1555 = vmatprep.subr.mxu0 0.0
  %1556 = vmatpush2.msra.mxu0 0.0
  %1557 = vmatprep.mubr.f32.mxu0 0.0
  %1558 = vmatmul.mubr.f32.gmra.mxu0 %v1423
  %v1559 = vpop.f32.mrf.mxu0
  %v1560 = vadd.f32 0.0, %v1559
  %v1561 = vpop.f32.mrf.mxu0
  %v1562 = vadd.f32 0.0, %v1561
  %1563 = vdwg.mxu0
  %1564 = vmatprep.subr.mxu0 %v1492
  %1565 = vmatpush1.msra.mxu0 %v1491
  %1566 = vmatprep.subr.mxu0 %v1488
  %1567 = vmatpush1.msra.mxu0 %v1487
  %1568 = vmatprep.subr.mxu0 %v1484
  %1569 = vmatpush1.msra.mxu0 %v1483
  %1570 = vmatprep.subr.mxu0 %v1480
  %1571 = vmatpush1.msra.mxu0 %v1479
  %1572 = vmatprep.subr.mxu0 %v1476
  %1573 = vmatpush1.msra.mxu0 %v1475
  %1574 = vmatprep.subr.mxu0 %v1472
  %1575 = vmatpush1.msra.mxu0 %v1471
  %1576 = vmatprep.subr.mxu0 %v1468
  %1577 = vmatpush1.msra.mxu0 %v1467
  %1578 = vmatprep.subr.mxu0 %v1464
  %1579 = vmatpush1.msra.mxu0 %v1463
  %1580 = vmatprep.subr.mxu0 %v1460
  %1581 = vmatpush1.msra.mxu0 %v1459
  %1582 = vmatprep.subr.mxu0 %v1456
  %1583 = vmatpush1.msra.mxu0 %v1455
  %1584 = vmatprep.subr.mxu0 %v1452
  %1585 = vmatpush1.msra.mxu0 %v1451
  %1586 = vmatprep.subr.mxu0 %v1448
  %1587 = vmatpush1.msra.mxu0 %v1447
  %1588 = vmatprep.subr.mxu0 %v1444
  %1589 = vmatpush1.msra.mxu0 %v1443
  %1590 = vmatprep.subr.mxu0 %v1440
  %1591 = vmatpush1.msra.mxu0 %v1439
  %1592 = vmatprep.subr.mxu0 %v1436
  %1593 = vmatpush1.msra.mxu0 %v1435
  %1594 = vmatprep.subr.mxu0 %v1432
  %1595 = vmatpush1.msra.mxu0 %v1431
  %1596 = vmatprep.subr.mxu0 0.0
  %1597 = vmatpush2.msra.mxu0 0.0
  %1598 = vmatprep.subr.mxu0 0.0
  %1599 = vmatpush2.msra.mxu0 0.0
  %1600 = vmatprep.subr.mxu0 0.0
  %1601 = vmatpush2.msra.mxu0 0.0
  %1602 = vmatprep.subr.mxu0 0.0
  %1603 = vmatpush2.msra.mxu0 0.0
  %1604 = vmatprep.subr.mxu0 0.0
  %1605 = vmatpush2.msra.mxu0 0.0
  %1606 = vmatprep.subr.mxu0 0.0
  %1607 = vmatpush2.msra.mxu0 0.0
  %1608 = vmatprep.subr.mxu0 0.0
  %1609 = vmatpush2.msra.mxu0 0.0
  %1610 = vmatprep.subr.mxu0 0.0
  %1611 = vmatpush2.msra.mxu0 0.0
  %1612 = vmatprep.subr.mxu0 0.0
  %1613 = vmatpush2.msra.mxu0 0.0
  %1614 = vmatprep.subr.mxu0 0.0
  %1615 = vmatpush2.msra.mxu0 0.0
  %1616 = vmatprep.subr.mxu0 0.0
  %1617 = vmatpush2.msra.mxu0 0.0
  %1618 = vmatprep.subr.mxu0 0.0
  %1619 = vmatpush2.msra.mxu0 0.0
  %1620 = vmatprep.subr.mxu0 0.0
  %1621 = vmatpush2.msra.mxu0 0.0
  %1622 = vmatprep.subr.mxu0 0.0
  %1623 = vmatpush2.msra.mxu0 0.0
  %1624 = vmatprep.subr.mxu0 0.0
  %1625 = vmatpush2.msra.mxu0 0.0
  %1626 = vmatprep.subr.mxu0 0.0
  %1627 = vmatpush2.msra.mxu0 0.0
  %1628 = vmatprep.mubr.f32.mxu0 0.0
  %1629 = vmatmul.mubr.f32.gmra.mxu0 %v1423
  %v1630 = vpop.f32.mrf.mxu0
  %v1631 = vadd.f32 0.0, %v1630
  %v1632 = vpop.f32.mrf.mxu0
  %v1633 = vadd.f32 0.0, %v1632
  %1634 = vdwg.mxu0
  %v1635 = vadd.f32 %v1425, %v1560
  %v1636 = vadd.f32 %v1426, %v1562
  %v1637 = vadd.f32 %v1427, %v1631
  %v1638 = vadd.f32 %v1428, %v1633
  %v1639 = vxor.u32 %v1635, 2147483648
  %v1640 = vxor.u32 %v1636, 2147483648
  %v1641 = vxor.u32 %v1637, 2147483648
  %v1642 = vmul.f32 %v1639, 1.442695
  %v1643 = vpow.pop %v1642
  %v1644 = vmul.f32 %v1640, 1.442695
  %v1645 = vpow.pop %v1644
  %v1646 = vmul.f32 %v1641, 1.442695
  %v1647 = vpow.pop %v1646
  %v1648 = vadd.f32 %v1643, 1.0
  %v1649 = vadd.f32 %v1645, 1.0
  %v1650 = vadd.f32 %v1647, 1.0
  %v1651 = vrcp.pop %v1648
  %v1652 = vmul.f32 1.0, %v1651
  %v1653 = vrcp.pop %v1649
  %v1654 = vmul.f32 1.0, %v1653
  %v1655 = vrcp.pop %v1650
  %v1656 = vmul.f32 1.0, %v1655
  %v1657 = vtanh.pop %v1638
  %v1658 = vmul.f32 %v1654, %v1421
  %v1659 = vmul.f32 %v1652, %v1657
  %v1660 = vadd.f32 %v1658, %v1659
  %v1661 = vtanh.pop %v1660
  %v1662 = vmul.f32 %v1656, %v1661
  %1663 = vst [vmem:[#allocation2 + $0x8] sm:$0xff] %v1662
  %v1664 = vld [vmem:[#allocation3 + $0x40] sm:$0xff]
  %v1665 = vld [vmem:[#allocation3 + $0x48] sm:$0xff]
  %v1666 = vld [vmem:[#allocation3 + $0x50] sm:$0xff]
  %v1667 = vld [vmem:[#allocation3 + $0x58] sm:$0xff]
  %v1668 = vld [vmem:[%s3] sm:$0xff]
  %v1669 = vld [vmem:[%s3 + $0x8] sm:$0xff]
  %v1670 = vld [vmem:[%s3 + $0x10] sm:$0xff]
  %v1671 = vld [vmem:[%s3 + $0x18] sm:$0xff]
  %v1672 = vld [vmem:[%s3 + $0x20] sm:$0xff]
  %v1673 = vld [vmem:[%s3 + $0x28] sm:$0xff]
  %v1674 = vld [vmem:[%s3 + $0x30] sm:$0xff]
  %v1675 = vld [vmem:[%s3 + $0x38] sm:$0xff]
  %v1676 = vld [vmem:[%s3 + $0x40] sm:$0xff]
  %v1677 = vld [vmem:[%s3 + $0x48] sm:$0xff]
  %v1678 = vld [vmem:[%s3 + $0x50] sm:$0xff]
  %v1679 = vld [vmem:[%s3 + $0x58] sm:$0xff]
  %v1680 = vld [vmem:[%s3 + $0x60] sm:$0xff]
  %v1681 = vld [vmem:[%s3 + $0x68] sm:$0xff]
  %v1682 = vld [vmem:[%s3 + $0x70] sm:$0xff]
  %v1683 = vld [vmem:[%s3 + $0x78] sm:$0xff]
  %v1684 = vld [vmem:[%s3 + $0x80] sm:$0xff]
  %v1685 = vld [vmem:[%s3 + $0x88] sm:$0xff]
  %v1686 = vld [vmem:[%s3 + $0x90] sm:$0xff]
  %v1687 = vld [vmem:[%s3 + $0x98] sm:$0xff]
  %v1688 = vld [vmem:[%s3 + $0xa0] sm:$0xff]
  %v1689 = vld [vmem:[%s3 + $0xa8] sm:$0xff]
  %v1690 = vld [vmem:[%s3 + $0xb0] sm:$0xff]
  %v1691 = vld [vmem:[%s3 + $0xb8] sm:$0xff]
  %v1692 = vld [vmem:[%s3 + $0xc0] sm:$0xff]
  %v1693 = vld [vmem:[%s3 + $0xc8] sm:$0xff]
  %v1694 = vld [vmem:[%s3 + $0xd0] sm:$0xff]
  %v1695 = vld [vmem:[%s3 + $0xd8] sm:$0xff]
  %v1696 = vld [vmem:[%s3 + $0xe0] sm:$0xff]
  %v1697 = vld [vmem:[%s3 + $0xe8] sm:$0xff]
  %v1698 = vld [vmem:[%s3 + $0xf0] sm:$0xff]
  %v1699 = vld [vmem:[%s3 + $0xf8] sm:$0xff]
  %v1700 = vld [vmem:[%s3 + $0x100] sm:$0xff]
  %v1701 = vld [vmem:[%s3 + $0x108] sm:$0xff]
  %v1702 = vld [vmem:[%s3 + $0x110] sm:$0xff]
  %v1703 = vld [vmem:[%s3 + $0x118] sm:$0xff]
  %v1704 = vld [vmem:[%s3 + $0x120] sm:$0xff]
  %v1705 = vld [vmem:[%s3 + $0x128] sm:$0xff]
  %v1706 = vld [vmem:[%s3 + $0x130] sm:$0xff]
  %v1707 = vld [vmem:[%s3 + $0x138] sm:$0xff]
  %v1708 = vld [vmem:[%s3 + $0x140] sm:$0xff]
  %v1709 = vld [vmem:[%s3 + $0x148] sm:$0xff]
  %v1710 = vld [vmem:[%s3 + $0x150] sm:$0xff]
  %v1711 = vld [vmem:[%s3 + $0x158] sm:$0xff]
  %v1712 = vld [vmem:[%s3 + $0x160] sm:$0xff]
  %v1713 = vld [vmem:[%s3 + $0x168] sm:$0xff]
  %v1714 = vld [vmem:[%s3 + $0x170] sm:$0xff]
  %v1715 = vld [vmem:[%s3 + $0x178] sm:$0xff]
  %v1716 = vld [vmem:[%s3 + $0x180] sm:$0xff]
  %v1717 = vld [vmem:[%s3 + $0x188] sm:$0xff]
  %v1718 = vld [vmem:[%s3 + $0x190] sm:$0xff]
  %v1719 = vld [vmem:[%s3 + $0x198] sm:$0xff]
  %v1720 = vld [vmem:[%s3 + $0x1a0] sm:$0xff]
  %v1721 = vld [vmem:[%s3 + $0x1a8] sm:$0xff]
  %v1722 = vld [vmem:[%s3 + $0x1b0] sm:$0xff]
  %v1723 = vld [vmem:[%s3 + $0x1b8] sm:$0xff]
  %v1724 = vld [vmem:[%s3 + $0x1c0] sm:$0xff]
  %v1725 = vld [vmem:[%s3 + $0x1c8] sm:$0xff]
  %v1726 = vld [vmem:[%s3 + $0x1d0] sm:$0xff]
  %v1727 = vld [vmem:[%s3 + $0x1d8] sm:$0xff]
  %v1728 = vld [vmem:[%s3 + $0x1e0] sm:$0xff]
  %v1729 = vld [vmem:[%s3 + $0x1e8] sm:$0xff]
  %v1730 = vld [vmem:[%s3 + $0x1f0] sm:$0xff]
  %v1731 = vld [vmem:[%s3 + $0x1f8] sm:$0xff]
  %1732 = vmatprep.subr.mxu0 %v1729
  %1733 = vmatpush1.msra.mxu0 %v1728
  %1734 = vmatprep.subr.mxu0 %v1725
  %1735 = vmatpush1.msra.mxu0 %v1724
  %1736 = vmatprep.subr.mxu0 %v1721
  %1737 = vmatpush1.msra.mxu0 %v1720
  %1738 = vmatprep.subr.mxu0 %v1717
  %1739 = vmatpush1.msra.mxu0 %v1716
  %1740 = vmatprep.subr.mxu0 %v1713
  %1741 = vmatpush1.msra.mxu0 %v1712
  %1742 = vmatprep.subr.mxu0 %v1709
  %1743 = vmatpush1.msra.mxu0 %v1708
  %1744 = vmatprep.subr.mxu0 %v1705
  %1745 = vmatpush1.msra.mxu0 %v1704
  %1746 = vmatprep.subr.mxu0 %v1701
  %1747 = vmatpush1.msra.mxu0 %v1700
  %1748 = vmatprep.subr.mxu0 %v1697
  %1749 = vmatpush1.msra.mxu0 %v1696
  %1750 = vmatprep.subr.mxu0 %v1693
  %1751 = vmatpush1.msra.mxu0 %v1692
  %1752 = vmatprep.subr.mxu0 %v1689
  %1753 = vmatpush1.msra.mxu0 %v1688
  %1754 = vmatprep.subr.mxu0 %v1685
  %1755 = vmatpush1.msra.mxu0 %v1684
  %1756 = vmatprep.subr.mxu0 %v1681
  %1757 = vmatpush1.msra.mxu0 %v1680
  %1758 = vmatprep.subr.mxu0 %v1677
  %1759 = vmatpush1.msra.mxu0 %v1676
  %1760 = vmatprep.subr.mxu0 %v1673
  %1761 = vmatpush1.msra.mxu0 %v1672
  %1762 = vmatprep.subr.mxu0 %v1669
  %1763 = vmatpush1.msra.mxu0 %v1668
  %1764 = vmatprep.subr.mxu0 0.0
  %1765 = vmatpush2.msra.mxu0 0.0
  %1766 = vmatprep.subr.mxu0 0.0
  %1767 = vmatpush2.msra.mxu0 0.0
  %1768 = vmatprep.subr.mxu0 0.0
  %1769 = vmatpush2.msra.mxu0 0.0
  %1770 = vmatprep.subr.mxu0 0.0
  %1771 = vmatpush2.msra.mxu0 0.0
  %1772 = vmatprep.subr.mxu0 0.0
  %1773 = vmatpush2.msra.mxu0 0.0
  %1774 = vmatprep.subr.mxu0 0.0
  %1775 = vmatpush2.msra.mxu0 0.0
  %1776 = vmatprep.subr.mxu0 0.0
  %1777 = vmatpush2.msra.mxu0 0.0
  %1778 = vmatprep.subr.mxu0 0.0
  %1779 = vmatpush2.msra.mxu0 0.0
  %1780 = vmatprep.subr.mxu0 0.0
  %1781 = vmatpush2.msra.mxu0 0.0
  %1782 = vmatprep.subr.mxu0 0.0
  %1783 = vmatpush2.msra.mxu0 0.0
  %1784 = vmatprep.subr.mxu0 0.0
  %1785 = vmatpush2.msra.mxu0 0.0
  %1786 = vmatprep.subr.mxu0 0.0
  %1787 = vmatpush2.msra.mxu0 0.0
  %1788 = vmatprep.subr.mxu0 0.0
  %1789 = vmatpush2.msra.mxu0 0.0
  %1790 = vmatprep.subr.mxu0 0.0
  %1791 = vmatpush2.msra.mxu0 0.0
  %1792 = vmatprep.subr.mxu0 0.0
  %1793 = vmatpush2.msra.mxu0 0.0
  %1794 = vmatprep.subr.mxu0 0.0
  %1795 = vmatpush2.msra.mxu0 0.0
  %1796 = vmatprep.mubr.f32.mxu0 0.0
  %1797 = vmatmul.mubr.f32.gmra.mxu0 %v1662
  %v1798 = vpop.f32.mrf.mxu0
  %v1799 = vadd.f32 0.0, %v1798
  %v1800 = vpop.f32.mrf.mxu0
  %v1801 = vadd.f32 0.0, %v1800
  %1802 = vdwg.mxu0
  %1803 = vmatprep.subr.mxu0 %v1731
  %1804 = vmatpush1.msra.mxu0 %v1730
  %1805 = vmatprep.subr.mxu0 %v1727
  %1806 = vmatpush1.msra.mxu0 %v1726
  %1807 = vmatprep.subr.mxu0 %v1723
  %1808 = vmatpush1.msra.mxu0 %v1722
  %1809 = vmatprep.subr.mxu0 %v1719
  %1810 = vmatpush1.msra.mxu0 %v1718
  %1811 = vmatprep.subr.mxu0 %v1715
  %1812 = vmatpush1.msra.mxu0 %v1714
  %1813 = vmatprep.subr.mxu0 %v1711
  %1814 = vmatpush1.msra.mxu0 %v1710
  %1815 = vmatprep.subr.mxu0 %v1707
  %1816 = vmatpush1.msra.mxu0 %v1706
  %1817 = vmatprep.subr.mxu0 %v1703
  %1818 = vmatpush1.msra.mxu0 %v1702
  %1819 = vmatprep.subr.mxu0 %v1699
  %1820 = vmatpush1.msra.mxu0 %v1698
  %1821 = vmatprep.subr.mxu0 %v1695
  %1822 = vmatpush1.msra.mxu0 %v1694
  %1823 = vmatprep.subr.mxu0 %v1691
  %1824 = vmatpush1.msra.mxu0 %v1690
  %1825 = vmatprep.subr.mxu0 %v1687
  %1826 = vmatpush1.msra.mxu0 %v1686
  %1827 = vmatprep.subr.mxu0 %v1683
  %1828 = vmatpush1.msra.mxu0 %v1682
  %1829 = vmatprep.subr.mxu0 %v1679
  %1830 = vmatpush1.msra.mxu0 %v1678
  %1831 = vmatprep.subr.mxu0 %v1675
  %1832 = vmatpush1.msra.mxu0 %v1674
  %1833 = vmatprep.subr.mxu0 %v1671
  %1834 = vmatpush1.msra.mxu0 %v1670
  %1835 = vmatprep.subr.mxu0 0.0
  %1836 = vmatpush2.msra.mxu0 0.0
  %1837 = vmatprep.subr.mxu0 0.0
  %1838 = vmatpush2.msra.mxu0 0.0
  %1839 = vmatprep.subr.mxu0 0.0
  %1840 = vmatpush2.msra.mxu0 0.0
  %1841 = vmatprep.subr.mxu0 0.0
  %1842 = vmatpush2.msra.mxu0 0.0
  %1843 = vmatprep.subr.mxu0 0.0
  %1844 = vmatpush2.msra.mxu0 0.0
  %1845 = vmatprep.subr.mxu0 0.0
  %1846 = vmatpush2.msra.mxu0 0.0
  %1847 = vmatprep.subr.mxu0 0.0
  %1848 = vmatpush2.msra.mxu0 0.0
  %1849 = vmatprep.subr.mxu0 0.0
  %1850 = vmatpush2.msra.mxu0 0.0
  %1851 = vmatprep.subr.mxu0 0.0
  %1852 = vmatpush2.msra.mxu0 0.0
  %1853 = vmatprep.subr.mxu0 0.0
  %1854 = vmatpush2.msra.mxu0 0.0
  %1855 = vmatprep.subr.mxu0 0.0
  %1856 = vmatpush2.msra.mxu0 0.0
  %1857 = vmatprep.subr.mxu0 0.0
  %1858 = vmatpush2.msra.mxu0 0.0
  %1859 = vmatprep.subr.mxu0 0.0
  %1860 = vmatpush2.msra.mxu0 0.0
  %1861 = vmatprep.subr.mxu0 0.0
  %1862 = vmatpush2.msra.mxu0 0.0
  %1863 = vmatprep.subr.mxu0 0.0
  %1864 = vmatpush2.msra.mxu0 0.0
  %1865 = vmatprep.subr.mxu0 0.0
  %1866 = vmatpush2.msra.mxu0 0.0
  %1867 = vmatprep.mubr.f32.mxu0 0.0
  %1868 = vmatmul.mubr.f32.gmra.mxu0 %v1662
  %v1869 = vpop.f32.mrf.mxu0
  %v1870 = vadd.f32 0.0, %v1869
  %v1871 = vpop.f32.mrf.mxu0
  %v1872 = vadd.f32 0.0, %v1871
  %1873 = vdwg.mxu0
  %v1874 = vadd.f32 %v1664, %v1799
  %v1875 = vadd.f32 %v1665, %v1801
  %v1876 = vadd.f32 %v1666, %v1870
  %v1877 = vadd.f32 %v1667, %v1872
  %v1878 = vxor.u32 %v1874, 2147483648
  %v1879 = vxor.u32 %v1875, 2147483648
  %v1880 = vxor.u32 %v1876, 2147483648
  %v1881 = vmul.f32 %v1878, 1.442695
  %v1882 = vpow.pop %v1881
  %v1883 = vmul.f32 %v1879, 1.442695
  %v1884 = vpow.pop %v1883
  %v1885 = vmul.f32 %v1880, 1.442695
  %v1886 = vpow.pop %v1885
  %v1887 = vadd.f32 %v1882, 1.0
  %v1888 = vadd.f32 %v1884, 1.0
  %v1889 = vadd.f32 %v1886, 1.0
  %v1890 = vrcp.pop %v1887
  %v1891 = vmul.f32 1.0, %v1890
  %v1892 = vrcp.pop %v1888
  %v1893 = vmul.f32 1.0, %v1892
  %v1894 = vrcp.pop %v1889
  %v1895 = vmul.f32 1.0, %v1894
  %v1896 = vtanh.pop %v1877
  %v1897 = vmul.f32 %v1893, %v1660
  %v1898 = vmul.f32 %v1891, %v1896
  %v1899 = vadd.f32 %v1897, %v1898
  %v1900 = vtanh.pop %v1899
  %v1901 = vmul.f32 %v1895, %v1900
  %1902 = vst [vmem:[#allocation2 + $0x10] sm:$0xff] %v1901
  %v1903 = vld [vmem:[#allocation3 + $0x60] sm:$0xff]
  %v1904 = vld [vmem:[#allocation3 + $0x68] sm:$0xff]
  %v1905 = vld [vmem:[#allocation3 + $0x70] sm:$0xff]
  %v1906 = vld [vmem:[#allocation3 + $0x78] sm:$0xff]
  %v1907 = vld [vmem:[%s3] sm:$0xff]
  %v1908 = vld [vmem:[%s3 + $0x8] sm:$0xff]
  %v1909 = vld [vmem:[%s3 + $0x10] sm:$0xff]
  %v1910 = vld [vmem:[%s3 + $0x18] sm:$0xff]
  %v1911 = vld [vmem:[%s3 + $0x20] sm:$0xff]
  %v1912 = vld [vmem:[%s3 + $0x28] sm:$0xff]
  %v1913 = vld [vmem:[%s3 + $0x30] sm:$0xff]
  %v1914 = vld [vmem:[%s3 + $0x38] sm:$0xff]
  %v1915 = vld [vmem:[%s3 + $0x40] sm:$0xff]
  %v1916 = vld [vmem:[%s3 + $0x48] sm:$0xff]
  %v1917 = vld [vmem:[%s3 + $0x50] sm:$0xff]
  %v1918 = vld [vmem:[%s3 + $0x58] sm:$0xff]
  %v1919 = vld [vmem:[%s3 + $0x60] sm:$0xff]
  %v1920 = vld [vmem:[%s3 + $0x68] sm:$0xff]
  %v1921 = vld [vmem:[%s3 + $0x70] sm:$0xff]
  %v1922 = vld [vmem:[%s3 + $0x78] sm:$0xff]
  %v1923 = vld [vmem:[%s3 + $0x80] sm:$0xff]
  %v1924 = vld [vmem:[%s3 + $0x88] sm:$0xff]
  %v1925 = vld [vmem:[%s3 + $0x90] sm:$0xff]
  %v1926 = vld [vmem:[%s3 + $0x98] sm:$0xff]
  %v1927 = vld [vmem:[%s3 + $0xa0] sm:$0xff]
  %v1928 = vld [vmem:[%s3 + $0xa8] sm:$0xff]
  %v1929 = vld [vmem:[%s3 + $0xb0] sm:$0xff]
  %v1930 = vld [vmem:[%s3 + $0xb8] sm:$0xff]
  %v1931 = vld [vmem:[%s3 + $0xc0] sm:$0xff]
  %v1932 = vld [vmem:[%s3 + $0xc8] sm:$0xff]
  %v1933 = vld [vmem:[%s3 + $0xd0] sm:$0xff]
  %v1934 = vld [vmem:[%s3 + $0xd8] sm:$0xff]
  %v1935 = vld [vmem:[%s3 + $0xe0] sm:$0xff]
  %v1936 = vld [vmem:[%s3 + $0xe8] sm:$0xff]
  %v1937 = vld [vmem:[%s3 + $0xf0] sm:$0xff]
  %v1938 = vld [vmem:[%s3 + $0xf8] sm:$0xff]
  %v1939 = vld [vmem:[%s3 + $0x100] sm:$0xff]
  %v1940 = vld [vmem:[%s3 + $0x108] sm:$0xff]
  %v1941 = vld [vmem:[%s3 + $0x110] sm:$0xff]
  %v1942 = vld [vmem:[%s3 + $0x118] sm:$0xff]
  %v1943 = vld [vmem:[%s3 + $0x120] sm:$0xff]
  %v1944 = vld [vmem:[%s3 + $0x128] sm:$0xff]
  %v1945 = vld [vmem:[%s3 + $0x130] sm:$0xff]
  %v1946 = vld [vmem:[%s3 + $0x138] sm:$0xff]
  %v1947 = vld [vmem:[%s3 + $0x140] sm:$0xff]
  %v1948 = vld [vmem:[%s3 + $0x148] sm:$0xff]
  %v1949 = vld [vmem:[%s3 + $0x150] sm:$0xff]
  %v1950 = vld [vmem:[%s3 + $0x158] sm:$0xff]
  %v1951 = vld [vmem:[%s3 + $0x160] sm:$0xff]
  %v1952 = vld [vmem:[%s3 + $0x168] sm:$0xff]
  %v1953 = vld [vmem:[%s3 + $0x170] sm:$0xff]
  %v1954 = vld [vmem:[%s3 + $0x178] sm:$0xff]
  %v1955 = vld [vmem:[%s3 + $0x180] sm:$0xff]
  %v1956 = vld [vmem:[%s3 + $0x188] sm:$0xff]
  %v1957 = vld [vmem:[%s3 + $0x190] sm:$0xff]
  %v1958 = vld [vmem:[%s3 + $0x198] sm:$0xff]
  %v1959 = vld [vmem:[%s3 + $0x1a0] sm:$0xff]
  %v1960 = vld [vmem:[%s3 + $0x1a8] sm:$0xff]
  %v1961 = vld [vmem:[%s3 + $0x1b0] sm:$0xff]
  %v1962 = vld [vmem:[%s3 + $0x1b8] sm:$0xff]
  %v1963 = vld [vmem:[%s3 + $0x1c0] sm:$0xff]
  %v1964 = vld [vmem:[%s3 + $0x1c8] sm:$0xff]
  %v1965 = vld [vmem:[%s3 + $0x1d0] sm:$0xff]
  %v1966 = vld [vmem:[%s3 + $0x1d8] sm:$0xff]
  %v1967 = vld [vmem:[%s3 + $0x1e0] sm:$0xff]
  %v1968 = vld [vmem:[%s3 + $0x1e8] sm:$0xff]
  %v1969 = vld [vmem:[%s3 + $0x1f0] sm:$0xff]
  %v1970 = vld [vmem:[%s3 + $0x1f8] sm:$0xff]
  %1971 = vmatprep.subr.mxu0 %v1968
  %1972 = vmatpush1.msra.mxu0 %v1967
  %1973 = vmatprep.subr.mxu0 %v1964
  %1974 = vmatpush1.msra.mxu0 %v1963
  %1975 = vmatprep.subr.mxu0 %v1960
  %1976 = vmatpush1.msra.mxu0 %v1959
  %1977 = vmatprep.subr.mxu0 %v1956
  %1978 = vmatpush1.msra.mxu0 %v1955
  %1979 = vmatprep.subr.mxu0 %v1952
  %1980 = vmatpush1.msra.mxu0 %v1951
  %1981 = vmatprep.subr.mxu0 %v1948
  %1982 = vmatpush1.msra.mxu0 %v1947
  %1983 = vmatprep.subr.mxu0 %v1944
  %1984 = vmatpush1.msra.mxu0 %v1943
  %1985 = vmatprep.subr.mxu0 %v1940
  %1986 = vmatpush1.msra.mxu0 %v1939
  %1987 = vmatprep.subr.mxu0 %v1936
  %1988 = vmatpush1.msra.mxu0 %v1935
  %1989 = vmatprep.subr.mxu0 %v1932
  %1990 = vmatpush1.msra.mxu0 %v1931
  %1991 = vmatprep.subr.mxu0 %v1928
  %1992 = vmatpush1.msra.mxu0 %v1927
  %1993 = vmatprep.subr.mxu0 %v1924
  %1994 = vmatpush1.msra.mxu0 %v1923
  %1995 = vmatprep.subr.mxu0 %v1920
  %1996 = vmatpush1.msra.mxu0 %v1919
  %1997 = vmatprep.subr.mxu0 %v1916
  %1998 = vmatpush1.msra.mxu0 %v1915
  %1999 = vmatprep.subr.mxu0 %v1912
  %2000 = vmatpush1.msra.mxu0 %v1911
  %2001 = vmatprep.subr.mxu0 %v1908
  %2002 = vmatpush1.msra.mxu0 %v1907
  %2003 = vmatprep.subr.mxu0 0.0
  %2004 = vmatpush2.msra.mxu0 0.0
  %2005 = vmatprep.subr.mxu0 0.0
  %2006 = vmatpush2.msra.mxu0 0.0
  %2007 = vmatprep.subr.mxu0 0.0
  %2008 = vmatpush2.msra.mxu0 0.0
  %2009 = vmatprep.subr.mxu0 0.0
  %2010 = vmatpush2.msra.mxu0 0.0
  %2011 = vmatprep.subr.mxu0 0.0
  %2012 = vmatpush2.msra.mxu0 0.0
  %2013 = vmatprep.subr.mxu0 0.0
  %2014 = vmatpush2.msra.mxu0 0.0
  %2015 = vmatprep.subr.mxu0 0.0
  %2016 = vmatpush2.msra.mxu0 0.0
  %2017 = vmatprep.subr.mxu0 0.0
  %2018 = vmatpush2.msra.mxu0 0.0
  %2019 = vmatprep.subr.mxu0 0.0
  %2020 = vmatpush2.msra.mxu0 0.0
  %2021 = vmatprep.subr.mxu0 0.0
  %2022 = vmatpush2.msra.mxu0 0.0
  %2023 = vmatprep.subr.mxu0 0.0
  %2024 = vmatpush2.msra.mxu0 0.0
  %2025 = vmatprep.subr.mxu0 0.0
  %2026 = vmatpush2.msra.mxu0 0.0
  %2027 = vmatprep.subr.mxu0 0.0
  %2028 = vmatpush2.msra.mxu0 0.0
  %2029 = vmatprep.subr.mxu0 0.0
  %2030 = vmatpush2.msra.mxu0 0.0
  %2031 = vmatprep.subr.mxu0 0.0
  %2032 = vmatpush2.msra.mxu0 0.0
  %2033 = vmatprep.subr.mxu0 0.0
  %2034 = vmatpush2.msra.mxu0 0.0
  %2035 = vmatprep.mubr.f32.mxu0 0.0
  %2036 = vmatmul.mubr.f32.gmra.mxu0 %v1901
  %v2037 = vpop.f32.mrf.mxu0
  %v2038 = vadd.f32 0.0, %v2037
  %v2039 = vpop.f32.mrf.mxu0
  %v2040 = vadd.f32 0.0, %v2039
  %2041 = vdwg.mxu0
  %2042 = vmatprep.subr.mxu0 %v1970
  %2043 = vmatpush1.msra.mxu0 %v1969
  %2044 = vmatprep.subr.mxu0 %v1966
  %2045 = vmatpush1.msra.mxu0 %v1965
  %2046 = vmatprep.subr.mxu0 %v1962
  %2047 = vmatpush1.msra.mxu0 %v1961
  %2048 = vmatprep.subr.mxu0 %v1958
  %2049 = vmatpush1.msra.mxu0 %v1957
  %2050 = vmatprep.subr.mxu0 %v1954
  %2051 = vmatpush1.msra.mxu0 %v1953
  %2052 = vmatprep.subr.mxu0 %v1950
  %2053 = vmatpush1.msra.mxu0 %v1949
  %2054 = vmatprep.subr.mxu0 %v1946
  %2055 = vmatpush1.msra.mxu0 %v1945
  %2056 = vmatprep.subr.mxu0 %v1942
  %2057 = vmatpush1.msra.mxu0 %v1941
  %2058 = vmatprep.subr.mxu0 %v1938
  %2059 = vmatpush1.msra.mxu0 %v1937
  %2060 = vmatprep.subr.mxu0 %v1934
  %2061 = vmatpush1.msra.mxu0 %v1933
  %2062 = vmatprep.subr.mxu0 %v1930
  %2063 = vmatpush1.msra.mxu0 %v1929
  %2064 = vmatprep.subr.mxu0 %v1926
  %2065 = vmatpush1.msra.mxu0 %v1925
  %2066 = vmatprep.subr.mxu0 %v1922
  %2067 = vmatpush1.msra.mxu0 %v1921
  %2068 = vmatprep.subr.mxu0 %v1918
  %2069 = vmatpush1.msra.mxu0 %v1917
  %2070 = vmatprep.subr.mxu0 %v1914
  %2071 = vmatpush1.msra.mxu0 %v1913
  %2072 = vmatprep.subr.mxu0 %v1910
  %2073 = vmatpush1.msra.mxu0 %v1909
  %2074 = vmatprep.subr.mxu0 0.0
  %2075 = vmatpush2.msra.mxu0 0.0
  %2076 = vmatprep.subr.mxu0 0.0
  %2077 = vmatpush2.msra.mxu0 0.0
  %2078 = vmatprep.subr.mxu0 0.0
  %2079 = vmatpush2.msra.mxu0 0.0
  %2080 = vmatprep.subr.mxu0 0.0
  %2081 = vmatpush2.msra.mxu0 0.0
  %2082 = vmatprep.subr.mxu0 0.0
  %2083 = vmatpush2.msra.mxu0 0.0
  %2084 = vmatprep.subr.mxu0 0.0
  %2085 = vmatpush2.msra.mxu0 0.0
  %2086 = vmatprep.subr.mxu0 0.0
  %2087 = vmatpush2.msra.mxu0 0.0
  %2088 = vmatprep.subr.mxu0 0.0
  %2089 = vmatpush2.msra.mxu0 0.0
  %2090 = vmatprep.subr.mxu0 0.0
  %2091 = vmatpush2.msra.mxu0 0.0
  %2092 = vmatprep.subr.mxu0 0.0
  %2093 = vmatpush2.msra.mxu0 0.0
  %2094 = vmatprep.subr.mxu0 0.0
  %2095 = vmatpush2.msra.mxu0 0.0
  %2096 = vmatprep.subr.mxu0 0.0
  %2097 = vmatpush2.msra.mxu0 0.0
  %2098 = vmatprep.subr.mxu0 0.0
  %2099 = vmatpush2.msra.mxu0 0.0
  %2100 = vmatprep.subr.mxu0 0.0
  %2101 = vmatpush2.msra.mxu0 0.0
  %2102 = vmatprep.subr.mxu0 0.0
  %2103 = vmatpush2.msra.mxu0 0.0
  %2104 = vmatprep.subr.mxu0 0.0
  %2105 = vmatpush2.msra.mxu0 0.0
  %2106 = vmatprep.mubr.f32.mxu0 0.0
  %2107 = vmatmul.mubr.f32.gmra.mxu0 %v1901
  %v2108 = vpop.f32.mrf.mxu0
  %v2109 = vadd.f32 0.0, %v2108
  %v2110 = vpop.f32.mrf.mxu0
  %v2111 = vadd.f32 0.0, %v2110
  %2112 = vdwg.mxu0
  %v2113 = vadd.f32 %v1903, %v2038
  %v2114 = vadd.f32 %v1904, %v2040
  %v2115 = vadd.f32 %v1905, %v2109
  %v2116 = vadd.f32 %v1906, %v2111
  %v2117 = vxor.u32 %v2113, 2147483648
  %v2118 = vxor.u32 %v2114, 2147483648
  %v2119 = vxor.u32 %v2115, 2147483648
  %v2120 = vmul.f32 %v2117, 1.442695
  %v2121 = vpow.pop %v2120
  %v2122 = vmul.f32 %v2118, 1.442695
  %v2123 = vpow.pop %v2122
  %v2124 = vmul.f32 %v2119, 1.442695
  %v2125 = vpow.pop %v2124
  %v2126 = vadd.f32 %v2121, 1.0
  %v2127 = vadd.f32 %v2123, 1.0
  %v2128 = vadd.f32 %v2125, 1.0
  %v2129 = vrcp.pop %v2126
  %v2130 = vmul.f32 1.0, %v2129
  %v2131 = vrcp.pop %v2127
  %v2132 = vmul.f32 1.0, %v2131
  %v2133 = vrcp.pop %v2128
  %v2134 = vmul.f32 1.0, %v2133
  %v2135 = vtanh.pop %v2116
  %v2136 = vmul.f32 %v2132, %v1899
  %v2137 = vmul.f32 %v2130, %v2135
  %v2138 = vadd.f32 %v2136, %v2137
  %v2139 = vtanh.pop %v2138
  %v2140 = vmul.f32 %v2134, %v2139
  %2141 = vst [vmem:[#allocation2 + $0x18] sm:$0xff] %v2140
  %v2142 = vld [vmem:[#allocation3 + $0x80] sm:$0xff]
  %v2143 = vld [vmem:[#allocation3 + $0x88] sm:$0xff]
  %v2144 = vld [vmem:[#allocation3 + $0x90] sm:$0xff]
  %v2145 = vld [vmem:[#allocation3 + $0x98] sm:$0xff]
  %v2146 = vld [vmem:[%s3] sm:$0xff]
  %v2147 = vld [vmem:[%s3 + $0x8] sm:$0xff]
  %v2148 = vld [vmem:[%s3 + $0x10] sm:$0xff]
  %v2149 = vld [vmem:[%s3 + $0x18] sm:$0xff]
  %v2150 = vld [vmem:[%s3 + $0x20] sm:$0xff]
  %v2151 = vld [vmem:[%s3 + $0x28] sm:$0xff]
  %v2152 = vld [vmem:[%s3 + $0x30] sm:$0xff]
  %v2153 = vld [vmem:[%s3 + $0x38] sm:$0xff]
  %v2154 = vld [vmem:[%s3 + $0x40] sm:$0xff]
  %v2155 = vld [vmem:[%s3 + $0x48] sm:$0xff]
  %v2156 = vld [vmem:[%s3 + $0x50] sm:$0xff]
  %v2157 = vld [vmem:[%s3 + $0x58] sm:$0xff]
  %v2158 = vld [vmem:[%s3 + $0x60] sm:$0xff]
  %v2159 = vld [vmem:[%s3 + $0x68] sm:$0xff]
  %v2160 = vld [vmem:[%s3 + $0x70] sm:$0xff]
  %v2161 = vld [vmem:[%s3 + $0x78] sm:$0xff]
  %v2162 = vld [vmem:[%s3 + $0x80] sm:$0xff]
  %v2163 = vld [vmem:[%s3 + $0x88] sm:$0xff]
  %v2164 = vld [vmem:[%s3 + $0x90] sm:$0xff]
  %v2165 = vld [vmem:[%s3 + $0x98] sm:$0xff]
  %v2166 = vld [vmem:[%s3 + $0xa0] sm:$0xff]
  %v2167 = vld [vmem:[%s3 + $0xa8] sm:$0xff]
  %v2168 = vld [vmem:[%s3 + $0xb0] sm:$0xff]
  %v2169 = vld [vmem:[%s3 + $0xb8] sm:$0xff]
  %v2170 = vld [vmem:[%s3 + $0xc0] sm:$0xff]
  %v2171 = vld [vmem:[%s3 + $0xc8] sm:$0xff]
  %v2172 = vld [vmem:[%s3 + $0xd0] sm:$0xff]
  %v2173 = vld [vmem:[%s3 + $0xd8] sm:$0xff]
  %v2174 = vld [vmem:[%s3 + $0xe0] sm:$0xff]
  %v2175 = vld [vmem:[%s3 + $0xe8] sm:$0xff]
  %v2176 = vld [vmem:[%s3 + $0xf0] sm:$0xff]
  %v2177 = vld [vmem:[%s3 + $0xf8] sm:$0xff]
  %v2178 = vld [vmem:[%s3 + $0x100] sm:$0xff]
  %v2179 = vld [vmem:[%s3 + $0x108] sm:$0xff]
  %v2180 = vld [vmem:[%s3 + $0x110] sm:$0xff]
  %v2181 = vld [vmem:[%s3 + $0x118] sm:$0xff]
  %v2182 = vld [vmem:[%s3 + $0x120] sm:$0xff]
  %v2183 = vld [vmem:[%s3 + $0x128] sm:$0xff]
  %v2184 = vld [vmem:[%s3 + $0x130] sm:$0xff]
  %v2185 = vld [vmem:[%s3 + $0x138] sm:$0xff]
  %v2186 = vld [vmem:[%s3 + $0x140] sm:$0xff]
  %v2187 = vld [vmem:[%s3 + $0x148] sm:$0xff]
  %v2188 = vld [vmem:[%s3 + $0x150] sm:$0xff]
  %v2189 = vld [vmem:[%s3 + $0x158] sm:$0xff]
  %v2190 = vld [vmem:[%s3 + $0x160] sm:$0xff]
  %v2191 = vld [vmem:[%s3 + $0x168] sm:$0xff]
  %v2192 = vld [vmem:[%s3 + $0x170] sm:$0xff]
  %v2193 = vld [vmem:[%s3 + $0x178] sm:$0xff]
  %v2194 = vld [vmem:[%s3 + $0x180] sm:$0xff]
  %v2195 = vld [vmem:[%s3 + $0x188] sm:$0xff]
  %v2196 = vld [vmem:[%s3 + $0x190] sm:$0xff]
  %v2197 = vld [vmem:[%s3 + $0x198] sm:$0xff]
  %v2198 = vld [vmem:[%s3 + $0x1a0] sm:$0xff]
  %v2199 = vld [vmem:[%s3 + $0x1a8] sm:$0xff]
  %v2200 = vld [vmem:[%s3 + $0x1b0] sm:$0xff]
  %v2201 = vld [vmem:[%s3 + $0x1b8] sm:$0xff]
  %v2202 = vld [vmem:[%s3 + $0x1c0] sm:$0xff]
  %v2203 = vld [vmem:[%s3 + $0x1c8] sm:$0xff]
  %v2204 = vld [vmem:[%s3 + $0x1d0] sm:$0xff]
  %v2205 = vld [vmem:[%s3 + $0x1d8] sm:$0xff]
  %v2206 = vld [vmem:[%s3 + $0x1e0] sm:$0xff]
  %v2207 = vld [vmem:[%s3 + $0x1e8] sm:$0xff]
  %v2208 = vld [vmem:[%s3 + $0x1f0] sm:$0xff]
  %v2209 = vld [vmem:[%s3 + $0x1f8] sm:$0xff]
  %2210 = vmatprep.subr.mxu0 %v2207
  %2211 = vmatpush1.msra.mxu0 %v2206
  %2212 = vmatprep.subr.mxu0 %v2203
  %2213 = vmatpush1.msra.mxu0 %v2202
  %2214 = vmatprep.subr.mxu0 %v2199
  %2215 = vmatpush1.msra.mxu0 %v2198
  %2216 = vmatprep.subr.mxu0 %v2195
  %2217 = vmatpush1.msra.mxu0 %v2194
  %2218 = vmatprep.subr.mxu0 %v2191
  %2219 = vmatpush1.msra.mxu0 %v2190
  %2220 = vmatprep.subr.mxu0 %v2187
  %2221 = vmatpush1.msra.mxu0 %v2186
  %2222 = vmatprep.subr.mxu0 %v2183
  %2223 = vmatpush1.msra.mxu0 %v2182
  %2224 = vmatprep.subr.mxu0 %v2179
  %2225 = vmatpush1.msra.mxu0 %v2178
  %2226 = vmatprep.subr.mxu0 %v2175
  %2227 = vmatpush1.msra.mxu0 %v2174
  %2228 = vmatprep.subr.mxu0 %v2171
  %2229 = vmatpush1.msra.mxu0 %v2170
  %2230 = vmatprep.subr.mxu0 %v2167
  %2231 = vmatpush1.msra.mxu0 %v2166
  %2232 = vmatprep.subr.mxu0 %v2163
  %2233 = vmatpush1.msra.mxu0 %v2162
  %2234 = vmatprep.subr.mxu0 %v2159
  %2235 = vmatpush1.msra.mxu0 %v2158
  %2236 = vmatprep.subr.mxu0 %v2155
  %2237 = vmatpush1.msra.mxu0 %v2154
  %2238 = vmatprep.subr.mxu0 %v2151
  %2239 = vmatpush1.msra.mxu0 %v2150
  %2240 = vmatprep.subr.mxu0 %v2147
  %2241 = vmatpush1.msra.mxu0 %v2146
  %2242 = vmatprep.subr.mxu0 0.0
  %2243 = vmatpush2.msra.mxu0 0.0
  %2244 = vmatprep.subr.mxu0 0.0
  %2245 = vmatpush2.msra.mxu0 0.0
  %2246 = vmatprep.subr.mxu0 0.0
  %2247 = vmatpush2.msra.mxu0 0.0
  %2248 = vmatprep.subr.mxu0 0.0
  %2249 = vmatpush2.msra.mxu0 0.0
  %2250 = vmatprep.subr.mxu0 0.0
  %2251 = vmatpush2.msra.mxu0 0.0
  %2252 = vmatprep.subr.mxu0 0.0
  %2253 = vmatpush2.msra.mxu0 0.0
  %2254 = vmatprep.subr.mxu0 0.0
  %2255 = vmatpush2.msra.mxu0 0.0
  %2256 = vmatprep.subr.mxu0 0.0
  %2257 = vmatpush2.msra.mxu0 0.0
  %2258 = vmatprep.subr.mxu0 0.0
  %2259 = vmatpush2.msra.mxu0 0.0
  %2260 = vmatprep.subr.mxu0 0.0
  %2261 = vmatpush2.msra.mxu0 0.0
  %2262 = vmatprep.subr.mxu0 0.0
  %2263 = vmatpush2.msra.mxu0 0.0
  %2264 = vmatprep.subr.mxu0 0.0
  %2265 = vmatpush2.msra.mxu0 0.0
  %2266 = vmatprep.subr.mxu0 0.0
  %2267 = vmatpush2.msra.mxu0 0.0
  %2268 = vmatprep.subr.mxu0 0.0
  %2269 = vmatpush2.msra.mxu0 0.0
  %2270 = vmatprep.subr.mxu0 0.0
  %2271 = vmatpush2.msra.mxu0 0.0
  %2272 = vmatprep.subr.mxu0 0.0
  %2273 = vmatpush2.msra.mxu0 0.0
  %2274 = vmatprep.mubr.f32.mxu0 0.0
  %2275 = vmatmul.mubr.f32.gmra.mxu0 %v2140
  %v2276 = vpop.f32.mrf.mxu0
  %v2277 = vadd.f32 0.0, %v2276
  %v2278 = vpop.f32.mrf.mxu0
  %v2279 = vadd.f32 0.0, %v2278
  %2280 = vdwg.mxu0
  %2281 = vmatprep.subr.mxu0 %v2209
  %2282 = vmatpush1.msra.mxu0 %v2208
  %2283 = vmatprep.subr.mxu0 %v2205
  %2284 = vmatpush1.msra.mxu0 %v2204
  %2285 = vmatprep.subr.mxu0 %v2201
  %2286 = vmatpush1.msra.mxu0 %v2200
  %2287 = vmatprep.subr.mxu0 %v2197
  %2288 = vmatpush1.msra.mxu0 %v2196
  %2289 = vmatprep.subr.mxu0 %v2193
  %2290 = vmatpush1.msra.mxu0 %v2192
  %2291 = vmatprep.subr.mxu0 %v2189
  %2292 = vmatpush1.msra.mxu0 %v2188
  %2293 = vmatprep.subr.mxu0 %v2185
  %2294 = vmatpush1.msra.mxu0 %v2184
  %2295 = vmatprep.subr.mxu0 %v2181
  %2296 = vmatpush1.msra.mxu0 %v2180
  %2297 = vmatprep.subr.mxu0 %v2177
  %2298 = vmatpush1.msra.mxu0 %v2176
  %2299 = vmatprep.subr.mxu0 %v2173
  %2300 = vmatpush1.msra.mxu0 %v2172
  %2301 = vmatprep.subr.mxu0 %v2169
  %2302 = vmatpush1.msra.mxu0 %v2168
  %2303 = vmatprep.subr.mxu0 %v2165
  %2304 = vmatpush1.msra.mxu0 %v2164
  %2305 = vmatprep.subr.mxu0 %v2161
  %2306 = vmatpush1.msra.mxu0 %v2160
  %2307 = vmatprep.subr.mxu0 %v2157
  %2308 = vmatpush1.msra.mxu0 %v2156
  %2309 = vmatprep.subr.mxu0 %v2153
  %2310 = vmatpush1.msra.mxu0 %v2152
  %2311 = vmatprep.subr.mxu0 %v2149
  %2312 = vmatpush1.msra.mxu0 %v2148
  %2313 = vmatprep.subr.mxu0 0.0
  %2314 = vmatpush2.msra.mxu0 0.0
  %2315 = vmatprep.subr.mxu0 0.0
  %2316 = vmatpush2.msra.mxu0 0.0
  %2317 = vmatprep.subr.mxu0 0.0
  %2318 = vmatpush2.msra.mxu0 0.0
  %2319 = vmatprep.subr.mxu0 0.0
  %2320 = vmatpush2.msra.mxu0 0.0
  %2321 = vmatprep.subr.mxu0 0.0
  %2322 = vmatpush2.msra.mxu0 0.0
  %2323 = vmatprep.subr.mxu0 0.0
  %2324 = vmatpush2.msra.mxu0 0.0
  %2325 = vmatprep.subr.mxu0 0.0
  %2326 = vmatpush2.msra.mxu0 0.0
  %2327 = vmatprep.subr.mxu0 0.0
  %2328 = vmatpush2.msra.mxu0 0.0
  %2329 = vmatprep.subr.mxu0 0.0
  %2330 = vmatpush2.msra.mxu0 0.0
  %2331 = vmatprep.subr.mxu0 0.0
  %2332 = vmatpush2.msra.mxu0 0.0
  %2333 = vmatprep.subr.mxu0 0.0
  %2334 = vmatpush2.msra.mxu0 0.0
  %2335 = vmatprep.subr.mxu0 0.0
  %2336 = vmatpush2.msra.mxu0 0.0
  %2337 = vmatprep.subr.mxu0 0.0
  %2338 = vmatpush2.msra.mxu0 0.0
  %2339 = vmatprep.subr.mxu0 0.0
  %2340 = vmatpush2.msra.mxu0 0.0
  %2341 = vmatprep.subr.mxu0 0.0
  %2342 = vmatpush2.msra.mxu0 0.0
  %2343 = vmatprep.subr.mxu0 0.0
  %2344 = vmatpush2.msra.mxu0 0.0
  %2345 = vmatprep.mubr.f32.mxu0 0.0
  %2346 = vmatmul.mubr.f32.gmra.mxu0 %v2140
  %v2347 = vpop.f32.mrf.mxu0
  %v2348 = vadd.f32 0.0, %v2347
  %v2349 = vpop.f32.mrf.mxu0
  %v2350 = vadd.f32 0.0, %v2349
  %2351 = vdwg.mxu0
  %v2352 = vadd.f32 %v2142, %v2277
  %v2353 = vadd.f32 %v2143, %v2279
  %v2354 = vadd.f32 %v2144, %v2348
  %v2355 = vadd.f32 %v2145, %v2350
  %v2356 = vxor.u32 %v2352, 2147483648
  %v2357 = vxor.u32 %v2353, 2147483648
  %v2358 = vxor.u32 %v2354, 2147483648
  %v2359 = vmul.f32 %v2356, 1.442695
  %v2360 = vpow.pop %v2359
  %v2361 = vmul.f32 %v2357, 1.442695
  %v2362 = vpow.pop %v2361
  %v2363 = vmul.f32 %v2358, 1.442695
  %v2364 = vpow.pop %v2363
  %v2365 = vadd.f32 %v2360, 1.0
  %v2366 = vadd.f32 %v2362, 1.0
  %v2367 = vadd.f32 %v2364, 1.0
  %v2368 = vrcp.pop %v2365
  %v2369 = vmul.f32 1.0, %v2368
  %v2370 = vrcp.pop %v2366
  %v2371 = vmul.f32 1.0, %v2370
  %v2372 = vrcp.pop %v2367
  %v2373 = vmul.f32 1.0, %v2372
  %v2374 = vtanh.pop %v2355
  %v2375 = vmul.f32 %v2371, %v2138
  %v2376 = vmul.f32 %v2369, %v2374
  %v2377 = vadd.f32 %v2375, %v2376
  %v2378 = vtanh.pop %v2377
  %v2379 = vmul.f32 %v2373, %v2378
  %2380 = vst [vmem:[#allocation2 + $0x20] sm:$0xff] %v2379
  %v2381 = vld [vmem:[#allocation3 + $0xa0] sm:$0xff]
  %v2382 = vld [vmem:[#allocation3 + $0xa8] sm:$0xff]
  %v2383 = vld [vmem:[#allocation3 + $0xb0] sm:$0xff]
  %v2384 = vld [vmem:[#allocation3 + $0xb8] sm:$0xff]
  %v2385 = vld [vmem:[%s3] sm:$0xff]
  %v2386 = vld [vmem:[%s3 + $0x8] sm:$0xff]
  %v2387 = vld [vmem:[%s3 + $0x10] sm:$0xff]
  %v2388 = vld [vmem:[%s3 + $0x18] sm:$0xff]
  %v2389 = vld [vmem:[%s3 + $0x20] sm:$0xff]
  %v2390 = vld [vmem:[%s3 + $0x28] sm:$0xff]
  %v2391 = vld [vmem:[%s3 + $0x30] sm:$0xff]
  %v2392 = vld [vmem:[%s3 + $0x38] sm:$0xff]
  %v2393 = vld [vmem:[%s3 + $0x40] sm:$0xff]
  %v2394 = vld [vmem:[%s3 + $0x48] sm:$0xff]
  %v2395 = vld [vmem:[%s3 + $0x50] sm:$0xff]
  %v2396 = vld [vmem:[%s3 + $0x58] sm:$0xff]
  %v2397 = vld [vmem:[%s3 + $0x60] sm:$0xff]
  %v2398 = vld [vmem:[%s3 + $0x68] sm:$0xff]
  %v2399 = vld [vmem:[%s3 + $0x70] sm:$0xff]
  %v2400 = vld [vmem:[%s3 + $0x78] sm:$0xff]
  %v2401 = vld [vmem:[%s3 + $0x80] sm:$0xff]
  %v2402 = vld [vmem:[%s3 + $0x88] sm:$0xff]
  %v2403 = vld [vmem:[%s3 + $0x90] sm:$0xff]
  %v2404 = vld [vmem:[%s3 + $0x98] sm:$0xff]
  %v2405 = vld [vmem:[%s3 + $0xa0] sm:$0xff]
  %v2406 = vld [vmem:[%s3 + $0xa8] sm:$0xff]
  %v2407 = vld [vmem:[%s3 + $0xb0] sm:$0xff]
  %v2408 = vld [vmem:[%s3 + $0xb8] sm:$0xff]
  %v2409 = vld [vmem:[%s3 + $0xc0] sm:$0xff]
  %v2410 = vld [vmem:[%s3 + $0xc8] sm:$0xff]
  %v2411 = vld [vmem:[%s3 + $0xd0] sm:$0xff]
  %v2412 = vld [vmem:[%s3 + $0xd8] sm:$0xff]
  %v2413 = vld [vmem:[%s3 + $0xe0] sm:$0xff]
  %v2414 = vld [vmem:[%s3 + $0xe8] sm:$0xff]
  %v2415 = vld [vmem:[%s3 + $0xf0] sm:$0xff]
  %v2416 = vld [vmem:[%s3 + $0xf8] sm:$0xff]
  %v2417 = vld [vmem:[%s3 + $0x100] sm:$0xff]
  %v2418 = vld [vmem:[%s3 + $0x108] sm:$0xff]
  %v2419 = vld [vmem:[%s3 + $0x110] sm:$0xff]
  %v2420 = vld [vmem:[%s3 + $0x118] sm:$0xff]
  %v2421 = vld [vmem:[%s3 + $0x120] sm:$0xff]
  %v2422 = vld [vmem:[%s3 + $0x128] sm:$0xff]
  %v2423 = vld [vmem:[%s3 + $0x130] sm:$0xff]
  %v2424 = vld [vmem:[%s3 + $0x138] sm:$0xff]
  %v2425 = vld [vmem:[%s3 + $0x140] sm:$0xff]
  %v2426 = vld [vmem:[%s3 + $0x148] sm:$0xff]
  %v2427 = vld [vmem:[%s3 + $0x150] sm:$0xff]
  %v2428 = vld [vmem:[%s3 + $0x158] sm:$0xff]
  %v2429 = vld [vmem:[%s3 + $0x160] sm:$0xff]
  %v2430 = vld [vmem:[%s3 + $0x168] sm:$0xff]
  %v2431 = vld [vmem:[%s3 + $0x170] sm:$0xff]
  %v2432 = vld [vmem:[%s3 + $0x178] sm:$0xff]
  %v2433 = vld [vmem:[%s3 + $0x180] sm:$0xff]
  %v2434 = vld [vmem:[%s3 + $0x188] sm:$0xff]
  %v2435 = vld [vmem:[%s3 + $0x190] sm:$0xff]
  %v2436 = vld [vmem:[%s3 + $0x198] sm:$0xff]
  %v2437 = vld [vmem:[%s3 + $0x1a0] sm:$0xff]
  %v2438 = vld [vmem:[%s3 + $0x1a8] sm:$0xff]
  %v2439 = vld [vmem:[%s3 + $0x1b0] sm:$0xff]
  %v2440 = vld [vmem:[%s3 + $0x1b8] sm:$0xff]
  %v2441 = vld [vmem:[%s3 + $0x1c0] sm:$0xff]
  %v2442 = vld [vmem:[%s3 + $0x1c8] sm:$0xff]
  %v2443 = vld [vmem:[%s3 + $0x1d0] sm:$0xff]
  %v2444 = vld [vmem:[%s3 + $0x1d8] sm:$0xff]
  %v2445 = vld [vmem:[%s3 + $0x1e0] sm:$0xff]
  %v2446 = vld [vmem:[%s3 + $0x1e8] sm:$0xff]
  %v2447 = vld [vmem:[%s3 + $0x1f0] sm:$0xff]
  %v2448 = vld [vmem:[%s3 + $0x1f8] sm:$0xff]
  %2449 = vmatprep.subr.mxu0 %v2446
  %2450 = vmatpush1.msra.mxu0 %v2445
  %2451 = vmatprep.subr.mxu0 %v2442
  %2452 = vmatpush1.msra.mxu0 %v2441
  %2453 = vmatprep.subr.mxu0 %v2438
  %2454 = vmatpush1.msra.mxu0 %v2437
  %2455 = vmatprep.subr.mxu0 %v2434
  %2456 = vmatpush1.msra.mxu0 %v2433
  %2457 = vmatprep.subr.mxu0 %v2430
  %2458 = vmatpush1.msra.mxu0 %v2429
  %2459 = vmatprep.subr.mxu0 %v2426
  %2460 = vmatpush1.msra.mxu0 %v2425
  %2461 = vmatprep.subr.mxu0 %v2422
  %2462 = vmatpush1.msra.mxu0 %v2421
  %2463 = vmatprep.subr.mxu0 %v2418
  %2464 = vmatpush1.msra.mxu0 %v2417
  %2465 = vmatprep.subr.mxu0 %v2414
  %2466 = vmatpush1.msra.mxu0 %v2413
  %2467 = vmatprep.subr.mxu0 %v2410
  %2468 = vmatpush1.msra.mxu0 %v2409
  %2469 = vmatprep.subr.mxu0 %v2406
  %2470 = vmatpush1.msra.mxu0 %v2405
  %2471 = vmatprep.subr.mxu0 %v2402
  %2472 = vmatpush1.msra.mxu0 %v2401
  %2473 = vmatprep.subr.mxu0 %v2398
  %2474 = vmatpush1.msra.mxu0 %v2397
  %2475 = vmatprep.subr.mxu0 %v2394
  %2476 = vmatpush1.msra.mxu0 %v2393
  %2477 = vmatprep.subr.mxu0 %v2390
  %2478 = vmatpush1.msra.mxu0 %v2389
  %2479 = vmatprep.subr.mxu0 %v2386
  %2480 = vmatpush1.msra.mxu0 %v2385
  %2481 = vmatprep.subr.mxu0 0.0
  %2482 = vmatpush2.msra.mxu0 0.0
  %2483 = vmatprep.subr.mxu0 0.0
  %2484 = vmatpush2.msra.mxu0 0.0
  %2485 = vmatprep.subr.mxu0 0.0
  %2486 = vmatpush2.msra.mxu0 0.0
  %2487 = vmatprep.subr.mxu0 0.0
  %2488 = vmatpush2.msra.mxu0 0.0
  %2489 = vmatprep.subr.mxu0 0.0
  %2490 = vmatpush2.msra.mxu0 0.0
  %2491 = vmatprep.subr.mxu0 0.0
  %2492 = vmatpush2.msra.mxu0 0.0
  %2493 = vmatprep.subr.mxu0 0.0
  %2494 = vmatpush2.msra.mxu0 0.0
  %2495 = vmatprep.subr.mxu0 0.0
  %2496 = vmatpush2.msra.mxu0 0.0
  %2497 = vmatprep.subr.mxu0 0.0
  %2498 = vmatpush2.msra.mxu0 0.0
  %2499 = vmatprep.subr.mxu0 0.0
  %2500 = vmatpush2.msra.mxu0 0.0
  %2501 = vmatprep.subr.mxu0 0.0
  %2502 = vmatpush2.msra.mxu0 0.0
  %2503 = vmatprep.subr.mxu0 0.0
  %2504 = vmatpush2.msra.mxu0 0.0
  %2505 = vmatprep.subr.mxu0 0.0
  %2506 = vmatpush2.msra.mxu0 0.0
  %2507 = vmatprep.subr.mxu0 0.0
  %2508 = vmatpush2.msra.mxu0 0.0
  %2509 = vmatprep.subr.mxu0 0.0
  %2510 = vmatpush2.msra.mxu0 0.0
  %2511 = vmatprep.subr.mxu0 0.0
  %2512 = vmatpush2.msra.mxu0 0.0
  %2513 = vmatprep.mubr.f32.mxu0 0.0
  %2514 = vmatmul.mubr.f32.gmra.mxu0 %v2379
  %v2515 = vpop.f32.mrf.mxu0
  %v2516 = vadd.f32 0.0, %v2515
  %v2517 = vpop.f32.mrf.mxu0
  %v2518 = vadd.f32 0.0, %v2517
  %2519 = vdwg.mxu0
  %2520 = vmatprep.subr.mxu0 %v2448
  %2521 = vmatpush1.msra.mxu0 %v2447
  %2522 = vmatprep.subr.mxu0 %v2444
  %2523 = vmatpush1.msra.mxu0 %v2443
  %2524 = vmatprep.subr.mxu0 %v2440
  %2525 = vmatpush1.msra.mxu0 %v2439
  %2526 = vmatprep.subr.mxu0 %v2436
  %2527 = vmatpush1.msra.mxu0 %v2435
  %2528 = vmatprep.subr.mxu0 %v2432
  %2529 = vmatpush1.msra.mxu0 %v2431
  %2530 = vmatprep.subr.mxu0 %v2428
  %2531 = vmatpush1.msra.mxu0 %v2427
  %2532 = vmatprep.subr.mxu0 %v2424
  %2533 = vmatpush1.msra.mxu0 %v2423
  %2534 = vmatprep.subr.mxu0 %v2420
  %2535 = vmatpush1.msra.mxu0 %v2419
  %2536 = vmatprep.subr.mxu0 %v2416
  %2537 = vmatpush1.msra.mxu0 %v2415
  %2538 = vmatprep.subr.mxu0 %v2412
  %2539 = vmatpush1.msra.mxu0 %v2411
  %2540 = vmatprep.subr.mxu0 %v2408
  %2541 = vmatpush1.msra.mxu0 %v2407
  %2542 = vmatprep.subr.mxu0 %v2404
  %2543 = vmatpush1.msra.mxu0 %v2403
  %2544 = vmatprep.subr.mxu0 %v2400
  %2545 = vmatpush1.msra.mxu0 %v2399
  %2546 = vmatprep.subr.mxu0 %v2396
  %2547 = vmatpush1.msra.mxu0 %v2395
  %2548 = vmatprep.subr.mxu0 %v2392
  %2549 = vmatpush1.msra.mxu0 %v2391
  %2550 = vmatprep.subr.mxu0 %v2388
  %2551 = vmatpush1.msra.mxu0 %v2387
  %2552 = vmatprep.subr.mxu0 0.0
  %2553 = vmatpush2.msra.mxu0 0.0
  %2554 = vmatprep.subr.mxu0 0.0
  %2555 = vmatpush2.msra.mxu0 0.0
  %2556 = vmatprep.subr.mxu0 0.0
  %2557 = vmatpush2.msra.mxu0 0.0
  %2558 = vmatprep.subr.mxu0 0.0
  %2559 = vmatpush2.msra.mxu0 0.0
  %2560 = vmatprep.subr.mxu0 0.0
  %2561 = vmatpush2.msra.mxu0 0.0
  %2562 = vmatprep.subr.mxu0 0.0
  %2563 = vmatpush2.msra.mxu0 0.0
  %2564 = vmatprep.subr.mxu0 0.0
  %2565 = vmatpush2.msra.mxu0 0.0
  %2566 = vmatprep.subr.mxu0 0.0
  %2567 = vmatpush2.msra.mxu0 0.0
  %2568 = vmatprep.subr.mxu0 0.0
  %2569 = vmatpush2.msra.mxu0 0.0
  %2570 = vmatprep.subr.mxu0 0.0
  %2571 = vmatpush2.msra.mxu0 0.0
  %2572 = vmatprep.subr.mxu0 0.0
  %2573 = vmatpush2.msra.mxu0 0.0
  %2574 = vmatprep.subr.mxu0 0.0
  %2575 = vmatpush2.msra.mxu0 0.0
  %2576 = vmatprep.subr.mxu0 0.0
  %2577 = vmatpush2.msra.mxu0 0.0
  %2578 = vmatprep.subr.mxu0 0.0
  %2579 = vmatpush2.msra.mxu0 0.0
  %2580 = vmatprep.subr.mxu0 0.0
  %2581 = vmatpush2.msra.mxu0 0.0
  %2582 = vmatprep.subr.mxu0 0.0
  %2583 = vmatpush2.msra.mxu0 0.0
  %2584 = vmatprep.mubr.f32.mxu0 0.0
  %2585 = vmatmul.mubr.f32.gmra.mxu0 %v2379
  %v2586 = vpop.f32.mrf.mxu0
  %v2587 = vadd.f32 0.0, %v2586
  %v2588 = vpop.f32.mrf.mxu0
  %v2589 = vadd.f32 0.0, %v2588
  %2590 = vdwg.mxu0
  %v2591 = vadd.f32 %v2381, %v2516
  %v2592 = vadd.f32 %v2382, %v2518
  %v2593 = vadd.f32 %v2383, %v2587
  %v2594 = vadd.f32 %v2384, %v2589
  %v2595 = vxor.u32 %v2591, 2147483648
  %v2596 = vxor.u32 %v2592, 2147483648
  %v2597 = vxor.u32 %v2593, 2147483648
  %v2598 = vmul.f32 %v2595, 1.442695
  %v2599 = vpow.pop %v2598
  %v2600 = vmul.f32 %v2596, 1.442695
  %v2601 = vpow.pop %v2600
  %v2602 = vmul.f32 %v2597, 1.442695
  %v2603 = vpow.pop %v2602
  %v2604 = vadd.f32 %v2599, 1.0
  %v2605 = vadd.f32 %v2601, 1.0
  %v2606 = vadd.f32 %v2603, 1.0
  %v2607 = vrcp.pop %v2604
  %v2608 = vmul.f32 1.0, %v2607
  %v2609 = vrcp.pop %v2605
  %v2610 = vmul.f32 1.0, %v2609
  %v2611 = vrcp.pop %v2606
  %v2612 = vmul.f32 1.0, %v2611
  %v2613 = vtanh.pop %v2594
  %v2614 = vmul.f32 %v2610, %v2377
  %v2615 = vmul.f32 %v2608, %v2613
  %v2616 = vadd.f32 %v2614, %v2615
  %v2617 = vtanh.pop %v2616
  %v2618 = vmul.f32 %v2612, %v2617
  %2619 = vst [vmem:[#allocation2 + $0x28] sm:$0xff] %v2618
  %v2620 = vld [vmem:[#allocation3 + $0xc0] sm:$0xff]
  %v2621 = vld [vmem:[#allocation3 + $0xc8] sm:$0xff]
  %v2622 = vld [vmem:[#allocation3 + $0xd0] sm:$0xff]
  %v2623 = vld [vmem:[#allocation3 + $0xd8] sm:$0xff]
  %v2624 = vld [vmem:[%s3] sm:$0xff]
  %v2625 = vld [vmem:[%s3 + $0x8] sm:$0xff]
  %v2626 = vld [vmem:[%s3 + $0x10] sm:$0xff]
  %v2627 = vld [vmem:[%s3 + $0x18] sm:$0xff]
  %v2628 = vld [vmem:[%s3 + $0x20] sm:$0xff]
  %v2629 = vld [vmem:[%s3 + $0x28] sm:$0xff]
  %v2630 = vld [vmem:[%s3 + $0x30] sm:$0xff]
  %v2631 = vld [vmem:[%s3 + $0x38] sm:$0xff]
  %v2632 = vld [vmem:[%s3 + $0x40] sm:$0xff]
  %v2633 = vld [vmem:[%s3 + $0x48] sm:$0xff]
  %v2634 = vld [vmem:[%s3 + $0x50] sm:$0xff]
  %v2635 = vld [vmem:[%s3 + $0x58] sm:$0xff]
  %v2636 = vld [vmem:[%s3 + $0x60] sm:$0xff]
  %v2637 = vld [vmem:[%s3 + $0x68] sm:$0xff]
  %v2638 = vld [vmem:[%s3 + $0x70] sm:$0xff]
  %v2639 = vld [vmem:[%s3 + $0x78] sm:$0xff]
  %v2640 = vld [vmem:[%s3 + $0x80] sm:$0xff]
  %v2641 = vld [vmem:[%s3 + $0x88] sm:$0xff]
  %v2642 = vld [vmem:[%s3 + $0x90] sm:$0xff]
  %v2643 = vld [vmem:[%s3 + $0x98] sm:$0xff]
  %v2644 = vld [vmem:[%s3 + $0xa0] sm:$0xff]
  %v2645 = vld [vmem:[%s3 + $0xa8] sm:$0xff]
  %v2646 = vld [vmem:[%s3 + $0xb0] sm:$0xff]
  %v2647 = vld [vmem:[%s3 + $0xb8] sm:$0xff]
  %v2648 = vld [vmem:[%s3 + $0xc0] sm:$0xff]
  %v2649 = vld [vmem:[%s3 + $0xc8] sm:$0xff]
  %v2650 = vld [vmem:[%s3 + $0xd0] sm:$0xff]
  %v2651 = vld [vmem:[%s3 + $0xd8] sm:$0xff]
  %v2652 = vld [vmem:[%s3 + $0xe0] sm:$0xff]
  %v2653 = vld [vmem:[%s3 + $0xe8] sm:$0xff]
  %v2654 = vld [vmem:[%s3 + $0xf0] sm:$0xff]
  %v2655 = vld [vmem:[%s3 + $0xf8] sm:$0xff]
  %v2656 = vld [vmem:[%s3 + $0x100] sm:$0xff]
  %v2657 = vld [vmem:[%s3 + $0x108] sm:$0xff]
  %v2658 = vld [vmem:[%s3 + $0x110] sm:$0xff]
  %v2659 = vld [vmem:[%s3 + $0x118] sm:$0xff]
  %v2660 = vld [vmem:[%s3 + $0x120] sm:$0xff]
  %v2661 = vld [vmem:[%s3 + $0x128] sm:$0xff]
  %v2662 = vld [vmem:[%s3 + $0x130] sm:$0xff]
  %v2663 = vld [vmem:[%s3 + $0x138] sm:$0xff]
  %v2664 = vld [vmem:[%s3 + $0x140] sm:$0xff]
  %v2665 = vld [vmem:[%s3 + $0x148] sm:$0xff]
  %v2666 = vld [vmem:[%s3 + $0x150] sm:$0xff]
  %v2667 = vld [vmem:[%s3 + $0x158] sm:$0xff]
  %v2668 = vld [vmem:[%s3 + $0x160] sm:$0xff]
  %v2669 = vld [vmem:[%s3 + $0x168] sm:$0xff]
  %v2670 = vld [vmem:[%s3 + $0x170] sm:$0xff]
  %v2671 = vld [vmem:[%s3 + $0x178] sm:$0xff]
  %v2672 = vld [vmem:[%s3 + $0x180] sm:$0xff]
  %v2673 = vld [vmem:[%s3 + $0x188] sm:$0xff]
  %v2674 = vld [vmem:[%s3 + $0x190] sm:$0xff]
  %v2675 = vld [vmem:[%s3 + $0x198] sm:$0xff]
  %v2676 = vld [vmem:[%s3 + $0x1a0] sm:$0xff]
  %v2677 = vld [vmem:[%s3 + $0x1a8] sm:$0xff]
  %v2678 = vld [vmem:[%s3 + $0x1b0] sm:$0xff]
  %v2679 = vld [vmem:[%s3 + $0x1b8] sm:$0xff]
  %v2680 = vld [vmem:[%s3 + $0x1c0] sm:$0xff]
  %v2681 = vld [vmem:[%s3 + $0x1c8] sm:$0xff]
  %v2682 = vld [vmem:[%s3 + $0x1d0] sm:$0xff]
  %v2683 = vld [vmem:[%s3 + $0x1d8] sm:$0xff]
  %v2684 = vld [vmem:[%s3 + $0x1e0] sm:$0xff]
  %v2685 = vld [vmem:[%s3 + $0x1e8] sm:$0xff]
  %v2686 = vld [vmem:[%s3 + $0x1f0] sm:$0xff]
  %v2687 = vld [vmem:[%s3 + $0x1f8] sm:$0xff]
  %2688 = vmatprep.subr.mxu0 %v2685
  %2689 = vmatpush1.msra.mxu0 %v2684
  %2690 = vmatprep.subr.mxu0 %v2681
  %2691 = vmatpush1.msra.mxu0 %v2680
  %2692 = vmatprep.subr.mxu0 %v2677
  %2693 = vmatpush1.msra.mxu0 %v2676
  %2694 = vmatprep.subr.mxu0 %v2673
  %2695 = vmatpush1.msra.mxu0 %v2672
  %2696 = vmatprep.subr.mxu0 %v2669
  %2697 = vmatpush1.msra.mxu0 %v2668
  %2698 = vmatprep.subr.mxu0 %v2665
  %2699 = vmatpush1.msra.mxu0 %v2664
  %2700 = vmatprep.subr.mxu0 %v2661
  %2701 = vmatpush1.msra.mxu0 %v2660
  %2702 = vmatprep.subr.mxu0 %v2657
  %2703 = vmatpush1.msra.mxu0 %v2656
  %2704 = vmatprep.subr.mxu0 %v2653
  %2705 = vmatpush1.msra.mxu0 %v2652
  %2706 = vmatprep.subr.mxu0 %v2649
  %2707 = vmatpush1.msra.mxu0 %v2648
  %2708 = vmatprep.subr.mxu0 %v2645
  %2709 = vmatpush1.msra.mxu0 %v2644
  %2710 = vmatprep.subr.mxu0 %v2641
  %2711 = vmatpush1.msra.mxu0 %v2640
  %2712 = vmatprep.subr.mxu0 %v2637
  %2713 = vmatpush1.msra.mxu0 %v2636
  %2714 = vmatprep.subr.mxu0 %v2633
  %2715 = vmatpush1.msra.mxu0 %v2632
  %2716 = vmatprep.subr.mxu0 %v2629
  %2717 = vmatpush1.msra.mxu0 %v2628
  %2718 = vmatprep.subr.mxu0 %v2625
  %2719 = vmatpush1.msra.mxu0 %v2624
  %2720 = vmatprep.subr.mxu0 0.0
  %2721 = vmatpush2.msra.mxu0 0.0
  %2722 = vmatprep.subr.mxu0 0.0
  %2723 = vmatpush2.msra.mxu0 0.0
  %2724 = vmatprep.subr.mxu0 0.0
  %2725 = vmatpush2.msra.mxu0 0.0
  %2726 = vmatprep.subr.mxu0 0.0
  %2727 = vmatpush2.msra.mxu0 0.0
  %2728 = vmatprep.subr.mxu0 0.0
  %2729 = vmatpush2.msra.mxu0 0.0
  %2730 = vmatprep.subr.mxu0 0.0
  %2731 = vmatpush2.msra.mxu0 0.0
  %2732 = vmatprep.subr.mxu0 0.0
  %2733 = vmatpush2.msra.mxu0 0.0
  %2734 = vmatprep.subr.mxu0 0.0
  %2735 = vmatpush2.msra.mxu0 0.0
  %2736 = vmatprep.subr.mxu0 0.0
  %2737 = vmatpush2.msra.mxu0 0.0
  %2738 = vmatprep.subr.mxu0 0.0
  %2739 = vmatpush2.msra.mxu0 0.0
  %2740 = vmatprep.subr.mxu0 0.0
  %2741 = vmatpush2.msra.mxu0 0.0
  %2742 = vmatprep.subr.mxu0 0.0
  %2743 = vmatpush2.msra.mxu0 0.0
  %2744 = vmatprep.subr.mxu0 0.0
  %2745 = vmatpush2.msra.mxu0 0.0
  %2746 = vmatprep.subr.mxu0 0.0
  %2747 = vmatpush2.msra.mxu0 0.0
  %2748 = vmatprep.subr.mxu0 0.0
  %2749 = vmatpush2.msra.mxu0 0.0
  %2750 = vmatprep.subr.mxu0 0.0
  %2751 = vmatpush2.msra.mxu0 0.0
  %2752 = vmatprep.mubr.f32.mxu0 0.0
  %2753 = vmatmul.mubr.f32.gmra.mxu0 %v2618
  %v2754 = vpop.f32.mrf.mxu0
  %v2755 = vadd.f32 0.0, %v2754
  %v2756 = vpop.f32.mrf.mxu0
  %v2757 = vadd.f32 0.0, %v2756
  %2758 = vdwg.mxu0
  %2759 = vmatprep.subr.mxu0 %v2687
  %2760 = vmatpush1.msra.mxu0 %v2686
  %2761 = vmatprep.subr.mxu0 %v2683
  %2762 = vmatpush1.msra.mxu0 %v2682
  %2763 = vmatprep.subr.mxu0 %v2679
  %2764 = vmatpush1.msra.mxu0 %v2678
  %2765 = vmatprep.subr.mxu0 %v2675
  %2766 = vmatpush1.msra.mxu0 %v2674
  %2767 = vmatprep.subr.mxu0 %v2671
  %2768 = vmatpush1.msra.mxu0 %v2670
  %2769 = vmatprep.subr.mxu0 %v2667
  %2770 = vmatpush1.msra.mxu0 %v2666
  %2771 = vmatprep.subr.mxu0 %v2663
  %2772 = vmatpush1.msra.mxu0 %v2662
  %2773 = vmatprep.subr.mxu0 %v2659
  %2774 = vmatpush1.msra.mxu0 %v2658
  %2775 = vmatprep.subr.mxu0 %v2655
  %2776 = vmatpush1.msra.mxu0 %v2654
  %2777 = vmatprep.subr.mxu0 %v2651
  %2778 = vmatpush1.msra.mxu0 %v2650
  %2779 = vmatprep.subr.mxu0 %v2647
  %2780 = vmatpush1.msra.mxu0 %v2646
  %2781 = vmatprep.subr.mxu0 %v2643
  %2782 = vmatpush1.msra.mxu0 %v2642
  %2783 = vmatprep.subr.mxu0 %v2639
  %2784 = vmatpush1.msra.mxu0 %v2638
  %2785 = vmatprep.subr.mxu0 %v2635
  %2786 = vmatpush1.msra.mxu0 %v2634
  %2787 = vmatprep.subr.mxu0 %v2631
  %2788 = vmatpush1.msra.mxu0 %v2630
  %2789 = vmatprep.subr.mxu0 %v2627
  %2790 = vmatpush1.msra.mxu0 %v2626
  %2791 = vmatprep.subr.mxu0 0.0
  %2792 = vmatpush2.msra.mxu0 0.0
  %2793 = vmatprep.subr.mxu0 0.0
  %2794 = vmatpush2.msra.mxu0 0.0
  %2795 = vmatprep.subr.mxu0 0.0
  %2796 = vmatpush2.msra.mxu0 0.0
  %2797 = vmatprep.subr.mxu0 0.0
  %2798 = vmatpush2.msra.mxu0 0.0
  %2799 = vmatprep.subr.mxu0 0.0
  %2800 = vmatpush2.msra.mxu0 0.0
  %2801 = vmatprep.subr.mxu0 0.0
  %2802 = vmatpush2.msra.mxu0 0.0
  %2803 = vmatprep.subr.mxu0 0.0
  %2804 = vmatpush2.msra.mxu0 0.0
  %2805 = vmatprep.subr.mxu0 0.0
  %2806 = vmatpush2.msra.mxu0 0.0
  %2807 = vmatprep.subr.mxu0 0.0
  %2808 = vmatpush2.msra.mxu0 0.0
  %2809 = vmatprep.subr.mxu0 0.0
  %2810 = vmatpush2.msra.mxu0 0.0
  %2811 = vmatprep.subr.mxu0 0.0
  %2812 = vmatpush2.msra.mxu0 0.0
  %2813 = vmatprep.subr.mxu0 0.0
  %2814 = vmatpush2.msra.mxu0 0.0
  %2815 = vmatprep.subr.mxu0 0.0
  %2816 = vmatpush2.msra.mxu0 0.0
  %2817 = vmatprep.subr.mxu0 0.0
  %2818 = vmatpush2.msra.mxu0 0.0
  %2819 = vmatprep.subr.mxu0 0.0
  %2820 = vmatpush2.msra.mxu0 0.0
  %2821 = vmatprep.subr.mxu0 0.0
  %2822 = vmatpush2.msra.mxu0 0.0
  %2823 = vmatprep.mubr.f32.mxu0 0.0
  %2824 = vmatmul.mubr.f32.gmra.mxu0 %v2618
  %v2825 = vpop.f32.mrf.mxu0
  %v2826 = vadd.f32 0.0, %v2825
  %v2827 = vpop.f32.mrf.mxu0
  %v2828 = vadd.f32 0.0, %v2827
  %2829 = vdwg.mxu0
  %v2830 = vadd.f32 %v2620, %v2755
  %v2831 = vadd.f32 %v2621, %v2757
  %v2832 = vadd.f32 %v2622, %v2826
  %v2833 = vadd.f32 %v2623, %v2828
  %v2834 = vxor.u32 %v2830, 2147483648
  %v2835 = vxor.u32 %v2831, 2147483648
  %v2836 = vxor.u32 %v2832, 2147483648
  %v2837 = vmul.f32 %v2834, 1.442695
  %v2838 = vpow.pop %v2837
  %v2839 = vmul.f32 %v2835, 1.442695
  %v2840 = vpow.pop %v2839
  %v2841 = vmul.f32 %v2836, 1.442695
  %v2842 = vpow.pop %v2841
  %v2843 = vadd.f32 %v2838, 1.0
  %v2844 = vadd.f32 %v2840, 1.0
  %v2845 = vadd.f32 %v2842, 1.0
  %v2846 = vrcp.pop %v2843
  %v2847 = vmul.f32 1.0, %v2846
  %v2848 = vrcp.pop %v2844
  %v2849 = vmul.f32 1.0, %v2848
  %v2850 = vrcp.pop %v2845
  %v2851 = vmul.f32 1.0, %v2850
  %v2852 = vtanh.pop %v2833
  %v2853 = vmul.f32 %v2849, %v2616
  %v2854 = vmul.f32 %v2847, %v2852
  %v2855 = vadd.f32 %v2853, %v2854
  %v2856 = vtanh.pop %v2855
  %v2857 = vmul.f32 %v2851, %v2856
  %2858 = vst [vmem:[#allocation2 + $0x30] sm:$0xff] %v2857
  %v2859 = vld [vmem:[#allocation3 + $0xe0] sm:$0xff]
  %v2860 = vld [vmem:[#allocation3 + $0xe8] sm:$0xff]
  %v2861 = vld [vmem:[#allocation3 + $0xf0] sm:$0xff]
  %v2862 = vld [vmem:[#allocation3 + $0xf8] sm:$0xff]
  %v2863 = vld [vmem:[%s3] sm:$0xff]
  %v2864 = vld [vmem:[%s3 + $0x8] sm:$0xff]
  %v2865 = vld [vmem:[%s3 + $0x10] sm:$0xff]
  %v2866 = vld [vmem:[%s3 + $0x18] sm:$0xff]
  %v2867 = vld [vmem:[%s3 + $0x20] sm:$0xff]
  %v2868 = vld [vmem:[%s3 + $0x28] sm:$0xff]
  %v2869 = vld [vmem:[%s3 + $0x30] sm:$0xff]
  %v2870 = vld [vmem:[%s3 + $0x38] sm:$0xff]
  %v2871 = vld [vmem:[%s3 + $0x40] sm:$0xff]
  %v2872 = vld [vmem:[%s3 + $0x48] sm:$0xff]
  %v2873 = vld [vmem:[%s3 + $0x50] sm:$0xff]
  %v2874 = vld [vmem:[%s3 + $0x58] sm:$0xff]
  %v2875 = vld [vmem:[%s3 + $0x60] sm:$0xff]
  %v2876 = vld [vmem:[%s3 + $0x68] sm:$0xff]
  %v2877 = vld [vmem:[%s3 + $0x70] sm:$0xff]
  %v2878 = vld [vmem:[%s3 + $0x78] sm:$0xff]
  %v2879 = vld [vmem:[%s3 + $0x80] sm:$0xff]
  %v2880 = vld [vmem:[%s3 + $0x88] sm:$0xff]
  %v2881 = vld [vmem:[%s3 + $0x90] sm:$0xff]
  %v2882 = vld [vmem:[%s3 + $0x98] sm:$0xff]
  %v2883 = vld [vmem:[%s3 + $0xa0] sm:$0xff]
  %v2884 = vld [vmem:[%s3 + $0xa8] sm:$0xff]
  %v2885 = vld [vmem:[%s3 + $0xb0] sm:$0xff]
  %v2886 = vld [vmem:[%s3 + $0xb8] sm:$0xff]
  %v2887 = vld [vmem:[%s3 + $0xc0] sm:$0xff]
  %v2888 = vld [vmem:[%s3 + $0xc8] sm:$0xff]
  %v2889 = vld [vmem:[%s3 + $0xd0] sm:$0xff]
  %v2890 = vld [vmem:[%s3 + $0xd8] sm:$0xff]
  %v2891 = vld [vmem:[%s3 + $0xe0] sm:$0xff]
  %v2892 = vld [vmem:[%s3 + $0xe8] sm:$0xff]
  %v2893 = vld [vmem:[%s3 + $0xf0] sm:$0xff]
  %v2894 = vld [vmem:[%s3 + $0xf8] sm:$0xff]
  %v2895 = vld [vmem:[%s3 + $0x100] sm:$0xff]
  %v2896 = vld [vmem:[%s3 + $0x108] sm:$0xff]
  %v2897 = vld [vmem:[%s3 + $0x110] sm:$0xff]
  %v2898 = vld [vmem:[%s3 + $0x118] sm:$0xff]
  %v2899 = vld [vmem:[%s3 + $0x120] sm:$0xff]
  %v2900 = vld [vmem:[%s3 + $0x128] sm:$0xff]
  %v2901 = vld [vmem:[%s3 + $0x130] sm:$0xff]
  %v2902 = vld [vmem:[%s3 + $0x138] sm:$0xff]
  %v2903 = vld [vmem:[%s3 + $0x140] sm:$0xff]
  %v2904 = vld [vmem:[%s3 + $0x148] sm:$0xff]
  %v2905 = vld [vmem:[%s3 + $0x150] sm:$0xff]
  %v2906 = vld [vmem:[%s3 + $0x158] sm:$0xff]
  %v2907 = vld [vmem:[%s3 + $0x160] sm:$0xff]
  %v2908 = vld [vmem:[%s3 + $0x168] sm:$0xff]
  %v2909 = vld [vmem:[%s3 + $0x170] sm:$0xff]
  %v2910 = vld [vmem:[%s3 + $0x178] sm:$0xff]
  %v2911 = vld [vmem:[%s3 + $0x180] sm:$0xff]
  %v2912 = vld [vmem:[%s3 + $0x188] sm:$0xff]
  %v2913 = vld [vmem:[%s3 + $0x190] sm:$0xff]
  %v2914 = vld [vmem:[%s3 + $0x198] sm:$0xff]
  %v2915 = vld [vmem:[%s3 + $0x1a0] sm:$0xff]
  %v2916 = vld [vmem:[%s3 + $0x1a8] sm:$0xff]
  %v2917 = vld [vmem:[%s3 + $0x1b0] sm:$0xff]
  %v2918 = vld [vmem:[%s3 + $0x1b8] sm:$0xff]
  %v2919 = vld [vmem:[%s3 + $0x1c0] sm:$0xff]
  %v2920 = vld [vmem:[%s3 + $0x1c8] sm:$0xff]
  %v2921 = vld [vmem:[%s3 + $0x1d0] sm:$0xff]
  %v2922 = vld [vmem:[%s3 + $0x1d8] sm:$0xff]
  %v2923 = vld [vmem:[%s3 + $0x1e0] sm:$0xff]
  %v2924 = vld [vmem:[%s3 + $0x1e8] sm:$0xff]
  %v2925 = vld [vmem:[%s3 + $0x1f0] sm:$0xff]
  %v2926 = vld [vmem:[%s3 + $0x1f8] sm:$0xff]
  %2927 = vmatprep.subr.mxu0 %v2924
  %2928 = vmatpush1.msra.mxu0 %v2923
  %2929 = vmatprep.subr.mxu0 %v2920
  %2930 = vmatpush1.msra.mxu0 %v2919
  %2931 = vmatprep.subr.mxu0 %v2916
  %2932 = vmatpush1.msra.mxu0 %v2915
  %2933 = vmatprep.subr.mxu0 %v2912
  %2934 = vmatpush1.msra.mxu0 %v2911
  %2935 = vmatprep.subr.mxu0 %v2908
  %2936 = vmatpush1.msra.mxu0 %v2907
  %2937 = vmatprep.subr.mxu0 %v2904
  %2938 = vmatpush1.msra.mxu0 %v2903
  %2939 = vmatprep.subr.mxu0 %v2900
  %2940 = vmatpush1.msra.mxu0 %v2899
  %2941 = vmatprep.subr.mxu0 %v2896
  %2942 = vmatpush1.msra.mxu0 %v2895
  %2943 = vmatprep.subr.mxu0 %v2892
  %2944 = vmatpush1.msra.mxu0 %v2891
  %2945 = vmatprep.subr.mxu0 %v2888
  %2946 = vmatpush1.msra.mxu0 %v2887
  %2947 = vmatprep.subr.mxu0 %v2884
  %2948 = vmatpush1.msra.mxu0 %v2883
  %2949 = vmatprep.subr.mxu0 %v2880
  %2950 = vmatpush1.msra.mxu0 %v2879
  %2951 = vmatprep.subr.mxu0 %v2876
  %2952 = vmatpush1.msra.mxu0 %v2875
  %2953 = vmatprep.subr.mxu0 %v2872
  %2954 = vmatpush1.msra.mxu0 %v2871
  %2955 = vmatprep.subr.mxu0 %v2868
  %2956 = vmatpush1.msra.mxu0 %v2867
  %2957 = vmatprep.subr.mxu0 %v2864
  %2958 = vmatpush1.msra.mxu0 %v2863
  %2959 = vmatprep.subr.mxu0 0.0
  %2960 = vmatpush2.msra.mxu0 0.0
  %2961 = vmatprep.subr.mxu0 0.0
  %2962 = vmatpush2.msra.mxu0 0.0
  %2963 = vmatprep.subr.mxu0 0.0
  %2964 = vmatpush2.msra.mxu0 0.0
  %2965 = vmatprep.subr.mxu0 0.0
  %2966 = vmatpush2.msra.mxu0 0.0
  %2967 = vmatprep.subr.mxu0 0.0
  %2968 = vmatpush2.msra.mxu0 0.0
  %2969 = vmatprep.subr.mxu0 0.0
  %2970 = vmatpush2.msra.mxu0 0.0
  %2971 = vmatprep.subr.mxu0 0.0
  %2972 = vmatpush2.msra.mxu0 0.0
  %2973 = vmatprep.subr.mxu0 0.0
  %2974 = vmatpush2.msra.mxu0 0.0
  %2975 = vmatprep.subr.mxu0 0.0
  %2976 = vmatpush2.msra.mxu0 0.0
  %2977 = vmatprep.subr.mxu0 0.0
  %2978 = vmatpush2.msra.mxu0 0.0
  %2979 = vmatprep.subr.mxu0 0.0
  %2980 = vmatpush2.msra.mxu0 0.0
  %2981 = vmatprep.subr.mxu0 0.0
  %2982 = vmatpush2.msra.mxu0 0.0
  %2983 = vmatprep.subr.mxu0 0.0
  %2984 = vmatpush2.msra.mxu0 0.0
  %2985 = vmatprep.subr.mxu0 0.0
  %2986 = vmatpush2.msra.mxu0 0.0
  %2987 = vmatprep.subr.mxu0 0.0
  %2988 = vmatpush2.msra.mxu0 0.0
  %2989 = vmatprep.subr.mxu0 0.0
  %2990 = vmatpush2.msra.mxu0 0.0
  %2991 = vmatprep.mubr.f32.mxu0 0.0
  %2992 = vmatmul.mubr.f32.gmra.mxu0 %v2857
  %v2993 = vpop.f32.mrf.mxu0
  %v2994 = vadd.f32 0.0, %v2993
  %v2995 = vpop.f32.mrf.mxu0
  %v2996 = vadd.f32 0.0, %v2995
  %2997 = vdwg.mxu0
  %2998 = vmatprep.subr.mxu0 %v2926
  %2999 = vmatpush1.msra.mxu0 %v2925
  %3000 = vmatprep.subr.mxu0 %v2922
  %3001 = vmatpush1.msra.mxu0 %v2921
  %3002 = vmatprep.subr.mxu0 %v2918
  %3003 = vmatpush1.msra.mxu0 %v2917
  %3004 = vmatprep.subr.mxu0 %v2914
  %3005 = vmatpush1.msra.mxu0 %v2913
  %3006 = vmatprep.subr.mxu0 %v2910
  %3007 = vmatpush1.msra.mxu0 %v2909
  %3008 = vmatprep.subr.mxu0 %v2906
  %3009 = vmatpush1.msra.mxu0 %v2905
  %3010 = vmatprep.subr.mxu0 %v2902
  %3011 = vmatpush1.msra.mxu0 %v2901
  %3012 = vmatprep.subr.mxu0 %v2898
  %3013 = vmatpush1.msra.mxu0 %v2897
  %3014 = vmatprep.subr.mxu0 %v2894
  %3015 = vmatpush1.msra.mxu0 %v2893
  %3016 = vmatprep.subr.mxu0 %v2890
  %3017 = vmatpush1.msra.mxu0 %v2889
  %3018 = vmatprep.subr.mxu0 %v2886
  %3019 = vmatpush1.msra.mxu0 %v2885
  %3020 = vmatprep.subr.mxu0 %v2882
  %3021 = vmatpush1.msra.mxu0 %v2881
  %3022 = vmatprep.subr.mxu0 %v2878
  %3023 = vmatpush1.msra.mxu0 %v2877
  %3024 = vmatprep.subr.mxu0 %v2874
  %3025 = vmatpush1.msra.mxu0 %v2873
  %3026 = vmatprep.subr.mxu0 %v2870
  %3027 = vmatpush1.msra.mxu0 %v2869
  %3028 = vmatprep.subr.mxu0 %v2866
  %3029 = vmatpush1.msra.mxu0 %v2865
  %3030 = vmatprep.subr.mxu0 0.0
  %3031 = vmatpush2.msra.mxu0 0.0
  %3032 = vmatprep.subr.mxu0 0.0
  %3033 = vmatpush2.msra.mxu0 0.0
  %3034 = vmatprep.subr.mxu0 0.0
  %3035 = vmatpush2.msra.mxu0 0.0
  %3036 = vmatprep.subr.mxu0 0.0
  %3037 = vmatpush2.msra.mxu0 0.0
  %3038 = vmatprep.subr.mxu0 0.0
  %3039 = vmatpush2.msra.mxu0 0.0
  %3040 = vmatprep.subr.mxu0 0.0
  %3041 = vmatpush2.msra.mxu0 0.0
  %3042 = vmatprep.subr.mxu0 0.0
  %3043 = vmatpush2.msra.mxu0 0.0
  %3044 = vmatprep.subr.mxu0 0.0
  %3045 = vmatpush2.msra.mxu0 0.0
  %3046 = vmatprep.subr.mxu0 0.0
  %3047 = vmatpush2.msra.mxu0 0.0
  %3048 = vmatprep.subr.mxu0 0.0
  %3049 = vmatpush2.msra.mxu0 0.0
  %3050 = vmatprep.subr.mxu0 0.0
  %3051 = vmatpush2.msra.mxu0 0.0
  %3052 = vmatprep.subr.mxu0 0.0
  %3053 = vmatpush2.msra.mxu0 0.0
  %3054 = vmatprep.subr.mxu0 0.0
  %3055 = vmatpush2.msra.mxu0 0.0
  %3056 = vmatprep.subr.mxu0 0.0
  %3057 = vmatpush2.msra.mxu0 0.0
  %3058 = vmatprep.subr.mxu0 0.0
  %3059 = vmatpush2.msra.mxu0 0.0
  %3060 = vmatprep.subr.mxu0 0.0
  %3061 = vmatpush2.msra.mxu0 0.0
  %3062 = vmatprep.mubr.f32.mxu0 0.0
  %3063 = vmatmul.mubr.f32.gmra.mxu0 %v2857
  %v3064 = vpop.f32.mrf.mxu0
  %v3065 = vadd.f32 0.0, %v3064
  %v3066 = vpop.f32.mrf.mxu0
  %v3067 = vadd.f32 0.0, %v3066
  %3068 = vdwg.mxu0
  %v3069 = vadd.f32 %v2859, %v2994
  %v3070 = vadd.f32 %v2860, %v2996
  %v3071 = vadd.f32 %v2861, %v3065
  %v3072 = vadd.f32 %v2862, %v3067
  %v3073 = vxor.u32 %v3069, 2147483648
  %v3074 = vxor.u32 %v3070, 2147483648
  %v3075 = vxor.u32 %v3071, 2147483648
  %v3076 = vmul.f32 %v3073, 1.442695
  %v3077 = vpow.pop %v3076
  %v3078 = vmul.f32 %v3074, 1.442695
  %v3079 = vpow.pop %v3078
  %v3080 = vmul.f32 %v3075, 1.442695
  %v3081 = vpow.pop %v3080
  %v3082 = vadd.f32 %v3077, 1.0
  %v3083 = vadd.f32 %v3079, 1.0
  %v3084 = vadd.f32 %v3081, 1.0
  %v3085 = vrcp.pop %v3082
  %v3086 = vmul.f32 1.0, %v3085
  %v3087 = vrcp.pop %v3083
  %v3088 = vmul.f32 1.0, %v3087
  %v3089 = vrcp.pop %v3084
  %v3090 = vmul.f32 1.0, %v3089
  %v3091 = vtanh.pop %v3072
  %v3092 = vmul.f32 %v3088, %v2855
  %v3093 = vmul.f32 %v3086, %v3091
  %v3094 = vadd.f32 %v3092, %v3093
  %v3095 = vtanh.pop %v3094
  %v3096 = vmul.f32 %v3090, %v3095
  %3097 = vst [vmem:[#allocation2 + $0x38] sm:$0xff] %v3096
  %s3098 = smul.u32 8, 16
  %s3099 = smul.u32 %s3098, 4
  %s3100 = sshll.u32 %s3099, 4
  %3101 = dma.done [#allocation9], %s3100
  %s3102 = sshll.u32 %s3099, 4
  %3103 = dma.done %s200, %s3102
  %v3104 = vld [vmem:[#allocation2] sm:$0xff]
  %v3105 = vld [vmem:[#allocation2 + $0x8] sm:$0xff]
  %v3106 = vld [vmem:[#allocation2 + $0x10] sm:$0xff]
  %v3107 = vld [vmem:[#allocation2 + $0x18] sm:$0xff]
  %v3108 = vld [vmem:[#allocation2 + $0x20] sm:$0xff]
  %v3109 = vld [vmem:[#allocation2 + $0x28] sm:$0xff]
  %v3110 = vld [vmem:[#allocation2 + $0x30] sm:$0xff]
  %v3111 = vld [vmem:[#allocation2 + $0x38] sm:$0xff]
  %v3112 = vld [vmem:[#allocation4] sm:$0xff]
  %v3113 = vld [vmem:[#allocation4 + $0x8] sm:$0xff]
  %v3114 = vld [vmem:[#allocation4 + $0x10] sm:$0xff]
  %v3115 = vld [vmem:[#allocation4 + $0x18] sm:$0xff]
  %v3116 = vld [vmem:[#allocation4 + $0x20] sm:$0xff]
  %v3117 = vld [vmem:[#allocation4 + $0x28] sm:$0xff]
  %v3118 = vld [vmem:[#allocation4 + $0x30] sm:$0xff]
  %v3119 = vld [vmem:[#allocation4 + $0x38] sm:$0xff]
  %v3120 = vld [vmem:[#allocation4 + $0x40] sm:$0xff]
  %v3121 = vld [vmem:[#allocation4 + $0x48] sm:$0xff]
  %v3122 = vld [vmem:[#allocation4 + $0x50] sm:$0xff]
  %v3123 = vld [vmem:[#allocation4 + $0x58] sm:$0xff]
  %v3124 = vld [vmem:[#allocation4 + $0x60] sm:$0xff]
  %v3125 = vld [vmem:[#allocation4 + $0x68] sm:$0xff]
  %v3126 = vld [vmem:[#allocation4 + $0x70] sm:$0xff]
  %v3127 = vld [vmem:[#allocation4 + $0x78] sm:$0xff]
  %v3128 = vld [vmem:[#allocation4 + $0x80] sm:$0xff]
  %v3129 = vld [vmem:[#allocation4 + $0x88] sm:$0xff]
  %v3130 = vld [vmem:[#allocation4 + $0x90] sm:$0xff]
  %v3131 = vld [vmem:[#allocation4 + $0x98] sm:$0xff]
  %v3132 = vld [vmem:[#allocation4 + $0xa0] sm:$0xff]
  %v3133 = vld [vmem:[#allocation4 + $0xa8] sm:$0xff]
  %v3134 = vld [vmem:[#allocation4 + $0xb0] sm:$0xff]
  %v3135 = vld [vmem:[#allocation4 + $0xb8] sm:$0xff]
  %v3136 = vld [vmem:[#allocation4 + $0xc0] sm:$0xff]
  %v3137 = vld [vmem:[#allocation4 + $0xc8] sm:$0xff]
  %v3138 = vld [vmem:[#allocation4 + $0xd0] sm:$0xff]
  %v3139 = vld [vmem:[#allocation4 + $0xd8] sm:$0xff]
  %v3140 = vld [vmem:[#allocation4 + $0xe0] sm:$0xff]
  %v3141 = vld [vmem:[#allocation4 + $0xe8] sm:$0xff]
  %v3142 = vld [vmem:[#allocation4 + $0xf0] sm:$0xff]
  %v3143 = vld [vmem:[#allocation4 + $0xf8] sm:$0xff]
  %v3144 = vld [vmem:[#allocation4 + $0x100] sm:$0xff]
  %v3145 = vld [vmem:[#allocation4 + $0x108] sm:$0xff]
  %v3146 = vld [vmem:[#allocation4 + $0x110] sm:$0xff]
  %v3147 = vld [vmem:[#allocation4 + $0x118] sm:$0xff]
  %v3148 = vld [vmem:[#allocation4 + $0x120] sm:$0xff]
  %v3149 = vld [vmem:[#allocation4 + $0x128] sm:$0xff]
  %v3150 = vld [vmem:[#allocation4 + $0x130] sm:$0xff]
  %v3151 = vld [vmem:[#allocation4 + $0x138] sm:$0xff]
  %v3152 = vld [vmem:[#allocation4 + $0x140] sm:$0xff]
  %v3153 = vld [vmem:[#allocation4 + $0x148] sm:$0xff]
  %v3154 = vld [vmem:[#allocation4 + $0x150] sm:$0xff]
  %v3155 = vld [vmem:[#allocation4 + $0x158] sm:$0xff]
  %v3156 = vld [vmem:[#allocation4 + $0x160] sm:$0xff]
  %v3157 = vld [vmem:[#allocation4 + $0x168] sm:$0xff]
  %v3158 = vld [vmem:[#allocation4 + $0x170] sm:$0xff]
  %v3159 = vld [vmem:[#allocation4 + $0x178] sm:$0xff]
  %v3160 = vld [vmem:[#allocation4 + $0x180] sm:$0xff]
  %v3161 = vld [vmem:[#allocation4 + $0x188] sm:$0xff]
  %v3162 = vld [vmem:[#allocation4 + $0x190] sm:$0xff]
  %v3163 = vld [vmem:[#allocation4 + $0x198] sm:$0xff]
  %v3164 = vld [vmem:[#allocation4 + $0x1a0] sm:$0xff]
  %v3165 = vld [vmem:[#allocation4 + $0x1a8] sm:$0xff]
  %v3166 = vld [vmem:[#allocation4 + $0x1b0] sm:$0xff]
  %v3167 = vld [vmem:[#allocation4 + $0x1b8] sm:$0xff]
  %v3168 = vld [vmem:[#allocation4 + $0x1c0] sm:$0xff]
  %v3169 = vld [vmem:[#allocation4 + $0x1c8] sm:$0xff]
  %v3170 = vld [vmem:[#allocation4 + $0x1d0] sm:$0xff]
  %v3171 = vld [vmem:[#allocation4 + $0x1d8] sm:$0xff]
  %v3172 = vld [vmem:[#allocation4 + $0x1e0] sm:$0xff]
  %v3173 = vld [vmem:[#allocation4 + $0x1e8] sm:$0xff]
  %v3174 = vld [vmem:[#allocation4 + $0x1f0] sm:$0xff]
  %v3175 = vld [vmem:[#allocation4 + $0x1f8] sm:$0xff]
  %v3176 = vld [vmem:[%s4] sm:$0xf]
  %v3178 = vlaneseq
  %v3179 = vshrl.u32 %v3178, 7
  %v3180 = vsub.s32 0, %v3179
  %v3181 = vrot.slane %v3176, %v3180
  %v3182 = vlaneseq
  %v3183 = vshrl.u32 %v3182, 7
  %v3184 = vsub.s32 1, %v3183
  %v3185 = vrot.slane %v3176, %v3184
  %v3186 = vlaneseq
  %v3187 = vshrl.u32 %v3186, 7
  %v3188 = vsub.s32 2, %v3187
  %v3189 = vrot.slane %v3176, %v3188
  %v3190 = vlaneseq
  %v3191 = vshrl.u32 %v3190, 7
  %v3192 = vsub.s32 3, %v3191
  %v3193 = vrot.slane %v3176, %v3192
  %3198 = vmatprep.subr.mxu0 %v3173
  %3199 = vmatpush1.msra.mxu0 %v3172
  %3200 = vmatprep.subr.mxu0 %v3169
  %3201 = vmatpush1.msra.mxu0 %v3168
  %3202 = vmatprep.subr.mxu0 %v3165
  %3203 = vmatpush1.msra.mxu0 %v3164
  %3204 = vmatprep.subr.mxu0 %v3161
  %3205 = vmatpush1.msra.mxu0 %v3160
  %3206 = vmatprep.subr.mxu0 %v3157
  %3207 = vmatpush1.msra.mxu0 %v3156
  %3208 = vmatprep.subr.mxu0 %v3153
  %3209 = vmatpush1.msra.mxu0 %v3152
  %3210 = vmatprep.subr.mxu0 %v3149
  %3211 = vmatpush1.msra.mxu0 %v3148
  %3212 = vmatprep.subr.mxu0 %v3145
  %3213 = vmatpush1.msra.mxu0 %v3144
  %3214 = vmatprep.subr.mxu0 %v3141
  %3215 = vmatpush1.msra.mxu0 %v3140
  %3216 = vmatprep.subr.mxu0 %v3137
  %3217 = vmatpush1.msra.mxu0 %v3136
  %3218 = vmatprep.subr.mxu0 %v3133
  %3219 = vmatpush1.msra.mxu0 %v3132
  %3220 = vmatprep.subr.mxu0 %v3129
  %3221 = vmatpush1.msra.mxu0 %v3128
  %3222 = vmatprep.subr.mxu0 %v3125
  %3223 = vmatpush1.msra.mxu0 %v3124
  %3224 = vmatprep.subr.mxu0 %v3121
  %3225 = vmatpush1.msra.mxu0 %v3120
  %3226 = vmatprep.subr.mxu0 %v3117
  %3227 = vmatpush1.msra.mxu0 %v3116
  %3228 = vmatprep.subr.mxu0 %v3113
  %3229 = vmatpush1.msra.mxu0 %v3112
  %3230 = vmatprep.subr.mxu0 0.0
  %3231 = vmatpush2.msra.mxu0 0.0
  %3232 = vmatprep.subr.mxu0 0.0
  %3233 = vmatpush2.msra.mxu0 0.0
  %3234 = vmatprep.subr.mxu0 0.0
  %3235 = vmatpush2.msra.mxu0 0.0
  %3236 = vmatprep.subr.mxu0 0.0
  %3237 = vmatpush2.msra.mxu0 0.0
  %3238 = vmatprep.subr.mxu0 0.0
  %3239 = vmatpush2.msra.mxu0 0.0
  %3240 = vmatprep.subr.mxu0 0.0
  %3241 = vmatpush2.msra.mxu0 0.0
  %3242 = vmatprep.subr.mxu0 0.0
  %3243 = vmatpush2.msra.mxu0 0.0
  %3244 = vmatprep.subr.mxu0 0.0
  %3245 = vmatpush2.msra.mxu0 0.0
  %3246 = vmatprep.subr.mxu0 0.0
  %3247 = vmatpush2.msra.mxu0 0.0
  %3248 = vmatprep.subr.mxu0 0.0
  %3249 = vmatpush2.msra.mxu0 0.0
  %3250 = vmatprep.subr.mxu0 0.0
  %3251 = vmatpush2.msra.mxu0 0.0
  %3252 = vmatprep.subr.mxu0 0.0
  %3253 = vmatpush2.msra.mxu0 0.0
  %3254 = vmatprep.subr.mxu0 0.0
  %3255 = vmatpush2.msra.mxu0 0.0
  %3256 = vmatprep.subr.mxu0 0.0
  %3257 = vmatpush2.msra.mxu0 0.0
  %3258 = vmatprep.subr.mxu0 0.0
  %3259 = vmatpush2.msra.mxu0 0.0
  %3260 = vmatprep.subr.mxu0 0.0
  %3261 = vmatpush2.msra.mxu0 0.0
  %3262 = vmatprep.mubr.f32.mxu0 0.0
  %3263 = vmatmul.mubr.f32.gmra.mxu0 %v3104
  %v3264 = vpop.f32.mrf.mxu0
  %v3265 = vadd.f32 %v3181, %v3264
  %v3266 = vpop.f32.mrf.mxu0
  %v3267 = vadd.f32 %v3185, %v3266
  %3268 = vmatprep.mubr.f32.mxu0 0.0
  %3269 = vmatmul.mubr.f32.gmra.mxu0 %v3105
  %v3270 = vpop.f32.mrf.mxu0
  %v3271 = vadd.f32 %v3181, %v3270
  %v3272 = vpop.f32.mrf.mxu0
  %v3273 = vadd.f32 %v3185, %v3272
  %3274 = vmatprep.mubr.f32.mxu0 0.0
  %3275 = vmatmul.mubr.f32.gmra.mxu0 %v3106
  %v3276 = vpop.f32.mrf.mxu0
  %v3277 = vadd.f32 %v3181, %v3276
  %v3278 = vpop.f32.mrf.mxu0
  %v3279 = vadd.f32 %v3185, %v3278
  %3280 = vmatprep.mubr.f32.mxu0 0.0
  %3281 = vmatmul.mubr.f32.gmra.mxu0 %v3107
  %v3282 = vpop.f32.mrf.mxu0
  %v3283 = vadd.f32 %v3181, %v3282
  %v3284 = vpop.f32.mrf.mxu0
  %v3285 = vadd.f32 %v3185, %v3284
  %3286 = vmatprep.mubr.f32.mxu0 0.0
  %3287 = vmatmul.mubr.f32.gmra.mxu0 %v3108
  %v3288 = vpop.f32.mrf.mxu0
  %v3289 = vadd.f32 %v3181, %v3288
  %v3290 = vpop.f32.mrf.mxu0
  %v3291 = vadd.f32 %v3185, %v3290
  %3292 = vmatprep.mubr.f32.mxu0 0.0
  %3293 = vmatmul.mubr.f32.gmra.mxu0 %v3109
  %v3294 = vpop.f32.mrf.mxu0
  %v3295 = vadd.f32 %v3181, %v3294
  %v3296 = vpop.f32.mrf.mxu0
  %v3297 = vadd.f32 %v3185, %v3296
  %3298 = vmatprep.mubr.f32.mxu0 0.0
  %3299 = vmatmul.mubr.f32.gmra.mxu0 %v3110
  %v3300 = vpop.f32.mrf.mxu0
  %v3301 = vadd.f32 %v3181, %v3300
  %v3302 = vpop.f32.mrf.mxu0
  %v3303 = vadd.f32 %v3185, %v3302
  %3304 = vmatprep.mubr.f32.mxu0 0.0
  %3305 = vmatmul.mubr.f32.gmra.mxu0 %v3111
  %v3306 = vpop.f32.mrf.mxu0
  %v3307 = vadd.f32 %v3181, %v3306
  %v3308 = vpop.f32.mrf.mxu0
  %v3309 = vadd.f32 %v3185, %v3308
  %3310 = vdwg.mxu0
  %3311 = vmatprep.subr.mxu0 %v3175
  %3312 = vmatpush1.msra.mxu0 %v3174
  %3313 = vmatprep.subr.mxu0 %v3171
  %3314 = vmatpush1.msra.mxu0 %v3170
  %3315 = vmatprep.subr.mxu0 %v3167
  %3316 = vmatpush1.msra.mxu0 %v3166
  %3317 = vmatprep.subr.mxu0 %v3163
  %3318 = vmatpush1.msra.mxu0 %v3162
  %3319 = vmatprep.subr.mxu0 %v3159
  %3320 = vmatpush1.msra.mxu0 %v3158
  %3321 = vmatprep.subr.mxu0 %v3155
  %3322 = vmatpush1.msra.mxu0 %v3154
  %3323 = vmatprep.subr.mxu0 %v3151
  %3324 = vmatpush1.msra.mxu0 %v3150
  %3325 = vmatprep.subr.mxu0 %v3147
  %3326 = vmatpush1.msra.mxu0 %v3146
  %3327 = vmatprep.subr.mxu0 %v3143
  %3328 = vmatpush1.msra.mxu0 %v3142
  %3329 = vmatprep.subr.mxu0 %v3139
  %3330 = vmatpush1.msra.mxu0 %v3138
  %3331 = vmatprep.subr.mxu0 %v3135
  %3332 = vmatpush1.msra.mxu0 %v3134
  %3333 = vmatprep.subr.mxu0 %v3131
  %3334 = vmatpush1.msra.mxu0 %v3130
  %3335 = vmatprep.subr.mxu0 %v3127
  %3336 = vmatpush1.msra.mxu0 %v3126
  %3337 = vmatprep.subr.mxu0 %v3123
  %3338 = vmatpush1.msra.mxu0 %v3122
  %3339 = vmatprep.subr.mxu0 %v3119
  %3340 = vmatpush1.msra.mxu0 %v3118
  %3341 = vmatprep.subr.mxu0 %v3115
  %3342 = vmatpush1.msra.mxu0 %v3114
  %3343 = vmatprep.subr.mxu0 0.0
  %3344 = vmatpush2.msra.mxu0 0.0
  %3345 = vmatprep.subr.mxu0 0.0
  %3346 = vmatpush2.msra.mxu0 0.0
  %3347 = vmatprep.subr.mxu0 0.0
  %3348 = vmatpush2.msra.mxu0 0.0
  %3349 = vmatprep.subr.mxu0 0.0
  %3350 = vmatpush2.msra.mxu0 0.0
  %3351 = vmatprep.subr.mxu0 0.0
  %3352 = vmatpush2.msra.mxu0 0.0
  %3353 = vmatprep.subr.mxu0 0.0
  %3354 = vmatpush2.msra.mxu0 0.0
  %3355 = vmatprep.subr.mxu0 0.0
  %3356 = vmatpush2.msra.mxu0 0.0
  %3357 = vmatprep.subr.mxu0 0.0
  %3358 = vmatpush2.msra.mxu0 0.0
  %3359 = vmatprep.subr.mxu0 0.0
  %3360 = vmatpush2.msra.mxu0 0.0
  %3361 = vmatprep.subr.mxu0 0.0
  %3362 = vmatpush2.msra.mxu0 0.0
  %3363 = vmatprep.subr.mxu0 0.0
  %3364 = vmatpush2.msra.mxu0 0.0
  %3365 = vmatprep.subr.mxu0 0.0
  %3366 = vmatpush2.msra.mxu0 0.0
  %3367 = vmatprep.subr.mxu0 0.0
  %3368 = vmatpush2.msra.mxu0 0.0
  %3369 = vmatprep.subr.mxu0 0.0
  %3370 = vmatpush2.msra.mxu0 0.0
  %3371 = vmatprep.subr.mxu0 0.0
  %3372 = vmatpush2.msra.mxu0 0.0
  %3373 = vmatprep.subr.mxu0 0.0
  %3374 = vmatpush2.msra.mxu0 0.0
  %3375 = vmatprep.mubr.f32.mxu0 0.0
  %3376 = vmatmul.mubr.f32.gmra.mxu0 %v3104
  %v3377 = vpop.f32.mrf.mxu0
  %v3378 = vadd.f32 %v3189, %v3377
  %v3379 = vpop.f32.mrf.mxu0
  %v3380 = vadd.f32 %v3193, %v3379
  %3381 = vmatprep.mubr.f32.mxu0 0.0
  %3382 = vmatmul.mubr.f32.gmra.mxu0 %v3105
  %v3383 = vpop.f32.mrf.mxu0
  %v3384 = vadd.f32 %v3189, %v3383
  %v3385 = vpop.f32.mrf.mxu0
  %v3386 = vadd.f32 %v3193, %v3385
  %3387 = vmatprep.mubr.f32.mxu0 0.0
  %3388 = vmatmul.mubr.f32.gmra.mxu0 %v3106
  %v3389 = vpop.f32.mrf.mxu0
  %v3390 = vadd.f32 %v3189, %v3389
  %v3391 = vpop.f32.mrf.mxu0
  %v3392 = vadd.f32 %v3193, %v3391
  %3393 = vmatprep.mubr.f32.mxu0 0.0
  %3394 = vmatmul.mubr.f32.gmra.mxu0 %v3107
  %v3395 = vpop.f32.mrf.mxu0
  %v3396 = vadd.f32 %v3189, %v3395
  %v3397 = vpop.f32.mrf.mxu0
  %v3398 = vadd.f32 %v3193, %v3397
  %3399 = vmatprep.mubr.f32.mxu0 0.0
  %3400 = vmatmul.mubr.f32.gmra.mxu0 %v3108
  %v3401 = vpop.f32.mrf.mxu0
  %v3402 = vadd.f32 %v3189, %v3401
  %v3403 = vpop.f32.mrf.mxu0
  %v3404 = vadd.f32 %v3193, %v3403
  %3405 = vmatprep.mubr.f32.mxu0 0.0
  %3406 = vmatmul.mubr.f32.gmra.mxu0 %v3109
  %v3407 = vpop.f32.mrf.mxu0
  %v3408 = vadd.f32 %v3189, %v3407
  %v3409 = vpop.f32.mrf.mxu0
  %v3410 = vadd.f32 %v3193, %v3409
  %3411 = vmatprep.mubr.f32.mxu0 0.0
  %3412 = vmatmul.mubr.f32.gmra.mxu0 %v3110
  %v3413 = vpop.f32.mrf.mxu0
  %v3414 = vadd.f32 %v3189, %v3413
  %v3415 = vpop.f32.mrf.mxu0
  %v3416 = vadd.f32 %v3193, %v3415
  %3417 = vmatprep.mubr.f32.mxu0 0.0
  %3418 = vmatmul.mubr.f32.gmra.mxu0 %v3111
  %v3419 = vpop.f32.mrf.mxu0
  %v3420 = vadd.f32 %v3189, %v3419
  %v3421 = vpop.f32.mrf.mxu0
  %v3422 = vadd.f32 %v3193, %v3421
  %3423 = vdwg.mxu0
  %3424 = vst [vmem:[#allocation3] sm:$0xff] %v3265
  %3425 = vst [vmem:[#allocation3 + $0x8] sm:$0xff] %v3267
  %3426 = vst [vmem:[#allocation3 + $0x10] sm:$0xff] %v3378
  %3427 = vst [vmem:[#allocation3 + $0x18] sm:$0xff] %v3380
  %3428 = vst [vmem:[#allocation3 + $0x20] sm:$0xff] %v3271
  %3429 = vst [vmem:[#allocation3 + $0x28] sm:$0xff] %v3273
  %3430 = vst [vmem:[#allocation3 + $0x30] sm:$0xff] %v3384
  %3431 = vst [vmem:[#allocation3 + $0x38] sm:$0xff] %v3386
  %3432 = vst [vmem:[#allocation3 + $0x40] sm:$0xff] %v3277
  %3433 = vst [vmem:[#allocation3 + $0x48] sm:$0xff] %v3279
  %3434 = vst [vmem:[#allocation3 + $0x50] sm:$0xff] %v3390
  %3435 = vst [vmem:[#allocation3 + $0x58] sm:$0xff] %v3392
  %3436 = vst [vmem:[#allocation3 + $0x60] sm:$0xff] %v3283
  %3437 = vst [vmem:[#allocation3 + $0x68] sm:$0xff] %v3285
  %3438 = vst [vmem:[#allocation3 + $0x70] sm:$0xff] %v3396
  %3439 = vst [vmem:[#allocation3 + $0x78] sm:$0xff] %v3398
  %3440 = vst [vmem:[#allocation3 + $0x80] sm:$0xff] %v3289
  %3441 = vst [vmem:[#allocation3 + $0x88] sm:$0xff] %v3291
  %3442 = vst [vmem:[#allocation3 + $0x90] sm:$0xff] %v3402
  %3443 = vst [vmem:[#allocation3 + $0x98] sm:$0xff] %v3404
  %3444 = vst [vmem:[#allocation3 + $0xa0] sm:$0xff] %v3295
  %3445 = vst [vmem:[#allocation3 + $0xa8] sm:$0xff] %v3297
  %3446 = vst [vmem:[#allocation3 + $0xb0] sm:$0xff] %v3408
  %3447 = vst [vmem:[#allocation3 + $0xb8] sm:$0xff] %v3410
  %3448 = vst [vmem:[#allocation3 + $0xc0] sm:$0xff] %v3301
  %3449 = vst [vmem:[#allocation3 + $0xc8] sm:$0xff] %v3303
  %3450 = vst [vmem:[#allocation3 + $0xd0] sm:$0xff] %v3414
  %3451 = vst [vmem:[#allocation3 + $0xd8] sm:$0xff] %v3416
  %3452 = vst [vmem:[#allocation3 + $0xe0] sm:$0xff] %v3307
  %3453 = vst [vmem:[#allocation3 + $0xe8] sm:$0xff] %v3309
  %3454 = vst [vmem:[#allocation3 + $0xf0] sm:$0xff] %v3420
  %3455 = vst [vmem:[#allocation3 + $0xf8] sm:$0xff] %v3422
  %v3456 = vld [vmem:[#allocation3] sm:$0xff]
  %v3457 = vld [vmem:[#allocation3 + $0x8] sm:$0xff]
  %v3458 = vld [vmem:[#allocation3 + $0x10] sm:$0xff]
  %v3459 = vld [vmem:[#allocation3 + $0x18] sm:$0xff]
  %v3460 = vld [vmem:[#allocation5] sm:$0xff]
  %v3461 = vld [vmem:[#allocation5 + $0x8] sm:$0xff]
  %v3462 = vld [vmem:[#allocation5 + $0x10] sm:$0xff]
  %v3463 = vld [vmem:[#allocation5 + $0x18] sm:$0xff]
  %v3464 = vld [vmem:[#allocation5 + $0x20] sm:$0xff]
  %v3465 = vld [vmem:[#allocation5 + $0x28] sm:$0xff]
  %v3466 = vld [vmem:[#allocation5 + $0x30] sm:$0xff]
  %v3467 = vld [vmem:[#allocation5 + $0x38] sm:$0xff]
  %v3468 = vld [vmem:[#allocation5 + $0x40] sm:$0xff]
  %v3469 = vld [vmem:[#allocation5 + $0x48] sm:$0xff]
  %v3470 = vld [vmem:[#allocation5 + $0x50] sm:$0xff]
  %v3471 = vld [vmem:[#allocation5 + $0x58] sm:$0xff]
  %v3472 = vld [vmem:[#allocation5 + $0x60] sm:$0xff]
  %v3473 = vld [vmem:[#allocation5 + $0x68] sm:$0xff]
  %v3474 = vld [vmem:[#allocation5 + $0x70] sm:$0xff]
  %v3475 = vld [vmem:[#allocation5 + $0x78] sm:$0xff]
  %v3476 = vld [vmem:[#allocation5 + $0x80] sm:$0xff]
  %v3477 = vld [vmem:[#allocation5 + $0x88] sm:$0xff]
  %v3478 = vld [vmem:[#allocation5 + $0x90] sm:$0xff]
  %v3479 = vld [vmem:[#allocation5 + $0x98] sm:$0xff]
  %v3480 = vld [vmem:[#allocation5 + $0xa0] sm:$0xff]
  %v3481 = vld [vmem:[#allocation5 + $0xa8] sm:$0xff]
  %v3482 = vld [vmem:[#allocation5 + $0xb0] sm:$0xff]
  %v3483 = vld [vmem:[#allocation5 + $0xb8] sm:$0xff]
  %v3484 = vld [vmem:[#allocation5 + $0xc0] sm:$0xff]
  %v3485 = vld [vmem:[#allocation5 + $0xc8] sm:$0xff]
  %v3486 = vld [vmem:[#allocation5 + $0xd0] sm:$0xff]
  %v3487 = vld [vmem:[#allocation5 + $0xd8] sm:$0xff]
  %v3488 = vld [vmem:[#allocation5 + $0xe0] sm:$0xff]
  %v3489 = vld [vmem:[#allocation5 + $0xe8] sm:$0xff]
  %v3490 = vld [vmem:[#allocation5 + $0xf0] sm:$0xff]
  %v3491 = vld [vmem:[#allocation5 + $0xf8] sm:$0xff]
  %v3492 = vld [vmem:[#allocation5 + $0x100] sm:$0xff]
  %v3493 = vld [vmem:[#allocation5 + $0x108] sm:$0xff]
  %v3494 = vld [vmem:[#allocation5 + $0x110] sm:$0xff]
  %v3495 = vld [vmem:[#allocation5 + $0x118] sm:$0xff]
  %v3496 = vld [vmem:[#allocation5 + $0x120] sm:$0xff]
  %v3497 = vld [vmem:[#allocation5 + $0x128] sm:$0xff]
  %v3498 = vld [vmem:[#allocation5 + $0x130] sm:$0xff]
  %v3499 = vld [vmem:[#allocation5 + $0x138] sm:$0xff]
  %v3500 = vld [vmem:[#allocation5 + $0x140] sm:$0xff]
  %v3501 = vld [vmem:[#allocation5 + $0x148] sm:$0xff]
  %v3502 = vld [vmem:[#allocation5 + $0x150] sm:$0xff]
  %v3503 = vld [vmem:[#allocation5 + $0x158] sm:$0xff]
  %v3504 = vld [vmem:[#allocation5 + $0x160] sm:$0xff]
  %v3505 = vld [vmem:[#allocation5 + $0x168] sm:$0xff]
  %v3506 = vld [vmem:[#allocation5 + $0x170] sm:$0xff]
  %v3507 = vld [vmem:[#allocation5 + $0x178] sm:$0xff]
  %v3508 = vld [vmem:[#allocation5 + $0x180] sm:$0xff]
  %v3509 = vld [vmem:[#allocation5 + $0x188] sm:$0xff]
  %v3510 = vld [vmem:[#allocation5 + $0x190] sm:$0xff]
  %v3511 = vld [vmem:[#allocation5 + $0x198] sm:$0xff]
  %v3512 = vld [vmem:[#allocation5 + $0x1a0] sm:$0xff]
  %v3513 = vld [vmem:[#allocation5 + $0x1a8] sm:$0xff]
  %v3514 = vld [vmem:[#allocation5 + $0x1b0] sm:$0xff]
  %v3515 = vld [vmem:[#allocation5 + $0x1b8] sm:$0xff]
  %v3516 = vld [vmem:[#allocation5 + $0x1c0] sm:$0xff]
  %v3517 = vld [vmem:[#allocation5 + $0x1c8] sm:$0xff]
  %v3518 = vld [vmem:[#allocation5 + $0x1d0] sm:$0xff]
  %v3519 = vld [vmem:[#allocation5 + $0x1d8] sm:$0xff]
  %v3520 = vld [vmem:[#allocation5 + $0x1e0] sm:$0xff]
  %v3521 = vld [vmem:[#allocation5 + $0x1e8] sm:$0xff]
  %v3522 = vld [vmem:[#allocation5 + $0x1f0] sm:$0xff]
  %v3523 = vld [vmem:[#allocation5 + $0x1f8] sm:$0xff]
  %3524 = vmatprep.subr.mxu0 %v3521
  %3525 = vmatpush1.msra.mxu0 %v3520
  %3526 = vmatprep.subr.mxu0 %v3517
  %3527 = vmatpush1.msra.mxu0 %v3516
  %3528 = vmatprep.subr.mxu0 %v3513
  %3529 = vmatpush1.msra.mxu0 %v3512
  %3530 = vmatprep.subr.mxu0 %v3509
  %3531 = vmatpush1.msra.mxu0 %v3508
  %3532 = vmatprep.subr.mxu0 %v3505
  %3533 = vmatpush1.msra.mxu0 %v3504
  %3534 = vmatprep.subr.mxu0 %v3501
  %3535 = vmatpush1.msra.mxu0 %v3500
  %3536 = vmatprep.subr.mxu0 %v3497
  %3537 = vmatpush1.msra.mxu0 %v3496
  %3538 = vmatprep.subr.mxu0 %v3493
  %3539 = vmatpush1.msra.mxu0 %v3492
  %3540 = vmatprep.subr.mxu0 %v3489
  %3541 = vmatpush1.msra.mxu0 %v3488
  %3542 = vmatprep.subr.mxu0 %v3485
  %3543 = vmatpush1.msra.mxu0 %v3484
  %3544 = vmatprep.subr.mxu0 %v3481
  %3545 = vmatpush1.msra.mxu0 %v3480
  %3546 = vmatprep.subr.mxu0 %v3477
  %3547 = vmatpush1.msra.mxu0 %v3476
  %3548 = vmatprep.subr.mxu0 %v3473
  %3549 = vmatpush1.msra.mxu0 %v3472
  %3550 = vmatprep.subr.mxu0 %v3469
  %3551 = vmatpush1.msra.mxu0 %v3468
  %3552 = vmatprep.subr.mxu0 %v3465
  %3553 = vmatpush1.msra.mxu0 %v3464
  %3554 = vmatprep.subr.mxu0 %v3461
  %3555 = vmatpush1.msra.mxu0 %v3460
  %3556 = vmatprep.subr.mxu0 0.0
  %3557 = vmatpush2.msra.mxu0 0.0
  %3558 = vmatprep.subr.mxu0 0.0
  %3559 = vmatpush2.msra.mxu0 0.0
  %3560 = vmatprep.subr.mxu0 0.0
  %3561 = vmatpush2.msra.mxu0 0.0
  %3562 = vmatprep.subr.mxu0 0.0
  %3563 = vmatpush2.msra.mxu0 0.0
  %3564 = vmatprep.subr.mxu0 0.0
  %3565 = vmatpush2.msra.mxu0 0.0
  %3566 = vmatprep.subr.mxu0 0.0
  %3567 = vmatpush2.msra.mxu0 0.0
  %3568 = vmatprep.subr.mxu0 0.0
  %3569 = vmatpush2.msra.mxu0 0.0
  %3570 = vmatprep.subr.mxu0 0.0
  %3571 = vmatpush2.msra.mxu0 0.0
  %3572 = vmatprep.subr.mxu0 0.0
  %3573 = vmatpush2.msra.mxu0 0.0
  %3574 = vmatprep.subr.mxu0 0.0
  %3575 = vmatpush2.msra.mxu0 0.0
  %3576 = vmatprep.subr.mxu0 0.0
  %3577 = vmatpush2.msra.mxu0 0.0
  %3578 = vmatprep.subr.mxu0 0.0
  %3579 = vmatpush2.msra.mxu0 0.0
  %3580 = vmatprep.subr.mxu0 0.0
  %3581 = vmatpush2.msra.mxu0 0.0
  %3582 = vmatprep.subr.mxu0 0.0
  %3583 = vmatpush2.msra.mxu0 0.0
  %3584 = vmatprep.subr.mxu0 0.0
  %3585 = vmatpush2.msra.mxu0 0.0
  %3586 = vmatprep.subr.mxu0 0.0
  %3587 = vmatpush2.msra.mxu0 0.0
  %3588 = vmatprep.mubr.f32.mxu0 0.0
  %3589 = vmatmul.mubr.f32.gmra.mxu0 0.0
  %v3590 = vpop.f32.mrf.mxu0
  %v3591 = vadd.f32 0.0, %v3590
  %v3592 = vpop.f32.mrf.mxu0
  %v3593 = vadd.f32 0.0, %v3592
  %3594 = vdwg.mxu0
  %3595 = vmatprep.subr.mxu0 %v3523
  %3596 = vmatpush1.msra.mxu0 %v3522
  %3597 = vmatprep.subr.mxu0 %v3519
  %3598 = vmatpush1.msra.mxu0 %v3518
  %3599 = vmatprep.subr.mxu0 %v3515
  %3600 = vmatpush1.msra.mxu0 %v3514
  %3601 = vmatprep.subr.mxu0 %v3511
  %3602 = vmatpush1.msra.mxu0 %v3510
  %3603 = vmatprep.subr.mxu0 %v3507
  %3604 = vmatpush1.msra.mxu0 %v3506
  %3605 = vmatprep.subr.mxu0 %v3503
  %3606 = vmatpush1.msra.mxu0 %v3502
  %3607 = vmatprep.subr.mxu0 %v3499
  %3608 = vmatpush1.msra.mxu0 %v3498
  %3609 = vmatprep.subr.mxu0 %v3495
  %3610 = vmatpush1.msra.mxu0 %v3494
  %3611 = vmatprep.subr.mxu0 %v3491
  %3612 = vmatpush1.msra.mxu0 %v3490
  %3613 = vmatprep.subr.mxu0 %v3487
  %3614 = vmatpush1.msra.mxu0 %v3486
  %3615 = vmatprep.subr.mxu0 %v3483
  %3616 = vmatpush1.msra.mxu0 %v3482
  %3617 = vmatprep.subr.mxu0 %v3479
  %3618 = vmatpush1.msra.mxu0 %v3478
  %3619 = vmatprep.subr.mxu0 %v3475
  %3620 = vmatpush1.msra.mxu0 %v3474
  %3621 = vmatprep.subr.mxu0 %v3471
  %3622 = vmatpush1.msra.mxu0 %v3470
  %3623 = vmatprep.subr.mxu0 %v3467
  %3624 = vmatpush1.msra.mxu0 %v3466
  %3625 = vmatprep.subr.mxu0 %v3463
  %3626 = vmatpush1.msra.mxu0 %v3462
  %3627 = vmatprep.subr.mxu0 0.0
  %3628 = vmatpush2.msra.mxu0 0.0
  %3629 = vmatprep.subr.mxu0 0.0
  %3630 = vmatpush2.msra.mxu0 0.0
  %3631 = vmatprep.subr.mxu0 0.0
  %3632 = vmatpush2.msra.mxu0 0.0
  %3633 = vmatprep.subr.mxu0 0.0
  %3634 = vmatpush2.msra.mxu0 0.0
  %3635 = vmatprep.subr.mxu0 0.0
  %3636 = vmatpush2.msra.mxu0 0.0
  %3637 = vmatprep.subr.mxu0 0.0
  %3638 = vmatpush2.msra.mxu0 0.0
  %3639 = vmatprep.subr.mxu0 0.0
  %3640 = vmatpush2.msra.mxu0 0.0
  %3641 = vmatprep.subr.mxu0 0.0
  %3642 = vmatpush2.msra.mxu0 0.0
  %3643 = vmatprep.subr.mxu0 0.0
  %3644 = vmatpush2.msra.mxu0 0.0
  %3645 = vmatprep.subr.mxu0 0.0
  %3646 = vmatpush2.msra.mxu0 0.0
  %3647 = vmatprep.subr.mxu0 0.0
  %3648 = vmatpush2.msra.mxu0 0.0
  %3649 = vmatprep.subr.mxu0 0.0
  %3650 = vmatpush2.msra.mxu0 0.0
  %3651 = vmatprep.subr.mxu0 0.0
  %3652 = vmatpush2.msra.mxu0 0.0
  %3653 = vmatprep.subr.mxu0 0.0
  %3654 = vmatpush2.msra.mxu0 0.0
  %3655 = vmatprep.subr.mxu0 0.0
  %3656 = vmatpush2.msra.mxu0 0.0
  %3657 = vmatprep.subr.mxu0 0.0
  %3658 = vmatpush2.msra.mxu0 0.0
  %3659 = vmatprep.mubr.f32.mxu0 0.0
  %3660 = vmatmul.mubr.f32.gmra.mxu0 0.0
  %v3661 = vpop.f32.mrf.mxu0
  %v3662 = vadd.f32 0.0, %v3661
  %v3663 = vpop.f32.mrf.mxu0
  %v3664 = vadd.f32 0.0, %v3663
  %3665 = vdwg.mxu0
  %v3666 = vadd.f32 %v3456, %v3591
  %v3667 = vadd.f32 %v3457, %v3593
  %v3668 = vadd.f32 %v3458, %v3662
  %v3669 = vadd.f32 %v3459, %v3664
  %v3670 = vxor.u32 %v3666, 2147483648
  %v3671 = vxor.u32 %v3667, 2147483648
  %v3672 = vxor.u32 %v3668, 2147483648
  %v3673 = vmul.f32 %v3670, 1.442695
  %v3674 = vpow.pop %v3673
  %v3675 = vmul.f32 %v3671, 1.442695
  %v3676 = vpow.pop %v3675
  %v3677 = vmul.f32 %v3672, 1.442695
  %v3678 = vpow.pop %v3677
  %v3679 = vadd.f32 %v3674, 1.0
  %v3680 = vadd.f32 %v3676, 1.0
  %v3681 = vadd.f32 %v3678, 1.0
  %v3682 = vrcp.pop %v3679
  %v3683 = vmul.f32 1.0, %v3682
  %v3684 = vrcp.pop %v3680
  %v3685 = vmul.f32 1.0, %v3684
  %v3686 = vrcp.pop %v3681
  %v3687 = vmul.f32 1.0, %v3686
  %v3688 = vtanh.pop %v3669
  %v3689 = vmul.f32 %v3685, 0.0
  %v3690 = vmul.f32 %v3683, %v3688
  %v3691 = vadd.f32 %v3689, %v3690
  %v3692 = vtanh.pop %v3691
  %v3693 = vmul.f32 %v3687, %v3692
  %3694 = vst [vmem:[#allocation2] sm:$0xff] %v3693
  %v3695 = vld [vmem:[#allocation3 + $0x20] sm:$0xff]
  %v3696 = vld [vmem:[#allocation3 + $0x28] sm:$0xff]
  %v3697 = vld [vmem:[#allocation3 + $0x30] sm:$0xff]
  %v3698 = vld [vmem:[#allocation3 + $0x38] sm:$0xff]
  %v3699 = vld [vmem:[#allocation5] sm:$0xff]
  %v3700 = vld [vmem:[#allocation5 + $0x8] sm:$0xff]
  %v3701 = vld [vmem:[#allocation5 + $0x10] sm:$0xff]
  %v3702 = vld [vmem:[#allocation5 + $0x18] sm:$0xff]
  %v3703 = vld [vmem:[#allocation5 + $0x20] sm:$0xff]
  %v3704 = vld [vmem:[#allocation5 + $0x28] sm:$0xff]
  %v3705 = vld [vmem:[#allocation5 + $0x30] sm:$0xff]
  %v3706 = vld [vmem:[#allocation5 + $0x38] sm:$0xff]
  %v3707 = vld [vmem:[#allocation5 + $0x40] sm:$0xff]
  %v3708 = vld [vmem:[#allocation5 + $0x48] sm:$0xff]
  %v3709 = vld [vmem:[#allocation5 + $0x50] sm:$0xff]
  %v3710 = vld [vmem:[#allocation5 + $0x58] sm:$0xff]
  %v3711 = vld [vmem:[#allocation5 + $0x60] sm:$0xff]
  %v3712 = vld [vmem:[#allocation5 + $0x68] sm:$0xff]
  %v3713 = vld [vmem:[#allocation5 + $0x70] sm:$0xff]
  %v3714 = vld [vmem:[#allocation5 + $0x78] sm:$0xff]
  %v3715 = vld [vmem:[#allocation5 + $0x80] sm:$0xff]
  %v3716 = vld [vmem:[#allocation5 + $0x88] sm:$0xff]
  %v3717 = vld [vmem:[#allocation5 + $0x90] sm:$0xff]
  %v3718 = vld [vmem:[#allocation5 + $0x98] sm:$0xff]
  %v3719 = vld [vmem:[#allocation5 + $0xa0] sm:$0xff]
  %v3720 = vld [vmem:[#allocation5 + $0xa8] sm:$0xff]
  %v3721 = vld [vmem:[#allocation5 + $0xb0] sm:$0xff]
  %v3722 = vld [vmem:[#allocation5 + $0xb8] sm:$0xff]
  %v3723 = vld [vmem:[#allocation5 + $0xc0] sm:$0xff]
  %v3724 = vld [vmem:[#allocation5 + $0xc8] sm:$0xff]
  %v3725 = vld [vmem:[#allocation5 + $0xd0] sm:$0xff]
  %v3726 = vld [vmem:[#allocation5 + $0xd8] sm:$0xff]
  %v3727 = vld [vmem:[#allocation5 + $0xe0] sm:$0xff]
  %v3728 = vld [vmem:[#allocation5 + $0xe8] sm:$0xff]
  %v3729 = vld [vmem:[#allocation5 + $0xf0] sm:$0xff]
  %v3730 = vld [vmem:[#allocation5 + $0xf8] sm:$0xff]
  %v3731 = vld [vmem:[#allocation5 + $0x100] sm:$0xff]
  %v3732 = vld [vmem:[#allocation5 + $0x108] sm:$0xff]
  %v3733 = vld [vmem:[#allocation5 + $0x110] sm:$0xff]
  %v3734 = vld [vmem:[#allocation5 + $0x118] sm:$0xff]
  %v3735 = vld [vmem:[#allocation5 + $0x120] sm:$0xff]
  %v3736 = vld [vmem:[#allocation5 + $0x128] sm:$0xff]
  %v3737 = vld [vmem:[#allocation5 + $0x130] sm:$0xff]
  %v3738 = vld [vmem:[#allocation5 + $0x138] sm:$0xff]
  %v3739 = vld [vmem:[#allocation5 + $0x140] sm:$0xff]
  %v3740 = vld [vmem:[#allocation5 + $0x148] sm:$0xff]
  %v3741 = vld [vmem:[#allocation5 + $0x150] sm:$0xff]
  %v3742 = vld [vmem:[#allocation5 + $0x158] sm:$0xff]
  %v3743 = vld [vmem:[#allocation5 + $0x160] sm:$0xff]
  %v3744 = vld [vmem:[#allocation5 + $0x168] sm:$0xff]
  %v3745 = vld [vmem:[#allocation5 + $0x170] sm:$0xff]
  %v3746 = vld [vmem:[#allocation5 + $0x178] sm:$0xff]
  %v3747 = vld [vmem:[#allocation5 + $0x180] sm:$0xff]
  %v3748 = vld [vmem:[#allocation5 + $0x188] sm:$0xff]
  %v3749 = vld [vmem:[#allocation5 + $0x190] sm:$0xff]
  %v3750 = vld [vmem:[#allocation5 + $0x198] sm:$0xff]
  %v3751 = vld [vmem:[#allocation5 + $0x1a0] sm:$0xff]
  %v3752 = vld [vmem:[#allocation5 + $0x1a8] sm:$0xff]
  %v3753 = vld [vmem:[#allocation5 + $0x1b0] sm:$0xff]
  %v3754 = vld [vmem:[#allocation5 + $0x1b8] sm:$0xff]
  %v3755 = vld [vmem:[#allocation5 + $0x1c0] sm:$0xff]
  %v3756 = vld [vmem:[#allocation5 + $0x1c8] sm:$0xff]
  %v3757 = vld [vmem:[#allocation5 + $0x1d0] sm:$0xff]
  %v3758 = vld [vmem:[#allocation5 + $0x1d8] sm:$0xff]
  %v3759 = vld [vmem:[#allocation5 + $0x1e0] sm:$0xff]
  %v3760 = vld [vmem:[#allocation5 + $0x1e8] sm:$0xff]
  %v3761 = vld [vmem:[#allocation5 + $0x1f0] sm:$0xff]
  %v3762 = vld [vmem:[#allocation5 + $0x1f8] sm:$0xff]
  %3763 = vmatprep.subr.mxu0 %v3760
  %3764 = vmatpush1.msra.mxu0 %v3759
  %3765 = vmatprep.subr.mxu0 %v3756
  %3766 = vmatpush1.msra.mxu0 %v3755
  %3767 = vmatprep.subr.mxu0 %v3752
  %3768 = vmatpush1.msra.mxu0 %v3751
  %3769 = vmatprep.subr.mxu0 %v3748
  %3770 = vmatpush1.msra.mxu0 %v3747
  %3771 = vmatprep.subr.mxu0 %v3744
  %3772 = vmatpush1.msra.mxu0 %v3743
  %3773 = vmatprep.subr.mxu0 %v3740
  %3774 = vmatpush1.msra.mxu0 %v3739
  %3775 = vmatprep.subr.mxu0 %v3736
  %3776 = vmatpush1.msra.mxu0 %v3735
  %3777 = vmatprep.subr.mxu0 %v3732
  %3778 = vmatpush1.msra.mxu0 %v3731
  %3779 = vmatprep.subr.mxu0 %v3728
  %3780 = vmatpush1.msra.mxu0 %v3727
  %3781 = vmatprep.subr.mxu0 %v3724
  %3782 = vmatpush1.msra.mxu0 %v3723
  %3783 = vmatprep.subr.mxu0 %v3720
  %3784 = vmatpush1.msra.mxu0 %v3719
  %3785 = vmatprep.subr.mxu0 %v3716
  %3786 = vmatpush1.msra.mxu0 %v3715
  %3787 = vmatprep.subr.mxu0 %v3712
  %3788 = vmatpush1.msra.mxu0 %v3711
  %3789 = vmatprep.subr.mxu0 %v3708
  %3790 = vmatpush1.msra.mxu0 %v3707
  %3791 = vmatprep.subr.mxu0 %v3704
  %3792 = vmatpush1.msra.mxu0 %v3703
  %3793 = vmatprep.subr.mxu0 %v3700
  %3794 = vmatpush1.msra.mxu0 %v3699
  %3795 = vmatprep.subr.mxu0 0.0
  %3796 = vmatpush2.msra.mxu0 0.0
  %3797 = vmatprep.subr.mxu0 0.0
  %3798 = vmatpush2.msra.mxu0 0.0
  %3799 = vmatprep.subr.mxu0 0.0
  %3800 = vmatpush2.msra.mxu0 0.0
  %3801 = vmatprep.subr.mxu0 0.0
  %3802 = vmatpush2.msra.mxu0 0.0
  %3803 = vmatprep.subr.mxu0 0.0
  %3804 = vmatpush2.msra.mxu0 0.0
  %3805 = vmatprep.subr.mxu0 0.0
  %3806 = vmatpush2.msra.mxu0 0.0
  %3807 = vmatprep.subr.mxu0 0.0
  %3808 = vmatpush2.msra.mxu0 0.0
  %3809 = vmatprep.subr.mxu0 0.0
  %3810 = vmatpush2.msra.mxu0 0.0
  %3811 = vmatprep.subr.mxu0 0.0
  %3812 = vmatpush2.msra.mxu0 0.0
  %3813 = vmatprep.subr.mxu0 0.0
  %3814 = vmatpush2.msra.mxu0 0.0
  %3815 = vmatprep.subr.mxu0 0.0
  %3816 = vmatpush2.msra.mxu0 0.0
  %3817 = vmatprep.subr.mxu0 0.0
  %3818 = vmatpush2.msra.mxu0 0.0
  %3819 = vmatprep.subr.mxu0 0.0
  %3820 = vmatpush2.msra.mxu0 0.0
  %3821 = vmatprep.subr.mxu0 0.0
  %3822 = vmatpush2.msra.mxu0 0.0
  %3823 = vmatprep.subr.mxu0 0.0
  %3824 = vmatpush2.msra.mxu0 0.0
  %3825 = vmatprep.subr.mxu0 0.0
  %3826 = vmatpush2.msra.mxu0 0.0
  %3827 = vmatprep.mubr.f32.mxu0 0.0
  %3828 = vmatmul.mubr.f32.gmra.mxu0 %v3693
  %v3829 = vpop.f32.mrf.mxu0
  %v3830 = vadd.f32 0.0, %v3829
  %v3831 = vpop.f32.mrf.mxu0
  %v3832 = vadd.f32 0.0, %v3831
  %3833 = vdwg.mxu0
  %3834 = vmatprep.subr.mxu0 %v3762
  %3835 = vmatpush1.msra.mxu0 %v3761
  %3836 = vmatprep.subr.mxu0 %v3758
  %3837 = vmatpush1.msra.mxu0 %v3757
  %3838 = vmatprep.subr.mxu0 %v3754
  %3839 = vmatpush1.msra.mxu0 %v3753
  %3840 = vmatprep.subr.mxu0 %v3750
  %3841 = vmatpush1.msra.mxu0 %v3749
  %3842 = vmatprep.subr.mxu0 %v3746
  %3843 = vmatpush1.msra.mxu0 %v3745
  %3844 = vmatprep.subr.mxu0 %v3742
  %3845 = vmatpush1.msra.mxu0 %v3741
  %3846 = vmatprep.subr.mxu0 %v3738
  %3847 = vmatpush1.msra.mxu0 %v3737
  %3848 = vmatprep.subr.mxu0 %v3734
  %3849 = vmatpush1.msra.mxu0 %v3733
  %3850 = vmatprep.subr.mxu0 %v3730
  %3851 = vmatpush1.msra.mxu0 %v3729
  %3852 = vmatprep.subr.mxu0 %v3726
  %3853 = vmatpush1.msra.mxu0 %v3725
  %3854 = vmatprep.subr.mxu0 %v3722
  %3855 = vmatpush1.msra.mxu0 %v3721
  %3856 = vmatprep.subr.mxu0 %v3718
  %3857 = vmatpush1.msra.mxu0 %v3717
  %3858 = vmatprep.subr.mxu0 %v3714
  %3859 = vmatpush1.msra.mxu0 %v3713
  %3860 = vmatprep.subr.mxu0 %v3710
  %3861 = vmatpush1.msra.mxu0 %v3709
  %3862 = vmatprep.subr.mxu0 %v3706
  %3863 = vmatpush1.msra.mxu0 %v3705
  %3864 = vmatprep.subr.mxu0 %v3702
  %3865 = vmatpush1.msra.mxu0 %v3701
  %3866 = vmatprep.subr.mxu0 0.0
  %3867 = vmatpush2.msra.mxu0 0.0
  %3868 = vmatprep.subr.mxu0 0.0
  %3869 = vmatpush2.msra.mxu0 0.0
  %3870 = vmatprep.subr.mxu0 0.0
  %3871 = vmatpush2.msra.mxu0 0.0
  %3872 = vmatprep.subr.mxu0 0.0
  %3873 = vmatpush2.msra.mxu0 0.0
  %3874 = vmatprep.subr.mxu0 0.0
  %3875 = vmatpush2.msra.mxu0 0.0
  %3876 = vmatprep.subr.mxu0 0.0
  %3877 = vmatpush2.msra.mxu0 0.0
  %3878 = vmatprep.subr.mxu0 0.0
  %3879 = vmatpush2.msra.mxu0 0.0
  %3880 = vmatprep.subr.mxu0 0.0
  %3881 = vmatpush2.msra.mxu0 0.0
  %3882 = vmatprep.subr.mxu0 0.0
  %3883 = vmatpush2.msra.mxu0 0.0
  %3884 = vmatprep.subr.mxu0 0.0
  %3885 = vmatpush2.msra.mxu0 0.0
  %3886 = vmatprep.subr.mxu0 0.0
  %3887 = vmatpush2.msra.mxu0 0.0
  %3888 = vmatprep.subr.mxu0 0.0
  %3889 = vmatpush2.msra.mxu0 0.0
  %3890 = vmatprep.subr.mxu0 0.0
  %3891 = vmatpush2.msra.mxu0 0.0
  %3892 = vmatprep.subr.mxu0 0.0
  %3893 = vmatpush2.msra.mxu0 0.0
  %3894 = vmatprep.subr.mxu0 0.0
  %3895 = vmatpush2.msra.mxu0 0.0
  %3896 = vmatprep.subr.mxu0 0.0
  %3897 = vmatpush2.msra.mxu0 0.0
  %3898 = vmatprep.mubr.f32.mxu0 0.0
  %3899 = vmatmul.mubr.f32.gmra.mxu0 %v3693
  %v3900 = vpop.f32.mrf.mxu0
  %v3901 = vadd.f32 0.0, %v3900
  %v3902 = vpop.f32.mrf.mxu0
  %v3903 = vadd.f32 0.0, %v3902
  %3904 = vdwg.mxu0
  %v3905 = vadd.f32 %v3695, %v3830
  %v3906 = vadd.f32 %v3696, %v3832
  %v3907 = vadd.f32 %v3697, %v3901
  %v3908 = vadd.f32 %v3698, %v3903
  %v3909 = vxor.u32 %v3905, 2147483648
  %v3910 = vxor.u32 %v3906, 2147483648
  %v3911 = vxor.u32 %v3907, 2147483648
  %v3912 = vmul.f32 %v3909, 1.442695
  %v3913 = vpow.pop %v3912
  %v3914 = vmul.f32 %v3910, 1.442695
  %v3915 = vpow.pop %v3914
  %v3916 = vmul.f32 %v3911, 1.442695
  %v3917 = vpow.pop %v3916
  %v3918 = vadd.f32 %v3913, 1.0
  %v3919 = vadd.f32 %v3915, 1.0
  %v3920 = vadd.f32 %v3917, 1.0
  %v3921 = vrcp.pop %v3918
  %v3922 = vmul.f32 1.0, %v3921
  %v3923 = vrcp.pop %v3919
  %v3924 = vmul.f32 1.0, %v3923
  %v3925 = vrcp.pop %v3920
  %v3926 = vmul.f32 1.0, %v3925
  %v3927 = vtanh.pop %v3908
  %v3928 = vmul.f32 %v3924, %v3691
  %v3929 = vmul.f32 %v3922, %v3927
  %v3930 = vadd.f32 %v3928, %v3929
  %v3931 = vtanh.pop %v3930
  %v3932 = vmul.f32 %v3926, %v3931
  %3933 = vst [vmem:[#allocation2 + $0x8] sm:$0xff] %v3932
  %v3934 = vld [vmem:[#allocation3 + $0x40] sm:$0xff]
  %v3935 = vld [vmem:[#allocation3 + $0x48] sm:$0xff]
  %v3936 = vld [vmem:[#allocation3 + $0x50] sm:$0xff]
  %v3937 = vld [vmem:[#allocation3 + $0x58] sm:$0xff]
  %v3938 = vld [vmem:[#allocation5] sm:$0xff]
  %v3939 = vld [vmem:[#allocation5 + $0x8] sm:$0xff]
  %v3940 = vld [vmem:[#allocation5 + $0x10] sm:$0xff]
  %v3941 = vld [vmem:[#allocation5 + $0x18] sm:$0xff]
  %v3942 = vld [vmem:[#allocation5 + $0x20] sm:$0xff]
  %v3943 = vld [vmem:[#allocation5 + $0x28] sm:$0xff]
  %v3944 = vld [vmem:[#allocation5 + $0x30] sm:$0xff]
  %v3945 = vld [vmem:[#allocation5 + $0x38] sm:$0xff]
  %v3946 = vld [vmem:[#allocation5 + $0x40] sm:$0xff]
  %v3947 = vld [vmem:[#allocation5 + $0x48] sm:$0xff]
  %v3948 = vld [vmem:[#allocation5 + $0x50] sm:$0xff]
  %v3949 = vld [vmem:[#allocation5 + $0x58] sm:$0xff]
  %v3950 = vld [vmem:[#allocation5 + $0x60] sm:$0xff]
  %v3951 = vld [vmem:[#allocation5 + $0x68] sm:$0xff]
  %v3952 = vld [vmem:[#allocation5 + $0x70] sm:$0xff]
  %v3953 = vld [vmem:[#allocation5 + $0x78] sm:$0xff]
  %v3954 = vld [vmem:[#allocation5 + $0x80] sm:$0xff]
  %v3955 = vld [vmem:[#allocation5 + $0x88] sm:$0xff]
  %v3956 = vld [vmem:[#allocation5 + $0x90] sm:$0xff]
  %v3957 = vld [vmem:[#allocation5 + $0x98] sm:$0xff]
  %v3958 = vld [vmem:[#allocation5 + $0xa0] sm:$0xff]
  %v3959 = vld [vmem:[#allocation5 + $0xa8] sm:$0xff]
  %v3960 = vld [vmem:[#allocation5 + $0xb0] sm:$0xff]
  %v3961 = vld [vmem:[#allocation5 + $0xb8] sm:$0xff]
  %v3962 = vld [vmem:[#allocation5 + $0xc0] sm:$0xff]
  %v3963 = vld [vmem:[#allocation5 + $0xc8] sm:$0xff]
  %v3964 = vld [vmem:[#allocation5 + $0xd0] sm:$0xff]
  %v3965 = vld [vmem:[#allocation5 + $0xd8] sm:$0xff]
  %v3966 = vld [vmem:[#allocation5 + $0xe0] sm:$0xff]
  %v3967 = vld [vmem:[#allocation5 + $0xe8] sm:$0xff]
  %v3968 = vld [vmem:[#allocation5 + $0xf0] sm:$0xff]
  %v3969 = vld [vmem:[#allocation5 + $0xf8] sm:$0xff]
  %v3970 = vld [vmem:[#allocation5 + $0x100] sm:$0xff]
  %v3971 = vld [vmem:[#allocation5 + $0x108] sm:$0xff]
  %v3972 = vld [vmem:[#allocation5 + $0x110] sm:$0xff]
  %v3973 = vld [vmem:[#allocation5 + $0x118] sm:$0xff]
  %v3974 = vld [vmem:[#allocation5 + $0x120] sm:$0xff]
  %v3975 = vld [vmem:[#allocation5 + $0x128] sm:$0xff]
  %v3976 = vld [vmem:[#allocation5 + $0x130] sm:$0xff]
  %v3977 = vld [vmem:[#allocation5 + $0x138] sm:$0xff]
  %v3978 = vld [vmem:[#allocation5 + $0x140] sm:$0xff]
  %v3979 = vld [vmem:[#allocation5 + $0x148] sm:$0xff]
  %v3980 = vld [vmem:[#allocation5 + $0x150] sm:$0xff]
  %v3981 = vld [vmem:[#allocation5 + $0x158] sm:$0xff]
  %v3982 = vld [vmem:[#allocation5 + $0x160] sm:$0xff]
  %v3983 = vld [vmem:[#allocation5 + $0x168] sm:$0xff]
  %v3984 = vld [vmem:[#allocation5 + $0x170] sm:$0xff]
  %v3985 = vld [vmem:[#allocation5 + $0x178] sm:$0xff]
  %v3986 = vld [vmem:[#allocation5 + $0x180] sm:$0xff]
  %v3987 = vld [vmem:[#allocation5 + $0x188] sm:$0xff]
  %v3988 = vld [vmem:[#allocation5 + $0x190] sm:$0xff]
  %v3989 = vld [vmem:[#allocation5 + $0x198] sm:$0xff]
  %v3990 = vld [vmem:[#allocation5 + $0x1a0] sm:$0xff]
  %v3991 = vld [vmem:[#allocation5 + $0x1a8] sm:$0xff]
  %v3992 = vld [vmem:[#allocation5 + $0x1b0] sm:$0xff]
  %v3993 = vld [vmem:[#allocation5 + $0x1b8] sm:$0xff]
  %v3994 = vld [vmem:[#allocation5 + $0x1c0] sm:$0xff]
  %v3995 = vld [vmem:[#allocation5 + $0x1c8] sm:$0xff]
  %v3996 = vld [vmem:[#allocation5 + $0x1d0] sm:$0xff]
  %v3997 = vld [vmem:[#allocation5 + $0x1d8] sm:$0xff]
  %v3998 = vld [vmem:[#allocation5 + $0x1e0] sm:$0xff]
  %v3999 = vld [vmem:[#allocation5 + $0x1e8] sm:$0xff]
  %v4000 = vld [vmem:[#allocation5 + $0x1f0] sm:$0xff]
  %v4001 = vld [vmem:[#allocation5 + $0x1f8] sm:$0xff]
  %4002 = vmatprep.subr.mxu0 %v3999
  %4003 = vmatpush1.msra.mxu0 %v3998
  %4004 = vmatprep.subr.mxu0 %v3995
  %4005 = vmatpush1.msra.mxu0 %v3994
  %4006 = vmatprep.subr.mxu0 %v3991
  %4007 = vmatpush1.msra.mxu0 %v3990
  %4008 = vmatprep.subr.mxu0 %v3987
  %4009 = vmatpush1.msra.mxu0 %v3986
  %4010 = vmatprep.subr.mxu0 %v3983
  %4011 = vmatpush1.msra.mxu0 %v3982
  %4012 = vmatprep.subr.mxu0 %v3979
  %4013 = vmatpush1.msra.mxu0 %v3978
  %4014 = vmatprep.subr.mxu0 %v3975
  %4015 = vmatpush1.msra.mxu0 %v3974
  %4016 = vmatprep.subr.mxu0 %v3971
  %4017 = vmatpush1.msra.mxu0 %v3970
  %4018 = vmatprep.subr.mxu0 %v3967
  %4019 = vmatpush1.msra.mxu0 %v3966
  %4020 = vmatprep.subr.mxu0 %v3963
  %4021 = vmatpush1.msra.mxu0 %v3962
  %4022 = vmatprep.subr.mxu0 %v3959
  %4023 = vmatpush1.msra.mxu0 %v3958
  %4024 = vmatprep.subr.mxu0 %v3955
  %4025 = vmatpush1.msra.mxu0 %v3954
  %4026 = vmatprep.subr.mxu0 %v3951
  %4027 = vmatpush1.msra.mxu0 %v3950
  %4028 = vmatprep.subr.mxu0 %v3947
  %4029 = vmatpush1.msra.mxu0 %v3946
  %4030 = vmatprep.subr.mxu0 %v3943
  %4031 = vmatpush1.msra.mxu0 %v3942
  %4032 = vmatprep.subr.mxu0 %v3939
  %4033 = vmatpush1.msra.mxu0 %v3938
  %4034 = vmatprep.subr.mxu0 0.0
  %4035 = vmatpush2.msra.mxu0 0.0
  %4036 = vmatprep.subr.mxu0 0.0
  %4037 = vmatpush2.msra.mxu0 0.0
  %4038 = vmatprep.subr.mxu0 0.0
  %4039 = vmatpush2.msra.mxu0 0.0
  %4040 = vmatprep.subr.mxu0 0.0
  %4041 = vmatpush2.msra.mxu0 0.0
  %4042 = vmatprep.subr.mxu0 0.0
  %4043 = vmatpush2.msra.mxu0 0.0
  %4044 = vmatprep.subr.mxu0 0.0
  %4045 = vmatpush2.msra.mxu0 0.0
  %4046 = vmatprep.subr.mxu0 0.0
  %4047 = vmatpush2.msra.mxu0 0.0
  %4048 = vmatprep.subr.mxu0 0.0
  %4049 = vmatpush2.msra.mxu0 0.0
  %4050 = vmatprep.subr.mxu0 0.0
  %4051 = vmatpush2.msra.mxu0 0.0
  %4052 = vmatprep.subr.mxu0 0.0
  %4053 = vmatpush2.msra.mxu0 0.0
  %4054 = vmatprep.subr.mxu0 0.0
  %4055 = vmatpush2.msra.mxu0 0.0
  %4056 = vmatprep.subr.mxu0 0.0
  %4057 = vmatpush2.msra.mxu0 0.0
  %4058 = vmatprep.subr.mxu0 0.0
  %4059 = vmatpush2.msra.mxu0 0.0
  %4060 = vmatprep.subr.mxu0 0.0
  %4061 = vmatpush2.msra.mxu0 0.0
  %4062 = vmatprep.subr.mxu0 0.0
  %4063 = vmatpush2.msra.mxu0 0.0
  %4064 = vmatprep.subr.mxu0 0.0
  %4065 = vmatpush2.msra.mxu0 0.0
  %4066 = vmatprep.mubr.f32.mxu0 0.0
  %4067 = vmatmul.mubr.f32.gmra.mxu0 %v3932
  %v4068 = vpop.f32.mrf.mxu0
  %v4069 = vadd.f32 0.0, %v4068
  %v4070 = vpop.f32.mrf.mxu0
  %v4071 = vadd.f32 0.0, %v4070
  %4072 = vdwg.mxu0
  %4073 = vmatprep.subr.mxu0 %v4001
  %4074 = vmatpush1.msra.mxu0 %v4000
  %4075 = vmatprep.subr.mxu0 %v3997
  %4076 = vmatpush1.msra.mxu0 %v3996
  %4077 = vmatprep.subr.mxu0 %v3993
  %4078 = vmatpush1.msra.mxu0 %v3992
  %4079 = vmatprep.subr.mxu0 %v3989
  %4080 = vmatpush1.msra.mxu0 %v3988
  %4081 = vmatprep.subr.mxu0 %v3985
  %4082 = vmatpush1.msra.mxu0 %v3984
  %4083 = vmatprep.subr.mxu0 %v3981
  %4084 = vmatpush1.msra.mxu0 %v3980
  %4085 = vmatprep.subr.mxu0 %v3977
  %4086 = vmatpush1.msra.mxu0 %v3976
  %4087 = vmatprep.subr.mxu0 %v3973
  %4088 = vmatpush1.msra.mxu0 %v3972
  %4089 = vmatprep.subr.mxu0 %v3969
  %4090 = vmatpush1.msra.mxu0 %v3968
  %4091 = vmatprep.subr.mxu0 %v3965
  %4092 = vmatpush1.msra.mxu0 %v3964
  %4093 = vmatprep.subr.mxu0 %v3961
  %4094 = vmatpush1.msra.mxu0 %v3960
  %4095 = vmatprep.subr.mxu0 %v3957
  %4096 = vmatpush1.msra.mxu0 %v3956
  %4097 = vmatprep.subr.mxu0 %v3953
  %4098 = vmatpush1.msra.mxu0 %v3952
  %4099 = vmatprep.subr.mxu0 %v3949
  %4100 = vmatpush1.msra.mxu0 %v3948
  %4101 = vmatprep.subr.mxu0 %v3945
  %4102 = vmatpush1.msra.mxu0 %v3944
  %4103 = vmatprep.subr.mxu0 %v3941
  %4104 = vmatpush1.msra.mxu0 %v3940
  %4105 = vmatprep.subr.mxu0 0.0
  %4106 = vmatpush2.msra.mxu0 0.0
  %4107 = vmatprep.subr.mxu0 0.0
  %4108 = vmatpush2.msra.mxu0 0.0
  %4109 = vmatprep.subr.mxu0 0.0
  %4110 = vmatpush2.msra.mxu0 0.0
  %4111 = vmatprep.subr.mxu0 0.0
  %4112 = vmatpush2.msra.mxu0 0.0
  %4113 = vmatprep.subr.mxu0 0.0
  %4114 = vmatpush2.msra.mxu0 0.0
  %4115 = vmatprep.subr.mxu0 0.0
  %4116 = vmatpush2.msra.mxu0 0.0
  %4117 = vmatprep.subr.mxu0 0.0
  %4118 = vmatpush2.msra.mxu0 0.0
  %4119 = vmatprep.subr.mxu0 0.0
  %4120 = vmatpush2.msra.mxu0 0.0
  %4121 = vmatprep.subr.mxu0 0.0
  %4122 = vmatpush2.msra.mxu0 0.0
  %4123 = vmatprep.subr.mxu0 0.0
  %4124 = vmatpush2.msra.mxu0 0.0
  %4125 = vmatprep.subr.mxu0 0.0
  %4126 = vmatpush2.msra.mxu0 0.0
  %4127 = vmatprep.subr.mxu0 0.0
  %4128 = vmatpush2.msra.mxu0 0.0
  %4129 = vmatprep.subr.mxu0 0.0
  %4130 = vmatpush2.msra.mxu0 0.0
  %4131 = vmatprep.subr.mxu0 0.0
  %4132 = vmatpush2.msra.mxu0 0.0
  %4133 = vmatprep.subr.mxu0 0.0
  %4134 = vmatpush2.msra.mxu0 0.0
  %4135 = vmatprep.subr.mxu0 0.0
  %4136 = vmatpush2.msra.mxu0 0.0
  %4137 = vmatprep.mubr.f32.mxu0 0.0
  %4138 = vmatmul.mubr.f32.gmra.mxu0 %v3932
  %v4139 = vpop.f32.mrf.mxu0
  %v4140 = vadd.f32 0.0, %v4139
  %v4141 = vpop.f32.mrf.mxu0
  %v4142 = vadd.f32 0.0, %v4141
  %4143 = vdwg.mxu0
  %v4144 = vadd.f32 %v3934, %v4069
  %v4145 = vadd.f32 %v3935, %v4071
  %v4146 = vadd.f32 %v3936, %v4140
  %v4147 = vadd.f32 %v3937, %v4142
  %v4148 = vxor.u32 %v4144, 2147483648
  %v4149 = vxor.u32 %v4145, 2147483648
  %v4150 = vxor.u32 %v4146, 2147483648
  %v4151 = vmul.f32 %v4148, 1.442695
  %v4152 = vpow.pop %v4151
  %v4153 = vmul.f32 %v4149, 1.442695
  %v4154 = vpow.pop %v4153
  %v4155 = vmul.f32 %v4150, 1.442695
  %v4156 = vpow.pop %v4155
  %v4157 = vadd.f32 %v4152, 1.0
  %v4158 = vadd.f32 %v4154, 1.0
  %v4159 = vadd.f32 %v4156, 1.0
  %v4160 = vrcp.pop %v4157
  %v4161 = vmul.f32 1.0, %v4160
  %v4162 = vrcp.pop %v4158
  %v4163 = vmul.f32 1.0, %v4162
  %v4164 = vrcp.pop %v4159
  %v4165 = vmul.f32 1.0, %v4164
  %v4166 = vtanh.pop %v4147
  %v4167 = vmul.f32 %v4163, %v3930
  %v4168 = vmul.f32 %v4161, %v4166
  %v4169 = vadd.f32 %v4167, %v4168
  %v4170 = vtanh.pop %v4169
  %v4171 = vmul.f32 %v4165, %v4170
  %4172 = vst [vmem:[#allocation2 + $0x10] sm:$0xff] %v4171
  %v4173 = vld [vmem:[#allocation3 + $0x60] sm:$0xff]
  %v4174 = vld [vmem:[#allocation3 + $0x68] sm:$0xff]
  %v4175 = vld [vmem:[#allocation3 + $0x70] sm:$0xff]
  %v4176 = vld [vmem:[#allocation3 + $0x78] sm:$0xff]
  %v4177 = vld [vmem:[#allocation5] sm:$0xff]
  %v4178 = vld [vmem:[#allocation5 + $0x8] sm:$0xff]
  %v4179 = vld [vmem:[#allocation5 + $0x10] sm:$0xff]
  %v4180 = vld [vmem:[#allocation5 + $0x18] sm:$0xff]
  %v4181 = vld [vmem:[#allocation5 + $0x20] sm:$0xff]
  %v4182 = vld [vmem:[#allocation5 + $0x28] sm:$0xff]
  %v4183 = vld [vmem:[#allocation5 + $0x30] sm:$0xff]
  %v4184 = vld [vmem:[#allocation5 + $0x38] sm:$0xff]
  %v4185 = vld [vmem:[#allocation5 + $0x40] sm:$0xff]
  %v4186 = vld [vmem:[#allocation5 + $0x48] sm:$0xff]
  %v4187 = vld [vmem:[#allocation5 + $0x50] sm:$0xff]
  %v4188 = vld [vmem:[#allocation5 + $0x58] sm:$0xff]
  %v4189 = vld [vmem:[#allocation5 + $0x60] sm:$0xff]
  %v4190 = vld [vmem:[#allocation5 + $0x68] sm:$0xff]
  %v4191 = vld [vmem:[#allocation5 + $0x70] sm:$0xff]
  %v4192 = vld [vmem:[#allocation5 + $0x78] sm:$0xff]
  %v4193 = vld [vmem:[#allocation5 + $0x80] sm:$0xff]
  %v4194 = vld [vmem:[#allocation5 + $0x88] sm:$0xff]
  %v4195 = vld [vmem:[#allocation5 + $0x90] sm:$0xff]
  %v4196 = vld [vmem:[#allocation5 + $0x98] sm:$0xff]
  %v4197 = vld [vmem:[#allocation5 + $0xa0] sm:$0xff]
  %v4198 = vld [vmem:[#allocation5 + $0xa8] sm:$0xff]
  %v4199 = vld [vmem:[#allocation5 + $0xb0] sm:$0xff]
  %v4200 = vld [vmem:[#allocation5 + $0xb8] sm:$0xff]
  %v4201 = vld [vmem:[#allocation5 + $0xc0] sm:$0xff]
  %v4202 = vld [vmem:[#allocation5 + $0xc8] sm:$0xff]
  %v4203 = vld [vmem:[#allocation5 + $0xd0] sm:$0xff]
  %v4204 = vld [vmem:[#allocation5 + $0xd8] sm:$0xff]
  %v4205 = vld [vmem:[#allocation5 + $0xe0] sm:$0xff]
  %v4206 = vld [vmem:[#allocation5 + $0xe8] sm:$0xff]
  %v4207 = vld [vmem:[#allocation5 + $0xf0] sm:$0xff]
  %v4208 = vld [vmem:[#allocation5 + $0xf8] sm:$0xff]
  %v4209 = vld [vmem:[#allocation5 + $0x100] sm:$0xff]
  %v4210 = vld [vmem:[#allocation5 + $0x108] sm:$0xff]
  %v4211 = vld [vmem:[#allocation5 + $0x110] sm:$0xff]
  %v4212 = vld [vmem:[#allocation5 + $0x118] sm:$0xff]
  %v4213 = vld [vmem:[#allocation5 + $0x120] sm:$0xff]
  %v4214 = vld [vmem:[#allocation5 + $0x128] sm:$0xff]
  %v4215 = vld [vmem:[#allocation5 + $0x130] sm:$0xff]
  %v4216 = vld [vmem:[#allocation5 + $0x138] sm:$0xff]
  %v4217 = vld [vmem:[#allocation5 + $0x140] sm:$0xff]
  %v4218 = vld [vmem:[#allocation5 + $0x148] sm:$0xff]
  %v4219 = vld [vmem:[#allocation5 + $0x150] sm:$0xff]
  %v4220 = vld [vmem:[#allocation5 + $0x158] sm:$0xff]
  %v4221 = vld [vmem:[#allocation5 + $0x160] sm:$0xff]
  %v4222 = vld [vmem:[#allocation5 + $0x168] sm:$0xff]
  %v4223 = vld [vmem:[#allocation5 + $0x170] sm:$0xff]
  %v4224 = vld [vmem:[#allocation5 + $0x178] sm:$0xff]
  %v4225 = vld [vmem:[#allocation5 + $0x180] sm:$0xff]
  %v4226 = vld [vmem:[#allocation5 + $0x188] sm:$0xff]
  %v4227 = vld [vmem:[#allocation5 + $0x190] sm:$0xff]
  %v4228 = vld [vmem:[#allocation5 + $0x198] sm:$0xff]
  %v4229 = vld [vmem:[#allocation5 + $0x1a0] sm:$0xff]
  %v4230 = vld [vmem:[#allocation5 + $0x1a8] sm:$0xff]
  %v4231 = vld [vmem:[#allocation5 + $0x1b0] sm:$0xff]
  %v4232 = vld [vmem:[#allocation5 + $0x1b8] sm:$0xff]
  %v4233 = vld [vmem:[#allocation5 + $0x1c0] sm:$0xff]
  %v4234 = vld [vmem:[#allocation5 + $0x1c8] sm:$0xff]
  %v4235 = vld [vmem:[#allocation5 + $0x1d0] sm:$0xff]
  %v4236 = vld [vmem:[#allocation5 + $0x1d8] sm:$0xff]
  %v4237 = vld [vmem:[#allocation5 + $0x1e0] sm:$0xff]
  %v4238 = vld [vmem:[#allocation5 + $0x1e8] sm:$0xff]
  %v4239 = vld [vmem:[#allocation5 + $0x1f0] sm:$0xff]
  %v4240 = vld [vmem:[#allocation5 + $0x1f8] sm:$0xff]
  %4241 = vmatprep.subr.mxu0 %v4238
  %4242 = vmatpush1.msra.mxu0 %v4237
  %4243 = vmatprep.subr.mxu0 %v4234
  %4244 = vmatpush1.msra.mxu0 %v4233
  %4245 = vmatprep.subr.mxu0 %v4230
  %4246 = vmatpush1.msra.mxu0 %v4229
  %4247 = vmatprep.subr.mxu0 %v4226
  %4248 = vmatpush1.msra.mxu0 %v4225
  %4249 = vmatprep.subr.mxu0 %v4222
  %4250 = vmatpush1.msra.mxu0 %v4221
  %4251 = vmatprep.subr.mxu0 %v4218
  %4252 = vmatpush1.msra.mxu0 %v4217
  %4253 = vmatprep.subr.mxu0 %v4214
  %4254 = vmatpush1.msra.mxu0 %v4213
  %4255 = vmatprep.subr.mxu0 %v4210
  %4256 = vmatpush1.msra.mxu0 %v4209
  %4257 = vmatprep.subr.mxu0 %v4206
  %4258 = vmatpush1.msra.mxu0 %v4205
  %4259 = vmatprep.subr.mxu0 %v4202
  %4260 = vmatpush1.msra.mxu0 %v4201
  %4261 = vmatprep.subr.mxu0 %v4198
  %4262 = vmatpush1.msra.mxu0 %v4197
  %4263 = vmatprep.subr.mxu0 %v4194
  %4264 = vmatpush1.msra.mxu0 %v4193
  %4265 = vmatprep.subr.mxu0 %v4190
  %4266 = vmatpush1.msra.mxu0 %v4189
  %4267 = vmatprep.subr.mxu0 %v4186
  %4268 = vmatpush1.msra.mxu0 %v4185
  %4269 = vmatprep.subr.mxu0 %v4182
  %4270 = vmatpush1.msra.mxu0 %v4181
  %4271 = vmatprep.subr.mxu0 %v4178
  %4272 = vmatpush1.msra.mxu0 %v4177
  %4273 = vmatprep.subr.mxu0 0.0
  %4274 = vmatpush2.msra.mxu0 0.0
  %4275 = vmatprep.subr.mxu0 0.0
  %4276 = vmatpush2.msra.mxu0 0.0
  %4277 = vmatprep.subr.mxu0 0.0
  %4278 = vmatpush2.msra.mxu0 0.0
  %4279 = vmatprep.subr.mxu0 0.0
  %4280 = vmatpush2.msra.mxu0 0.0
  %4281 = vmatprep.subr.mxu0 0.0
  %4282 = vmatpush2.msra.mxu0 0.0
  %4283 = vmatprep.subr.mxu0 0.0
  %4284 = vmatpush2.msra.mxu0 0.0
  %4285 = vmatprep.subr.mxu0 0.0
  %4286 = vmatpush2.msra.mxu0 0.0
  %4287 = vmatprep.subr.mxu0 0.0
  %4288 = vmatpush2.msra.mxu0 0.0
  %4289 = vmatprep.subr.mxu0 0.0
  %4290 = vmatpush2.msra.mxu0 0.0
  %4291 = vmatprep.subr.mxu0 0.0
  %4292 = vmatpush2.msra.mxu0 0.0
  %4293 = vmatprep.subr.mxu0 0.0
  %4294 = vmatpush2.msra.mxu0 0.0
  %4295 = vmatprep.subr.mxu0 0.0
  %4296 = vmatpush2.msra.mxu0 0.0
  %4297 = vmatprep.subr.mxu0 0.0
  %4298 = vmatpush2.msra.mxu0 0.0
  %4299 = vmatprep.subr.mxu0 0.0
  %4300 = vmatpush2.msra.mxu0 0.0
  %4301 = vmatprep.subr.mxu0 0.0
  %4302 = vmatpush2.msra.mxu0 0.0
  %4303 = vmatprep.subr.mxu0 0.0
  %4304 = vmatpush2.msra.mxu0 0.0
  %4305 = vmatprep.mubr.f32.mxu0 0.0
  %4306 = vmatmul.mubr.f32.gmra.mxu0 %v4171
  %v4307 = vpop.f32.mrf.mxu0
  %v4308 = vadd.f32 0.0, %v4307
  %v4309 = vpop.f32.mrf.mxu0
  %v4310 = vadd.f32 0.0, %v4309
  %4311 = vdwg.mxu0
  %4312 = vmatprep.subr.mxu0 %v4240
  %4313 = vmatpush1.msra.mxu0 %v4239
  %4314 = vmatprep.subr.mxu0 %v4236
  %4315 = vmatpush1.msra.mxu0 %v4235
  %4316 = vmatprep.subr.mxu0 %v4232
  %4317 = vmatpush1.msra.mxu0 %v4231
  %4318 = vmatprep.subr.mxu0 %v4228
  %4319 = vmatpush1.msra.mxu0 %v4227
  %4320 = vmatprep.subr.mxu0 %v4224
  %4321 = vmatpush1.msra.mxu0 %v4223
  %4322 = vmatprep.subr.mxu0 %v4220
  %4323 = vmatpush1.msra.mxu0 %v4219
  %4324 = vmatprep.subr.mxu0 %v4216
  %4325 = vmatpush1.msra.mxu0 %v4215
  %4326 = vmatprep.subr.mxu0 %v4212
  %4327 = vmatpush1.msra.mxu0 %v4211
  %4328 = vmatprep.subr.mxu0 %v4208
  %4329 = vmatpush1.msra.mxu0 %v4207
  %4330 = vmatprep.subr.mxu0 %v4204
  %4331 = vmatpush1.msra.mxu0 %v4203
  %4332 = vmatprep.subr.mxu0 %v4200
  %4333 = vmatpush1.msra.mxu0 %v4199
  %4334 = vmatprep.subr.mxu0 %v4196
  %4335 = vmatpush1.msra.mxu0 %v4195
  %4336 = vmatprep.subr.mxu0 %v4192
  %4337 = vmatpush1.msra.mxu0 %v4191
  %4338 = vmatprep.subr.mxu0 %v4188
  %4339 = vmatpush1.msra.mxu0 %v4187
  %4340 = vmatprep.subr.mxu0 %v4184
  %4341 = vmatpush1.msra.mxu0 %v4183
  %4342 = vmatprep.subr.mxu0 %v4180
  %4343 = vmatpush1.msra.mxu0 %v4179
  %4344 = vmatprep.subr.mxu0 0.0
  %4345 = vmatpush2.msra.mxu0 0.0
  %4346 = vmatprep.subr.mxu0 0.0
  %4347 = vmatpush2.msra.mxu0 0.0
  %4348 = vmatprep.subr.mxu0 0.0
  %4349 = vmatpush2.msra.mxu0 0.0
  %4350 = vmatprep.subr.mxu0 0.0
  %4351 = vmatpush2.msra.mxu0 0.0
  %4352 = vmatprep.subr.mxu0 0.0
  %4353 = vmatpush2.msra.mxu0 0.0
  %4354 = vmatprep.subr.mxu0 0.0
  %4355 = vmatpush2.msra.mxu0 0.0
  %4356 = vmatprep.subr.mxu0 0.0
  %4357 = vmatpush2.msra.mxu0 0.0
  %4358 = vmatprep.subr.mxu0 0.0
  %4359 = vmatpush2.msra.mxu0 0.0
  %4360 = vmatprep.subr.mxu0 0.0
  %4361 = vmatpush2.msra.mxu0 0.0
  %4362 = vmatprep.subr.mxu0 0.0
  %4363 = vmatpush2.msra.mxu0 0.0
  %4364 = vmatprep.subr.mxu0 0.0
  %4365 = vmatpush2.msra.mxu0 0.0
  %4366 = vmatprep.subr.mxu0 0.0
  %4367 = vmatpush2.msra.mxu0 0.0
  %4368 = vmatprep.subr.mxu0 0.0
  %4369 = vmatpush2.msra.mxu0 0.0
  %4370 = vmatprep.subr.mxu0 0.0
  %4371 = vmatpush2.msra.mxu0 0.0
  %4372 = vmatprep.subr.mxu0 0.0
  %4373 = vmatpush2.msra.mxu0 0.0
  %4374 = vmatprep.subr.mxu0 0.0
  %4375 = vmatpush2.msra.mxu0 0.0
  %4376 = vmatprep.mubr.f32.mxu0 0.0
  %4377 = vmatmul.mubr.f32.gmra.mxu0 %v4171
  %v4378 = vpop.f32.mrf.mxu0
  %v4379 = vadd.f32 0.0, %v4378
  %v4380 = vpop.f32.mrf.mxu0
  %v4381 = vadd.f32 0.0, %v4380
  %4382 = vdwg.mxu0
  %v4383 = vadd.f32 %v4173, %v4308
  %v4384 = vadd.f32 %v4174, %v4310
  %v4385 = vadd.f32 %v4175, %v4379
  %v4386 = vadd.f32 %v4176, %v4381
  %v4387 = vxor.u32 %v4383, 2147483648
  %v4388 = vxor.u32 %v4384, 2147483648
  %v4389 = vxor.u32 %v4385, 2147483648
  %v4390 = vmul.f32 %v4387, 1.442695
  %v4391 = vpow.pop %v4390
  %v4392 = vmul.f32 %v4388, 1.442695
  %v4393 = vpow.pop %v4392
  %v4394 = vmul.f32 %v4389, 1.442695
  %v4395 = vpow.pop %v4394
  %v4396 = vadd.f32 %v4391, 1.0
  %v4397 = vadd.f32 %v4393, 1.0
  %v4398 = vadd.f32 %v4395, 1.0
  %v4399 = vrcp.pop %v4396
  %v4400 = vmul.f32 1.0, %v4399
  %v4401 = vrcp.pop %v4397
  %v4402 = vmul.f32 1.0, %v4401
  %v4403 = vrcp.pop %v4398
  %v4404 = vmul.f32 1.0, %v4403
  %v4405 = vtanh.pop %v4386
  %v4406 = vmul.f32 %v4402, %v4169
  %v4407 = vmul.f32 %v4400, %v4405
  %v4408 = vadd.f32 %v4406, %v4407
  %v4409 = vtanh.pop %v4408
  %v4410 = vmul.f32 %v4404, %v4409
  %4411 = vst [vmem:[#allocation2 + $0x18] sm:$0xff] %v4410
  %v4412 = vld [vmem:[#allocation3 + $0x80] sm:$0xff]
  %v4413 = vld [vmem:[#allocation3 + $0x88] sm:$0xff]
  %v4414 = vld [vmem:[#allocation3 + $0x90] sm:$0xff]
  %v4415 = vld [vmem:[#allocation3 + $0x98] sm:$0xff]
  %v4416 = vld [vmem:[#allocation5] sm:$0xff]
  %v4417 = vld [vmem:[#allocation5 + $0x8] sm:$0xff]
  %v4418 = vld [vmem:[#allocation5 + $0x10] sm:$0xff]
  %v4419 = vld [vmem:[#allocation5 + $0x18] sm:$0xff]
  %v4420 = vld [vmem:[#allocation5 + $0x20] sm:$0xff]
  %v4421 = vld [vmem:[#allocation5 + $0x28] sm:$0xff]
  %v4422 = vld [vmem:[#allocation5 + $0x30] sm:$0xff]
  %v4423 = vld [vmem:[#allocation5 + $0x38] sm:$0xff]
  %v4424 = vld [vmem:[#allocation5 + $0x40] sm:$0xff]
  %v4425 = vld [vmem:[#allocation5 + $0x48] sm:$0xff]
  %v4426 = vld [vmem:[#allocation5 + $0x50] sm:$0xff]
  %v4427 = vld [vmem:[#allocation5 + $0x58] sm:$0xff]
  %v4428 = vld [vmem:[#allocation5 + $0x60] sm:$0xff]
  %v4429 = vld [vmem:[#allocation5 + $0x68] sm:$0xff]
  %v4430 = vld [vmem:[#allocation5 + $0x70] sm:$0xff]
  %v4431 = vld [vmem:[#allocation5 + $0x78] sm:$0xff]
  %v4432 = vld [vmem:[#allocation5 + $0x80] sm:$0xff]
  %v4433 = vld [vmem:[#allocation5 + $0x88] sm:$0xff]
  %v4434 = vld [vmem:[#allocation5 + $0x90] sm:$0xff]
  %v4435 = vld [vmem:[#allocation5 + $0x98] sm:$0xff]
  %v4436 = vld [vmem:[#allocation5 + $0xa0] sm:$0xff]
  %v4437 = vld [vmem:[#allocation5 + $0xa8] sm:$0xff]
  %v4438 = vld [vmem:[#allocation5 + $0xb0] sm:$0xff]
  %v4439 = vld [vmem:[#allocation5 + $0xb8] sm:$0xff]
  %v4440 = vld [vmem:[#allocation5 + $0xc0] sm:$0xff]
  %v4441 = vld [vmem:[#allocation5 + $0xc8] sm:$0xff]
  %v4442 = vld [vmem:[#allocation5 + $0xd0] sm:$0xff]
  %v4443 = vld [vmem:[#allocation5 + $0xd8] sm:$0xff]
  %v4444 = vld [vmem:[#allocation5 + $0xe0] sm:$0xff]
  %v4445 = vld [vmem:[#allocation5 + $0xe8] sm:$0xff]
  %v4446 = vld [vmem:[#allocation5 + $0xf0] sm:$0xff]
  %v4447 = vld [vmem:[#allocation5 + $0xf8] sm:$0xff]
  %v4448 = vld [vmem:[#allocation5 + $0x100] sm:$0xff]
  %v4449 = vld [vmem:[#allocation5 + $0x108] sm:$0xff]
  %v4450 = vld [vmem:[#allocation5 + $0x110] sm:$0xff]
  %v4451 = vld [vmem:[#allocation5 + $0x118] sm:$0xff]
  %v4452 = vld [vmem:[#allocation5 + $0x120] sm:$0xff]
  %v4453 = vld [vmem:[#allocation5 + $0x128] sm:$0xff]
  %v4454 = vld [vmem:[#allocation5 + $0x130] sm:$0xff]
  %v4455 = vld [vmem:[#allocation5 + $0x138] sm:$0xff]
  %v4456 = vld [vmem:[#allocation5 + $0x140] sm:$0xff]
  %v4457 = vld [vmem:[#allocation5 + $0x148] sm:$0xff]
  %v4458 = vld [vmem:[#allocation5 + $0x150] sm:$0xff]
  %v4459 = vld [vmem:[#allocation5 + $0x158] sm:$0xff]
  %v4460 = vld [vmem:[#allocation5 + $0x160] sm:$0xff]
  %v4461 = vld [vmem:[#allocation5 + $0x168] sm:$0xff]
  %v4462 = vld [vmem:[#allocation5 + $0x170] sm:$0xff]
  %v4463 = vld [vmem:[#allocation5 + $0x178] sm:$0xff]
  %v4464 = vld [vmem:[#allocation5 + $0x180] sm:$0xff]
  %v4465 = vld [vmem:[#allocation5 + $0x188] sm:$0xff]
  %v4466 = vld [vmem:[#allocation5 + $0x190] sm:$0xff]
  %v4467 = vld [vmem:[#allocation5 + $0x198] sm:$0xff]
  %v4468 = vld [vmem:[#allocation5 + $0x1a0] sm:$0xff]
  %v4469 = vld [vmem:[#allocation5 + $0x1a8] sm:$0xff]
  %v4470 = vld [vmem:[#allocation5 + $0x1b0] sm:$0xff]
  %v4471 = vld [vmem:[#allocation5 + $0x1b8] sm:$0xff]
  %v4472 = vld [vmem:[#allocation5 + $0x1c0] sm:$0xff]
  %v4473 = vld [vmem:[#allocation5 + $0x1c8] sm:$0xff]
  %v4474 = vld [vmem:[#allocation5 + $0x1d0] sm:$0xff]
  %v4475 = vld [vmem:[#allocation5 + $0x1d8] sm:$0xff]
  %v4476 = vld [vmem:[#allocation5 + $0x1e0] sm:$0xff]
  %v4477 = vld [vmem:[#allocation5 + $0x1e8] sm:$0xff]
  %v4478 = vld [vmem:[#allocation5 + $0x1f0] sm:$0xff]
  %v4479 = vld [vmem:[#allocation5 + $0x1f8] sm:$0xff]
  %4480 = vmatprep.subr.mxu0 %v4477
  %4481 = vmatpush1.msra.mxu0 %v4476
  %4482 = vmatprep.subr.mxu0 %v4473
  %4483 = vmatpush1.msra.mxu0 %v4472
  %4484 = vmatprep.subr.mxu0 %v4469
  %4485 = vmatpush1.msra.mxu0 %v4468
  %4486 = vmatprep.subr.mxu0 %v4465
  %4487 = vmatpush1.msra.mxu0 %v4464
  %4488 = vmatprep.subr.mxu0 %v4461
  %4489 = vmatpush1.msra.mxu0 %v4460
  %4490 = vmatprep.subr.mxu0 %v4457
  %4491 = vmatpush1.msra.mxu0 %v4456
  %4492 = vmatprep.subr.mxu0 %v4453
  %4493 = vmatpush1.msra.mxu0 %v4452
  %4494 = vmatprep.subr.mxu0 %v4449
  %4495 = vmatpush1.msra.mxu0 %v4448
  %4496 = vmatprep.subr.mxu0 %v4445
  %4497 = vmatpush1.msra.mxu0 %v4444
  %4498 = vmatprep.subr.mxu0 %v4441
  %4499 = vmatpush1.msra.mxu0 %v4440
  %4500 = vmatprep.subr.mxu0 %v4437
  %4501 = vmatpush1.msra.mxu0 %v4436
  %4502 = vmatprep.subr.mxu0 %v4433
  %4503 = vmatpush1.msra.mxu0 %v4432
  %4504 = vmatprep.subr.mxu0 %v4429
  %4505 = vmatpush1.msra.mxu0 %v4428
  %4506 = vmatprep.subr.mxu0 %v4425
  %4507 = vmatpush1.msra.mxu0 %v4424
  %4508 = vmatprep.subr.mxu0 %v4421
  %4509 = vmatpush1.msra.mxu0 %v4420
  %4510 = vmatprep.subr.mxu0 %v4417
  %4511 = vmatpush1.msra.mxu0 %v4416
  %4512 = vmatprep.subr.mxu0 0.0
  %4513 = vmatpush2.msra.mxu0 0.0
  %4514 = vmatprep.subr.mxu0 0.0
  %4515 = vmatpush2.msra.mxu0 0.0
  %4516 = vmatprep.subr.mxu0 0.0
  %4517 = vmatpush2.msra.mxu0 0.0
  %4518 = vmatprep.subr.mxu0 0.0
  %4519 = vmatpush2.msra.mxu0 0.0
  %4520 = vmatprep.subr.mxu0 0.0
  %4521 = vmatpush2.msra.mxu0 0.0
  %4522 = vmatprep.subr.mxu0 0.0
  %4523 = vmatpush2.msra.mxu0 0.0
  %4524 = vmatprep.subr.mxu0 0.0
  %4525 = vmatpush2.msra.mxu0 0.0
  %4526 = vmatprep.subr.mxu0 0.0
  %4527 = vmatpush2.msra.mxu0 0.0
  %4528 = vmatprep.subr.mxu0 0.0
  %4529 = vmatpush2.msra.mxu0 0.0
  %4530 = vmatprep.subr.mxu0 0.0
  %4531 = vmatpush2.msra.mxu0 0.0
  %4532 = vmatprep.subr.mxu0 0.0
  %4533 = vmatpush2.msra.mxu0 0.0
  %4534 = vmatprep.subr.mxu0 0.0
  %4535 = vmatpush2.msra.mxu0 0.0
  %4536 = vmatprep.subr.mxu0 0.0
  %4537 = vmatpush2.msra.mxu0 0.0
  %4538 = vmatprep.subr.mxu0 0.0
  %4539 = vmatpush2.msra.mxu0 0.0
  %4540 = vmatprep.subr.mxu0 0.0
  %4541 = vmatpush2.msra.mxu0 0.0
  %4542 = vmatprep.subr.mxu0 0.0
  %4543 = vmatpush2.msra.mxu0 0.0
  %4544 = vmatprep.mubr.f32.mxu0 0.0
  %4545 = vmatmul.mubr.f32.gmra.mxu0 %v4410
  %v4546 = vpop.f32.mrf.mxu0
  %v4547 = vadd.f32 0.0, %v4546
  %v4548 = vpop.f32.mrf.mxu0
  %v4549 = vadd.f32 0.0, %v4548
  %4550 = vdwg.mxu0
  %4551 = vmatprep.subr.mxu0 %v4479
  %4552 = vmatpush1.msra.mxu0 %v4478
  %4553 = vmatprep.subr.mxu0 %v4475
  %4554 = vmatpush1.msra.mxu0 %v4474
  %4555 = vmatprep.subr.mxu0 %v4471
  %4556 = vmatpush1.msra.mxu0 %v4470
  %4557 = vmatprep.subr.mxu0 %v4467
  %4558 = vmatpush1.msra.mxu0 %v4466
  %4559 = vmatprep.subr.mxu0 %v4463
  %4560 = vmatpush1.msra.mxu0 %v4462
  %4561 = vmatprep.subr.mxu0 %v4459
  %4562 = vmatpush1.msra.mxu0 %v4458
  %4563 = vmatprep.subr.mxu0 %v4455
  %4564 = vmatpush1.msra.mxu0 %v4454
  %4565 = vmatprep.subr.mxu0 %v4451
  %4566 = vmatpush1.msra.mxu0 %v4450
  %4567 = vmatprep.subr.mxu0 %v4447
  %4568 = vmatpush1.msra.mxu0 %v4446
  %4569 = vmatprep.subr.mxu0 %v4443
  %4570 = vmatpush1.msra.mxu0 %v4442
  %4571 = vmatprep.subr.mxu0 %v4439
  %4572 = vmatpush1.msra.mxu0 %v4438
  %4573 = vmatprep.subr.mxu0 %v4435
  %4574 = vmatpush1.msra.mxu0 %v4434
  %4575 = vmatprep.subr.mxu0 %v4431
  %4576 = vmatpush1.msra.mxu0 %v4430
  %4577 = vmatprep.subr.mxu0 %v4427
  %4578 = vmatpush1.msra.mxu0 %v4426
  %4579 = vmatprep.subr.mxu0 %v4423
  %4580 = vmatpush1.msra.mxu0 %v4422
  %4581 = vmatprep.subr.mxu0 %v4419
  %4582 = vmatpush1.msra.mxu0 %v4418
  %4583 = vmatprep.subr.mxu0 0.0
  %4584 = vmatpush2.msra.mxu0 0.0
  %4585 = vmatprep.subr.mxu0 0.0
  %4586 = vmatpush2.msra.mxu0 0.0
  %4587 = vmatprep.subr.mxu0 0.0
  %4588 = vmatpush2.msra.mxu0 0.0
  %4589 = vmatprep.subr.mxu0 0.0
  %4590 = vmatpush2.msra.mxu0 0.0
  %4591 = vmatprep.subr.mxu0 0.0
  %4592 = vmatpush2.msra.mxu0 0.0
  %4593 = vmatprep.subr.mxu0 0.0
  %4594 = vmatpush2.msra.mxu0 0.0
  %4595 = vmatprep.subr.mxu0 0.0
  %4596 = vmatpush2.msra.mxu0 0.0
  %4597 = vmatprep.subr.mxu0 0.0
  %4598 = vmatpush2.msra.mxu0 0.0
  %4599 = vmatprep.subr.mxu0 0.0
  %4600 = vmatpush2.msra.mxu0 0.0
  %4601 = vmatprep.subr.mxu0 0.0
  %4602 = vmatpush2.msra.mxu0 0.0
  %4603 = vmatprep.subr.mxu0 0.0
  %4604 = vmatpush2.msra.mxu0 0.0
  %4605 = vmatprep.subr.mxu0 0.0
  %4606 = vmatpush2.msra.mxu0 0.0
  %4607 = vmatprep.subr.mxu0 0.0
  %4608 = vmatpush2.msra.mxu0 0.0
  %4609 = vmatprep.subr.mxu0 0.0
  %4610 = vmatpush2.msra.mxu0 0.0
  %4611 = vmatprep.subr.mxu0 0.0
  %4612 = vmatpush2.msra.mxu0 0.0
  %4613 = vmatprep.subr.mxu0 0.0
  %4614 = vmatpush2.msra.mxu0 0.0
  %4615 = vmatprep.mubr.f32.mxu0 0.0
  %4616 = vmatmul.mubr.f32.gmra.mxu0 %v4410
  %v4617 = vpop.f32.mrf.mxu0
  %v4618 = vadd.f32 0.0, %v4617
  %v4619 = vpop.f32.mrf.mxu0
  %v4620 = vadd.f32 0.0, %v4619
  %4621 = vdwg.mxu0
  %v4622 = vadd.f32 %v4412, %v4547
  %v4623 = vadd.f32 %v4413, %v4549
  %v4624 = vadd.f32 %v4414, %v4618
  %v4625 = vadd.f32 %v4415, %v4620
  %v4626 = vxor.u32 %v4622, 2147483648
  %v4627 = vxor.u32 %v4623, 2147483648
  %v4628 = vxor.u32 %v4624, 2147483648
  %v4629 = vmul.f32 %v4626, 1.442695
  %v4630 = vpow.pop %v4629
  %v4631 = vmul.f32 %v4627, 1.442695
  %v4632 = vpow.pop %v4631
  %v4633 = vmul.f32 %v4628, 1.442695
  %v4634 = vpow.pop %v4633
  %v4635 = vadd.f32 %v4630, 1.0
  %v4636 = vadd.f32 %v4632, 1.0
  %v4637 = vadd.f32 %v4634, 1.0
  %v4638 = vrcp.pop %v4635
  %v4639 = vmul.f32 1.0, %v4638
  %v4640 = vrcp.pop %v4636
  %v4641 = vmul.f32 1.0, %v4640
  %v4642 = vrcp.pop %v4637
  %v4643 = vmul.f32 1.0, %v4642
  %v4644 = vtanh.pop %v4625
  %v4645 = vmul.f32 %v4641, %v4408
  %v4646 = vmul.f32 %v4639, %v4644
  %v4647 = vadd.f32 %v4645, %v4646
  %v4648 = vtanh.pop %v4647
  %v4649 = vmul.f32 %v4643, %v4648
  %4650 = vst [vmem:[#allocation2 + $0x20] sm:$0xff] %v4649
  %v4651 = vld [vmem:[#allocation3 + $0xa0] sm:$0xff]
  %v4652 = vld [vmem:[#allocation3 + $0xa8] sm:$0xff]
  %v4653 = vld [vmem:[#allocation3 + $0xb0] sm:$0xff]
  %v4654 = vld [vmem:[#allocation3 + $0xb8] sm:$0xff]
  %v4655 = vld [vmem:[#allocation5] sm:$0xff]
  %v4656 = vld [vmem:[#allocation5 + $0x8] sm:$0xff]
  %v4657 = vld [vmem:[#allocation5 + $0x10] sm:$0xff]
  %v4658 = vld [vmem:[#allocation5 + $0x18] sm:$0xff]
  %v4659 = vld [vmem:[#allocation5 + $0x20] sm:$0xff]
  %v4660 = vld [vmem:[#allocation5 + $0x28] sm:$0xff]
  %v4661 = vld [vmem:[#allocation5 + $0x30] sm:$0xff]
  %v4662 = vld [vmem:[#allocation5 + $0x38] sm:$0xff]
  %v4663 = vld [vmem:[#allocation5 + $0x40] sm:$0xff]
  %v4664 = vld [vmem:[#allocation5 + $0x48] sm:$0xff]
  %v4665 = vld [vmem:[#allocation5 + $0x50] sm:$0xff]
  %v4666 = vld [vmem:[#allocation5 + $0x58] sm:$0xff]
  %v4667 = vld [vmem:[#allocation5 + $0x60] sm:$0xff]
  %v4668 = vld [vmem:[#allocation5 + $0x68] sm:$0xff]
  %v4669 = vld [vmem:[#allocation5 + $0x70] sm:$0xff]
  %v4670 = vld [vmem:[#allocation5 + $0x78] sm:$0xff]
  %v4671 = vld [vmem:[#allocation5 + $0x80] sm:$0xff]
  %v4672 = vld [vmem:[#allocation5 + $0x88] sm:$0xff]
  %v4673 = vld [vmem:[#allocation5 + $0x90] sm:$0xff]
  %v4674 = vld [vmem:[#allocation5 + $0x98] sm:$0xff]
  %v4675 = vld [vmem:[#allocation5 + $0xa0] sm:$0xff]
  %v4676 = vld [vmem:[#allocation5 + $0xa8] sm:$0xff]
  %v4677 = vld [vmem:[#allocation5 + $0xb0] sm:$0xff]
  %v4678 = vld [vmem:[#allocation5 + $0xb8] sm:$0xff]
  %v4679 = vld [vmem:[#allocation5 + $0xc0] sm:$0xff]
  %v4680 = vld [vmem:[#allocation5 + $0xc8] sm:$0xff]
  %v4681 = vld [vmem:[#allocation5 + $0xd0] sm:$0xff]
  %v4682 = vld [vmem:[#allocation5 + $0xd8] sm:$0xff]
  %v4683 = vld [vmem:[#allocation5 + $0xe0] sm:$0xff]
  %v4684 = vld [vmem:[#allocation5 + $0xe8] sm:$0xff]
  %v4685 = vld [vmem:[#allocation5 + $0xf0] sm:$0xff]
  %v4686 = vld [vmem:[#allocation5 + $0xf8] sm:$0xff]
  %v4687 = vld [vmem:[#allocation5 + $0x100] sm:$0xff]
  %v4688 = vld [vmem:[#allocation5 + $0x108] sm:$0xff]
  %v4689 = vld [vmem:[#allocation5 + $0x110] sm:$0xff]
  %v4690 = vld [vmem:[#allocation5 + $0x118] sm:$0xff]
  %v4691 = vld [vmem:[#allocation5 + $0x120] sm:$0xff]
  %v4692 = vld [vmem:[#allocation5 + $0x128] sm:$0xff]
  %v4693 = vld [vmem:[#allocation5 + $0x130] sm:$0xff]
  %v4694 = vld [vmem:[#allocation5 + $0x138] sm:$0xff]
  %v4695 = vld [vmem:[#allocation5 + $0x140] sm:$0xff]
  %v4696 = vld [vmem:[#allocation5 + $0x148] sm:$0xff]
  %v4697 = vld [vmem:[#allocation5 + $0x150] sm:$0xff]
  %v4698 = vld [vmem:[#allocation5 + $0x158] sm:$0xff]
  %v4699 = vld [vmem:[#allocation5 + $0x160] sm:$0xff]
  %v4700 = vld [vmem:[#allocation5 + $0x168] sm:$0xff]
  %v4701 = vld [vmem:[#allocation5 + $0x170] sm:$0xff]
  %v4702 = vld [vmem:[#allocation5 + $0x178] sm:$0xff]
  %v4703 = vld [vmem:[#allocation5 + $0x180] sm:$0xff]
  %v4704 = vld [vmem:[#allocation5 + $0x188] sm:$0xff]
  %v4705 = vld [vmem:[#allocation5 + $0x190] sm:$0xff]
  %v4706 = vld [vmem:[#allocation5 + $0x198] sm:$0xff]
  %v4707 = vld [vmem:[#allocation5 + $0x1a0] sm:$0xff]
  %v4708 = vld [vmem:[#allocation5 + $0x1a8] sm:$0xff]
  %v4709 = vld [vmem:[#allocation5 + $0x1b0] sm:$0xff]
  %v4710 = vld [vmem:[#allocation5 + $0x1b8] sm:$0xff]
  %v4711 = vld [vmem:[#allocation5 + $0x1c0] sm:$0xff]
  %v4712 = vld [vmem:[#allocation5 + $0x1c8] sm:$0xff]
  %v4713 = vld [vmem:[#allocation5 + $0x1d0] sm:$0xff]
  %v4714 = vld [vmem:[#allocation5 + $0x1d8] sm:$0xff]
  %v4715 = vld [vmem:[#allocation5 + $0x1e0] sm:$0xff]
  %v4716 = vld [vmem:[#allocation5 + $0x1e8] sm:$0xff]
  %v4717 = vld [vmem:[#allocation5 + $0x1f0] sm:$0xff]
  %v4718 = vld [vmem:[#allocation5 + $0x1f8] sm:$0xff]
  %4719 = vmatprep.subr.mxu0 %v4716
  %4720 = vmatpush1.msra.mxu0 %v4715
  %4721 = vmatprep.subr.mxu0 %v4712
  %4722 = vmatpush1.msra.mxu0 %v4711
  %4723 = vmatprep.subr.mxu0 %v4708
  %4724 = vmatpush1.msra.mxu0 %v4707
  %4725 = vmatprep.subr.mxu0 %v4704
  %4726 = vmatpush1.msra.mxu0 %v4703
  %4727 = vmatprep.subr.mxu0 %v4700
  %4728 = vmatpush1.msra.mxu0 %v4699
  %4729 = vmatprep.subr.mxu0 %v4696
  %4730 = vmatpush1.msra.mxu0 %v4695
  %4731 = vmatprep.subr.mxu0 %v4692
  %4732 = vmatpush1.msra.mxu0 %v4691
  %4733 = vmatprep.subr.mxu0 %v4688
  %4734 = vmatpush1.msra.mxu0 %v4687
  %4735 = vmatprep.subr.mxu0 %v4684
  %4736 = vmatpush1.msra.mxu0 %v4683
  %4737 = vmatprep.subr.mxu0 %v4680
  %4738 = vmatpush1.msra.mxu0 %v4679
  %4739 = vmatprep.subr.mxu0 %v4676
  %4740 = vmatpush1.msra.mxu0 %v4675
  %4741 = vmatprep.subr.mxu0 %v4672
  %4742 = vmatpush1.msra.mxu0 %v4671
  %4743 = vmatprep.subr.mxu0 %v4668
  %4744 = vmatpush1.msra.mxu0 %v4667
  %4745 = vmatprep.subr.mxu0 %v4664
  %4746 = vmatpush1.msra.mxu0 %v4663
  %4747 = vmatprep.subr.mxu0 %v4660
  %4748 = vmatpush1.msra.mxu0 %v4659
  %4749 = vmatprep.subr.mxu0 %v4656
  %4750 = vmatpush1.msra.mxu0 %v4655
  %4751 = vmatprep.subr.mxu0 0.0
  %4752 = vmatpush2.msra.mxu0 0.0
  %4753 = vmatprep.subr.mxu0 0.0
  %4754 = vmatpush2.msra.mxu0 0.0
  %4755 = vmatprep.subr.mxu0 0.0
  %4756 = vmatpush2.msra.mxu0 0.0
  %4757 = vmatprep.subr.mxu0 0.0
  %4758 = vmatpush2.msra.mxu0 0.0
  %4759 = vmatprep.subr.mxu0 0.0
  %4760 = vmatpush2.msra.mxu0 0.0
  %4761 = vmatprep.subr.mxu0 0.0
  %4762 = vmatpush2.msra.mxu0 0.0
  %4763 = vmatprep.subr.mxu0 0.0
  %4764 = vmatpush2.msra.mxu0 0.0
  %4765 = vmatprep.subr.mxu0 0.0
  %4766 = vmatpush2.msra.mxu0 0.0
  %4767 = vmatprep.subr.mxu0 0.0
  %4768 = vmatpush2.msra.mxu0 0.0
  %4769 = vmatprep.subr.mxu0 0.0
  %4770 = vmatpush2.msra.mxu0 0.0
  %4771 = vmatprep.subr.mxu0 0.0
  %4772 = vmatpush2.msra.mxu0 0.0
  %4773 = vmatprep.subr.mxu0 0.0
  %4774 = vmatpush2.msra.mxu0 0.0
  %4775 = vmatprep.subr.mxu0 0.0
  %4776 = vmatpush2.msra.mxu0 0.0
  %4777 = vmatprep.subr.mxu0 0.0
  %4778 = vmatpush2.msra.mxu0 0.0
  %4779 = vmatprep.subr.mxu0 0.0
  %4780 = vmatpush2.msra.mxu0 0.0
  %4781 = vmatprep.subr.mxu0 0.0
  %4782 = vmatpush2.msra.mxu0 0.0
  %4783 = vmatprep.mubr.f32.mxu0 0.0
  %4784 = vmatmul.mubr.f32.gmra.mxu0 %v4649
  %v4785 = vpop.f32.mrf.mxu0
  %v4786 = vadd.f32 0.0, %v4785
  %v4787 = vpop.f32.mrf.mxu0
  %v4788 = vadd.f32 0.0, %v4787
  %4789 = vdwg.mxu0
  %4790 = vmatprep.subr.mxu0 %v4718
  %4791 = vmatpush1.msra.mxu0 %v4717
  %4792 = vmatprep.subr.mxu0 %v4714
  %4793 = vmatpush1.msra.mxu0 %v4713
  %4794 = vmatprep.subr.mxu0 %v4710
  %4795 = vmatpush1.msra.mxu0 %v4709
  %4796 = vmatprep.subr.mxu0 %v4706
  %4797 = vmatpush1.msra.mxu0 %v4705
  %4798 = vmatprep.subr.mxu0 %v4702
  %4799 = vmatpush1.msra.mxu0 %v4701
  %4800 = vmatprep.subr.mxu0 %v4698
  %4801 = vmatpush1.msra.mxu0 %v4697
  %4802 = vmatprep.subr.mxu0 %v4694
  %4803 = vmatpush1.msra.mxu0 %v4693
  %4804 = vmatprep.subr.mxu0 %v4690
  %4805 = vmatpush1.msra.mxu0 %v4689
  %4806 = vmatprep.subr.mxu0 %v4686
  %4807 = vmatpush1.msra.mxu0 %v4685
  %4808 = vmatprep.subr.mxu0 %v4682
  %4809 = vmatpush1.msra.mxu0 %v4681
  %4810 = vmatprep.subr.mxu0 %v4678
  %4811 = vmatpush1.msra.mxu0 %v4677
  %4812 = vmatprep.subr.mxu0 %v4674
  %4813 = vmatpush1.msra.mxu0 %v4673
  %4814 = vmatprep.subr.mxu0 %v4670
  %4815 = vmatpush1.msra.mxu0 %v4669
  %4816 = vmatprep.subr.mxu0 %v4666
  %4817 = vmatpush1.msra.mxu0 %v4665
  %4818 = vmatprep.subr.mxu0 %v4662
  %4819 = vmatpush1.msra.mxu0 %v4661
  %4820 = vmatprep.subr.mxu0 %v4658
  %4821 = vmatpush1.msra.mxu0 %v4657
  %4822 = vmatprep.subr.mxu0 0.0
  %4823 = vmatpush2.msra.mxu0 0.0
  %4824 = vmatprep.subr.mxu0 0.0
  %4825 = vmatpush2.msra.mxu0 0.0
  %4826 = vmatprep.subr.mxu0 0.0
  %4827 = vmatpush2.msra.mxu0 0.0
  %4828 = vmatprep.subr.mxu0 0.0
  %4829 = vmatpush2.msra.mxu0 0.0
  %4830 = vmatprep.subr.mxu0 0.0
  %4831 = vmatpush2.msra.mxu0 0.0
  %4832 = vmatprep.subr.mxu0 0.0
  %4833 = vmatpush2.msra.mxu0 0.0
  %4834 = vmatprep.subr.mxu0 0.0
  %4835 = vmatpush2.msra.mxu0 0.0
  %4836 = vmatprep.subr.mxu0 0.0
  %4837 = vmatpush2.msra.mxu0 0.0
  %4838 = vmatprep.subr.mxu0 0.0
  %4839 = vmatpush2.msra.mxu0 0.0
  %4840 = vmatprep.subr.mxu0 0.0
  %4841 = vmatpush2.msra.mxu0 0.0
  %4842 = vmatprep.subr.mxu0 0.0
  %4843 = vmatpush2.msra.mxu0 0.0
  %4844 = vmatprep.subr.mxu0 0.0
  %4845 = vmatpush2.msra.mxu0 0.0
  %4846 = vmatprep.subr.mxu0 0.0
  %4847 = vmatpush2.msra.mxu0 0.0
  %4848 = vmatprep.subr.mxu0 0.0
  %4849 = vmatpush2.msra.mxu0 0.0
  %4850 = vmatprep.subr.mxu0 0.0
  %4851 = vmatpush2.msra.mxu0 0.0
  %4852 = vmatprep.subr.mxu0 0.0
  %4853 = vmatpush2.msra.mxu0 0.0
  %4854 = vmatprep.mubr.f32.mxu0 0.0
  %4855 = vmatmul.mubr.f32.gmra.mxu0 %v4649
  %v4856 = vpop.f32.mrf.mxu0
  %v4857 = vadd.f32 0.0, %v4856
  %v4858 = vpop.f32.mrf.mxu0
  %v4859 = vadd.f32 0.0, %v4858
  %4860 = vdwg.mxu0
  %v4861 = vadd.f32 %v4651, %v4786
  %v4862 = vadd.f32 %v4652, %v4788
  %v4863 = vadd.f32 %v4653, %v4857
  %v4864 = vadd.f32 %v4654, %v4859
  %v4865 = vxor.u32 %v4861, 2147483648
  %v4866 = vxor.u32 %v4862, 2147483648
  %v4867 = vxor.u32 %v4863, 2147483648
  %v4868 = vmul.f32 %v4865, 1.442695
  %v4869 = vpow.pop %v4868
  %v4870 = vmul.f32 %v4866, 1.442695
  %v4871 = vpow.pop %v4870
  %v4872 = vmul.f32 %v4867, 1.442695
  %v4873 = vpow.pop %v4872
  %v4874 = vadd.f32 %v4869, 1.0
  %v4875 = vadd.f32 %v4871, 1.0
  %v4876 = vadd.f32 %v4873, 1.0
  %v4877 = vrcp.pop %v4874
  %v4878 = vmul.f32 1.0, %v4877
  %v4879 = vrcp.pop %v4875
  %v4880 = vmul.f32 1.0, %v4879
  %v4881 = vrcp.pop %v4876
  %v4882 = vmul.f32 1.0, %v4881
  %v4883 = vtanh.pop %v4864
  %v4884 = vmul.f32 %v4880, %v4647
  %v4885 = vmul.f32 %v4878, %v4883
  %v4886 = vadd.f32 %v4884, %v4885
  %v4887 = vtanh.pop %v4886
  %v4888 = vmul.f32 %v4882, %v4887
  %4889 = vst [vmem:[#allocation2 + $0x28] sm:$0xff] %v4888
  %v4890 = vld [vmem:[#allocation3 + $0xc0] sm:$0xff]
  %v4891 = vld [vmem:[#allocation3 + $0xc8] sm:$0xff]
  %v4892 = vld [vmem:[#allocation3 + $0xd0] sm:$0xff]
  %v4893 = vld [vmem:[#allocation3 + $0xd8] sm:$0xff]
  %v4894 = vld [vmem:[#allocation5] sm:$0xff]
  %v4895 = vld [vmem:[#allocation5 + $0x8] sm:$0xff]
  %v4896 = vld [vmem:[#allocation5 + $0x10] sm:$0xff]
  %v4897 = vld [vmem:[#allocation5 + $0x18] sm:$0xff]
  %v4898 = vld [vmem:[#allocation5 + $0x20] sm:$0xff]
  %v4899 = vld [vmem:[#allocation5 + $0x28] sm:$0xff]
  %v4900 = vld [vmem:[#allocation5 + $0x30] sm:$0xff]
  %v4901 = vld [vmem:[#allocation5 + $0x38] sm:$0xff]
  %v4902 = vld [vmem:[#allocation5 + $0x40] sm:$0xff]
  %v4903 = vld [vmem:[#allocation5 + $0x48] sm:$0xff]
  %v4904 = vld [vmem:[#allocation5 + $0x50] sm:$0xff]
  %v4905 = vld [vmem:[#allocation5 + $0x58] sm:$0xff]
  %v4906 = vld [vmem:[#allocation5 + $0x60] sm:$0xff]
  %v4907 = vld [vmem:[#allocation5 + $0x68] sm:$0xff]
  %v4908 = vld [vmem:[#allocation5 + $0x70] sm:$0xff]
  %v4909 = vld [vmem:[#allocation5 + $0x78] sm:$0xff]
  %v4910 = vld [vmem:[#allocation5 + $0x80] sm:$0xff]
  %v4911 = vld [vmem:[#allocation5 + $0x88] sm:$0xff]
  %v4912 = vld [vmem:[#allocation5 + $0x90] sm:$0xff]
  %v4913 = vld [vmem:[#allocation5 + $0x98] sm:$0xff]
  %v4914 = vld [vmem:[#allocation5 + $0xa0] sm:$0xff]
  %v4915 = vld [vmem:[#allocation5 + $0xa8] sm:$0xff]
  %v4916 = vld [vmem:[#allocation5 + $0xb0] sm:$0xff]
  %v4917 = vld [vmem:[#allocation5 + $0xb8] sm:$0xff]
  %v4918 = vld [vmem:[#allocation5 + $0xc0] sm:$0xff]
  %v4919 = vld [vmem:[#allocation5 + $0xc8] sm:$0xff]
  %v4920 = vld [vmem:[#allocation5 + $0xd0] sm:$0xff]
  %v4921 = vld [vmem:[#allocation5 + $0xd8] sm:$0xff]
  %v4922 = vld [vmem:[#allocation5 + $0xe0] sm:$0xff]
  %v4923 = vld [vmem:[#allocation5 + $0xe8] sm:$0xff]
  %v4924 = vld [vmem:[#allocation5 + $0xf0] sm:$0xff]
  %v4925 = vld [vmem:[#allocation5 + $0xf8] sm:$0xff]
  %v4926 = vld [vmem:[#allocation5 + $0x100] sm:$0xff]
  %v4927 = vld [vmem:[#allocation5 + $0x108] sm:$0xff]
  %v4928 = vld [vmem:[#allocation5 + $0x110] sm:$0xff]
  %v4929 = vld [vmem:[#allocation5 + $0x118] sm:$0xff]
  %v4930 = vld [vmem:[#allocation5 + $0x120] sm:$0xff]
  %v4931 = vld [vmem:[#allocation5 + $0x128] sm:$0xff]
  %v4932 = vld [vmem:[#allocation5 + $0x130] sm:$0xff]
  %v4933 = vld [vmem:[#allocation5 + $0x138] sm:$0xff]
  %v4934 = vld [vmem:[#allocation5 + $0x140] sm:$0xff]
  %v4935 = vld [vmem:[#allocation5 + $0x148] sm:$0xff]
  %v4936 = vld [vmem:[#allocation5 + $0x150] sm:$0xff]
  %v4937 = vld [vmem:[#allocation5 + $0x158] sm:$0xff]
  %v4938 = vld [vmem:[#allocation5 + $0x160] sm:$0xff]
  %v4939 = vld [vmem:[#allocation5 + $0x168] sm:$0xff]
  %v4940 = vld [vmem:[#allocation5 + $0x170] sm:$0xff]
  %v4941 = vld [vmem:[#allocation5 + $0x178] sm:$0xff]
  %v4942 = vld [vmem:[#allocation5 + $0x180] sm:$0xff]
  %v4943 = vld [vmem:[#allocation5 + $0x188] sm:$0xff]
  %v4944 = vld [vmem:[#allocation5 + $0x190] sm:$0xff]
  %v4945 = vld [vmem:[#allocation5 + $0x198] sm:$0xff]
  %v4946 = vld [vmem:[#allocation5 + $0x1a0] sm:$0xff]
  %v4947 = vld [vmem:[#allocation5 + $0x1a8] sm:$0xff]
  %v4948 = vld [vmem:[#allocation5 + $0x1b0] sm:$0xff]
  %v4949 = vld [vmem:[#allocation5 + $0x1b8] sm:$0xff]
  %v4950 = vld [vmem:[#allocation5 + $0x1c0] sm:$0xff]
  %v4951 = vld [vmem:[#allocation5 + $0x1c8] sm:$0xff]
  %v4952 = vld [vmem:[#allocation5 + $0x1d0] sm:$0xff]
  %v4953 = vld [vmem:[#allocation5 + $0x1d8] sm:$0xff]
  %v4954 = vld [vmem:[#allocation5 + $0x1e0] sm:$0xff]
  %v4955 = vld [vmem:[#allocation5 + $0x1e8] sm:$0xff]
  %v4956 = vld [vmem:[#allocation5 + $0x1f0] sm:$0xff]
  %v4957 = vld [vmem:[#allocation5 + $0x1f8] sm:$0xff]
  %4958 = vmatprep.subr.mxu0 %v4955
  %4959 = vmatpush1.msra.mxu0 %v4954
  %4960 = vmatprep.subr.mxu0 %v4951
  %4961 = vmatpush1.msra.mxu0 %v4950
  %4962 = vmatprep.subr.mxu0 %v4947
  %4963 = vmatpush1.msra.mxu0 %v4946
  %4964 = vmatprep.subr.mxu0 %v4943
  %4965 = vmatpush1.msra.mxu0 %v4942
  %4966 = vmatprep.subr.mxu0 %v4939
  %4967 = vmatpush1.msra.mxu0 %v4938
  %4968 = vmatprep.subr.mxu0 %v4935
  %4969 = vmatpush1.msra.mxu0 %v4934
  %4970 = vmatprep.subr.mxu0 %v4931
  %4971 = vmatpush1.msra.mxu0 %v4930
  %4972 = vmatprep.subr.mxu0 %v4927
  %4973 = vmatpush1.msra.mxu0 %v4926
  %4974 = vmatprep.subr.mxu0 %v4923
  %4975 = vmatpush1.msra.mxu0 %v4922
  %4976 = vmatprep.subr.mxu0 %v4919
  %4977 = vmatpush1.msra.mxu0 %v4918
  %4978 = vmatprep.subr.mxu0 %v4915
  %4979 = vmatpush1.msra.mxu0 %v4914
  %4980 = vmatprep.subr.mxu0 %v4911
  %4981 = vmatpush1.msra.mxu0 %v4910
  %4982 = vmatprep.subr.mxu0 %v4907
  %4983 = vmatpush1.msra.mxu0 %v4906
  %4984 = vmatprep.subr.mxu0 %v4903
  %4985 = vmatpush1.msra.mxu0 %v4902
  %4986 = vmatprep.subr.mxu0 %v4899
  %4987 = vmatpush1.msra.mxu0 %v4898
  %4988 = vmatprep.subr.mxu0 %v4895
  %4989 = vmatpush1.msra.mxu0 %v4894
  %4990 = vmatprep.subr.mxu0 0.0
  %4991 = vmatpush2.msra.mxu0 0.0
  %4992 = vmatprep.subr.mxu0 0.0
  %4993 = vmatpush2.msra.mxu0 0.0
  %4994 = vmatprep.subr.mxu0 0.0
  %4995 = vmatpush2.msra.mxu0 0.0
  %4996 = vmatprep.subr.mxu0 0.0
  %4997 = vmatpush2.msra.mxu0 0.0
  %4998 = vmatprep.subr.mxu0 0.0
  %4999 = vmatpush2.msra.mxu0 0.0
  %5000 = vmatprep.subr.mxu0 0.0
  %5001 = vmatpush2.msra.mxu0 0.0
  %5002 = vmatprep.subr.mxu0 0.0
  %5003 = vmatpush2.msra.mxu0 0.0
  %5004 = vmatprep.subr.mxu0 0.0
  %5005 = vmatpush2.msra.mxu0 0.0
  %5006 = vmatprep.subr.mxu0 0.0
  %5007 = vmatpush2.msra.mxu0 0.0
  %5008 = vmatprep.subr.mxu0 0.0
  %5009 = vmatpush2.msra.mxu0 0.0
  %5010 = vmatprep.subr.mxu0 0.0
  %5011 = vmatpush2.msra.mxu0 0.0
  %5012 = vmatprep.subr.mxu0 0.0
  %5013 = vmatpush2.msra.mxu0 0.0
  %5014 = vmatprep.subr.mxu0 0.0
  %5015 = vmatpush2.msra.mxu0 0.0
  %5016 = vmatprep.subr.mxu0 0.0
  %5017 = vmatpush2.msra.mxu0 0.0
  %5018 = vmatprep.subr.mxu0 0.0
  %5019 = vmatpush2.msra.mxu0 0.0
  %5020 = vmatprep.subr.mxu0 0.0
  %5021 = vmatpush2.msra.mxu0 0.0
  %5022 = vmatprep.mubr.f32.mxu0 0.0
  %5023 = vmatmul.mubr.f32.gmra.mxu0 %v4888
  %v5024 = vpop.f32.mrf.mxu0
  %v5025 = vadd.f32 0.0, %v5024
  %v5026 = vpop.f32.mrf.mxu0
  %v5027 = vadd.f32 0.0, %v5026
  %5028 = vdwg.mxu0
  %5029 = vmatprep.subr.mxu0 %v4957
  %5030 = vmatpush1.msra.mxu0 %v4956
  %5031 = vmatprep.subr.mxu0 %v4953
  %5032 = vmatpush1.msra.mxu0 %v4952
  %5033 = vmatprep.subr.mxu0 %v4949
  %5034 = vmatpush1.msra.mxu0 %v4948
  %5035 = vmatprep.subr.mxu0 %v4945
  %5036 = vmatpush1.msra.mxu0 %v4944
  %5037 = vmatprep.subr.mxu0 %v4941
  %5038 = vmatpush1.msra.mxu0 %v4940
  %5039 = vmatprep.subr.mxu0 %v4937
  %5040 = vmatpush1.msra.mxu0 %v4936
  %5041 = vmatprep.subr.mxu0 %v4933
  %5042 = vmatpush1.msra.mxu0 %v4932
  %5043 = vmatprep.subr.mxu0 %v4929
  %5044 = vmatpush1.msra.mxu0 %v4928
  %5045 = vmatprep.subr.mxu0 %v4925
  %5046 = vmatpush1.msra.mxu0 %v4924
  %5047 = vmatprep.subr.mxu0 %v4921
  %5048 = vmatpush1.msra.mxu0 %v4920
  %5049 = vmatprep.subr.mxu0 %v4917
  %5050 = vmatpush1.msra.mxu0 %v4916
  %5051 = vmatprep.subr.mxu0 %v4913
  %5052 = vmatpush1.msra.mxu0 %v4912
  %5053 = vmatprep.subr.mxu0 %v4909
  %5054 = vmatpush1.msra.mxu0 %v4908
  %5055 = vmatprep.subr.mxu0 %v4905
  %5056 = vmatpush1.msra.mxu0 %v4904
  %5057 = vmatprep.subr.mxu0 %v4901
  %5058 = vmatpush1.msra.mxu0 %v4900
  %5059 = vmatprep.subr.mxu0 %v4897
  %5060 = vmatpush1.msra.mxu0 %v4896
  %5061 = vmatprep.subr.mxu0 0.0
  %5062 = vmatpush2.msra.mxu0 0.0
  %5063 = vmatprep.subr.mxu0 0.0
  %5064 = vmatpush2.msra.mxu0 0.0
  %5065 = vmatprep.subr.mxu0 0.0
  %5066 = vmatpush2.msra.mxu0 0.0
  %5067 = vmatprep.subr.mxu0 0.0
  %5068 = vmatpush2.msra.mxu0 0.0
  %5069 = vmatprep.subr.mxu0 0.0
  %5070 = vmatpush2.msra.mxu0 0.0
  %5071 = vmatprep.subr.mxu0 0.0
  %5072 = vmatpush2.msra.mxu0 0.0
  %5073 = vmatprep.subr.mxu0 0.0
  %5074 = vmatpush2.msra.mxu0 0.0
  %5075 = vmatprep.subr.mxu0 0.0
  %5076 = vmatpush2.msra.mxu0 0.0
  %5077 = vmatprep.subr.mxu0 0.0
  %5078 = vmatpush2.msra.mxu0 0.0
  %5079 = vmatprep.subr.mxu0 0.0
  %5080 = vmatpush2.msra.mxu0 0.0
  %5081 = vmatprep.subr.mxu0 0.0
  %5082 = vmatpush2.msra.mxu0 0.0
  %5083 = vmatprep.subr.mxu0 0.0
  %5084 = vmatpush2.msra.mxu0 0.0
  %5085 = vmatprep.subr.mxu0 0.0
  %5086 = vmatpush2.msra.mxu0 0.0
  %5087 = vmatprep.subr.mxu0 0.0
  %5088 = vmatpush2.msra.mxu0 0.0
  %5089 = vmatprep.subr.mxu0 0.0
  %5090 = vmatpush2.msra.mxu0 0.0
  %5091 = vmatprep.subr.mxu0 0.0
  %5092 = vmatpush2.msra.mxu0 0.0
  %5093 = vmatprep.mubr.f32.mxu0 0.0
  %5094 = vmatmul.mubr.f32.gmra.mxu0 %v4888
  %v5095 = vpop.f32.mrf.mxu0
  %v5096 = vadd.f32 0.0, %v5095
  %v5097 = vpop.f32.mrf.mxu0
  %v5098 = vadd.f32 0.0, %v5097
  %5099 = vdwg.mxu0
  %v5100 = vadd.f32 %v4890, %v5025
  %v5101 = vadd.f32 %v4891, %v5027
  %v5102 = vadd.f32 %v4892, %v5096
  %v5103 = vadd.f32 %v4893, %v5098
  %v5104 = vxor.u32 %v5100, 2147483648
  %v5105 = vxor.u32 %v5101, 2147483648
  %v5106 = vxor.u32 %v5102, 2147483648
  %v5107 = vmul.f32 %v5104, 1.442695
  %v5108 = vpow.pop %v5107
  %v5109 = vmul.f32 %v5105, 1.442695
  %v5110 = vpow.pop %v5109
  %v5111 = vmul.f32 %v5106, 1.442695
  %v5112 = vpow.pop %v5111
  %v5113 = vadd.f32 %v5108, 1.0
  %v5114 = vadd.f32 %v5110, 1.0
  %v5115 = vadd.f32 %v5112, 1.0
  %v5116 = vrcp.pop %v5113
  %v5117 = vmul.f32 1.0, %v5116
  %v5118 = vrcp.pop %v5114
  %v5119 = vmul.f32 1.0, %v5118
  %v5120 = vrcp.pop %v5115
  %v5121 = vmul.f32 1.0, %v5120
  %v5122 = vtanh.pop %v5103
  %v5123 = vmul.f32 %v5119, %v4886
  %v5124 = vmul.f32 %v5117, %v5122
  %v5125 = vadd.f32 %v5123, %v5124
  %v5126 = vtanh.pop %v5125
  %v5127 = vmul.f32 %v5121, %v5126
  %5128 = vst [vmem:[#allocation2 + $0x30] sm:$0xff] %v5127
  %v5129 = vld [vmem:[#allocation3 + $0xe0] sm:$0xff]
  %v5130 = vld [vmem:[#allocation3 + $0xe8] sm:$0xff]
  %v5131 = vld [vmem:[#allocation3 + $0xf0] sm:$0xff]
  %v5132 = vld [vmem:[#allocation3 + $0xf8] sm:$0xff]
  %v5133 = vld [vmem:[#allocation5] sm:$0xff]
  %v5134 = vld [vmem:[#allocation5 + $0x8] sm:$0xff]
  %v5135 = vld [vmem:[#allocation5 + $0x10] sm:$0xff]
  %v5136 = vld [vmem:[#allocation5 + $0x18] sm:$0xff]
  %v5137 = vld [vmem:[#allocation5 + $0x20] sm:$0xff]
  %v5138 = vld [vmem:[#allocation5 + $0x28] sm:$0xff]
  %v5139 = vld [vmem:[#allocation5 + $0x30] sm:$0xff]
  %v5140 = vld [vmem:[#allocation5 + $0x38] sm:$0xff]
  %v5141 = vld [vmem:[#allocation5 + $0x40] sm:$0xff]
  %v5142 = vld [vmem:[#allocation5 + $0x48] sm:$0xff]
  %v5143 = vld [vmem:[#allocation5 + $0x50] sm:$0xff]
  %v5144 = vld [vmem:[#allocation5 + $0x58] sm:$0xff]
  %v5145 = vld [vmem:[#allocation5 + $0x60] sm:$0xff]
  %v5146 = vld [vmem:[#allocation5 + $0x68] sm:$0xff]
  %v5147 = vld [vmem:[#allocation5 + $0x70] sm:$0xff]
  %v5148 = vld [vmem:[#allocation5 + $0x78] sm:$0xff]
  %v5149 = vld [vmem:[#allocation5 + $0x80] sm:$0xff]
  %v5150 = vld [vmem:[#allocation5 + $0x88] sm:$0xff]
  %v5151 = vld [vmem:[#allocation5 + $0x90] sm:$0xff]
  %v5152 = vld [vmem:[#allocation5 + $0x98] sm:$0xff]
  %v5153 = vld [vmem:[#allocation5 + $0xa0] sm:$0xff]
  %v5154 = vld [vmem:[#allocation5 + $0xa8] sm:$0xff]
  %v5155 = vld [vmem:[#allocation5 + $0xb0] sm:$0xff]
  %v5156 = vld [vmem:[#allocation5 + $0xb8] sm:$0xff]
  %v5157 = vld [vmem:[#allocation5 + $0xc0] sm:$0xff]
  %v5158 = vld [vmem:[#allocation5 + $0xc8] sm:$0xff]
  %v5159 = vld [vmem:[#allocation5 + $0xd0] sm:$0xff]
  %v5160 = vld [vmem:[#allocation5 + $0xd8] sm:$0xff]
  %v5161 = vld [vmem:[#allocation5 + $0xe0] sm:$0xff]
  %v5162 = vld [vmem:[#allocation5 + $0xe8] sm:$0xff]
  %v5163 = vld [vmem:[#allocation5 + $0xf0] sm:$0xff]
  %v5164 = vld [vmem:[#allocation5 + $0xf8] sm:$0xff]
  %v5165 = vld [vmem:[#allocation5 + $0x100] sm:$0xff]
  %v5166 = vld [vmem:[#allocation5 + $0x108] sm:$0xff]
  %v5167 = vld [vmem:[#allocation5 + $0x110] sm:$0xff]
  %v5168 = vld [vmem:[#allocation5 + $0x118] sm:$0xff]
  %v5169 = vld [vmem:[#allocation5 + $0x120] sm:$0xff]
  %v5170 = vld [vmem:[#allocation5 + $0x128] sm:$0xff]
  %v5171 = vld [vmem:[#allocation5 + $0x130] sm:$0xff]
  %v5172 = vld [vmem:[#allocation5 + $0x138] sm:$0xff]
  %v5173 = vld [vmem:[#allocation5 + $0x140] sm:$0xff]
  %v5174 = vld [vmem:[#allocation5 + $0x148] sm:$0xff]
  %v5175 = vld [vmem:[#allocation5 + $0x150] sm:$0xff]
  %v5176 = vld [vmem:[#allocation5 + $0x158] sm:$0xff]
  %v5177 = vld [vmem:[#allocation5 + $0x160] sm:$0xff]
  %v5178 = vld [vmem:[#allocation5 + $0x168] sm:$0xff]
  %v5179 = vld [vmem:[#allocation5 + $0x170] sm:$0xff]
  %v5180 = vld [vmem:[#allocation5 + $0x178] sm:$0xff]
  %v5181 = vld [vmem:[#allocation5 + $0x180] sm:$0xff]
  %v5182 = vld [vmem:[#allocation5 + $0x188] sm:$0xff]
  %v5183 = vld [vmem:[#allocation5 + $0x190] sm:$0xff]
  %v5184 = vld [vmem:[#allocation5 + $0x198] sm:$0xff]
  %v5185 = vld [vmem:[#allocation5 + $0x1a0] sm:$0xff]
  %v5186 = vld [vmem:[#allocation5 + $0x1a8] sm:$0xff]
  %v5187 = vld [vmem:[#allocation5 + $0x1b0] sm:$0xff]
  %v5188 = vld [vmem:[#allocation5 + $0x1b8] sm:$0xff]
  %v5189 = vld [vmem:[#allocation5 + $0x1c0] sm:$0xff]
  %v5190 = vld [vmem:[#allocation5 + $0x1c8] sm:$0xff]
  %v5191 = vld [vmem:[#allocation5 + $0x1d0] sm:$0xff]
  %v5192 = vld [vmem:[#allocation5 + $0x1d8] sm:$0xff]
  %v5193 = vld [vmem:[#allocation5 + $0x1e0] sm:$0xff]
  %v5194 = vld [vmem:[#allocation5 + $0x1e8] sm:$0xff]
  %v5195 = vld [vmem:[#allocation5 + $0x1f0] sm:$0xff]
  %v5196 = vld [vmem:[#allocation5 + $0x1f8] sm:$0xff]
  %5197 = vmatprep.subr.mxu0 %v5194
  %5198 = vmatpush1.msra.mxu0 %v5193
  %5199 = vmatprep.subr.mxu0 %v5190
  %5200 = vmatpush1.msra.mxu0 %v5189
  %5201 = vmatprep.subr.mxu0 %v5186
  %5202 = vmatpush1.msra.mxu0 %v5185
  %5203 = vmatprep.subr.mxu0 %v5182
  %5204 = vmatpush1.msra.mxu0 %v5181
  %5205 = vmatprep.subr.mxu0 %v5178
  %5206 = vmatpush1.msra.mxu0 %v5177
  %5207 = vmatprep.subr.mxu0 %v5174
  %5208 = vmatpush1.msra.mxu0 %v5173
  %5209 = vmatprep.subr.mxu0 %v5170
  %5210 = vmatpush1.msra.mxu0 %v5169
  %5211 = vmatprep.subr.mxu0 %v5166
  %5212 = vmatpush1.msra.mxu0 %v5165
  %5213 = vmatprep.subr.mxu0 %v5162
  %5214 = vmatpush1.msra.mxu0 %v5161
  %5215 = vmatprep.subr.mxu0 %v5158
  %5216 = vmatpush1.msra.mxu0 %v5157
  %5217 = vmatprep.subr.mxu0 %v5154
  %5218 = vmatpush1.msra.mxu0 %v5153
  %5219 = vmatprep.subr.mxu0 %v5150
  %5220 = vmatpush1.msra.mxu0 %v5149
  %5221 = vmatprep.subr.mxu0 %v5146
  %5222 = vmatpush1.msra.mxu0 %v5145
  %5223 = vmatprep.subr.mxu0 %v5142
  %5224 = vmatpush1.msra.mxu0 %v5141
  %5225 = vmatprep.subr.mxu0 %v5138
  %5226 = vmatpush1.msra.mxu0 %v5137
  %5227 = vmatprep.subr.mxu0 %v5134
  %5228 = vmatpush1.msra.mxu0 %v5133
  %5229 = vmatprep.subr.mxu0 0.0
  %5230 = vmatpush2.msra.mxu0 0.0
  %5231 = vmatprep.subr.mxu0 0.0
  %5232 = vmatpush2.msra.mxu0 0.0
  %5233 = vmatprep.subr.mxu0 0.0
  %5234 = vmatpush2.msra.mxu0 0.0
  %5235 = vmatprep.subr.mxu0 0.0
  %5236 = vmatpush2.msra.mxu0 0.0
  %5237 = vmatprep.subr.mxu0 0.0
  %5238 = vmatpush2.msra.mxu0 0.0
  %5239 = vmatprep.subr.mxu0 0.0
  %5240 = vmatpush2.msra.mxu0 0.0
  %5241 = vmatprep.subr.mxu0 0.0
  %5242 = vmatpush2.msra.mxu0 0.0
  %5243 = vmatprep.subr.mxu0 0.0
  %5244 = vmatpush2.msra.mxu0 0.0
  %5245 = vmatprep.subr.mxu0 0.0
  %5246 = vmatpush2.msra.mxu0 0.0
  %5247 = vmatprep.subr.mxu0 0.0
  %5248 = vmatpush2.msra.mxu0 0.0
  %5249 = vmatprep.subr.mxu0 0.0
  %5250 = vmatpush2.msra.mxu0 0.0
  %5251 = vmatprep.subr.mxu0 0.0
  %5252 = vmatpush2.msra.mxu0 0.0
  %5253 = vmatprep.subr.mxu0 0.0
  %5254 = vmatpush2.msra.mxu0 0.0
  %5255 = vmatprep.subr.mxu0 0.0
  %5256 = vmatpush2.msra.mxu0 0.0
  %5257 = vmatprep.subr.mxu0 0.0
  %5258 = vmatpush2.msra.mxu0 0.0
  %5259 = vmatprep.subr.mxu0 0.0
  %5260 = vmatpush2.msra.mxu0 0.0
  %5261 = vmatprep.mubr.f32.mxu0 0.0
  %5262 = vmatmul.mubr.f32.gmra.mxu0 %v5127
  %v5263 = vpop.f32.mrf.mxu0
  %v5264 = vadd.f32 0.0, %v5263
  %v5265 = vpop.f32.mrf.mxu0
  %v5266 = vadd.f32 0.0, %v5265
  %5267 = vdwg.mxu0
  %5268 = vmatprep.subr.mxu0 %v5196
  %5269 = vmatpush1.msra.mxu0 %v5195
  %5270 = vmatprep.subr.mxu0 %v5192
  %5271 = vmatpush1.msra.mxu0 %v5191
  %5272 = vmatprep.subr.mxu0 %v5188
  %5273 = vmatpush1.msra.mxu0 %v5187
  %5274 = vmatprep.subr.mxu0 %v5184
  %5275 = vmatpush1.msra.mxu0 %v5183
  %5276 = vmatprep.subr.mxu0 %v5180
  %5277 = vmatpush1.msra.mxu0 %v5179
  %5278 = vmatprep.subr.mxu0 %v5176
  %5279 = vmatpush1.msra.mxu0 %v5175
  %5280 = vmatprep.subr.mxu0 %v5172
  %5281 = vmatpush1.msra.mxu0 %v5171
  %5282 = vmatprep.subr.mxu0 %v5168
  %5283 = vmatpush1.msra.mxu0 %v5167
  %5284 = vmatprep.subr.mxu0 %v5164
  %5285 = vmatpush1.msra.mxu0 %v5163
  %5286 = vmatprep.subr.mxu0 %v5160
  %5287 = vmatpush1.msra.mxu0 %v5159
  %5288 = vmatprep.subr.mxu0 %v5156
  %5289 = vmatpush1.msra.mxu0 %v5155
  %5290 = vmatprep.subr.mxu0 %v5152
  %5291 = vmatpush1.msra.mxu0 %v5151
  %5292 = vmatprep.subr.mxu0 %v5148
  %5293 = vmatpush1.msra.mxu0 %v5147
  %5294 = vmatprep.subr.mxu0 %v5144
  %5295 = vmatpush1.msra.mxu0 %v5143
  %5296 = vmatprep.subr.mxu0 %v5140
  %5297 = vmatpush1.msra.mxu0 %v5139
  %5298 = vmatprep.subr.mxu0 %v5136
  %5299 = vmatpush1.msra.mxu0 %v5135
  %5300 = vmatprep.subr.mxu0 0.0
  %5301 = vmatpush2.msra.mxu0 0.0
  %5302 = vmatprep.subr.mxu0 0.0
  %5303 = vmatpush2.msra.mxu0 0.0
  %5304 = vmatprep.subr.mxu0 0.0
  %5305 = vmatpush2.msra.mxu0 0.0
  %5306 = vmatprep.subr.mxu0 0.0
  %5307 = vmatpush2.msra.mxu0 0.0
  %5308 = vmatprep.subr.mxu0 0.0
  %5309 = vmatpush2.msra.mxu0 0.0
  %5310 = vmatprep.subr.mxu0 0.0
  %5311 = vmatpush2.msra.mxu0 0.0
  %5312 = vmatprep.subr.mxu0 0.0
  %5313 = vmatpush2.msra.mxu0 0.0
  %5314 = vmatprep.subr.mxu0 0.0
  %5315 = vmatpush2.msra.mxu0 0.0
  %5316 = vmatprep.subr.mxu0 0.0
  %5317 = vmatpush2.msra.mxu0 0.0
  %5318 = vmatprep.subr.mxu0 0.0
  %5319 = vmatpush2.msra.mxu0 0.0
  %5320 = vmatprep.subr.mxu0 0.0
  %5321 = vmatpush2.msra.mxu0 0.0
  %5322 = vmatprep.subr.mxu0 0.0
  %5323 = vmatpush2.msra.mxu0 0.0
  %5324 = vmatprep.subr.mxu0 0.0
  %5325 = vmatpush2.msra.mxu0 0.0
  %5326 = vmatprep.subr.mxu0 0.0
  %5327 = vmatpush2.msra.mxu0 0.0
  %5328 = vmatprep.subr.mxu0 0.0
  %5329 = vmatpush2.msra.mxu0 0.0
  %5330 = vmatprep.subr.mxu0 0.0
  %5331 = vmatpush2.msra.mxu0 0.0
  %5332 = vmatprep.mubr.f32.mxu0 0.0
  %5333 = vmatmul.mubr.f32.gmra.mxu0 %v5127
  %v5334 = vpop.f32.mrf.mxu0
  %v5335 = vadd.f32 0.0, %v5334
  %v5336 = vpop.f32.mrf.mxu0
  %v5337 = vadd.f32 0.0, %v5336
  %5338 = vdwg.mxu0
  %v5339 = vadd.f32 %v5129, %v5264
  %v5340 = vadd.f32 %v5130, %v5266
  %v5341 = vadd.f32 %v5131, %v5335
  %v5342 = vadd.f32 %v5132, %v5337
  %v5343 = vxor.u32 %v5339, 2147483648
  %v5344 = vxor.u32 %v5340, 2147483648
  %v5345 = vxor.u32 %v5341, 2147483648
  %v5346 = vmul.f32 %v5343, 1.442695
  %v5347 = vpow.pop %v5346
  %v5348 = vmul.f32 %v5344, 1.442695
  %v5349 = vpow.pop %v5348
  %v5350 = vmul.f32 %v5345, 1.442695
  %v5351 = vpow.pop %v5350
  %v5352 = vadd.f32 %v5347, 1.0
  %v5353 = vadd.f32 %v5349, 1.0
  %v5354 = vadd.f32 %v5351, 1.0
  %v5355 = vrcp.pop %v5352
  %v5356 = vmul.f32 1.0, %v5355
  %v5357 = vrcp.pop %v5353
  %v5358 = vmul.f32 1.0, %v5357
  %v5359 = vrcp.pop %v5354
  %v5360 = vmul.f32 1.0, %v5359
  %v5361 = vtanh.pop %v5342
  %v5362 = vmul.f32 %v5358, %v5125
  %v5363 = vmul.f32 %v5356, %v5361
  %v5364 = vadd.f32 %v5362, %v5363
  %v5365 = vtanh.pop %v5364
  %v5366 = vmul.f32 %v5360, %v5365
  %5367 = vst [vmem:[#allocation2 + $0x38] sm:$0xff] %v5366
  %s5368 = sshll.u32 %s3099, 4
  %5369 = dma.done %s370, %s5368
  %s5370 = sshll.u32 %s3099, 4
  %5371 = dma.done %s540, %s5370
  %v5372 = vld [vmem:[#allocation2] sm:$0xff]
  %v5373 = vld [vmem:[#allocation2 + $0x8] sm:$0xff]
  %v5374 = vld [vmem:[#allocation2 + $0x10] sm:$0xff]
  %v5375 = vld [vmem:[#allocation2 + $0x18] sm:$0xff]
  %v5376 = vld [vmem:[#allocation2 + $0x20] sm:$0xff]
  %v5377 = vld [vmem:[#allocation2 + $0x28] sm:$0xff]
  %v5378 = vld [vmem:[#allocation2 + $0x30] sm:$0xff]
  %v5379 = vld [vmem:[#allocation2 + $0x38] sm:$0xff]
  %v5380 = vld [vmem:[#allocation6] sm:$0xff]
  %v5381 = vld [vmem:[#allocation6 + $0x8] sm:$0xff]
  %v5382 = vld [vmem:[#allocation6 + $0x10] sm:$0xff]
  %v5383 = vld [vmem:[#allocation6 + $0x18] sm:$0xff]
  %v5384 = vld [vmem:[#allocation6 + $0x20] sm:$0xff]
  %v5385 = vld [vmem:[#allocation6 + $0x28] sm:$0xff]
  %v5386 = vld [vmem:[#allocation6 + $0x30] sm:$0xff]
  %v5387 = vld [vmem:[#allocation6 + $0x38] sm:$0xff]
  %v5388 = vld [vmem:[#allocation6 + $0x40] sm:$0xff]
  %v5389 = vld [vmem:[#allocation6 + $0x48] sm:$0xff]
  %v5390 = vld [vmem:[#allocation6 + $0x50] sm:$0xff]
  %v5391 = vld [vmem:[#allocation6 + $0x58] sm:$0xff]
  %v5392 = vld [vmem:[#allocation6 + $0x60] sm:$0xff]
  %v5393 = vld [vmem:[#allocation6 + $0x68] sm:$0xff]
  %v5394 = vld [vmem:[#allocation6 + $0x70] sm:$0xff]
  %v5395 = vld [vmem:[#allocation6 + $0x78] sm:$0xff]
  %v5396 = vld [vmem:[#allocation6 + $0x80] sm:$0xff]
  %v5397 = vld [vmem:[#allocation6 + $0x88] sm:$0xff]
  %v5398 = vld [vmem:[#allocation6 + $0x90] sm:$0xff]
  %v5399 = vld [vmem:[#allocation6 + $0x98] sm:$0xff]
  %v5400 = vld [vmem:[#allocation6 + $0xa0] sm:$0xff]
  %v5401 = vld [vmem:[#allocation6 + $0xa8] sm:$0xff]
  %v5402 = vld [vmem:[#allocation6 + $0xb0] sm:$0xff]
  %v5403 = vld [vmem:[#allocation6 + $0xb8] sm:$0xff]
  %v5404 = vld [vmem:[#allocation6 + $0xc0] sm:$0xff]
  %v5405 = vld [vmem:[#allocation6 + $0xc8] sm:$0xff]
  %v5406 = vld [vmem:[#allocation6 + $0xd0] sm:$0xff]
  %v5407 = vld [vmem:[#allocation6 + $0xd8] sm:$0xff]
  %v5408 = vld [vmem:[#allocation6 + $0xe0] sm:$0xff]
  %v5409 = vld [vmem:[#allocation6 + $0xe8] sm:$0xff]
  %v5410 = vld [vmem:[#allocation6 + $0xf0] sm:$0xff]
  %v5411 = vld [vmem:[#allocation6 + $0xf8] sm:$0xff]
  %v5412 = vld [vmem:[#allocation6 + $0x100] sm:$0xff]
  %v5413 = vld [vmem:[#allocation6 + $0x108] sm:$0xff]
  %v5414 = vld [vmem:[#allocation6 + $0x110] sm:$0xff]
  %v5415 = vld [vmem:[#allocation6 + $0x118] sm:$0xff]
  %v5416 = vld [vmem:[#allocation6 + $0x120] sm:$0xff]
  %v5417 = vld [vmem:[#allocation6 + $0x128] sm:$0xff]
  %v5418 = vld [vmem:[#allocation6 + $0x130] sm:$0xff]
  %v5419 = vld [vmem:[#allocation6 + $0x138] sm:$0xff]
  %v5420 = vld [vmem:[#allocation6 + $0x140] sm:$0xff]
  %v5421 = vld [vmem:[#allocation6 + $0x148] sm:$0xff]
  %v5422 = vld [vmem:[#allocation6 + $0x150] sm:$0xff]
  %v5423 = vld [vmem:[#allocation6 + $0x158] sm:$0xff]
  %v5424 = vld [vmem:[#allocation6 + $0x160] sm:$0xff]
  %v5425 = vld [vmem:[#allocation6 + $0x168] sm:$0xff]
  %v5426 = vld [vmem:[#allocation6 + $0x170] sm:$0xff]
  %v5427 = vld [vmem:[#allocation6 + $0x178] sm:$0xff]
  %v5428 = vld [vmem:[#allocation6 + $0x180] sm:$0xff]
  %v5429 = vld [vmem:[#allocation6 + $0x188] sm:$0xff]
  %v5430 = vld [vmem:[#allocation6 + $0x190] sm:$0xff]
  %v5431 = vld [vmem:[#allocation6 + $0x198] sm:$0xff]
  %v5432 = vld [vmem:[#allocation6 + $0x1a0] sm:$0xff]
  %v5433 = vld [vmem:[#allocation6 + $0x1a8] sm:$0xff]
  %v5434 = vld [vmem:[#allocation6 + $0x1b0] sm:$0xff]
  %v5435 = vld [vmem:[#allocation6 + $0x1b8] sm:$0xff]
  %v5436 = vld [vmem:[#allocation6 + $0x1c0] sm:$0xff]
  %v5437 = vld [vmem:[#allocation6 + $0x1c8] sm:$0xff]
  %v5438 = vld [vmem:[#allocation6 + $0x1d0] sm:$0xff]
  %v5439 = vld [vmem:[#allocation6 + $0x1d8] sm:$0xff]
  %v5440 = vld [vmem:[#allocation6 + $0x1e0] sm:$0xff]
  %v5441 = vld [vmem:[#allocation6 + $0x1e8] sm:$0xff]
  %v5442 = vld [vmem:[#allocation6 + $0x1f0] sm:$0xff]
  %v5443 = vld [vmem:[#allocation6 + $0x1f8] sm:$0xff]
  %v5444 = vld [vmem:[%s5] sm:$0xf]
  %v5446 = vlaneseq
  %v5447 = vshrl.u32 %v5446, 7
  %v5448 = vsub.s32 0, %v5447
  %v5449 = vrot.slane %v5444, %v5448
  %v5450 = vlaneseq
  %v5451 = vshrl.u32 %v5450, 7
  %v5452 = vsub.s32 1, %v5451
  %v5453 = vrot.slane %v5444, %v5452
  %v5454 = vlaneseq
  %v5455 = vshrl.u32 %v5454, 7
  %v5456 = vsub.s32 2, %v5455
  %v5457 = vrot.slane %v5444, %v5456
  %v5458 = vlaneseq
  %v5459 = vshrl.u32 %v5458, 7
  %v5460 = vsub.s32 3, %v5459
  %v5461 = vrot.slane %v5444, %v5460
  %5466 = vmatprep.subr.mxu0 %v5441
  %5467 = vmatpush1.msra.mxu0 %v5440
  %5468 = vmatprep.subr.mxu0 %v5437
  %5469 = vmatpush1.msra.mxu0 %v5436
  %5470 = vmatprep.subr.mxu0 %v5433
  %5471 = vmatpush1.msra.mxu0 %v5432
  %5472 = vmatprep.subr.mxu0 %v5429
  %5473 = vmatpush1.msra.mxu0 %v5428
  %5474 = vmatprep.subr.mxu0 %v5425
  %5475 = vmatpush1.msra.mxu0 %v5424
  %5476 = vmatprep.subr.mxu0 %v5421
  %5477 = vmatpush1.msra.mxu0 %v5420
  %5478 = vmatprep.subr.mxu0 %v5417
  %5479 = vmatpush1.msra.mxu0 %v5416
  %5480 = vmatprep.subr.mxu0 %v5413
  %5481 = vmatpush1.msra.mxu0 %v5412
  %5482 = vmatprep.subr.mxu0 %v5409
  %5483 = vmatpush1.msra.mxu0 %v5408
  %5484 = vmatprep.subr.mxu0 %v5405
  %5485 = vmatpush1.msra.mxu0 %v5404
  %5486 = vmatprep.subr.mxu0 %v5401
  %5487 = vmatpush1.msra.mxu0 %v5400
  %5488 = vmatprep.subr.mxu0 %v5397
  %5489 = vmatpush1.msra.mxu0 %v5396
  %5490 = vmatprep.subr.mxu0 %v5393
  %5491 = vmatpush1.msra.mxu0 %v5392
  %5492 = vmatprep.subr.mxu0 %v5389
  %5493 = vmatpush1.msra.mxu0 %v5388
  %5494 = vmatprep.subr.mxu0 %v5385
  %5495 = vmatpush1.msra.mxu0 %v5384
  %5496 = vmatprep.subr.mxu0 %v5381
  %5497 = vmatpush1.msra.mxu0 %v5380
  %5498 = vmatprep.subr.mxu0 0.0
  %5499 = vmatpush2.msra.mxu0 0.0
  %5500 = vmatprep.subr.mxu0 0.0
  %5501 = vmatpush2.msra.mxu0 0.0
  %5502 = vmatprep.subr.mxu0 0.0
  %5503 = vmatpush2.msra.mxu0 0.0
  %5504 = vmatprep.subr.mxu0 0.0
  %5505 = vmatpush2.msra.mxu0 0.0
  %5506 = vmatprep.subr.mxu0 0.0
  %5507 = vmatpush2.msra.mxu0 0.0
  %5508 = vmatprep.subr.mxu0 0.0
  %5509 = vmatpush2.msra.mxu0 0.0
  %5510 = vmatprep.subr.mxu0 0.0
  %5511 = vmatpush2.msra.mxu0 0.0
  %5512 = vmatprep.subr.mxu0 0.0
  %5513 = vmatpush2.msra.mxu0 0.0
  %5514 = vmatprep.subr.mxu0 0.0
  %5515 = vmatpush2.msra.mxu0 0.0
  %5516 = vmatprep.subr.mxu0 0.0
  %5517 = vmatpush2.msra.mxu0 0.0
  %5518 = vmatprep.subr.mxu0 0.0
  %5519 = vmatpush2.msra.mxu0 0.0
  %5520 = vmatprep.subr.mxu0 0.0
  %5521 = vmatpush2.msra.mxu0 0.0
  %5522 = vmatprep.subr.mxu0 0.0
  %5523 = vmatpush2.msra.mxu0 0.0
  %5524 = vmatprep.subr.mxu0 0.0
  %5525 = vmatpush2.msra.mxu0 0.0
  %5526 = vmatprep.subr.mxu0 0.0
  %5527 = vmatpush2.msra.mxu0 0.0
  %5528 = vmatprep.subr.mxu0 0.0
  %5529 = vmatpush2.msra.mxu0 0.0
  %5530 = vmatprep.mubr.f32.mxu0 0.0
  %5531 = vmatmul.mubr.f32.gmra.mxu0 %v5372
  %v5532 = vpop.f32.mrf.mxu0
  %v5533 = vadd.f32 %v5449, %v5532
  %v5534 = vpop.f32.mrf.mxu0
  %v5535 = vadd.f32 %v5453, %v5534
  %5536 = vmatprep.mubr.f32.mxu0 0.0
  %5537 = vmatmul.mubr.f32.gmra.mxu0 %v5373
  %v5538 = vpop.f32.mrf.mxu0
  %v5539 = vadd.f32 %v5449, %v5538
  %v5540 = vpop.f32.mrf.mxu0
  %v5541 = vadd.f32 %v5453, %v5540
  %5542 = vmatprep.mubr.f32.mxu0 0.0
  %5543 = vmatmul.mubr.f32.gmra.mxu0 %v5374
  %v5544 = vpop.f32.mrf.mxu0
  %v5545 = vadd.f32 %v5449, %v5544
  %v5546 = vpop.f32.mrf.mxu0
  %v5547 = vadd.f32 %v5453, %v5546
  %5548 = vmatprep.mubr.f32.mxu0 0.0
  %5549 = vmatmul.mubr.f32.gmra.mxu0 %v5375
  %v5550 = vpop.f32.mrf.mxu0
  %v5551 = vadd.f32 %v5449, %v5550
  %v5552 = vpop.f32.mrf.mxu0
  %v5553 = vadd.f32 %v5453, %v5552
  %5554 = vmatprep.mubr.f32.mxu0 0.0
  %5555 = vmatmul.mubr.f32.gmra.mxu0 %v5376
  %v5556 = vpop.f32.mrf.mxu0
  %v5557 = vadd.f32 %v5449, %v5556
  %v5558 = vpop.f32.mrf.mxu0
  %v5559 = vadd.f32 %v5453, %v5558
  %5560 = vmatprep.mubr.f32.mxu0 0.0
  %5561 = vmatmul.mubr.f32.gmra.mxu0 %v5377
  %v5562 = vpop.f32.mrf.mxu0
  %v5563 = vadd.f32 %v5449, %v5562
  %v5564 = vpop.f32.mrf.mxu0
  %v5565 = vadd.f32 %v5453, %v5564
  %5566 = vmatprep.mubr.f32.mxu0 0.0
  %5567 = vmatmul.mubr.f32.gmra.mxu0 %v5378
  %v5568 = vpop.f32.mrf.mxu0
  %v5569 = vadd.f32 %v5449, %v5568
  %v5570 = vpop.f32.mrf.mxu0
  %v5571 = vadd.f32 %v5453, %v5570
  %5572 = vmatprep.mubr.f32.mxu0 0.0
  %5573 = vmatmul.mubr.f32.gmra.mxu0 %v5379
  %v5574 = vpop.f32.mrf.mxu0
  %v5575 = vadd.f32 %v5449, %v5574
  %v5576 = vpop.f32.mrf.mxu0
  %v5577 = vadd.f32 %v5453, %v5576
  %5578 = vdwg.mxu0
  %5579 = vmatprep.subr.mxu0 %v5443
  %5580 = vmatpush1.msra.mxu0 %v5442
  %5581 = vmatprep.subr.mxu0 %v5439
  %5582 = vmatpush1.msra.mxu0 %v5438
  %5583 = vmatprep.subr.mxu0 %v5435
  %5584 = vmatpush1.msra.mxu0 %v5434
  %5585 = vmatprep.subr.mxu0 %v5431
  %5586 = vmatpush1.msra.mxu0 %v5430
  %5587 = vmatprep.subr.mxu0 %v5427
  %5588 = vmatpush1.msra.mxu0 %v5426
  %5589 = vmatprep.subr.mxu0 %v5423
  %5590 = vmatpush1.msra.mxu0 %v5422
  %5591 = vmatprep.subr.mxu0 %v5419
  %5592 = vmatpush1.msra.mxu0 %v5418
  %5593 = vmatprep.subr.mxu0 %v5415
  %5594 = vmatpush1.msra.mxu0 %v5414
  %5595 = vmatprep.subr.mxu0 %v5411
  %5596 = vmatpush1.msra.mxu0 %v5410
  %5597 = vmatprep.subr.mxu0 %v5407
  %5598 = vmatpush1.msra.mxu0 %v5406
  %5599 = vmatprep.subr.mxu0 %v5403
  %5600 = vmatpush1.msra.mxu0 %v5402
  %5601 = vmatprep.subr.mxu0 %v5399
  %5602 = vmatpush1.msra.mxu0 %v5398
  %5603 = vmatprep.subr.mxu0 %v5395
  %5604 = vmatpush1.msra.mxu0 %v5394
  %5605 = vmatprep.subr.mxu0 %v5391
  %5606 = vmatpush1.msra.mxu0 %v5390
  %5607 = vmatprep.subr.mxu0 %v5387
  %5608 = vmatpush1.msra.mxu0 %v5386
  %5609 = vmatprep.subr.mxu0 %v5383
  %5610 = vmatpush1.msra.mxu0 %v5382
  %5611 = vmatprep.subr.mxu0 0.0
  %5612 = vmatpush2.msra.mxu0 0.0
  %5613 = vmatprep.subr.mxu0 0.0
  %5614 = vmatpush2.msra.mxu0 0.0
  %5615 = vmatprep.subr.mxu0 0.0
  %5616 = vmatpush2.msra.mxu0 0.0
  %5617 = vmatprep.subr.mxu0 0.0
  %5618 = vmatpush2.msra.mxu0 0.0
  %5619 = vmatprep.subr.mxu0 0.0
  %5620 = vmatpush2.msra.mxu0 0.0
  %5621 = vmatprep.subr.mxu0 0.0
  %5622 = vmatpush2.msra.mxu0 0.0
  %5623 = vmatprep.subr.mxu0 0.0
  %5624 = vmatpush2.msra.mxu0 0.0
  %5625 = vmatprep.subr.mxu0 0.0
  %5626 = vmatpush2.msra.mxu0 0.0
  %5627 = vmatprep.subr.mxu0 0.0
  %5628 = vmatpush2.msra.mxu0 0.0
  %5629 = vmatprep.subr.mxu0 0.0
  %5630 = vmatpush2.msra.mxu0 0.0
  %5631 = vmatprep.subr.mxu0 0.0
  %5632 = vmatpush2.msra.mxu0 0.0
  %5633 = vmatprep.subr.mxu0 0.0
  %5634 = vmatpush2.msra.mxu0 0.0
  %5635 = vmatprep.subr.mxu0 0.0
  %5636 = vmatpush2.msra.mxu0 0.0
  %5637 = vmatprep.subr.mxu0 0.0
  %5638 = vmatpush2.msra.mxu0 0.0
  %5639 = vmatprep.subr.mxu0 0.0
  %5640 = vmatpush2.msra.mxu0 0.0
  %5641 = vmatprep.subr.mxu0 0.0
  %5642 = vmatpush2.msra.mxu0 0.0
  %5643 = vmatprep.mubr.f32.mxu0 0.0
  %5644 = vmatmul.mubr.f32.gmra.mxu0 %v5372
  %v5645 = vpop.f32.mrf.mxu0
  %v5646 = vadd.f32 %v5457, %v5645
  %v5647 = vpop.f32.mrf.mxu0
  %v5648 = vadd.f32 %v5461, %v5647
  %5649 = vmatprep.mubr.f32.mxu0 0.0
  %5650 = vmatmul.mubr.f32.gmra.mxu0 %v5373
  %v5651 = vpop.f32.mrf.mxu0
  %v5652 = vadd.f32 %v5457, %v5651
  %v5653 = vpop.f32.mrf.mxu0
  %v5654 = vadd.f32 %v5461, %v5653
  %5655 = vmatprep.mubr.f32.mxu0 0.0
  %5656 = vmatmul.mubr.f32.gmra.mxu0 %v5374
  %v5657 = vpop.f32.mrf.mxu0
  %v5658 = vadd.f32 %v5457, %v5657
  %v5659 = vpop.f32.mrf.mxu0
  %v5660 = vadd.f32 %v5461, %v5659
  %5661 = vmatprep.mubr.f32.mxu0 0.0
  %5662 = vmatmul.mubr.f32.gmra.mxu0 %v5375
  %v5663 = vpop.f32.mrf.mxu0
  %v5664 = vadd.f32 %v5457, %v5663
  %v5665 = vpop.f32.mrf.mxu0
  %v5666 = vadd.f32 %v5461, %v5665
  %5667 = vmatprep.mubr.f32.mxu0 0.0
  %5668 = vmatmul.mubr.f32.gmra.mxu0 %v5376
  %v5669 = vpop.f32.mrf.mxu0
  %v5670 = vadd.f32 %v5457, %v5669
  %v5671 = vpop.f32.mrf.mxu0
  %v5672 = vadd.f32 %v5461, %v5671
  %5673 = vmatprep.mubr.f32.mxu0 0.0
  %5674 = vmatmul.mubr.f32.gmra.mxu0 %v5377
  %v5675 = vpop.f32.mrf.mxu0
  %v5676 = vadd.f32 %v5457, %v5675
  %v5677 = vpop.f32.mrf.mxu0
  %v5678 = vadd.f32 %v5461, %v5677
  %5679 = vmatprep.mubr.f32.mxu0 0.0
  %5680 = vmatmul.mubr.f32.gmra.mxu0 %v5378
  %v5681 = vpop.f32.mrf.mxu0
  %v5682 = vadd.f32 %v5457, %v5681
  %v5683 = vpop.f32.mrf.mxu0
  %v5684 = vadd.f32 %v5461, %v5683
  %5685 = vmatprep.mubr.f32.mxu0 0.0
  %5686 = vmatmul.mubr.f32.gmra.mxu0 %v5379
  %v5687 = vpop.f32.mrf.mxu0
  %v5688 = vadd.f32 %v5457, %v5687
  %v5689 = vpop.f32.mrf.mxu0
  %v5690 = vadd.f32 %v5461, %v5689
  %5691 = vdwg.mxu0
  %5692 = vst [vmem:[#allocation3] sm:$0xff] %v5533
  %5693 = vst [vmem:[#allocation3 + $0x8] sm:$0xff] %v5535
  %5694 = vst [vmem:[#allocation3 + $0x10] sm:$0xff] %v5646
  %5695 = vst [vmem:[#allocation3 + $0x18] sm:$0xff] %v5648
  %5696 = vst [vmem:[#allocation3 + $0x20] sm:$0xff] %v5539
  %5697 = vst [vmem:[#allocation3 + $0x28] sm:$0xff] %v5541
  %5698 = vst [vmem:[#allocation3 + $0x30] sm:$0xff] %v5652
  %5699 = vst [vmem:[#allocation3 + $0x38] sm:$0xff] %v5654
  %5700 = vst [vmem:[#allocation3 + $0x40] sm:$0xff] %v5545
  %5701 = vst [vmem:[#allocation3 + $0x48] sm:$0xff] %v5547
  %5702 = vst [vmem:[#allocation3 + $0x50] sm:$0xff] %v5658
  %5703 = vst [vmem:[#allocation3 + $0x58] sm:$0xff] %v5660
  %5704 = vst [vmem:[#allocation3 + $0x60] sm:$0xff] %v5551
  %5705 = vst [vmem:[#allocation3 + $0x68] sm:$0xff] %v5553
  %5706 = vst [vmem:[#allocation3 + $0x70] sm:$0xff] %v5664
  %5707 = vst [vmem:[#allocation3 + $0x78] sm:$0xff] %v5666
  %5708 = vst [vmem:[#allocation3 + $0x80] sm:$0xff] %v5557
  %5709 = vst [vmem:[#allocation3 + $0x88] sm:$0xff] %v5559
  %5710 = vst [vmem:[#allocation3 + $0x90] sm:$0xff] %v5670
  %5711 = vst [vmem:[#allocation3 + $0x98] sm:$0xff] %v5672
  %5712 = vst [vmem:[#allocation3 + $0xa0] sm:$0xff] %v5563
  %5713 = vst [vmem:[#allocation3 + $0xa8] sm:$0xff] %v5565
  %5714 = vst [vmem:[#allocation3 + $0xb0] sm:$0xff] %v5676
  %5715 = vst [vmem:[#allocation3 + $0xb8] sm:$0xff] %v5678
  %5716 = vst [vmem:[#allocation3 + $0xc0] sm:$0xff] %v5569
  %5717 = vst [vmem:[#allocation3 + $0xc8] sm:$0xff] %v5571
  %5718 = vst [vmem:[#allocation3 + $0xd0] sm:$0xff] %v5682
  %5719 = vst [vmem:[#allocation3 + $0xd8] sm:$0xff] %v5684
  %5720 = vst [vmem:[#allocation3 + $0xe0] sm:$0xff] %v5575
  %5721 = vst [vmem:[#allocation3 + $0xe8] sm:$0xff] %v5577
  %5722 = vst [vmem:[#allocation3 + $0xf0] sm:$0xff] %v5688
  %5723 = vst [vmem:[#allocation3 + $0xf8] sm:$0xff] %v5690
  %v5724 = vld [vmem:[#allocation3] sm:$0xff]
  %v5725 = vld [vmem:[#allocation3 + $0x8] sm:$0xff]
  %v5726 = vld [vmem:[#allocation3 + $0x10] sm:$0xff]
  %v5727 = vld [vmem:[#allocation3 + $0x18] sm:$0xff]
  %v5728 = vld [vmem:[#allocation7] sm:$0xff]
  %v5729 = vld [vmem:[#allocation7 + $0x8] sm:$0xff]
  %v5730 = vld [vmem:[#allocation7 + $0x10] sm:$0xff]
  %v5731 = vld [vmem:[#allocation7 + $0x18] sm:$0xff]
  %v5732 = vld [vmem:[#allocation7 + $0x20] sm:$0xff]
  %v5733 = vld [vmem:[#allocation7 + $0x28] sm:$0xff]
  %v5734 = vld [vmem:[#allocation7 + $0x30] sm:$0xff]
  %v5735 = vld [vmem:[#allocation7 + $0x38] sm:$0xff]
  %v5736 = vld [vmem:[#allocation7 + $0x40] sm:$0xff]
  %v5737 = vld [vmem:[#allocation7 + $0x48] sm:$0xff]
  %v5738 = vld [vmem:[#allocation7 + $0x50] sm:$0xff]
  %v5739 = vld [vmem:[#allocation7 + $0x58] sm:$0xff]
  %v5740 = vld [vmem:[#allocation7 + $0x60] sm:$0xff]
  %v5741 = vld [vmem:[#allocation7 + $0x68] sm:$0xff]
  %v5742 = vld [vmem:[#allocation7 + $0x70] sm:$0xff]
  %v5743 = vld [vmem:[#allocation7 + $0x78] sm:$0xff]
  %v5744 = vld [vmem:[#allocation7 + $0x80] sm:$0xff]
  %v5745 = vld [vmem:[#allocation7 + $0x88] sm:$0xff]
  %v5746 = vld [vmem:[#allocation7 + $0x90] sm:$0xff]
  %v5747 = vld [vmem:[#allocation7 + $0x98] sm:$0xff]
  %v5748 = vld [vmem:[#allocation7 + $0xa0] sm:$0xff]
  %v5749 = vld [vmem:[#allocation7 + $0xa8] sm:$0xff]
  %v5750 = vld [vmem:[#allocation7 + $0xb0] sm:$0xff]
  %v5751 = vld [vmem:[#allocation7 + $0xb8] sm:$0xff]
  %v5752 = vld [vmem:[#allocation7 + $0xc0] sm:$0xff]
  %v5753 = vld [vmem:[#allocation7 + $0xc8] sm:$0xff]
  %v5754 = vld [vmem:[#allocation7 + $0xd0] sm:$0xff]
  %v5755 = vld [vmem:[#allocation7 + $0xd8] sm:$0xff]
  %v5756 = vld [vmem:[#allocation7 + $0xe0] sm:$0xff]
  %v5757 = vld [vmem:[#allocation7 + $0xe8] sm:$0xff]
  %v5758 = vld [vmem:[#allocation7 + $0xf0] sm:$0xff]
  %v5759 = vld [vmem:[#allocation7 + $0xf8] sm:$0xff]
  %v5760 = vld [vmem:[#allocation7 + $0x100] sm:$0xff]
  %v5761 = vld [vmem:[#allocation7 + $0x108] sm:$0xff]
  %v5762 = vld [vmem:[#allocation7 + $0x110] sm:$0xff]
  %v5763 = vld [vmem:[#allocation7 + $0x118] sm:$0xff]
  %v5764 = vld [vmem:[#allocation7 + $0x120] sm:$0xff]
  %v5765 = vld [vmem:[#allocation7 + $0x128] sm:$0xff]
  %v5766 = vld [vmem:[#allocation7 + $0x130] sm:$0xff]
  %v5767 = vld [vmem:[#allocation7 + $0x138] sm:$0xff]
  %v5768 = vld [vmem:[#allocation7 + $0x140] sm:$0xff]
  %v5769 = vld [vmem:[#allocation7 + $0x148] sm:$0xff]
  %v5770 = vld [vmem:[#allocation7 + $0x150] sm:$0xff]
  %v5771 = vld [vmem:[#allocation7 + $0x158] sm:$0xff]
  %v5772 = vld [vmem:[#allocation7 + $0x160] sm:$0xff]
  %v5773 = vld [vmem:[#allocation7 + $0x168] sm:$0xff]
  %v5774 = vld [vmem:[#allocation7 + $0x170] sm:$0xff]
  %v5775 = vld [vmem:[#allocation7 + $0x178] sm:$0xff]
  %v5776 = vld [vmem:[#allocation7 + $0x180] sm:$0xff]
  %v5777 = vld [vmem:[#allocation7 + $0x188] sm:$0xff]
  %v5778 = vld [vmem:[#allocation7 + $0x190] sm:$0xff]
  %v5779 = vld [vmem:[#allocation7 + $0x198] sm:$0xff]
  %v5780 = vld [vmem:[#allocation7 + $0x1a0] sm:$0xff]
  %v5781 = vld [vmem:[#allocation7 + $0x1a8] sm:$0xff]
  %v5782 = vld [vmem:[#allocation7 + $0x1b0] sm:$0xff]
  %v5783 = vld [vmem:[#allocation7 + $0x1b8] sm:$0xff]
  %v5784 = vld [vmem:[#allocation7 + $0x1c0] sm:$0xff]
  %v5785 = vld [vmem:[#allocation7 + $0x1c8] sm:$0xff]
  %v5786 = vld [vmem:[#allocation7 + $0x1d0] sm:$0xff]
  %v5787 = vld [vmem:[#allocation7 + $0x1d8] sm:$0xff]
  %v5788 = vld [vmem:[#allocation7 + $0x1e0] sm:$0xff]
  %v5789 = vld [vmem:[#allocation7 + $0x1e8] sm:$0xff]
  %v5790 = vld [vmem:[#allocation7 + $0x1f0] sm:$0xff]
  %v5791 = vld [vmem:[#allocation7 + $0x1f8] sm:$0xff]
  %5792 = vmatprep.subr.mxu0 %v5789
  %5793 = vmatpush1.msra.mxu0 %v5788
  %5794 = vmatprep.subr.mxu0 %v5785
  %5795 = vmatpush1.msra.mxu0 %v5784
  %5796 = vmatprep.subr.mxu0 %v5781
  %5797 = vmatpush1.msra.mxu0 %v5780
  %5798 = vmatprep.subr.mxu0 %v5777
  %5799 = vmatpush1.msra.mxu0 %v5776
  %5800 = vmatprep.subr.mxu0 %v5773
  %5801 = vmatpush1.msra.mxu0 %v5772
  %5802 = vmatprep.subr.mxu0 %v5769
  %5803 = vmatpush1.msra.mxu0 %v5768
  %5804 = vmatprep.subr.mxu0 %v5765
  %5805 = vmatpush1.msra.mxu0 %v5764
  %5806 = vmatprep.subr.mxu0 %v5761
  %5807 = vmatpush1.msra.mxu0 %v5760
  %5808 = vmatprep.subr.mxu0 %v5757
  %5809 = vmatpush1.msra.mxu0 %v5756
  %5810 = vmatprep.subr.mxu0 %v5753
  %5811 = vmatpush1.msra.mxu0 %v5752
  %5812 = vmatprep.subr.mxu0 %v5749
  %5813 = vmatpush1.msra.mxu0 %v5748
  %5814 = vmatprep.subr.mxu0 %v5745
  %5815 = vmatpush1.msra.mxu0 %v5744
  %5816 = vmatprep.subr.mxu0 %v5741
  %5817 = vmatpush1.msra.mxu0 %v5740
  %5818 = vmatprep.subr.mxu0 %v5737
  %5819 = vmatpush1.msra.mxu0 %v5736
  %5820 = vmatprep.subr.mxu0 %v5733
  %5821 = vmatpush1.msra.mxu0 %v5732
  %5822 = vmatprep.subr.mxu0 %v5729
  %5823 = vmatpush1.msra.mxu0 %v5728
  %5824 = vmatprep.subr.mxu0 0.0
  %5825 = vmatpush2.msra.mxu0 0.0
  %5826 = vmatprep.subr.mxu0 0.0
  %5827 = vmatpush2.msra.mxu0 0.0
  %5828 = vmatprep.subr.mxu0 0.0
  %5829 = vmatpush2.msra.mxu0 0.0
  %5830 = vmatprep.subr.mxu0 0.0
  %5831 = vmatpush2.msra.mxu0 0.0
  %5832 = vmatprep.subr.mxu0 0.0
  %5833 = vmatpush2.msra.mxu0 0.0
  %5834 = vmatprep.subr.mxu0 0.0
  %5835 = vmatpush2.msra.mxu0 0.0
  %5836 = vmatprep.subr.mxu0 0.0
  %5837 = vmatpush2.msra.mxu0 0.0
  %5838 = vmatprep.subr.mxu0 0.0
  %5839 = vmatpush2.msra.mxu0 0.0
  %5840 = vmatprep.subr.mxu0 0.0
  %5841 = vmatpush2.msra.mxu0 0.0
  %5842 = vmatprep.subr.mxu0 0.0
  %5843 = vmatpush2.msra.mxu0 0.0
  %5844 = vmatprep.subr.mxu0 0.0
  %5845 = vmatpush2.msra.mxu0 0.0
  %5846 = vmatprep.subr.mxu0 0.0
  %5847 = vmatpush2.msra.mxu0 0.0
  %5848 = vmatprep.subr.mxu0 0.0
  %5849 = vmatpush2.msra.mxu0 0.0
  %5850 = vmatprep.subr.mxu0 0.0
  %5851 = vmatpush2.msra.mxu0 0.0
  %5852 = vmatprep.subr.mxu0 0.0
  %5853 = vmatpush2.msra.mxu0 0.0
  %5854 = vmatprep.subr.mxu0 0.0
  %5855 = vmatpush2.msra.mxu0 0.0
  %5856 = vmatprep.mubr.f32.mxu0 0.0
  %5857 = vmatmul.mubr.f32.gmra.mxu0 0.0
  %v5858 = vpop.f32.mrf.mxu0
  %v5859 = vadd.f32 0.0, %v5858
  %v5860 = vpop.f32.mrf.mxu0
  %v5861 = vadd.f32 0.0, %v5860
  %5862 = vdwg.mxu0
  %5863 = vmatprep.subr.mxu0 %v5791
  %5864 = vmatpush1.msra.mxu0 %v5790
  %5865 = vmatprep.subr.mxu0 %v5787
  %5866 = vmatpush1.msra.mxu0 %v5786
  %5867 = vmatprep.subr.mxu0 %v5783
  %5868 = vmatpush1.msra.mxu0 %v5782
  %5869 = vmatprep.subr.mxu0 %v5779
  %5870 = vmatpush1.msra.mxu0 %v5778
  %5871 = vmatprep.subr.mxu0 %v5775
  %5872 = vmatpush1.msra.mxu0 %v5774
  %5873 = vmatprep.subr.mxu0 %v5771
  %5874 = vmatpush1.msra.mxu0 %v5770
  %5875 = vmatprep.subr.mxu0 %v5767
  %5876 = vmatpush1.msra.mxu0 %v5766
  %5877 = vmatprep.subr.mxu0 %v5763
  %5878 = vmatpush1.msra.mxu0 %v5762
  %5879 = vmatprep.subr.mxu0 %v5759
  %5880 = vmatpush1.msra.mxu0 %v5758
  %5881 = vmatprep.subr.mxu0 %v5755
  %5882 = vmatpush1.msra.mxu0 %v5754
  %5883 = vmatprep.subr.mxu0 %v5751
  %5884 = vmatpush1.msra.mxu0 %v5750
  %5885 = vmatprep.subr.mxu0 %v5747
  %5886 = vmatpush1.msra.mxu0 %v5746
  %5887 = vmatprep.subr.mxu0 %v5743
  %5888 = vmatpush1.msra.mxu0 %v5742
  %5889 = vmatprep.subr.mxu0 %v5739
  %5890 = vmatpush1.msra.mxu0 %v5738
  %5891 = vmatprep.subr.mxu0 %v5735
  %5892 = vmatpush1.msra.mxu0 %v5734
  %5893 = vmatprep.subr.mxu0 %v5731
  %5894 = vmatpush1.msra.mxu0 %v5730
  %5895 = vmatprep.subr.mxu0 0.0
  %5896 = vmatpush2.msra.mxu0 0.0
  %5897 = vmatprep.subr.mxu0 0.0
  %5898 = vmatpush2.msra.mxu0 0.0
  %5899 = vmatprep.subr.mxu0 0.0
  %5900 = vmatpush2.msra.mxu0 0.0
  %5901 = vmatprep.subr.mxu0 0.0
  %5902 = vmatpush2.msra.mxu0 0.0
  %5903 = vmatprep.subr.mxu0 0.0
  %5904 = vmatpush2.msra.mxu0 0.0
  %5905 = vmatprep.subr.mxu0 0.0
  %5906 = vmatpush2.msra.mxu0 0.0
  %5907 = vmatprep.subr.mxu0 0.0
  %5908 = vmatpush2.msra.mxu0 0.0
  %5909 = vmatprep.subr.mxu0 0.0
  %5910 = vmatpush2.msra.mxu0 0.0
  %5911 = vmatprep.subr.mxu0 0.0
  %5912 = vmatpush2.msra.mxu0 0.0
  %5913 = vmatprep.subr.mxu0 0.0
  %5914 = vmatpush2.msra.mxu0 0.0
  %5915 = vmatprep.subr.mxu0 0.0
  %5916 = vmatpush2.msra.mxu0 0.0
  %5917 = vmatprep.subr.mxu0 0.0
  %5918 = vmatpush2.msra.mxu0 0.0
  %5919 = vmatprep.subr.mxu0 0.0
  %5920 = vmatpush2.msra.mxu0 0.0
  %5921 = vmatprep.subr.mxu0 0.0
  %5922 = vmatpush2.msra.mxu0 0.0
  %5923 = vmatprep.subr.mxu0 0.0
  %5924 = vmatpush2.msra.mxu0 0.0
  %5925 = vmatprep.subr.mxu0 0.0
  %5926 = vmatpush2.msra.mxu0 0.0
  %5927 = vmatprep.mubr.f32.mxu0 0.0
  %5928 = vmatmul.mubr.f32.gmra.mxu0 0.0
  %v5929 = vpop.f32.mrf.mxu0
  %v5930 = vadd.f32 0.0, %v5929
  %v5931 = vpop.f32.mrf.mxu0
  %v5932 = vadd.f32 0.0, %v5931
  %5933 = vdwg.mxu0
  %v5934 = vadd.f32 %v5724, %v5859
  %v5935 = vadd.f32 %v5725, %v5861
  %v5936 = vadd.f32 %v5726, %v5930
  %v5937 = vadd.f32 %v5727, %v5932
  %v5938 = vxor.u32 %v5934, 2147483648
  %v5939 = vxor.u32 %v5935, 2147483648
  %v5940 = vxor.u32 %v5936, 2147483648
  %v5941 = vmul.f32 %v5938, 1.442695
  %v5942 = vpow.pop %v5941
  %v5943 = vmul.f32 %v5939, 1.442695
  %v5944 = vpow.pop %v5943
  %v5945 = vmul.f32 %v5940, 1.442695
  %v5946 = vpow.pop %v5945
  %v5947 = vadd.f32 %v5942, 1.0
  %v5948 = vadd.f32 %v5944, 1.0
  %v5949 = vadd.f32 %v5946, 1.0
  %v5950 = vrcp.pop %v5947
  %v5951 = vmul.f32 1.0, %v5950
  %v5952 = vrcp.pop %v5948
  %v5953 = vmul.f32 1.0, %v5952
  %v5954 = vrcp.pop %v5949
  %v5955 = vmul.f32 1.0, %v5954
  %v5956 = vtanh.pop %v5937
  %v5957 = vmul.f32 %v5953, 0.0
  %v5958 = vmul.f32 %v5951, %v5956
  %v5959 = vadd.f32 %v5957, %v5958
  %v5960 = vtanh.pop %v5959
  %v5961 = vmul.f32 %v5955, %v5960
  %v5962 = vld [vmem:[#allocation3 + $0x20] sm:$0xff]
  %v5963 = vld [vmem:[#allocation3 + $0x28] sm:$0xff]
  %v5964 = vld [vmem:[#allocation3 + $0x30] sm:$0xff]
  %v5965 = vld [vmem:[#allocation3 + $0x38] sm:$0xff]
  %5966 = vmatprep.subr.mxu0 %v5789
  %5967 = vmatpush1.msra.mxu0 %v5788
  %5968 = vmatprep.subr.mxu0 %v5785
  %5969 = vmatpush1.msra.mxu0 %v5784
  %5970 = vmatprep.subr.mxu0 %v5781
  %5971 = vmatpush1.msra.mxu0 %v5780
  %5972 = vmatprep.subr.mxu0 %v5777
  %5973 = vmatpush1.msra.mxu0 %v5776
  %5974 = vmatprep.subr.mxu0 %v5773
  %5975 = vmatpush1.msra.mxu0 %v5772
  %5976 = vmatprep.subr.mxu0 %v5769
  %5977 = vmatpush1.msra.mxu0 %v5768
  %5978 = vmatprep.subr.mxu0 %v5765
  %5979 = vmatpush1.msra.mxu0 %v5764
  %5980 = vmatprep.subr.mxu0 %v5761
  %5981 = vmatpush1.msra.mxu0 %v5760
  %5982 = vmatprep.subr.mxu0 %v5757
  %5983 = vmatpush1.msra.mxu0 %v5756
  %5984 = vmatprep.subr.mxu0 %v5753
  %5985 = vmatpush1.msra.mxu0 %v5752
  %5986 = vmatprep.subr.mxu0 %v5749
  %5987 = vmatpush1.msra.mxu0 %v5748
  %5988 = vmatprep.subr.mxu0 %v5745
  %5989 = vmatpush1.msra.mxu0 %v5744
  %5990 = vmatprep.subr.mxu0 %v5741
  %5991 = vmatpush1.msra.mxu0 %v5740
  %5992 = vmatprep.subr.mxu0 %v5737
  %5993 = vmatpush1.msra.mxu0 %v5736
  %5994 = vmatprep.subr.mxu0 %v5733
  %5995 = vmatpush1.msra.mxu0 %v5732
  %5996 = vmatprep.subr.mxu0 %v5729
  %5997 = vmatpush1.msra.mxu0 %v5728
  %5998 = vmatprep.subr.mxu0 0.0
  %5999 = vmatpush2.msra.mxu0 0.0
  %6000 = vmatprep.subr.mxu0 0.0
  %6001 = vmatpush2.msra.mxu0 0.0
  %6002 = vmatprep.subr.mxu0 0.0
  %6003 = vmatpush2.msra.mxu0 0.0
  %6004 = vmatprep.subr.mxu0 0.0
  %6005 = vmatpush2.msra.mxu0 0.0
  %6006 = vmatprep.subr.mxu0 0.0
  %6007 = vmatpush2.msra.mxu0 0.0
  %6008 = vmatprep.subr.mxu0 0.0
  %6009 = vmatpush2.msra.mxu0 0.0
  %6010 = vmatprep.subr.mxu0 0.0
  %6011 = vmatpush2.msra.mxu0 0.0
  %6012 = vmatprep.subr.mxu0 0.0
  %6013 = vmatpush2.msra.mxu0 0.0
  %6014 = vmatprep.subr.mxu0 0.0
  %6015 = vmatpush2.msra.mxu0 0.0
  %6016 = vmatprep.subr.mxu0 0.0
  %6017 = vmatpush2.msra.mxu0 0.0
  %6018 = vmatprep.subr.mxu0 0.0
  %6019 = vmatpush2.msra.mxu0 0.0
  %6020 = vmatprep.subr.mxu0 0.0
  %6021 = vmatpush2.msra.mxu0 0.0
  %6022 = vmatprep.subr.mxu0 0.0
  %6023 = vmatpush2.msra.mxu0 0.0
  %6024 = vmatprep.subr.mxu0 0.0
  %6025 = vmatpush2.msra.mxu0 0.0
  %6026 = vmatprep.subr.mxu0 0.0
  %6027 = vmatpush2.msra.mxu0 0.0
  %6028 = vmatprep.subr.mxu0 0.0
  %6029 = vmatpush2.msra.mxu0 0.0
  %6030 = vmatprep.mubr.f32.mxu0 0.0
  %6031 = vmatmul.mubr.f32.gmra.mxu0 %v5961
  %v6032 = vpop.f32.mrf.mxu0
  %v6033 = vadd.f32 0.0, %v6032
  %v6034 = vpop.f32.mrf.mxu0
  %v6035 = vadd.f32 0.0, %v6034
  %6036 = vdwg.mxu0
  %6037 = vmatprep.subr.mxu0 %v5791
  %6038 = vmatpush1.msra.mxu0 %v5790
  %6039 = vmatprep.subr.mxu0 %v5787
  %6040 = vmatpush1.msra.mxu0 %v5786
  %6041 = vmatprep.subr.mxu0 %v5783
  %6042 = vmatpush1.msra.mxu0 %v5782
  %6043 = vmatprep.subr.mxu0 %v5779
  %6044 = vmatpush1.msra.mxu0 %v5778
  %6045 = vmatprep.subr.mxu0 %v5775
  %6046 = vmatpush1.msra.mxu0 %v5774
  %6047 = vmatprep.subr.mxu0 %v5771
  %6048 = vmatpush1.msra.mxu0 %v5770
  %6049 = vmatprep.subr.mxu0 %v5767
  %6050 = vmatpush1.msra.mxu0 %v5766
  %6051 = vmatprep.subr.mxu0 %v5763
  %6052 = vmatpush1.msra.mxu0 %v5762
  %6053 = vmatprep.subr.mxu0 %v5759
  %6054 = vmatpush1.msra.mxu0 %v5758
  %6055 = vmatprep.subr.mxu0 %v5755
  %6056 = vmatpush1.msra.mxu0 %v5754
  %6057 = vmatprep.subr.mxu0 %v5751
  %6058 = vmatpush1.msra.mxu0 %v5750
  %6059 = vmatprep.subr.mxu0 %v5747
  %6060 = vmatpush1.msra.mxu0 %v5746
  %6061 = vmatprep.subr.mxu0 %v5743
  %6062 = vmatpush1.msra.mxu0 %v5742
  %6063 = vmatprep.subr.mxu0 %v5739
  %6064 = vmatpush1.msra.mxu0 %v5738
  %6065 = vmatprep.subr.mxu0 %v5735
  %6066 = vmatpush1.msra.mxu0 %v5734
  %6067 = vmatprep.subr.mxu0 %v5731
  %6068 = vmatpush1.msra.mxu0 %v5730
  %6069 = vmatprep.subr.mxu0 0.0
  %6070 = vmatpush2.msra.mxu0 0.0
  %6071 = vmatprep.subr.mxu0 0.0
  %6072 = vmatpush2.msra.mxu0 0.0
  %6073 = vmatprep.subr.mxu0 0.0
  %6074 = vmatpush2.msra.mxu0 0.0
  %6075 = vmatprep.subr.mxu0 0.0
  %6076 = vmatpush2.msra.mxu0 0.0
  %6077 = vmatprep.subr.mxu0 0.0
  %6078 = vmatpush2.msra.mxu0 0.0
  %6079 = vmatprep.subr.mxu0 0.0
  %6080 = vmatpush2.msra.mxu0 0.0
  %6081 = vmatprep.subr.mxu0 0.0
  %6082 = vmatpush2.msra.mxu0 0.0
  %6083 = vmatprep.subr.mxu0 0.0
  %6084 = vmatpush2.msra.mxu0 0.0
  %6085 = vmatprep.subr.mxu0 0.0
  %6086 = vmatpush2.msra.mxu0 0.0
  %6087 = vmatprep.subr.mxu0 0.0
  %6088 = vmatpush2.msra.mxu0 0.0
  %6089 = vmatprep.subr.mxu0 0.0
  %6090 = vmatpush2.msra.mxu0 0.0
  %6091 = vmatprep.subr.mxu0 0.0
  %6092 = vmatpush2.msra.mxu0 0.0
  %6093 = vmatprep.subr.mxu0 0.0
  %6094 = vmatpush2.msra.mxu0 0.0
  %6095 = vmatprep.subr.mxu0 0.0
  %6096 = vmatpush2.msra.mxu0 0.0
  %6097 = vmatprep.subr.mxu0 0.0
  %6098 = vmatpush2.msra.mxu0 0.0
  %6099 = vmatprep.subr.mxu0 0.0
  %6100 = vmatpush2.msra.mxu0 0.0
  %6101 = vmatprep.mubr.f32.mxu0 0.0
  %6102 = vmatmul.mubr.f32.gmra.mxu0 %v5961
  %v6103 = vpop.f32.mrf.mxu0
  %v6104 = vadd.f32 0.0, %v6103
  %v6105 = vpop.f32.mrf.mxu0
  %v6106 = vadd.f32 0.0, %v6105
  %6107 = vdwg.mxu0
  %v6108 = vadd.f32 %v5962, %v6033
  %v6109 = vadd.f32 %v5963, %v6035
  %v6110 = vadd.f32 %v5964, %v6104
  %v6111 = vadd.f32 %v5965, %v6106
  %v6112 = vxor.u32 %v6108, 2147483648
  %v6113 = vxor.u32 %v6109, 2147483648
  %v6114 = vxor.u32 %v6110, 2147483648
  %v6115 = vmul.f32 %v6112, 1.442695
  %v6116 = vpow.pop %v6115
  %v6117 = vmul.f32 %v6113, 1.442695
  %v6118 = vpow.pop %v6117
  %v6119 = vmul.f32 %v6114, 1.442695
  %v6120 = vpow.pop %v6119
  %v6121 = vadd.f32 %v6116, 1.0
  %v6122 = vadd.f32 %v6118, 1.0
  %v6123 = vadd.f32 %v6120, 1.0
  %v6124 = vrcp.pop %v6121
  %v6125 = vmul.f32 1.0, %v6124
  %v6126 = vrcp.pop %v6122
  %v6127 = vmul.f32 1.0, %v6126
  %v6128 = vrcp.pop %v6123
  %v6129 = vmul.f32 1.0, %v6128
  %v6130 = vtanh.pop %v6111
  %v6131 = vmul.f32 %v6127, %v5959
  %v6132 = vmul.f32 %v6125, %v6130
  %v6133 = vadd.f32 %v6131, %v6132
  %v6134 = vtanh.pop %v6133
  %v6135 = vmul.f32 %v6129, %v6134
  %v6136 = vld [vmem:[#allocation3 + $0x40] sm:$0xff]
  %v6137 = vld [vmem:[#allocation3 + $0x48] sm:$0xff]
  %v6138 = vld [vmem:[#allocation3 + $0x50] sm:$0xff]
  %v6139 = vld [vmem:[#allocation3 + $0x58] sm:$0xff]
  %6140 = vmatprep.subr.mxu0 %v5789
  %6141 = vmatpush1.msra.mxu0 %v5788
  %6142 = vmatprep.subr.mxu0 %v5785
  %6143 = vmatpush1.msra.mxu0 %v5784
  %6144 = vmatprep.subr.mxu0 %v5781
  %6145 = vmatpush1.msra.mxu0 %v5780
  %6146 = vmatprep.subr.mxu0 %v5777
  %6147 = vmatpush1.msra.mxu0 %v5776
  %6148 = vmatprep.subr.mxu0 %v5773
  %6149 = vmatpush1.msra.mxu0 %v5772
  %6150 = vmatprep.subr.mxu0 %v5769
  %6151 = vmatpush1.msra.mxu0 %v5768
  %6152 = vmatprep.subr.mxu0 %v5765
  %6153 = vmatpush1.msra.mxu0 %v5764
  %6154 = vmatprep.subr.mxu0 %v5761
  %6155 = vmatpush1.msra.mxu0 %v5760
  %6156 = vmatprep.subr.mxu0 %v5757
  %6157 = vmatpush1.msra.mxu0 %v5756
  %6158 = vmatprep.subr.mxu0 %v5753
  %6159 = vmatpush1.msra.mxu0 %v5752
  %6160 = vmatprep.subr.mxu0 %v5749
  %6161 = vmatpush1.msra.mxu0 %v5748
  %6162 = vmatprep.subr.mxu0 %v5745
  %6163 = vmatpush1.msra.mxu0 %v5744
  %6164 = vmatprep.subr.mxu0 %v5741
  %6165 = vmatpush1.msra.mxu0 %v5740
  %6166 = vmatprep.subr.mxu0 %v5737
  %6167 = vmatpush1.msra.mxu0 %v5736
  %6168 = vmatprep.subr.mxu0 %v5733
  %6169 = vmatpush1.msra.mxu0 %v5732
  %6170 = vmatprep.subr.mxu0 %v5729
  %6171 = vmatpush1.msra.mxu0 %v5728
  %6172 = vmatprep.subr.mxu0 0.0
  %6173 = vmatpush2.msra.mxu0 0.0
  %6174 = vmatprep.subr.mxu0 0.0
  %6175 = vmatpush2.msra.mxu0 0.0
  %6176 = vmatprep.subr.mxu0 0.0
  %6177 = vmatpush2.msra.mxu0 0.0
  %6178 = vmatprep.subr.mxu0 0.0
  %6179 = vmatpush2.msra.mxu0 0.0
  %6180 = vmatprep.subr.mxu0 0.0
  %6181 = vmatpush2.msra.mxu0 0.0
  %6182 = vmatprep.subr.mxu0 0.0
  %6183 = vmatpush2.msra.mxu0 0.0
  %6184 = vmatprep.subr.mxu0 0.0
  %6185 = vmatpush2.msra.mxu0 0.0
  %6186 = vmatprep.subr.mxu0 0.0
  %6187 = vmatpush2.msra.mxu0 0.0
  %6188 = vmatprep.subr.mxu0 0.0
  %6189 = vmatpush2.msra.mxu0 0.0
  %6190 = vmatprep.subr.mxu0 0.0
  %6191 = vmatpush2.msra.mxu0 0.0
  %6192 = vmatprep.subr.mxu0 0.0
  %6193 = vmatpush2.msra.mxu0 0.0
  %6194 = vmatprep.subr.mxu0 0.0
  %6195 = vmatpush2.msra.mxu0 0.0
  %6196 = vmatprep.subr.mxu0 0.0
  %6197 = vmatpush2.msra.mxu0 0.0
  %6198 = vmatprep.subr.mxu0 0.0
  %6199 = vmatpush2.msra.mxu0 0.0
  %6200 = vmatprep.subr.mxu0 0.0
  %6201 = vmatpush2.msra.mxu0 0.0
  %6202 = vmatprep.subr.mxu0 0.0
  %6203 = vmatpush2.msra.mxu0 0.0
  %6204 = vmatprep.mubr.f32.mxu0 0.0
  %6205 = vmatmul.mubr.f32.gmra.mxu0 %v6135
  %v6206 = vpop.f32.mrf.mxu0
  %v6207 = vadd.f32 0.0, %v6206
  %v6208 = vpop.f32.mrf.mxu0
  %v6209 = vadd.f32 0.0, %v6208
  %6210 = vdwg.mxu0
  %6211 = vmatprep.subr.mxu0 %v5791
  %6212 = vmatpush1.msra.mxu0 %v5790
  %6213 = vmatprep.subr.mxu0 %v5787
  %6214 = vmatpush1.msra.mxu0 %v5786
  %6215 = vmatprep.subr.mxu0 %v5783
  %6216 = vmatpush1.msra.mxu0 %v5782
  %6217 = vmatprep.subr.mxu0 %v5779
  %6218 = vmatpush1.msra.mxu0 %v5778
  %6219 = vmatprep.subr.mxu0 %v5775
  %6220 = vmatpush1.msra.mxu0 %v5774
  %6221 = vmatprep.subr.mxu0 %v5771
  %6222 = vmatpush1.msra.mxu0 %v5770
  %6223 = vmatprep.subr.mxu0 %v5767
  %6224 = vmatpush1.msra.mxu0 %v5766
  %6225 = vmatprep.subr.mxu0 %v5763
  %6226 = vmatpush1.msra.mxu0 %v5762
  %6227 = vmatprep.subr.mxu0 %v5759
  %6228 = vmatpush1.msra.mxu0 %v5758
  %6229 = vmatprep.subr.mxu0 %v5755
  %6230 = vmatpush1.msra.mxu0 %v5754
  %6231 = vmatprep.subr.mxu0 %v5751
  %6232 = vmatpush1.msra.mxu0 %v5750
  %6233 = vmatprep.subr.mxu0 %v5747
  %6234 = vmatpush1.msra.mxu0 %v5746
  %6235 = vmatprep.subr.mxu0 %v5743
  %6236 = vmatpush1.msra.mxu0 %v5742
  %6237 = vmatprep.subr.mxu0 %v5739
  %6238 = vmatpush1.msra.mxu0 %v5738
  %6239 = vmatprep.subr.mxu0 %v5735
  %6240 = vmatpush1.msra.mxu0 %v5734
  %6241 = vmatprep.subr.mxu0 %v5731
  %6242 = vmatpush1.msra.mxu0 %v5730
  %6243 = vmatprep.subr.mxu0 0.0
  %6244 = vmatpush2.msra.mxu0 0.0
  %6245 = vmatprep.subr.mxu0 0.0
  %6246 = vmatpush2.msra.mxu0 0.0
  %6247 = vmatprep.subr.mxu0 0.0
  %6248 = vmatpush2.msra.mxu0 0.0
  %6249 = vmatprep.subr.mxu0 0.0
  %6250 = vmatpush2.msra.mxu0 0.0
  %6251 = vmatprep.subr.mxu0 0.0
  %6252 = vmatpush2.msra.mxu0 0.0
  %6253 = vmatprep.subr.mxu0 0.0
  %6254 = vmatpush2.msra.mxu0 0.0
  %6255 = vmatprep.subr.mxu0 0.0
  %6256 = vmatpush2.msra.mxu0 0.0
  %6257 = vmatprep.subr.mxu0 0.0
  %6258 = vmatpush2.msra.mxu0 0.0
  %6259 = vmatprep.subr.mxu0 0.0
  %6260 = vmatpush2.msra.mxu0 0.0
  %6261 = vmatprep.subr.mxu0 0.0
  %6262 = vmatpush2.msra.mxu0 0.0
  %6263 = vmatprep.subr.mxu0 0.0
  %6264 = vmatpush2.msra.mxu0 0.0
  %6265 = vmatprep.subr.mxu0 0.0
  %6266 = vmatpush2.msra.mxu0 0.0
  %6267 = vmatprep.subr.mxu0 0.0
  %6268 = vmatpush2.msra.mxu0 0.0
  %6269 = vmatprep.subr.mxu0 0.0
  %6270 = vmatpush2.msra.mxu0 0.0
  %6271 = vmatprep.subr.mxu0 0.0
  %6272 = vmatpush2.msra.mxu0 0.0
  %6273 = vmatprep.subr.mxu0 0.0
  %6274 = vmatpush2.msra.mxu0 0.0
  %6275 = vmatprep.mubr.f32.mxu0 0.0
  %6276 = vmatmul.mubr.f32.gmra.mxu0 %v6135
  %v6277 = vpop.f32.mrf.mxu0
  %v6278 = vadd.f32 0.0, %v6277
  %v6279 = vpop.f32.mrf.mxu0
  %v6280 = vadd.f32 0.0, %v6279
  %6281 = vdwg.mxu0
  %v6282 = vadd.f32 %v6136, %v6207
  %v6283 = vadd.f32 %v6137, %v6209
  %v6284 = vadd.f32 %v6138, %v6278
  %v6285 = vadd.f32 %v6139, %v6280
  %v6286 = vxor.u32 %v6282, 2147483648
  %v6287 = vxor.u32 %v6283, 2147483648
  %v6288 = vxor.u32 %v6284, 2147483648
  %v6289 = vmul.f32 %v6286, 1.442695
  %v6290 = vpow.pop %v6289
  %v6291 = vmul.f32 %v6287, 1.442695
  %v6292 = vpow.pop %v6291
  %v6293 = vmul.f32 %v6288, 1.442695
  %v6294 = vpow.pop %v6293
  %v6295 = vadd.f32 %v6290, 1.0
  %v6296 = vadd.f32 %v6292, 1.0
  %v6297 = vadd.f32 %v6294, 1.0
  %v6298 = vrcp.pop %v6295
  %v6299 = vmul.f32 1.0, %v6298
  %v6300 = vrcp.pop %v6296
  %v6301 = vmul.f32 1.0, %v6300
  %v6302 = vrcp.pop %v6297
  %v6303 = vmul.f32 1.0, %v6302
  %v6304 = vtanh.pop %v6285
  %v6305 = vmul.f32 %v6301, %v6133
  %v6306 = vmul.f32 %v6299, %v6304
  %v6307 = vadd.f32 %v6305, %v6306
  %v6308 = vtanh.pop %v6307
  %v6309 = vmul.f32 %v6303, %v6308
  %v6310 = vld [vmem:[#allocation3 + $0x60] sm:$0xff]
  %v6311 = vld [vmem:[#allocation3 + $0x68] sm:$0xff]
  %v6312 = vld [vmem:[#allocation3 + $0x70] sm:$0xff]
  %v6313 = vld [vmem:[#allocation3 + $0x78] sm:$0xff]
  %6314 = vmatprep.subr.mxu0 %v5789
  %6315 = vmatpush1.msra.mxu0 %v5788
  %6316 = vmatprep.subr.mxu0 %v5785
  %6317 = vmatpush1.msra.mxu0 %v5784
  %6318 = vmatprep.subr.mxu0 %v5781
  %6319 = vmatpush1.msra.mxu0 %v5780
  %6320 = vmatprep.subr.mxu0 %v5777
  %6321 = vmatpush1.msra.mxu0 %v5776
  %6322 = vmatprep.subr.mxu0 %v5773
  %6323 = vmatpush1.msra.mxu0 %v5772
  %6324 = vmatprep.subr.mxu0 %v5769
  %6325 = vmatpush1.msra.mxu0 %v5768
  %6326 = vmatprep.subr.mxu0 %v5765
  %6327 = vmatpush1.msra.mxu0 %v5764
  %6328 = vmatprep.subr.mxu0 %v5761
  %6329 = vmatpush1.msra.mxu0 %v5760
  %6330 = vmatprep.subr.mxu0 %v5757
  %6331 = vmatpush1.msra.mxu0 %v5756
  %6332 = vmatprep.subr.mxu0 %v5753
  %6333 = vmatpush1.msra.mxu0 %v5752
  %6334 = vmatprep.subr.mxu0 %v5749
  %6335 = vmatpush1.msra.mxu0 %v5748
  %6336 = vmatprep.subr.mxu0 %v5745
  %6337 = vmatpush1.msra.mxu0 %v5744
  %6338 = vmatprep.subr.mxu0 %v5741
  %6339 = vmatpush1.msra.mxu0 %v5740
  %6340 = vmatprep.subr.mxu0 %v5737
  %6341 = vmatpush1.msra.mxu0 %v5736
  %6342 = vmatprep.subr.mxu0 %v5733
  %6343 = vmatpush1.msra.mxu0 %v5732
  %6344 = vmatprep.subr.mxu0 %v5729
  %6345 = vmatpush1.msra.mxu0 %v5728
  %6346 = vmatprep.subr.mxu0 0.0
  %6347 = vmatpush2.msra.mxu0 0.0
  %6348 = vmatprep.subr.mxu0 0.0
  %6349 = vmatpush2.msra.mxu0 0.0
  %6350 = vmatprep.subr.mxu0 0.0
  %6351 = vmatpush2.msra.mxu0 0.0
  %6352 = vmatprep.subr.mxu0 0.0
  %6353 = vmatpush2.msra.mxu0 0.0
  %6354 = vmatprep.subr.mxu0 0.0
  %6355 = vmatpush2.msra.mxu0 0.0
  %6356 = vmatprep.subr.mxu0 0.0
  %6357 = vmatpush2.msra.mxu0 0.0
  %6358 = vmatprep.subr.mxu0 0.0
  %6359 = vmatpush2.msra.mxu0 0.0
  %6360 = vmatprep.subr.mxu0 0.0
  %6361 = vmatpush2.msra.mxu0 0.0
  %6362 = vmatprep.subr.mxu0 0.0
  %6363 = vmatpush2.msra.mxu0 0.0
  %6364 = vmatprep.subr.mxu0 0.0
  %6365 = vmatpush2.msra.mxu0 0.0
  %6366 = vmatprep.subr.mxu0 0.0
  %6367 = vmatpush2.msra.mxu0 0.0
  %6368 = vmatprep.subr.mxu0 0.0
  %6369 = vmatpush2.msra.mxu0 0.0
  %6370 = vmatprep.subr.mxu0 0.0
  %6371 = vmatpush2.msra.mxu0 0.0
  %6372 = vmatprep.subr.mxu0 0.0
  %6373 = vmatpush2.msra.mxu0 0.0
  %6374 = vmatprep.subr.mxu0 0.0
  %6375 = vmatpush2.msra.mxu0 0.0
  %6376 = vmatprep.subr.mxu0 0.0
  %6377 = vmatpush2.msra.mxu0 0.0
  %6378 = vmatprep.mubr.f32.mxu0 0.0
  %6379 = vmatmul.mubr.f32.gmra.mxu0 %v6309
  %v6380 = vpop.f32.mrf.mxu0
  %v6381 = vadd.f32 0.0, %v6380
  %v6382 = vpop.f32.mrf.mxu0
  %v6383 = vadd.f32 0.0, %v6382
  %6384 = vdwg.mxu0
  %6385 = vmatprep.subr.mxu0 %v5791
  %6386 = vmatpush1.msra.mxu0 %v5790
  %6387 = vmatprep.subr.mxu0 %v5787
  %6388 = vmatpush1.msra.mxu0 %v5786
  %6389 = vmatprep.subr.mxu0 %v5783
  %6390 = vmatpush1.msra.mxu0 %v5782
  %6391 = vmatprep.subr.mxu0 %v5779
  %6392 = vmatpush1.msra.mxu0 %v5778
  %6393 = vmatprep.subr.mxu0 %v5775
  %6394 = vmatpush1.msra.mxu0 %v5774
  %6395 = vmatprep.subr.mxu0 %v5771
  %6396 = vmatpush1.msra.mxu0 %v5770
  %6397 = vmatprep.subr.mxu0 %v5767
  %6398 = vmatpush1.msra.mxu0 %v5766
  %6399 = vmatprep.subr.mxu0 %v5763
  %6400 = vmatpush1.msra.mxu0 %v5762
  %6401 = vmatprep.subr.mxu0 %v5759
  %6402 = vmatpush1.msra.mxu0 %v5758
  %6403 = vmatprep.subr.mxu0 %v5755
  %6404 = vmatpush1.msra.mxu0 %v5754
  %6405 = vmatprep.subr.mxu0 %v5751
  %6406 = vmatpush1.msra.mxu0 %v5750
  %6407 = vmatprep.subr.mxu0 %v5747
  %6408 = vmatpush1.msra.mxu0 %v5746
  %6409 = vmatprep.subr.mxu0 %v5743
  %6410 = vmatpush1.msra.mxu0 %v5742
  %6411 = vmatprep.subr.mxu0 %v5739
  %6412 = vmatpush1.msra.mxu0 %v5738
  %6413 = vmatprep.subr.mxu0 %v5735
  %6414 = vmatpush1.msra.mxu0 %v5734
  %6415 = vmatprep.subr.mxu0 %v5731
  %6416 = vmatpush1.msra.mxu0 %v5730
  %6417 = vmatprep.subr.mxu0 0.0
  %6418 = vmatpush2.msra.mxu0 0.0
  %6419 = vmatprep.subr.mxu0 0.0
  %6420 = vmatpush2.msra.mxu0 0.0
  %6421 = vmatprep.subr.mxu0 0.0
  %6422 = vmatpush2.msra.mxu0 0.0
  %6423 = vmatprep.subr.mxu0 0.0
  %6424 = vmatpush2.msra.mxu0 0.0
  %6425 = vmatprep.subr.mxu0 0.0
  %6426 = vmatpush2.msra.mxu0 0.0
  %6427 = vmatprep.subr.mxu0 0.0
  %6428 = vmatpush2.msra.mxu0 0.0
  %6429 = vmatprep.subr.mxu0 0.0
  %6430 = vmatpush2.msra.mxu0 0.0
  %6431 = vmatprep.subr.mxu0 0.0
  %6432 = vmatpush2.msra.mxu0 0.0
  %6433 = vmatprep.subr.mxu0 0.0
  %6434 = vmatpush2.msra.mxu0 0.0
  %6435 = vmatprep.subr.mxu0 0.0
  %6436 = vmatpush2.msra.mxu0 0.0
  %6437 = vmatprep.subr.mxu0 0.0
  %6438 = vmatpush2.msra.mxu0 0.0
  %6439 = vmatprep.subr.mxu0 0.0
  %6440 = vmatpush2.msra.mxu0 0.0
  %6441 = vmatprep.subr.mxu0 0.0
  %6442 = vmatpush2.msra.mxu0 0.0
  %6443 = vmatprep.subr.mxu0 0.0
  %6444 = vmatpush2.msra.mxu0 0.0
  %6445 = vmatprep.subr.mxu0 0.0
  %6446 = vmatpush2.msra.mxu0 0.0
  %6447 = vmatprep.subr.mxu0 0.0
  %6448 = vmatpush2.msra.mxu0 0.0
  %6449 = vmatprep.mubr.f32.mxu0 0.0
  %6450 = vmatmul.mubr.f32.gmra.mxu0 %v6309
  %v6451 = vpop.f32.mrf.mxu0
  %v6452 = vadd.f32 0.0, %v6451
  %v6453 = vpop.f32.mrf.mxu0
  %v6454 = vadd.f32 0.0, %v6453
  %6455 = vdwg.mxu0
  %v6456 = vadd.f32 %v6310, %v6381
  %v6457 = vadd.f32 %v6311, %v6383
  %v6458 = vadd.f32 %v6312, %v6452
  %v6459 = vadd.f32 %v6313, %v6454
  %v6460 = vxor.u32 %v6456, 2147483648
  %v6461 = vxor.u32 %v6457, 2147483648
  %v6462 = vxor.u32 %v6458, 2147483648
  %v6463 = vmul.f32 %v6460, 1.442695
  %v6464 = vpow.pop %v6463
  %v6465 = vmul.f32 %v6461, 1.442695
  %v6466 = vpow.pop %v6465
  %v6467 = vmul.f32 %v6462, 1.442695
  %v6468 = vpow.pop %v6467
  %v6469 = vadd.f32 %v6464, 1.0
  %v6470 = vadd.f32 %v6466, 1.0
  %v6471 = vadd.f32 %v6468, 1.0
  %v6472 = vrcp.pop %v6469
  %v6473 = vmul.f32 1.0, %v6472
  %v6474 = vrcp.pop %v6470
  %v6475 = vmul.f32 1.0, %v6474
  %v6476 = vrcp.pop %v6471
  %v6477 = vmul.f32 1.0, %v6476
  %v6478 = vtanh.pop %v6459
  %v6479 = vmul.f32 %v6475, %v6307
  %v6480 = vmul.f32 %v6473, %v6478
  %v6481 = vadd.f32 %v6479, %v6480
  %v6482 = vtanh.pop %v6481
  %v6483 = vmul.f32 %v6477, %v6482
  %v6484 = vld [vmem:[#allocation3 + $0x80] sm:$0xff]
  %v6485 = vld [vmem:[#allocation3 + $0x88] sm:$0xff]
  %v6486 = vld [vmem:[#allocation3 + $0x90] sm:$0xff]
  %v6487 = vld [vmem:[#allocation3 + $0x98] sm:$0xff]
  %6488 = vmatprep.subr.mxu0 %v5789
  %6489 = vmatpush1.msra.mxu0 %v5788
  %6490 = vmatprep.subr.mxu0 %v5785
  %6491 = vmatpush1.msra.mxu0 %v5784
  %6492 = vmatprep.subr.mxu0 %v5781
  %6493 = vmatpush1.msra.mxu0 %v5780
  %6494 = vmatprep.subr.mxu0 %v5777
  %6495 = vmatpush1.msra.mxu0 %v5776
  %6496 = vmatprep.subr.mxu0 %v5773
  %6497 = vmatpush1.msra.mxu0 %v5772
  %6498 = vmatprep.subr.mxu0 %v5769
  %6499 = vmatpush1.msra.mxu0 %v5768
  %6500 = vmatprep.subr.mxu0 %v5765
  %6501 = vmatpush1.msra.mxu0 %v5764
  %6502 = vmatprep.subr.mxu0 %v5761
  %6503 = vmatpush1.msra.mxu0 %v5760
  %6504 = vmatprep.subr.mxu0 %v5757
  %6505 = vmatpush1.msra.mxu0 %v5756
  %6506 = vmatprep.subr.mxu0 %v5753
  %6507 = vmatpush1.msra.mxu0 %v5752
  %6508 = vmatprep.subr.mxu0 %v5749
  %6509 = vmatpush1.msra.mxu0 %v5748
  %6510 = vmatprep.subr.mxu0 %v5745
  %6511 = vmatpush1.msra.mxu0 %v5744
  %6512 = vmatprep.subr.mxu0 %v5741
  %6513 = vmatpush1.msra.mxu0 %v5740
  %6514 = vmatprep.subr.mxu0 %v5737
  %6515 = vmatpush1.msra.mxu0 %v5736
  %6516 = vmatprep.subr.mxu0 %v5733
  %6517 = vmatpush1.msra.mxu0 %v5732
  %6518 = vmatprep.subr.mxu0 %v5729
  %6519 = vmatpush1.msra.mxu0 %v5728
  %6520 = vmatprep.subr.mxu0 0.0
  %6521 = vmatpush2.msra.mxu0 0.0
  %6522 = vmatprep.subr.mxu0 0.0
  %6523 = vmatpush2.msra.mxu0 0.0
  %6524 = vmatprep.subr.mxu0 0.0
  %6525 = vmatpush2.msra.mxu0 0.0
  %6526 = vmatprep.subr.mxu0 0.0
  %6527 = vmatpush2.msra.mxu0 0.0
  %6528 = vmatprep.subr.mxu0 0.0
  %6529 = vmatpush2.msra.mxu0 0.0
  %6530 = vmatprep.subr.mxu0 0.0
  %6531 = vmatpush2.msra.mxu0 0.0
  %6532 = vmatprep.subr.mxu0 0.0
  %6533 = vmatpush2.msra.mxu0 0.0
  %6534 = vmatprep.subr.mxu0 0.0
  %6535 = vmatpush2.msra.mxu0 0.0
  %6536 = vmatprep.subr.mxu0 0.0
  %6537 = vmatpush2.msra.mxu0 0.0
  %6538 = vmatprep.subr.mxu0 0.0
  %6539 = vmatpush2.msra.mxu0 0.0
  %6540 = vmatprep.subr.mxu0 0.0
  %6541 = vmatpush2.msra.mxu0 0.0
  %6542 = vmatprep.subr.mxu0 0.0
  %6543 = vmatpush2.msra.mxu0 0.0
  %6544 = vmatprep.subr.mxu0 0.0
  %6545 = vmatpush2.msra.mxu0 0.0
  %6546 = vmatprep.subr.mxu0 0.0
  %6547 = vmatpush2.msra.mxu0 0.0
  %6548 = vmatprep.subr.mxu0 0.0
  %6549 = vmatpush2.msra.mxu0 0.0
  %6550 = vmatprep.subr.mxu0 0.0
  %6551 = vmatpush2.msra.mxu0 0.0
  %6552 = vmatprep.mubr.f32.mxu0 0.0
  %6553 = vmatmul.mubr.f32.gmra.mxu0 %v6483
  %v6554 = vpop.f32.mrf.mxu0
  %v6555 = vadd.f32 0.0, %v6554
  %v6556 = vpop.f32.mrf.mxu0
  %v6557 = vadd.f32 0.0, %v6556
  %6558 = vdwg.mxu0
  %6559 = vmatprep.subr.mxu0 %v5791
  %6560 = vmatpush1.msra.mxu0 %v5790
  %6561 = vmatprep.subr.mxu0 %v5787
  %6562 = vmatpush1.msra.mxu0 %v5786
  %6563 = vmatprep.subr.mxu0 %v5783
  %6564 = vmatpush1.msra.mxu0 %v5782
  %6565 = vmatprep.subr.mxu0 %v5779
  %6566 = vmatpush1.msra.mxu0 %v5778
  %6567 = vmatprep.subr.mxu0 %v5775
  %6568 = vmatpush1.msra.mxu0 %v5774
  %6569 = vmatprep.subr.mxu0 %v5771
  %6570 = vmatpush1.msra.mxu0 %v5770
  %6571 = vmatprep.subr.mxu0 %v5767
  %6572 = vmatpush1.msra.mxu0 %v5766
  %6573 = vmatprep.subr.mxu0 %v5763
  %6574 = vmatpush1.msra.mxu0 %v5762
  %6575 = vmatprep.subr.mxu0 %v5759
  %6576 = vmatpush1.msra.mxu0 %v5758
  %6577 = vmatprep.subr.mxu0 %v5755
  %6578 = vmatpush1.msra.mxu0 %v5754
  %6579 = vmatprep.subr.mxu0 %v5751
  %6580 = vmatpush1.msra.mxu0 %v5750
  %6581 = vmatprep.subr.mxu0 %v5747
  %6582 = vmatpush1.msra.mxu0 %v5746
  %6583 = vmatprep.subr.mxu0 %v5743
  %6584 = vmatpush1.msra.mxu0 %v5742
  %6585 = vmatprep.subr.mxu0 %v5739
  %6586 = vmatpush1.msra.mxu0 %v5738
  %6587 = vmatprep.subr.mxu0 %v5735
  %6588 = vmatpush1.msra.mxu0 %v5734
  %6589 = vmatprep.subr.mxu0 %v5731
  %6590 = vmatpush1.msra.mxu0 %v5730
  %6591 = vmatprep.subr.mxu0 0.0
  %6592 = vmatpush2.msra.mxu0 0.0
  %6593 = vmatprep.subr.mxu0 0.0
  %6594 = vmatpush2.msra.mxu0 0.0
  %6595 = vmatprep.subr.mxu0 0.0
  %6596 = vmatpush2.msra.mxu0 0.0
  %6597 = vmatprep.subr.mxu0 0.0
  %6598 = vmatpush2.msra.mxu0 0.0
  %6599 = vmatprep.subr.mxu0 0.0
  %6600 = vmatpush2.msra.mxu0 0.0
  %6601 = vmatprep.subr.mxu0 0.0
  %6602 = vmatpush2.msra.mxu0 0.0
  %6603 = vmatprep.subr.mxu0 0.0
  %6604 = vmatpush2.msra.mxu0 0.0
  %6605 = vmatprep.subr.mxu0 0.0
  %6606 = vmatpush2.msra.mxu0 0.0
  %6607 = vmatprep.subr.mxu0 0.0
  %6608 = vmatpush2.msra.mxu0 0.0
  %6609 = vmatprep.subr.mxu0 0.0
  %6610 = vmatpush2.msra.mxu0 0.0
  %6611 = vmatprep.subr.mxu0 0.0
  %6612 = vmatpush2.msra.mxu0 0.0
  %6613 = vmatprep.subr.mxu0 0.0
  %6614 = vmatpush2.msra.mxu0 0.0
  %6615 = vmatprep.subr.mxu0 0.0
  %6616 = vmatpush2.msra.mxu0 0.0
  %6617 = vmatprep.subr.mxu0 0.0
  %6618 = vmatpush2.msra.mxu0 0.0
  %6619 = vmatprep.subr.mxu0 0.0
  %6620 = vmatpush2.msra.mxu0 0.0
  %6621 = vmatprep.subr.mxu0 0.0
  %6622 = vmatpush2.msra.mxu0 0.0
  %6623 = vmatprep.mubr.f32.mxu0 0.0
  %6624 = vmatmul.mubr.f32.gmra.mxu0 %v6483
  %v6625 = vpop.f32.mrf.mxu0
  %v6626 = vadd.f32 0.0, %v6625
  %v6627 = vpop.f32.mrf.mxu0
  %v6628 = vadd.f32 0.0, %v6627
  %6629 = vdwg.mxu0
  %v6630 = vadd.f32 %v6484, %v6555
  %v6631 = vadd.f32 %v6485, %v6557
  %v6632 = vadd.f32 %v6486, %v6626
  %v6633 = vadd.f32 %v6487, %v6628
  %v6634 = vxor.u32 %v6630, 2147483648
  %v6635 = vxor.u32 %v6631, 2147483648
  %v6636 = vxor.u32 %v6632, 2147483648
  %v6637 = vmul.f32 %v6634, 1.442695
  %v6638 = vpow.pop %v6637
  %v6639 = vmul.f32 %v6635, 1.442695
  %v6640 = vpow.pop %v6639
  %v6641 = vmul.f32 %v6636, 1.442695
  %v6642 = vpow.pop %v6641
  %v6643 = vadd.f32 %v6638, 1.0
  %v6644 = vadd.f32 %v6640, 1.0
  %v6645 = vadd.f32 %v6642, 1.0
  %v6646 = vrcp.pop %v6643
  %v6647 = vmul.f32 1.0, %v6646
  %v6648 = vrcp.pop %v6644
  %v6649 = vmul.f32 1.0, %v6648
  %v6650 = vrcp.pop %v6645
  %v6651 = vmul.f32 1.0, %v6650
  %v6652 = vtanh.pop %v6633
  %v6653 = vmul.f32 %v6649, %v6481
  %v6654 = vmul.f32 %v6647, %v6652
  %v6655 = vadd.f32 %v6653, %v6654
  %v6656 = vtanh.pop %v6655
  %v6657 = vmul.f32 %v6651, %v6656
  %v6658 = vld [vmem:[#allocation3 + $0xa0] sm:$0xff]
  %v6659 = vld [vmem:[#allocation3 + $0xa8] sm:$0xff]
  %v6660 = vld [vmem:[#allocation3 + $0xb0] sm:$0xff]
  %v6661 = vld [vmem:[#allocation3 + $0xb8] sm:$0xff]
  %6662 = vmatprep.subr.mxu0 %v5789
  %6663 = vmatpush1.msra.mxu0 %v5788
  %6664 = vmatprep.subr.mxu0 %v5785
  %6665 = vmatpush1.msra.mxu0 %v5784
  %6666 = vmatprep.subr.mxu0 %v5781
  %6667 = vmatpush1.msra.mxu0 %v5780
  %6668 = vmatprep.subr.mxu0 %v5777
  %6669 = vmatpush1.msra.mxu0 %v5776
  %6670 = vmatprep.subr.mxu0 %v5773
  %6671 = vmatpush1.msra.mxu0 %v5772
  %6672 = vmatprep.subr.mxu0 %v5769
  %6673 = vmatpush1.msra.mxu0 %v5768
  %6674 = vmatprep.subr.mxu0 %v5765
  %6675 = vmatpush1.msra.mxu0 %v5764
  %6676 = vmatprep.subr.mxu0 %v5761
  %6677 = vmatpush1.msra.mxu0 %v5760
  %6678 = vmatprep.subr.mxu0 %v5757
  %6679 = vmatpush1.msra.mxu0 %v5756
  %6680 = vmatprep.subr.mxu0 %v5753
  %6681 = vmatpush1.msra.mxu0 %v5752
  %6682 = vmatprep.subr.mxu0 %v5749
  %6683 = vmatpush1.msra.mxu0 %v5748
  %6684 = vmatprep.subr.mxu0 %v5745
  %6685 = vmatpush1.msra.mxu0 %v5744
  %6686 = vmatprep.subr.mxu0 %v5741
  %6687 = vmatpush1.msra.mxu0 %v5740
  %6688 = vmatprep.subr.mxu0 %v5737
  %6689 = vmatpush1.msra.mxu0 %v5736
  %6690 = vmatprep.subr.mxu0 %v5733
  %6691 = vmatpush1.msra.mxu0 %v5732
  %6692 = vmatprep.subr.mxu0 %v5729
  %6693 = vmatpush1.msra.mxu0 %v5728
  %6694 = vmatprep.subr.mxu0 0.0
  %6695 = vmatpush2.msra.mxu0 0.0
  %6696 = vmatprep.subr.mxu0 0.0
  %6697 = vmatpush2.msra.mxu0 0.0
  %6698 = vmatprep.subr.mxu0 0.0
  %6699 = vmatpush2.msra.mxu0 0.0
  %6700 = vmatprep.subr.mxu0 0.0
  %6701 = vmatpush2.msra.mxu0 0.0
  %6702 = vmatprep.subr.mxu0 0.0
  %6703 = vmatpush2.msra.mxu0 0.0
  %6704 = vmatprep.subr.mxu0 0.0
  %6705 = vmatpush2.msra.mxu0 0.0
  %6706 = vmatprep.subr.mxu0 0.0
  %6707 = vmatpush2.msra.mxu0 0.0
  %6708 = vmatprep.subr.mxu0 0.0
  %6709 = vmatpush2.msra.mxu0 0.0
  %6710 = vmatprep.subr.mxu0 0.0
  %6711 = vmatpush2.msra.mxu0 0.0
  %6712 = vmatprep.subr.mxu0 0.0
  %6713 = vmatpush2.msra.mxu0 0.0
  %6714 = vmatprep.subr.mxu0 0.0
  %6715 = vmatpush2.msra.mxu0 0.0
  %6716 = vmatprep.subr.mxu0 0.0
  %6717 = vmatpush2.msra.mxu0 0.0
  %6718 = vmatprep.subr.mxu0 0.0
  %6719 = vmatpush2.msra.mxu0 0.0
  %6720 = vmatprep.subr.mxu0 0.0
  %6721 = vmatpush2.msra.mxu0 0.0
  %6722 = vmatprep.subr.mxu0 0.0
  %6723 = vmatpush2.msra.mxu0 0.0
  %6724 = vmatprep.subr.mxu0 0.0
  %6725 = vmatpush2.msra.mxu0 0.0
  %6726 = vmatprep.mubr.f32.mxu0 0.0
  %6727 = vmatmul.mubr.f32.gmra.mxu0 %v6657
  %v6728 = vpop.f32.mrf.mxu0
  %v6729 = vadd.f32 0.0, %v6728
  %v6730 = vpop.f32.mrf.mxu0
  %v6731 = vadd.f32 0.0, %v6730
  %6732 = vdwg.mxu0
  %6733 = vmatprep.subr.mxu0 %v5791
  %6734 = vmatpush1.msra.mxu0 %v5790
  %6735 = vmatprep.subr.mxu0 %v5787
  %6736 = vmatpush1.msra.mxu0 %v5786
  %6737 = vmatprep.subr.mxu0 %v5783
  %6738 = vmatpush1.msra.mxu0 %v5782
  %6739 = vmatprep.subr.mxu0 %v5779
  %6740 = vmatpush1.msra.mxu0 %v5778
  %6741 = vmatprep.subr.mxu0 %v5775
  %6742 = vmatpush1.msra.mxu0 %v5774
  %6743 = vmatprep.subr.mxu0 %v5771
  %6744 = vmatpush1.msra.mxu0 %v5770
  %6745 = vmatprep.subr.mxu0 %v5767
  %6746 = vmatpush1.msra.mxu0 %v5766
  %6747 = vmatprep.subr.mxu0 %v5763
  %6748 = vmatpush1.msra.mxu0 %v5762
  %6749 = vmatprep.subr.mxu0 %v5759
  %6750 = vmatpush1.msra.mxu0 %v5758
  %6751 = vmatprep.subr.mxu0 %v5755
  %6752 = vmatpush1.msra.mxu0 %v5754
  %6753 = vmatprep.subr.mxu0 %v5751
  %6754 = vmatpush1.msra.mxu0 %v5750
  %6755 = vmatprep.subr.mxu0 %v5747
  %6756 = vmatpush1.msra.mxu0 %v5746
  %6757 = vmatprep.subr.mxu0 %v5743
  %6758 = vmatpush1.msra.mxu0 %v5742
  %6759 = vmatprep.subr.mxu0 %v5739
  %6760 = vmatpush1.msra.mxu0 %v5738
  %6761 = vmatprep.subr.mxu0 %v5735
  %6762 = vmatpush1.msra.mxu0 %v5734
  %6763 = vmatprep.subr.mxu0 %v5731
  %6764 = vmatpush1.msra.mxu0 %v5730
  %6765 = vmatprep.subr.mxu0 0.0
  %6766 = vmatpush2.msra.mxu0 0.0
  %6767 = vmatprep.subr.mxu0 0.0
  %6768 = vmatpush2.msra.mxu0 0.0
  %6769 = vmatprep.subr.mxu0 0.0
  %6770 = vmatpush2.msra.mxu0 0.0
  %6771 = vmatprep.subr.mxu0 0.0
  %6772 = vmatpush2.msra.mxu0 0.0
  %6773 = vmatprep.subr.mxu0 0.0
  %6774 = vmatpush2.msra.mxu0 0.0
  %6775 = vmatprep.subr.mxu0 0.0
  %6776 = vmatpush2.msra.mxu0 0.0
  %6777 = vmatprep.subr.mxu0 0.0
  %6778 = vmatpush2.msra.mxu0 0.0
  %6779 = vmatprep.subr.mxu0 0.0
  %6780 = vmatpush2.msra.mxu0 0.0
  %6781 = vmatprep.subr.mxu0 0.0
  %6782 = vmatpush2.msra.mxu0 0.0
  %6783 = vmatprep.subr.mxu0 0.0
  %6784 = vmatpush2.msra.mxu0 0.0
  %6785 = vmatprep.subr.mxu0 0.0
  %6786 = vmatpush2.msra.mxu0 0.0
  %6787 = vmatprep.subr.mxu0 0.0
  %6788 = vmatpush2.msra.mxu0 0.0
  %6789 = vmatprep.subr.mxu0 0.0
  %6790 = vmatpush2.msra.mxu0 0.0
  %6791 = vmatprep.subr.mxu0 0.0
  %6792 = vmatpush2.msra.mxu0 0.0
  %6793 = vmatprep.subr.mxu0 0.0
  %6794 = vmatpush2.msra.mxu0 0.0
  %6795 = vmatprep.subr.mxu0 0.0
  %6796 = vmatpush2.msra.mxu0 0.0
  %6797 = vmatprep.mubr.f32.mxu0 0.0
  %6798 = vmatmul.mubr.f32.gmra.mxu0 %v6657
  %v6799 = vpop.f32.mrf.mxu0
  %v6800 = vadd.f32 0.0, %v6799
  %v6801 = vpop.f32.mrf.mxu0
  %v6802 = vadd.f32 0.0, %v6801
  %6803 = vdwg.mxu0
  %v6804 = vadd.f32 %v6658, %v6729
  %v6805 = vadd.f32 %v6659, %v6731
  %v6806 = vadd.f32 %v6660, %v6800
  %v6807 = vadd.f32 %v6661, %v6802
  %v6808 = vxor.u32 %v6804, 2147483648
  %v6809 = vxor.u32 %v6805, 2147483648
  %v6810 = vxor.u32 %v6806, 2147483648
  %v6811 = vmul.f32 %v6808, 1.442695
  %v6812 = vpow.pop %v6811
  %v6813 = vmul.f32 %v6809, 1.442695
  %v6814 = vpow.pop %v6813
  %v6815 = vmul.f32 %v6810, 1.442695
  %v6816 = vpow.pop %v6815
  %v6817 = vadd.f32 %v6812, 1.0
  %v6818 = vadd.f32 %v6814, 1.0
  %v6819 = vadd.f32 %v6816, 1.0
  %v6820 = vrcp.pop %v6817
  %v6821 = vmul.f32 1.0, %v6820
  %v6822 = vrcp.pop %v6818
  %v6823 = vmul.f32 1.0, %v6822
  %v6824 = vrcp.pop %v6819
  %v6825 = vmul.f32 1.0, %v6824
  %v6826 = vtanh.pop %v6807
  %v6827 = vmul.f32 %v6823, %v6655
  %v6828 = vmul.f32 %v6821, %v6826
  %v6829 = vadd.f32 %v6827, %v6828
  %v6830 = vtanh.pop %v6829
  %v6831 = vmul.f32 %v6825, %v6830
  %v6832 = vld [vmem:[#allocation3 + $0xc0] sm:$0xff]
  %v6833 = vld [vmem:[#allocation3 + $0xc8] sm:$0xff]
  %v6834 = vld [vmem:[#allocation3 + $0xd0] sm:$0xff]
  %v6835 = vld [vmem:[#allocation3 + $0xd8] sm:$0xff]
  %6836 = vmatprep.subr.mxu0 %v5789
  %6837 = vmatpush1.msra.mxu0 %v5788
  %6838 = vmatprep.subr.mxu0 %v5785
  %6839 = vmatpush1.msra.mxu0 %v5784
  %6840 = vmatprep.subr.mxu0 %v5781
  %6841 = vmatpush1.msra.mxu0 %v5780
  %6842 = vmatprep.subr.mxu0 %v5777
  %6843 = vmatpush1.msra.mxu0 %v5776
  %6844 = vmatprep.subr.mxu0 %v5773
  %6845 = vmatpush1.msra.mxu0 %v5772
  %6846 = vmatprep.subr.mxu0 %v5769
  %6847 = vmatpush1.msra.mxu0 %v5768
  %6848 = vmatprep.subr.mxu0 %v5765
  %6849 = vmatpush1.msra.mxu0 %v5764
  %6850 = vmatprep.subr.mxu0 %v5761
  %6851 = vmatpush1.msra.mxu0 %v5760
  %6852 = vmatprep.subr.mxu0 %v5757
  %6853 = vmatpush1.msra.mxu0 %v5756
  %6854 = vmatprep.subr.mxu0 %v5753
  %6855 = vmatpush1.msra.mxu0 %v5752
  %6856 = vmatprep.subr.mxu0 %v5749
  %6857 = vmatpush1.msra.mxu0 %v5748
  %6858 = vmatprep.subr.mxu0 %v5745
  %6859 = vmatpush1.msra.mxu0 %v5744
  %6860 = vmatprep.subr.mxu0 %v5741
  %6861 = vmatpush1.msra.mxu0 %v5740
  %6862 = vmatprep.subr.mxu0 %v5737
  %6863 = vmatpush1.msra.mxu0 %v5736
  %6864 = vmatprep.subr.mxu0 %v5733
  %6865 = vmatpush1.msra.mxu0 %v5732
  %6866 = vmatprep.subr.mxu0 %v5729
  %6867 = vmatpush1.msra.mxu0 %v5728
  %6868 = vmatprep.subr.mxu0 0.0
  %6869 = vmatpush2.msra.mxu0 0.0
  %6870 = vmatprep.subr.mxu0 0.0
  %6871 = vmatpush2.msra.mxu0 0.0
  %6872 = vmatprep.subr.mxu0 0.0
  %6873 = vmatpush2.msra.mxu0 0.0
  %6874 = vmatprep.subr.mxu0 0.0
  %6875 = vmatpush2.msra.mxu0 0.0
  %6876 = vmatprep.subr.mxu0 0.0
  %6877 = vmatpush2.msra.mxu0 0.0
  %6878 = vmatprep.subr.mxu0 0.0
  %6879 = vmatpush2.msra.mxu0 0.0
  %6880 = vmatprep.subr.mxu0 0.0
  %6881 = vmatpush2.msra.mxu0 0.0
  %6882 = vmatprep.subr.mxu0 0.0
  %6883 = vmatpush2.msra.mxu0 0.0
  %6884 = vmatprep.subr.mxu0 0.0
  %6885 = vmatpush2.msra.mxu0 0.0
  %6886 = vmatprep.subr.mxu0 0.0
  %6887 = vmatpush2.msra.mxu0 0.0
  %6888 = vmatprep.subr.mxu0 0.0
  %6889 = vmatpush2.msra.mxu0 0.0
  %6890 = vmatprep.subr.mxu0 0.0
  %6891 = vmatpush2.msra.mxu0 0.0
  %6892 = vmatprep.subr.mxu0 0.0
  %6893 = vmatpush2.msra.mxu0 0.0
  %6894 = vmatprep.subr.mxu0 0.0
  %6895 = vmatpush2.msra.mxu0 0.0
  %6896 = vmatprep.subr.mxu0 0.0
  %6897 = vmatpush2.msra.mxu0 0.0
  %6898 = vmatprep.subr.mxu0 0.0
  %6899 = vmatpush2.msra.mxu0 0.0
  %6900 = vmatprep.mubr.f32.mxu0 0.0
  %6901 = vmatmul.mubr.f32.gmra.mxu0 %v6831
  %v6902 = vpop.f32.mrf.mxu0
  %v6903 = vadd.f32 0.0, %v6902
  %v6904 = vpop.f32.mrf.mxu0
  %v6905 = vadd.f32 0.0, %v6904
  %6906 = vdwg.mxu0
  %6907 = vmatprep.subr.mxu0 %v5791
  %6908 = vmatpush1.msra.mxu0 %v5790
  %6909 = vmatprep.subr.mxu0 %v5787
  %6910 = vmatpush1.msra.mxu0 %v5786
  %6911 = vmatprep.subr.mxu0 %v5783
  %6912 = vmatpush1.msra.mxu0 %v5782
  %6913 = vmatprep.subr.mxu0 %v5779
  %6914 = vmatpush1.msra.mxu0 %v5778
  %6915 = vmatprep.subr.mxu0 %v5775
  %6916 = vmatpush1.msra.mxu0 %v5774
  %6917 = vmatprep.subr.mxu0 %v5771
  %6918 = vmatpush1.msra.mxu0 %v5770
  %6919 = vmatprep.subr.mxu0 %v5767
  %6920 = vmatpush1.msra.mxu0 %v5766
  %6921 = vmatprep.subr.mxu0 %v5763
  %6922 = vmatpush1.msra.mxu0 %v5762
  %6923 = vmatprep.subr.mxu0 %v5759
  %6924 = vmatpush1.msra.mxu0 %v5758
  %6925 = vmatprep.subr.mxu0 %v5755
  %6926 = vmatpush1.msra.mxu0 %v5754
  %6927 = vmatprep.subr.mxu0 %v5751
  %6928 = vmatpush1.msra.mxu0 %v5750
  %6929 = vmatprep.subr.mxu0 %v5747
  %6930 = vmatpush1.msra.mxu0 %v5746
  %6931 = vmatprep.subr.mxu0 %v5743
  %6932 = vmatpush1.msra.mxu0 %v5742
  %6933 = vmatprep.subr.mxu0 %v5739
  %6934 = vmatpush1.msra.mxu0 %v5738
  %6935 = vmatprep.subr.mxu0 %v5735
  %6936 = vmatpush1.msra.mxu0 %v5734
  %6937 = vmatprep.subr.mxu0 %v5731
  %6938 = vmatpush1.msra.mxu0 %v5730
  %6939 = vmatprep.subr.mxu0 0.0
  %6940 = vmatpush2.msra.mxu0 0.0
  %6941 = vmatprep.subr.mxu0 0.0
  %6942 = vmatpush2.msra.mxu0 0.0
  %6943 = vmatprep.subr.mxu0 0.0
  %6944 = vmatpush2.msra.mxu0 0.0
  %6945 = vmatprep.subr.mxu0 0.0
  %6946 = vmatpush2.msra.mxu0 0.0
  %6947 = vmatprep.subr.mxu0 0.0
  %6948 = vmatpush2.msra.mxu0 0.0
  %6949 = vmatprep.subr.mxu0 0.0
  %6950 = vmatpush2.msra.mxu0 0.0
  %6951 = vmatprep.subr.mxu0 0.0
  %6952 = vmatpush2.msra.mxu0 0.0
  %6953 = vmatprep.subr.mxu0 0.0
  %6954 = vmatpush2.msra.mxu0 0.0
  %6955 = vmatprep.subr.mxu0 0.0
  %6956 = vmatpush2.msra.mxu0 0.0
  %6957 = vmatprep.subr.mxu0 0.0
  %6958 = vmatpush2.msra.mxu0 0.0
  %6959 = vmatprep.subr.mxu0 0.0
  %6960 = vmatpush2.msra.mxu0 0.0
  %6961 = vmatprep.subr.mxu0 0.0
  %6962 = vmatpush2.msra.mxu0 0.0
  %6963 = vmatprep.subr.mxu0 0.0
  %6964 = vmatpush2.msra.mxu0 0.0
  %6965 = vmatprep.subr.mxu0 0.0
  %6966 = vmatpush2.msra.mxu0 0.0
  %6967 = vmatprep.subr.mxu0 0.0
  %6968 = vmatpush2.msra.mxu0 0.0
  %6969 = vmatprep.subr.mxu0 0.0
  %6970 = vmatpush2.msra.mxu0 0.0
  %6971 = vmatprep.mubr.f32.mxu0 0.0
  %6972 = vmatmul.mubr.f32.gmra.mxu0 %v6831
  %v6973 = vpop.f32.mrf.mxu0
  %v6974 = vadd.f32 0.0, %v6973
  %v6975 = vpop.f32.mrf.mxu0
  %v6976 = vadd.f32 0.0, %v6975
  %6977 = vdwg.mxu0
  %v6978 = vadd.f32 %v6832, %v6903
  %v6979 = vadd.f32 %v6833, %v6905
  %v6980 = vadd.f32 %v6834, %v6974
  %v6981 = vadd.f32 %v6835, %v6976
  %v6982 = vxor.u32 %v6978, 2147483648
  %v6983 = vxor.u32 %v6979, 2147483648
  %v6984 = vxor.u32 %v6980, 2147483648
  %v6985 = vmul.f32 %v6982, 1.442695
  %v6986 = vpow.pop %v6985
  %v6987 = vmul.f32 %v6983, 1.442695
  %v6988 = vpow.pop %v6987
  %v6989 = vmul.f32 %v6984, 1.442695
  %v6990 = vpow.pop %v6989
  %v6991 = vadd.f32 %v6986, 1.0
  %v6992 = vadd.f32 %v6988, 1.0
  %v6993 = vadd.f32 %v6990, 1.0
  %v6994 = vrcp.pop %v6991
  %v6995 = vmul.f32 1.0, %v6994
  %v6996 = vrcp.pop %v6992
  %v6997 = vmul.f32 1.0, %v6996
  %v6998 = vrcp.pop %v6993
  %v6999 = vmul.f32 1.0, %v6998
  %v7000 = vtanh.pop %v6981
  %v7001 = vmul.f32 %v6997, %v6829
  %v7002 = vmul.f32 %v6995, %v7000
  %v7003 = vadd.f32 %v7001, %v7002
  %v7004 = vtanh.pop %v7003
  %v7005 = vmul.f32 %v6999, %v7004
  %v7006 = vld [vmem:[#allocation3 + $0xe0] sm:$0xff]
  %v7007 = vld [vmem:[#allocation3 + $0xe8] sm:$0xff]
  %v7008 = vld [vmem:[#allocation3 + $0xf0] sm:$0xff]
  %v7009 = vld [vmem:[#allocation3 + $0xf8] sm:$0xff]
  %7010 = vmatprep.subr.mxu0 %v5789
  %7011 = vmatpush1.msra.mxu0 %v5788
  %7012 = vmatprep.subr.mxu0 %v5785
  %7013 = vmatpush1.msra.mxu0 %v5784
  %7014 = vmatprep.subr.mxu0 %v5781
  %7015 = vmatpush1.msra.mxu0 %v5780
  %7016 = vmatprep.subr.mxu0 %v5777
  %7017 = vmatpush1.msra.mxu0 %v5776
  %7018 = vmatprep.subr.mxu0 %v5773
  %7019 = vmatpush1.msra.mxu0 %v5772
  %7020 = vmatprep.subr.mxu0 %v5769
  %7021 = vmatpush1.msra.mxu0 %v5768
  %7022 = vmatprep.subr.mxu0 %v5765
  %7023 = vmatpush1.msra.mxu0 %v5764
  %7024 = vmatprep.subr.mxu0 %v5761
  %7025 = vmatpush1.msra.mxu0 %v5760
  %7026 = vmatprep.subr.mxu0 %v5757
  %7027 = vmatpush1.msra.mxu0 %v5756
  %7028 = vmatprep.subr.mxu0 %v5753
  %7029 = vmatpush1.msra.mxu0 %v5752
  %7030 = vmatprep.subr.mxu0 %v5749
  %7031 = vmatpush1.msra.mxu0 %v5748
  %7032 = vmatprep.subr.mxu0 %v5745
  %7033 = vmatpush1.msra.mxu0 %v5744
  %7034 = vmatprep.subr.mxu0 %v5741
  %7035 = vmatpush1.msra.mxu0 %v5740
  %7036 = vmatprep.subr.mxu0 %v5737
  %7037 = vmatpush1.msra.mxu0 %v5736
  %7038 = vmatprep.subr.mxu0 %v5733
  %7039 = vmatpush1.msra.mxu0 %v5732
  %7040 = vmatprep.subr.mxu0 %v5729
  %7041 = vmatpush1.msra.mxu0 %v5728
  %7042 = vmatprep.subr.mxu0 0.0
  %7043 = vmatpush2.msra.mxu0 0.0
  %7044 = vmatprep.subr.mxu0 0.0
  %7045 = vmatpush2.msra.mxu0 0.0
  %7046 = vmatprep.subr.mxu0 0.0
  %7047 = vmatpush2.msra.mxu0 0.0
  %7048 = vmatprep.subr.mxu0 0.0
  %7049 = vmatpush2.msra.mxu0 0.0
  %7050 = vmatprep.subr.mxu0 0.0
  %7051 = vmatpush2.msra.mxu0 0.0
  %7052 = vmatprep.subr.mxu0 0.0
  %7053 = vmatpush2.msra.mxu0 0.0
  %7054 = vmatprep.subr.mxu0 0.0
  %7055 = vmatpush2.msra.mxu0 0.0
  %7056 = vmatprep.subr.mxu0 0.0
  %7057 = vmatpush2.msra.mxu0 0.0
  %7058 = vmatprep.subr.mxu0 0.0
  %7059 = vmatpush2.msra.mxu0 0.0
  %7060 = vmatprep.subr.mxu0 0.0
  %7061 = vmatpush2.msra.mxu0 0.0
  %7062 = vmatprep.subr.mxu0 0.0
  %7063 = vmatpush2.msra.mxu0 0.0
  %7064 = vmatprep.subr.mxu0 0.0
  %7065 = vmatpush2.msra.mxu0 0.0
  %7066 = vmatprep.subr.mxu0 0.0
  %7067 = vmatpush2.msra.mxu0 0.0
  %7068 = vmatprep.subr.mxu0 0.0
  %7069 = vmatpush2.msra.mxu0 0.0
  %7070 = vmatprep.subr.mxu0 0.0
  %7071 = vmatpush2.msra.mxu0 0.0
  %7072 = vmatprep.subr.mxu0 0.0
  %7073 = vmatpush2.msra.mxu0 0.0
  %7074 = vmatprep.mubr.f32.mxu0 0.0
  %7075 = vmatmul.mubr.f32.gmra.mxu0 %v7005
  %v7076 = vpop.f32.mrf.mxu0
  %v7077 = vadd.f32 0.0, %v7076
  %v7078 = vpop.f32.mrf.mxu0
  %v7079 = vadd.f32 0.0, %v7078
  %7080 = vdwg.mxu0
  %7081 = vmatprep.subr.mxu0 %v5791
  %7082 = vmatpush1.msra.mxu0 %v5790
  %7083 = vmatprep.subr.mxu0 %v5787
  %7084 = vmatpush1.msra.mxu0 %v5786
  %7085 = vmatprep.subr.mxu0 %v5783
  %7086 = vmatpush1.msra.mxu0 %v5782
  %7087 = vmatprep.subr.mxu0 %v5779
  %7088 = vmatpush1.msra.mxu0 %v5778
  %7089 = vmatprep.subr.mxu0 %v5775
  %7090 = vmatpush1.msra.mxu0 %v5774
  %7091 = vmatprep.subr.mxu0 %v5771
  %7092 = vmatpush1.msra.mxu0 %v5770
  %7093 = vmatprep.subr.mxu0 %v5767
  %7094 = vmatpush1.msra.mxu0 %v5766
  %7095 = vmatprep.subr.mxu0 %v5763
  %7096 = vmatpush1.msra.mxu0 %v5762
  %7097 = vmatprep.subr.mxu0 %v5759
  %7098 = vmatpush1.msra.mxu0 %v5758
  %7099 = vmatprep.subr.mxu0 %v5755
  %7100 = vmatpush1.msra.mxu0 %v5754
  %7101 = vmatprep.subr.mxu0 %v5751
  %7102 = vmatpush1.msra.mxu0 %v5750
  %7103 = vmatprep.subr.mxu0 %v5747
  %7104 = vmatpush1.msra.mxu0 %v5746
  %7105 = vmatprep.subr.mxu0 %v5743
  %7106 = vmatpush1.msra.mxu0 %v5742
  %7107 = vmatprep.subr.mxu0 %v5739
  %7108 = vmatpush1.msra.mxu0 %v5738
  %7109 = vmatprep.subr.mxu0 %v5735
  %7110 = vmatpush1.msra.mxu0 %v5734
  %7111 = vmatprep.subr.mxu0 %v5731
  %7112 = vmatpush1.msra.mxu0 %v5730
  %7113 = vmatprep.subr.mxu0 0.0
  %7114 = vmatpush2.msra.mxu0 0.0
  %7115 = vmatprep.subr.mxu0 0.0
  %7116 = vmatpush2.msra.mxu0 0.0
  %7117 = vmatprep.subr.mxu0 0.0
  %7118 = vmatpush2.msra.mxu0 0.0
  %7119 = vmatprep.subr.mxu0 0.0
  %7120 = vmatpush2.msra.mxu0 0.0
  %7121 = vmatprep.subr.mxu0 0.0
  %7122 = vmatpush2.msra.mxu0 0.0
  %7123 = vmatprep.subr.mxu0 0.0
  %7124 = vmatpush2.msra.mxu0 0.0
  %7125 = vmatprep.subr.mxu0 0.0
  %7126 = vmatpush2.msra.mxu0 0.0
  %7127 = vmatprep.subr.mxu0 0.0
  %7128 = vmatpush2.msra.mxu0 0.0
  %7129 = vmatprep.subr.mxu0 0.0
  %7130 = vmatpush2.msra.mxu0 0.0
  %7131 = vmatprep.subr.mxu0 0.0
  %7132 = vmatpush2.msra.mxu0 0.0
  %7133 = vmatprep.subr.mxu0 0.0
  %7134 = vmatpush2.msra.mxu0 0.0
  %7135 = vmatprep.subr.mxu0 0.0
  %7136 = vmatpush2.msra.mxu0 0.0
  %7137 = vmatprep.subr.mxu0 0.0
  %7138 = vmatpush2.msra.mxu0 0.0
  %7139 = vmatprep.subr.mxu0 0.0
  %7140 = vmatpush2.msra.mxu0 0.0
  %7141 = vmatprep.subr.mxu0 0.0
  %7142 = vmatpush2.msra.mxu0 0.0
  %7143 = vmatprep.subr.mxu0 0.0
  %7144 = vmatpush2.msra.mxu0 0.0
  %7145 = vmatprep.mubr.f32.mxu0 0.0
  %7146 = vmatmul.mubr.f32.gmra.mxu0 %v7005
  %v7147 = vpop.f32.mrf.mxu0
  %v7148 = vadd.f32 0.0, %v7147
  %v7149 = vpop.f32.mrf.mxu0
  %v7150 = vadd.f32 0.0, %v7149
  %7151 = vdwg.mxu0
  %v7152 = vadd.f32 %v7006, %v7077
  %v7153 = vadd.f32 %v7007, %v7079
  %v7154 = vadd.f32 %v7008, %v7148
  %v7155 = vadd.f32 %v7009, %v7150
  %v7156 = vxor.u32 %v7152, 2147483648
  %v7157 = vxor.u32 %v7153, 2147483648
  %v7158 = vxor.u32 %v7154, 2147483648
  %v7159 = vmul.f32 %v7156, 1.442695
  %v7160 = vpow.pop %v7159
  %v7161 = vmul.f32 %v7157, 1.442695
  %v7162 = vpow.pop %v7161
  %v7163 = vmul.f32 %v7158, 1.442695
  %v7164 = vpow.pop %v7163
  %v7165 = vadd.f32 %v7160, 1.0
  %v7166 = vadd.f32 %v7162, 1.0
  %v7167 = vadd.f32 %v7164, 1.0
  %v7168 = vrcp.pop %v7165
  %v7169 = vmul.f32 1.0, %v7168
  %v7170 = vrcp.pop %v7166
  %v7171 = vmul.f32 1.0, %v7170
  %v7172 = vrcp.pop %v7167
  %v7173 = vmul.f32 1.0, %v7172
  %v7174 = vtanh.pop %v7155
  %v7175 = vmul.f32 %v7171, %v7003
  %v7176 = vmul.f32 %v7169, %v7174
  %v7177 = vadd.f32 %v7175, %v7176
  %v7178 = vtanh.pop %v7177
  %v7179 = vmul.f32 %v7173, %v7178
  %s7180 = smul.u32 128, 1
  %s7181 = sshll.u32 %s7180, 4
  %7182 = dma.done %s710, %s7181
  %v7183 = vld [vmem:[#allocation8] sm:$0xff]
  %v7184 = vld [vmem:[#allocation8 + $0x8] sm:$0xff]
  %v7185 = vld [vmem:[#allocation8 + $0x10] sm:$0xff]
  %v7186 = vld [vmem:[#allocation8 + $0x18] sm:$0xff]
  %v7187 = vld [vmem:[#allocation8 + $0x20] sm:$0xff]
  %v7188 = vld [vmem:[#allocation8 + $0x28] sm:$0xff]
  %v7189 = vld [vmem:[#allocation8 + $0x30] sm:$0xff]
  %v7190 = vld [vmem:[#allocation8 + $0x38] sm:$0xff]
  %v7191 = vld [vmem:[#allocation8 + $0x40] sm:$0xff]
  %v7192 = vld [vmem:[#allocation8 + $0x48] sm:$0xff]
  %v7193 = vld [vmem:[#allocation8 + $0x50] sm:$0xff]
  %v7194 = vld [vmem:[#allocation8 + $0x58] sm:$0xff]
  %v7195 = vld [vmem:[#allocation8 + $0x60] sm:$0xff]
  %v7196 = vld [vmem:[#allocation8 + $0x68] sm:$0xff]
  %v7197 = vld [vmem:[#allocation8 + $0x70] sm:$0xff]
  %v7198 = vld [vmem:[#allocation8 + $0x78] sm:$0xff]
  %v7199 = vld [vmem:[%s6] sm:$0x1]
  %v7201 = vlaneseq
  %v7202 = vshrl.u32 %v7201, 7
  %v7203 = vsub.s32 0, %v7202
  %v7204 = vrot.slane %v7199, %v7203
  %7206 = vmatprep.subr.mxu0 0.0
  %7207 = vmatpush1.msra.mxu0 %v7198
  %7208 = vmatprep.subr.mxu0 0.0
  %7209 = vmatpush1.msra.mxu0 %v7197
  %7210 = vmatprep.subr.mxu0 0.0
  %7211 = vmatpush1.msra.mxu0 %v7196
  %7212 = vmatprep.subr.mxu0 0.0
  %7213 = vmatpush1.msra.mxu0 %v7195
  %7214 = vmatprep.subr.mxu0 0.0
  %7215 = vmatpush1.msra.mxu0 %v7194
  %7216 = vmatprep.subr.mxu0 0.0
  %7217 = vmatpush1.msra.mxu0 %v7193
  %7218 = vmatprep.subr.mxu0 0.0
  %7219 = vmatpush1.msra.mxu0 %v7192
  %7220 = vmatprep.subr.mxu0 0.0
  %7221 = vmatpush1.msra.mxu0 %v7191
  %7222 = vmatprep.subr.mxu0 0.0
  %7223 = vmatpush1.msra.mxu0 %v7190
  %7224 = vmatprep.subr.mxu0 0.0
  %7225 = vmatpush1.msra.mxu0 %v7189
  %7226 = vmatprep.subr.mxu0 0.0
  %7227 = vmatpush1.msra.mxu0 %v7188
  %7228 = vmatprep.subr.mxu0 0.0
  %7229 = vmatpush1.msra.mxu0 %v7187
  %7230 = vmatprep.subr.mxu0 0.0
  %7231 = vmatpush1.msra.mxu0 %v7186
  %7232 = vmatprep.subr.mxu0 0.0
  %7233 = vmatpush1.msra.mxu0 %v7185
  %7234 = vmatprep.subr.mxu0 0.0
  %7235 = vmatpush1.msra.mxu0 %v7184
  %7236 = vmatprep.subr.mxu0 0.0
  %7237 = vmatpush1.msra.mxu0 %v7183
  %7238 = vmatprep.subr.mxu0 0.0
  %7239 = vmatpush2.msra.mxu0 0.0
  %7240 = vmatprep.subr.mxu0 0.0
  %7241 = vmatpush2.msra.mxu0 0.0
  %7242 = vmatprep.subr.mxu0 0.0
  %7243 = vmatpush2.msra.mxu0 0.0
  %7244 = vmatprep.subr.mxu0 0.0
  %7245 = vmatpush2.msra.mxu0 0.0
  %7246 = vmatprep.subr.mxu0 0.0
  %7247 = vmatpush2.msra.mxu0 0.0
  %7248 = vmatprep.subr.mxu0 0.0
  %7249 = vmatpush2.msra.mxu0 0.0
  %7250 = vmatprep.subr.mxu0 0.0
  %7251 = vmatpush2.msra.mxu0 0.0
  %7252 = vmatprep.subr.mxu0 0.0
  %7253 = vmatpush2.msra.mxu0 0.0
  %7254 = vmatprep.subr.mxu0 0.0
  %7255 = vmatpush2.msra.mxu0 0.0
  %7256 = vmatprep.subr.mxu0 0.0
  %7257 = vmatpush2.msra.mxu0 0.0
  %7258 = vmatprep.subr.mxu0 0.0
  %7259 = vmatpush2.msra.mxu0 0.0
  %7260 = vmatprep.subr.mxu0 0.0
  %7261 = vmatpush2.msra.mxu0 0.0
  %7262 = vmatprep.subr.mxu0 0.0
  %7263 = vmatpush2.msra.mxu0 0.0
  %7264 = vmatprep.subr.mxu0 0.0
  %7265 = vmatpush2.msra.mxu0 0.0
  %7266 = vmatprep.subr.mxu0 0.0
  %7267 = vmatpush2.msra.mxu0 0.0
  %7268 = vmatprep.subr.mxu0 0.0
  %7269 = vmatpush2.msra.mxu0 0.0
  %7270 = vmatprep.mubr.f32.mxu0 0.0
  %7271 = vmatmul.mubr.f32.gmra.mxu0 %v7179
  %v7272 = vpop.f32.mrf.mxu0
  %v7273 = vadd.f32 %v7204, %v7272
  %v7274 = vpop.f32.mrf.mxu0
  %7275 = vdwg.mxu0
  %7276 = vst [vmem:[%s12] sm:$0xff] %v7273
  // Predicated region
  $region200: #{predictive_lstm_forward.1} parent=0 // pred_check
    _
  $region201: #{predictive_lstm_forward.1} parent=0 // pred_check_branch
    %7278 = sbr.rel (0) target = $region203
  $region202: #{predictive_lstm_forward.1} parent=0 // pred_region
    _
  $region203: #{predictive_lstm_forward.1} parent=0 // pred_fallthru
    _
  // Predicated region
  $region204: #{predictive_lstm_forward.1} parent=0 // pred_check
    _
  $region205: #{predictive_lstm_forward.1} parent=0 // pred_check_branch
    %7280 = sbr.rel (0) target = $region207
  $region206: #{predictive_lstm_forward.1} parent=0 // pred_region
    _
  $region207: #{predictive_lstm_forward.1} parent=0 // pred_fallthru
    _
  %7281 = vsyncmov [#allocation9]
  %s7282 = vpop.sfrf %7281
  %p7283 = scmp.eq.s32.totalorder %s7282, 0
  %p7284 = pneg %p7283
  %7286 = shalt.err (%p7284)
  %s7287 = scalar_lea.sflag [#allocation9], 1
  %7288 = vsyncmov %s7287
  %s7289 = vpop.sfrf %7288
  %p7290 = scmp.eq.s32.totalorder %s7289, 0
  %p7291 = pneg %p7290
  %7293 = shalt.err (%p7291)
  %s7294 = scalar_lea.sflag [#allocation9], 2
  %7295 = vsyncmov %s7294
  %s7296 = vpop.sfrf %7295
  %p7297 = scmp.eq.s32.totalorder %s7296, 0
  %p7298 = pneg %p7297
  %7300 = shalt.err (%p7298)
  %s7301 = scalar_lea.sflag [#allocation9], 3
  %7302 = vsyncmov %s7301
  %s7303 = vpop.sfrf %7302
  %p7304 = scmp.eq.s32.totalorder %s7303, 0
  %p7305 = pneg %p7304
  %7307 = shalt.err (%p7305)
  %s7308 = scalar_lea.sflag [#allocation9], 4
  %7309 = vsyncmov %s7308
  %s7310 = vpop.sfrf %7309
  %p7311 = scmp.eq.s32.totalorder %s7310, 0
  %p7312 = pneg %p7311
  %7314 = shalt.err (%p7312)

</llo_original>
